<compile_context>
chip_gen: v6e
topology: v6e:2x2x1
jax: 0.10.0
libtpu: 0.0.40
codegen_flags: <defaults>
</compile_context>

<pallas_src>
import functools

import jax
import jax.numpy as jnp
from jax import lax
from jax.experimental import pallas as pl
from jax.experimental.pallas import tpu as pltpu


# ---------------------------------------------------------------------------
# Small helpers
# ---------------------------------------------------------------------------
def _layernorm(x, w, b, eps=1e-5):
    # x: (T, H) f32;  w, b: (1, H) f32
    mu = jnp.mean(x, axis=-1, keepdims=True)
    var = jnp.mean((x - mu) ** 2, axis=-1, keepdims=True)
    return (x - mu) * lax.rsqrt(var + eps) * w + b


def _round_up(x, m):
    return (x + m - 1) // m * m


def _pick_tile(n, candidates):
    for c in candidates:
        if c <= n and n % c == 0:
            return c
    return n


def _token_layout(n):
    """Pad the token count and pick a lane/sublane friendly token tile."""
    if n >= 128:
        n_pad = _round_up(n, 128)
        # TN <= 256 is safe on all generations (v7x has 64 MiB VMEM);
        # v5e/v6e could go to 512 with a raised scoped-VMEM limit.
        tn = 256 if n_pad % 256 == 0 else 128
    else:
        n_pad = _round_up(n, 8)
        tn = n_pad
    return n_pad, tn


_MLP_TILES = (512, 256, 128)


# ---------------------------------------------------------------------------
# Pallas kernels
# ---------------------------------------------------------------------------
def patch_embed_kernel(p_ref, w_ref, b_ref, pos_ref, o_ref):
    # p_ref: (1, TN, K) bf16   w_ref: (K, H) bf16   b_ref: (1, H) f32
    # pos_ref: (TN, H) f32     o_ref: (1, TN, H) bf16
    acc = jnp.dot(p_ref[0], w_ref[...], preferred_element_type=jnp.float32)
    o_ref[0] = (acc + b_ref[...] + pos_ref[...]).astype(o_ref.dtype)


def qkv_kernel(x_ref, ln_w, ln_b, wqkv, o_ref):
    # LN1 + fused QKV projection (qkv_bias=False, module default).
    # The softmax scale is pre-folded into the q columns of wqkv.
    xn = _layernorm(x_ref[0].astype(jnp.float32), ln_w[...], ln_b[...])
    o_ref[0] = jnp.dot(xn.astype(jnp.bfloat16), wqkv[...],
                       preferred_element_type=jnp.float32).astype(o_ref.dtype)


def flash_attn_kernel(q_ref, k_ref, v_ref, o_ref, m_sc, l_sc, acc_sc,
                      *, num_heads, head_dim, n_valid, tk, masked):
    # Online-softmax attention with all heads packed per grid step.
    # Grid = (B, q_tiles, kv_tiles); kv (reduction) is innermost.
    # q_ref/k_ref/v_ref: (1, TQ/TK, H) bf16 lane-dense blocks (q pre-scaled).
    kv = pl.program_id(2)

    @pl.when(kv == 0)
    def _():
        m_sc[...] = jnp.full(m_sc.shape, -1e30, jnp.float32)
        l_sc[...] = jnp.zeros(l_sc.shape, jnp.float32)
        acc_sc[...] = jnp.zeros(acc_sc.shape, jnp.float32)

    q = q_ref[0]                         # (TQ, H) bf16
    k = k_ref[0]                         # (TK, H) bf16
    v = v_ref[0]                         # (TK, H) bf16

    if masked:
        key_idx = kv * tk + lax.broadcasted_iota(jnp.int32, (1, tk), 1)
        kmask = key_idx < n_valid        # (1, TK) — mask padded key tokens

    for h in range(num_heads):           # static, small (4..16)
        sl = slice(h * head_dim, (h + 1) * head_dim)
        qh = q[:, sl]                    # (TQ, hd)
        kh = k[:, sl]                    # (TK, hd)
        vh = v[:, sl]                    # (TK, hd)

        s = lax.dot_general(qh, kh, (((1,), (1,)), ((), ())),
                            preferred_element_type=jnp.float32)   # (TQ, TK)
        if masked:
            s = jnp.where(kmask, s, -1e30)

        m_prev = m_sc[h]                 # (TQ, 1)
        m_new = jnp.maximum(m_prev, jnp.max(s, axis=-1, keepdims=True))
        alpha = jnp.exp(m_prev - m_new)
        p = jnp.exp(s - m_new)
        l_sc[h] = alpha * l_sc[h] + jnp.sum(p, axis=-1, keepdims=True)
        acc_sc[h] = alpha * acc_sc[h] + jnp.dot(
            p.astype(jnp.bfloat16), vh, preferred_element_type=jnp.float32)
        m_sc[h] = m_new

    @pl.when(kv == pl.num_programs(2) - 1)
    def _():
        # Exact normalisation (once per output tile), one dense (TQ, H) store.
        outs = [acc_sc[h] / l_sc[h] for h in range(num_heads)]
        o_ref[0] = jnp.concatenate(outs, axis=-1).astype(o_ref.dtype)


def block_mlp_kernel(*refs, fuse_final_ln):
    # Fused: x1 = x + ctx @ Wo + bo; out = x1 + W2(gelu(W1(LN2(x1)))) + b2.
    # Grid = (B, token_tiles, mlp_tiles); mlp axis is an accumulated reduction.
    if fuse_final_ln:
        (x_ref, ctx_ref, wo, bo, ln2w, ln2b, w1, b1, w2, b2, fw, fb,
         o_ref, on_ref, xn2_sc, acc_sc) = refs
    else:
        (x_ref, ctx_ref, wo, bo, ln2w, ln2b, w1, b1, w2, b2,
         o_ref, xn2_sc, acc_sc) = refs

    m = pl.program_id(2)

    @pl.when(m == 0)
    def _():
        attn = jnp.dot(ctx_ref[0], wo[...], preferred_element_type=jnp.float32)
        x1 = x_ref[0].astype(jnp.float32) + attn + bo[...]
        xn2_sc[...] = _layernorm(x1, ln2w[...], ln2b[...]).astype(jnp.bfloat16)
        acc_sc[...] = x1                 # residual folded into the accumulator

    h = jnp.dot(xn2_sc[...], w1[...], preferred_element_type=jnp.float32) + b1[...]
    h = jax.nn.gelu(h, approximate=True).astype(jnp.bfloat16)
    acc_sc[...] = acc_sc[...] + jnp.dot(h, w2[...],
                                        preferred_element_type=jnp.float32)

    @pl.when(m == pl.num_programs(2) - 1)
    def _():
        out = acc_sc[...] + b2[...]
        o_ref[0] = out.astype(o_ref.dtype)
        if fuse_final_ln:
            on_ref[0] = _layernorm(out, fw[...], fb[...]).astype(on_ref.dtype)


# ---------------------------------------------------------------------------
# Wrappers (pallas_call plumbing)
# ---------------------------------------------------------------------------
def run_patch_embed(patches, w, b, pos, tn):
    B, n_pad, K = patches.shape
    H = w.shape[1]
    return pl.pallas_call(
        patch_embed_kernel,
        out_shape=jax.ShapeDtypeStruct((B, n_pad, H), jnp.bfloat16),
        grid=(B, n_pad // tn),
        in_specs=[
            pl.BlockSpec((1, tn, K), lambda bi, t: (bi, t, 0)),
            pl.BlockSpec((K, H), lambda bi, t: (0, 0)),
            pl.BlockSpec((1, H), lambda bi, t: (0, 0)),
            pl.BlockSpec((tn, H), lambda bi, t: (t, 0)),
        ],
        out_specs=pl.BlockSpec((1, tn, H), lambda bi, t: (bi, t, 0)),
        compiler_params=pltpu.CompilerParams(
            dimension_semantics=("parallel", "parallel")),
    )(patches, w, b, pos)


def run_qkv(x, p, tn):
    B, n_pad, H = x.shape
    tok = lambda bi, t: (bi, t, 0)
    const = lambda bi, t: (0, 0)
    return pl.pallas_call(
        qkv_kernel,
        out_shape=jax.ShapeDtypeStruct((B, n_pad, 3 * H), jnp.bfloat16),
        grid=(B, n_pad // tn),
        in_specs=[
            pl.BlockSpec((1, tn, H), tok),
            pl.BlockSpec((1, H), const),
            pl.BlockSpec((1, H), const),
            pl.BlockSpec((H, 3 * H), const),
        ],
        out_specs=pl.BlockSpec((1, tn, 3 * H), tok),
        compiler_params=pltpu.CompilerParams(
            dimension_semantics=("parallel", "parallel")),
    )(x, p["ln1w"], p["ln1b"], p["wqkv"])


def run_flash_attention(qkv, num_heads, n_valid, tq):
    B, n_pad, H3 = qkv.shape
    H = H3 // 3
    hd = H // num_heads
    tk = min(tq, 128)                    # smaller kv tile -> smaller f32 s/p live set
    kernel = functools.partial(flash_attn_kernel, num_heads=num_heads,
                               head_dim=hd, n_valid=n_valid, tk=tk,
                               masked=(n_pad != n_valid))
    # q / k / v are views of the same (B, N, 3H) array, selected purely by the
    # last-axis block index (0 -> q, 1 -> k, 2 -> v): no host reshape/transpose.
    return pl.pallas_call(
        kernel,
        out_shape=jax.ShapeDtypeStruct((B, n_pad, H), jnp.bfloat16),
        grid=(B, n_pad // tq, n_pad // tk),
        in_specs=[
            pl.BlockSpec((1, tq, H), lambda b, qi, ki: (b, qi, 0)),
            pl.BlockSpec((1, tk, H), lambda b, qi, ki: (b, ki, 1)),
            pl.BlockSpec((1, tk, H), lambda b, qi, ki: (b, ki, 2)),
        ],
        out_specs=pl.BlockSpec((1, tq, H), lambda b, qi, ki: (b, qi, 0)),
        scratch_shapes=[
            pltpu.VMEM((num_heads, tq, 1), jnp.float32),    # m
            pltpu.VMEM((num_heads, tq, 1), jnp.float32),    # l
            pltpu.VMEM((num_heads, tq, hd), jnp.float32),   # acc
        ],
        compiler_params=pltpu.CompilerParams(
            dimension_semantics=("parallel", "parallel", "arbitrary")),
    )(qkv, qkv, qkv)


def run_block_mlp(x, ctx, p, tn, final_ln=None):
    B, n_pad, H = x.shape
    M = p["w1"].shape[1]
    tm = _pick_tile(M, _MLP_TILES)
    fuse = final_ln is not None

    tok = lambda bi, t, m: (bi, t, 0)
    const = lambda bi, t, m: (0, 0)

    in_specs = [
        pl.BlockSpec((1, tn, H), tok),                    # x (bf16 residual)
        pl.BlockSpec((1, tn, H), tok),                    # ctx (attention output)
        pl.BlockSpec((H, H), const),                      # wo
        pl.BlockSpec((1, H), const),                      # bo
        pl.BlockSpec((1, H), const),                      # ln2w
        pl.BlockSpec((1, H), const),                      # ln2b
        pl.BlockSpec((H, tm), lambda bi, t, m: (0, m)),   # w1 column tile
        pl.BlockSpec((1, tm), lambda bi, t, m: (0, m)),   # b1 tile
        pl.BlockSpec((tm, H), lambda bi, t, m: (m, 0)),   # w2 row tile
        pl.BlockSpec((1, H), const),                      # b2
    ]
    args = [x, ctx, p["wo"], p["bo"], p["ln2w"], p["ln2b"],
            p["w1"], p["b1"], p["w2"], p["b2"]]

    if fuse:
        in_specs += [pl.BlockSpec((1, H), const), pl.BlockSpec((1, H), const)]
        args += [final_ln[0], final_ln[1]]
        out_shape = (jax.ShapeDtypeStruct((B, n_pad, H), jnp.bfloat16),
                     jax.ShapeDtypeStruct((B, n_pad, H), jnp.float32))
        out_specs = (pl.BlockSpec((1, tn, H), tok),
                     pl.BlockSpec((1, tn, H), tok))
    else:
        out_shape = jax.ShapeDtypeStruct((B, n_pad, H), jnp.bfloat16)
        out_specs = pl.BlockSpec((1, tn, H), tok)

    kernel = functools.partial(block_mlp_kernel, fuse_final_ln=fuse)
    return pl.pallas_call(
        kernel,
        out_shape=out_shape,
        grid=(B, n_pad // tn, M // tm),
        in_specs=in_specs,
        out_specs=out_specs,
        scratch_shapes=[
            pltpu.VMEM((tn, H), jnp.bfloat16),   # LN2(x1) (matmul operand)
            pltpu.VMEM((tn, H), jnp.float32),    # accumulator (residual folded in)
        ],
        compiler_params=pltpu.CompilerParams(
            dimension_semantics=("parallel", "parallel", "arbitrary")),
    )(*args)


# ---------------------------------------------------------------------------
# Model construction / forward (glue in plain JAX)
# ---------------------------------------------------------------------------
def extract_patches(x, patch_size):
    # x: (B, C, D, H, W); Conv3d with kernel_size == stride == patch_size
    # expressed as non-overlapping patch extraction in (C, pd, ph, pw) order.
    B, C, D, H, W = x.shape
    pd, ph, pw = patch_size
    nd, nh, nw = D // pd, H // ph, W // pw
    x = x.reshape(B, C, nd, pd, nh, ph, nw, pw)
    x = x.transpose(0, 2, 4, 6, 1, 3, 5, 7)    # (B, nd, nh, nw, C, pd, ph, pw)
    return x.reshape(B, nd * nh * nw, C * pd * ph * pw)


def init_vit_params(key, in_channels, img_size, patch_size,
                    hidden_size, mlp_dim, num_layers, num_heads):
    assert hidden_size % num_heads == 0
    assert hidden_size % 128 == 0, "hidden_size must be lane-dense (multiple of 128)"
    n_patches = 1
    for s, p in zip(img_size, patch_size):
        n_patches *= s // p
    k_dim = in_channels * patch_size[0] * patch_size[1] * patch_size[2]
    scale = (hidden_size // num_heads) ** -0.5

    keys = jax.random.split(key, 2 + num_layers)

    def w(kk, shape):
        return (jax.random.normal(kk, shape, jnp.float32) * 0.02).astype(jnp.bfloat16)

    params = {
        # Conv3d weight (hidden, C, pd, ph, pw) flattened to (K, hidden), bf16.
        "patch_w": w(keys[0], (k_dim, hidden_size)),
        "patch_b": jnp.zeros((1, hidden_size), jnp.float32),
        "pos_emb": jax.random.normal(keys[1], (n_patches, hidden_size),
                                     jnp.float32) * 0.02,
        "final_lnw": jnp.ones((1, hidden_size), jnp.float32),
        "final_lnb": jnp.zeros((1, hidden_size), jnp.float32),
        "blocks": [],
    }
    for i in range(num_layers):
        bk = jax.random.split(keys[2 + i], 6)
        wq = jax.random.normal(bk[0], (hidden_size, hidden_size), jnp.float32) * 0.02
        wk = jax.random.normal(bk[1], (hidden_size, hidden_size), jnp.float32) * 0.02
        wv = jax.random.normal(bk[2], (hidden_size, hidden_size), jnp.float32) * 0.02
        # Fused qkv weight (MONAI head-major column layout); softmax scale
        # folded into the q columns so the attention kernel never rescales.
        wqkv = jnp.concatenate([wq * scale, wk, wv], axis=1).astype(jnp.bfloat16)
        params["blocks"].append({
            "ln1w": jnp.ones((1, hidden_size), jnp.float32),
            "ln1b": jnp.zeros((1, hidden_size), jnp.float32),
            "wqkv": wqkv,
            "wo": w(bk[3], (hidden_size, hidden_size)),
            "bo": jnp.zeros((1, hidden_size), jnp.float32),
            "ln2w": jnp.ones((1, hidden_size), jnp.float32),
            "ln2b": jnp.zeros((1, hidden_size), jnp.float32),
            "w1": w(bk[4], (hidden_size, mlp_dim)),
            "b1": jnp.zeros((1, mlp_dim), jnp.float32),
            "w2": w(bk[5], (mlp_dim, hidden_size)),
            "b2": jnp.zeros((1, hidden_size), jnp.float32),
        })
    return params


def vit_forward(x, params, patch_size, num_heads):
    # classification=False, use_mask=False, qkv_bias=False, dropout_rate=0.0
    patches = extract_patches(x, patch_size)
    B, N, K = patches.shape
    n_pad, tn = _token_layout(N)

    pos = params["pos_emb"]
    if n_pad != N:
        patches = jnp.pad(patches, ((0, 0), (0, n_pad - N), (0, 0)))
        pos = jnp.pad(pos, ((0, n_pad - N), (0, 0)))

    h = run_patch_embed(patches.astype(jnp.bfloat16),
                        params["patch_w"], params["patch_b"], pos, tn)

    hidden_states_out = []
    out = None
    n_layers = len(params["blocks"])
    for i, blk in enumerate(params["blocks"]):
        qkv = run_qkv(h, blk, tn)
        ctx = run_flash_attention(qkv, num_heads, N, tn)
        if i == n_layers - 1:
            # final LayerNorm fused into the last block's epilogue
            h, out = run_block_mlp(h, ctx, blk, tn,
                                   final_ln=(params["final_lnw"],
                                             params["final_lnb"]))
        else:
            h = run_block_mlp(h, ctx, blk, tn)
        hidden_states_out.append(h[:, :N] if n_pad != N else h)

    out = out[:, :N] if n_pad != N else out
    return out, hidden_states_out


# ---------------------------------------------------------------------------
if __name__ == "__main__":
    # Small but lane-dense shapes (H multiple of 128, tokens multiple of 8).
    B, C = 2, 1
    img_size = (16, 16, 16)
    patch_size = (4, 4, 4)
    hidden_size, mlp_dim = 128, 256
    num_layers, num_heads = 2, 4
    n_tokens = (16 // 4) ** 3          # 64

    key = jax.random.PRNGKey(0)
    kx, kp = jax.random.split(key)
    x = jax.random.normal(kx, (B, C) + img_size, jnp.float32)

    params = init_vit_params(kp, C, img_size, patch_size,
                             hidden_size, mlp_dim, num_layers, num_heads)

    fwd = jax.jit(functools.partial(vit_forward,
                                    patch_size=patch_size, num_heads=num_heads))
    out, hidden_states = fwd(x, params)
    out = jax.block_until_ready(out)
    for hs in hidden_states:
        jax.block_until_ready(hs)

    assert out.shape == (B, n_tokens, hidden_size)
    assert len(hidden_states) == num_layers
    for hs in hidden_states:
        assert hs.shape == (B, n_tokens, hidden_size)
    assert bool(jnp.all(jnp.isfinite(out)))
    print("KERNEL_OK")
</pallas_src>

<mosaic_0001>
module attributes {stable_mosaic.version = 11 : i64} {
  func.func @patch_embed_kernel(%arg0: i32, %arg1: i32, %arg2: memref<1x64x64xbf16, #tpu.memory_space<vmem>>, %arg3: memref<64x128xbf16, #tpu.memory_space<vmem>>, %arg4: memref<1x128xf32, #tpu.memory_space<vmem>>, %arg5: memref<64x128xf32, #tpu.memory_space<vmem>>, %arg6: memref<1x64x128xbf16, #tpu.memory_space<vmem>>) attributes {dimension_semantics = [#tpu.dimension_semantics<parallel>, #tpu.dimension_semantics<parallel>], iteration_bounds = array<i64: 2, 1>, scalar_prefetch = 0 : i64, scratch_operands = 0 : i64, tpu.core_type = #tpu.core_type<tc>, window_params = [{transform_indices = @transform_0, window_bounds = array<i64: 1, 64, 64>}, {pipeline_mode = #tpu.pipeline_mode<synchronous>, transform_indices = @transform_1, window_bounds = array<i64: 64, 128>}, {pipeline_mode = #tpu.pipeline_mode<synchronous>, transform_indices = @transform_2, window_bounds = array<i64: 1, 128>}, {transform_indices = @transform_3, window_bounds = array<i64: 64, 128>}, {transform_indices = @transform_4, window_bounds = array<i64: 1, 64, 128>}]} {
    %c0 = arith.constant 0 : index
    %c0_0 = arith.constant 0 : index
    %c0_1 = arith.constant 0 : index
    %0 = vector.load %arg2[%c0, %c0_0, %c0_1] : memref<1x64x64xbf16, #tpu.memory_space<vmem>>, vector<1x64x64xbf16>
    %1 = vector.shape_cast %0 : vector<1x64x64xbf16> to vector<64x64xbf16>
    %c0_2 = arith.constant 0 : index
    %c0_3 = arith.constant 0 : index
    %2 = vector.load %arg3[%c0_2, %c0_3] : memref<64x128xbf16, #tpu.memory_space<vmem>>, vector<64x128xbf16>
    %cst = arith.constant dense<0.000000e+00> : vector<64x128xf32>
    %3 = tpu.matmul %1, %2, %cst {dimension_numbers = #tpu.dot_dimension_numbers<[1], [0], [0], [1], [0, 0, 1, 1], [], []>} : vector<64x64xbf16>, vector<64x128xbf16>, vector<64x128xf32> -> vector<64x128xf32>
    %c0_4 = arith.constant 0 : index
    %c0_5 = arith.constant 0 : index
    %4 = vector.load %arg4[%c0_4, %c0_5] : memref<1x128xf32, #tpu.memory_space<vmem>>, vector<1x128xf32>
    %5 = vector.broadcast %4 : vector<1x128xf32> to vector<64x128xf32>
    %6 = arith.addf %3, %5 : vector<64x128xf32>
    %c0_6 = arith.constant 0 : index
    %c0_7 = arith.constant 0 : index
    %7 = vector.load %arg5[%c0_6, %c0_7] : memref<64x128xf32, #tpu.memory_space<vmem>>, vector<64x128xf32>
    %8 = arith.addf %6, %7 : vector<64x128xf32>
    %9 = arith.truncf %8 : vector<64x128xf32> to vector<64x128xbf16>
    %c0_8 = arith.constant 0 : index
    %c0_9 = arith.constant 0 : index
    %c0_10 = arith.constant 0 : index
    %10 = vector.load %arg6[%c0_8, %c0_9, %c0_10] : memref<1x64x128xbf16, #tpu.memory_space<vmem>>, vector<1x64x128xbf16>
    %11 = vector.shape_cast %10 : vector<1x64x128xbf16> to vector<64x128xbf16>
    %12 = vector.shape_cast %9 : vector<64x128xbf16> to vector<1x64x128xbf16>
    tpu.vector_store %arg6[%c0_8, %c0_9, %c0_10], %12 {strides = array<i32>} : memref<1x64x128xbf16, #tpu.memory_space<vmem>>, vector<1x64x128xbf16>,
    return
  }
  func.func @transform_0(%arg0: i32, %arg1: i32) -> (i32, i32, i32) {
    %c0_i32 = arith.constant 0 : i32
    %c0_i32_0 = arith.constant 0 : i32
    return %arg0, %arg1, %c0_i32 : i32, i32, i32
  }
  func.func @transform_1(%arg0: i32, %arg1: i32) -> (i32, i32) {
    %c0_i32 = arith.constant 0 : i32
    %c0_i32_0 = arith.constant 0 : i32
    %c0_i32_1 = arith.constant 0 : i32
    return %c0_i32, %c0_i32_0 : i32, i32
  }
  func.func @transform_2(%arg0: i32, %arg1: i32) -> (i32, i32) {
    %c0_i32 = arith.constant 0 : i32
    %c0_i32_0 = arith.constant 0 : i32
    %c0_i32_1 = arith.constant 0 : i32
    return %c0_i32, %c0_i32_0 : i32, i32
  }
  func.func @transform_3(%arg0: i32, %arg1: i32) -> (i32, i32) {
    %c0_i32 = arith.constant 0 : i32
    %c0_i32_0 = arith.constant 0 : i32
    return %arg1, %c0_i32 : i32, i32
  }
  func.func @transform_4(%arg0: i32, %arg1: i32) -> (i32, i32, i32) {
    %c0_i32 = arith.constant 0 : i32
    %c0_i32_0 = arith.constant 0 : i32
    return %arg0, %arg1, %c0_i32 : i32, i32, i32
  }
}

module attributes {stable_mosaic.version = 11 : i64} {
  func.func @qkv_kernel(%arg0: i32, %arg1: i32, %arg2: memref<1x64x128xbf16, #tpu.memory_space<vmem>>, %arg3: memref<1x128xf32, #tpu.memory_space<vmem>>, %arg4: memref<1x128xf32, #tpu.memory_space<vmem>>, %arg5: memref<128x384xbf16, #tpu.memory_space<vmem>>, %arg6: memref<1x64x384xbf16, #tpu.memory_space<vmem>>) attributes {dimension_semantics = [#tpu.dimension_semantics<parallel>, #tpu.dimension_semantics<parallel>], iteration_bounds = array<i64: 2, 1>, scalar_prefetch = 0 : i64, scratch_operands = 0 : i64, tpu.core_type = #tpu.core_type<tc>, window_params = [{transform_indices = @transform_0, window_bounds = array<i64: 1, 64, 128>}, {pipeline_mode = #tpu.pipeline_mode<synchronous>, transform_indices = @transform_1, window_bounds = array<i64: 1, 128>}, {pipeline_mode = #tpu.pipeline_mode<synchronous>, transform_indices = @transform_2, window_bounds = array<i64: 1, 128>}, {pipeline_mode = #tpu.pipeline_mode<synchronous>, transform_indices = @transform_3, window_bounds = array<i64: 128, 384>}, {transform_indices = @transform_4, window_bounds = array<i64: 1, 64, 384>}]} {
    %c0 = arith.constant 0 : index
    %c0_0 = arith.constant 0 : index
    %c0_1 = arith.constant 0 : index
    %0 = vector.load %arg2[%c0, %c0_0, %c0_1] : memref<1x64x128xbf16, #tpu.memory_space<vmem>>, vector<1x64x128xbf16>
    %1 = vector.shape_cast %0 : vector<1x64x128xbf16> to vector<64x128xbf16>
    %2 = arith.extf %1 : vector<64x128xbf16> to vector<64x128xf32>
    %c0_2 = arith.constant 0 : index
    %c0_3 = arith.constant 0 : index
    %3 = vector.load %arg3[%c0_2, %c0_3] : memref<1x128xf32, #tpu.memory_space<vmem>>, vector<1x128xf32>
    %c0_4 = arith.constant 0 : index
    %c0_5 = arith.constant 0 : index
    %4 = vector.load %arg4[%c0_4, %c0_5] : memref<1x128xf32, #tpu.memory_space<vmem>>, vector<1x128xf32>
    %cst = arith.constant dense<0.000000e+00> : vector<64xf32>
    %5 = vector.multi_reduction <add>, %2, %cst [1] : vector<64x128xf32> to vector<64xf32>
    %6 = vector.shape_cast %5 : vector<64xf32> to vector<64x1xf32>
    %cst_6 = arith.constant 1.280000e+02 : f32
    %7 = vector.broadcast %cst_6 : f32 to vector<64x1xf32>
    %8 = arith.divf %6, %7 : vector<64x1xf32>
    %9 = vector.broadcast %8 : vector<64x1xf32> to vector<64x128xf32>
    %10 = arith.subf %2, %9 : vector<64x128xf32>
    %11 = arith.mulf %10, %10 : vector<64x128xf32>
    %cst_7 = arith.constant dense<0.000000e+00> : vector<64xf32>
    %12 = vector.multi_reduction <add>, %11, %cst_7 [1] : vector<64x128xf32> to vector<64xf32>
    %13 = vector.shape_cast %12 : vector<64xf32> to vector<64x1xf32>
    %cst_8 = arith.constant 1.280000e+02 : f32
    %14 = vector.broadcast %cst_8 : f32 to vector<64x1xf32>
    %15 = arith.divf %13, %14 : vector<64x1xf32>
    %16 = vector.broadcast %8 : vector<64x1xf32> to vector<64x128xf32>
    %17 = arith.subf %2, %16 : vector<64x128xf32>
    %cst_9 = arith.constant 9.99999974E-6 : f32
    %18 = vector.broadcast %cst_9 : f32 to vector<64x1xf32>
    %19 = arith.addf %15, %18 : vector<64x1xf32>
    %20 = math.rsqrt %19 : vector<64x1xf32>
    %21 = vector.broadcast %20 : vector<64x1xf32> to vector<64x128xf32>
    %22 = arith.mulf %17, %21 : vector<64x128xf32>
    %23 = vector.broadcast %3 : vector<1x128xf32> to vector<64x128xf32>
    %24 = arith.mulf %22, %23 : vector<64x128xf32>
    %25 = vector.broadcast %4 : vector<1x128xf32> to vector<64x128xf32>
    %26 = arith.addf %24, %25 : vector<64x128xf32>
    %27 = arith.truncf %26 : vector<64x128xf32> to vector<64x128xbf16>
    %c0_10 = arith.constant 0 : index
    %c0_11 = arith.constant 0 : index
    %28 = vector.load %arg5[%c0_10, %c0_11] : memref<128x384xbf16, #tpu.memory_space<vmem>>, vector<128x384xbf16>
    %cst_12 = arith.constant dense<0.000000e+00> : vector<64x384xf32>
    %29 = tpu.matmul %27, %28, %cst_12 {dimension_numbers = #tpu.dot_dimension_numbers<[1], [0], [0], [1], [0, 0, 1, 1], [], []>} : vector<64x128xbf16>, vector<128x384xbf16>, vector<64x384xf32> -> vector<64x384xf32>
    %30 = arith.truncf %29 : vector<64x384xf32> to vector<64x384xbf16>
    %c0_13 = arith.constant 0 : index
    %c0_14 = arith.constant 0 : index
    %c0_15 = arith.constant 0 : index
    %31 = vector.load %arg6[%c0_13, %c0_14, %c0_15] : memref<1x64x384xbf16, #tpu.memory_space<vmem>>, vector<1x64x384xbf16>
    %32 = vector.shape_cast %31 : vector<1x64x384xbf16> to vector<64x384xbf16>
    %33 = vector.shape_cast %30 : vector<64x384xbf16> to vector<1x64x384xbf16>
    tpu.vector_store %arg6[%c0_13, %c0_14, %c0_15], %33 {strides = array<i32>} : memref<1x64x384xbf16, #tpu.memory_space<vmem>>, vector<1x64x384xbf16>,
    return
  }
  func.func @transform_0(%arg0: i32, %arg1: i32) -> (i32, i32, i32) {
    %c0_i32 = arith.constant 0 : i32
    %c0_i32_0 = arith.constant 0 : i32
    return %arg0, %arg1, %c0_i32 : i32, i32, i32
  }
  func.func @transform_1(%arg0: i32, %arg1: i32) -> (i32, i32) {
    %c0_i32 = arith.constant 0 : i32
    %c0_i32_0 = arith.constant 0 : i32
    %c0_i32_1 = arith.constant 0 : i32
    return %c0_i32, %c0_i32_0 : i32, i32
  }
  func.func @transform_2(%arg0: i32, %arg1: i32) -> (i32, i32) {
    %c0_i32 = arith.constant 0 : i32
    %c0_i32_0 = arith.constant 0 : i32
    %c0_i32_1 = arith.constant 0 : i32
    return %c0_i32, %c0_i32_0 : i32, i32
  }
  func.func @transform_3(%arg0: i32, %arg1: i32) -> (i32, i32) {
    %c0_i32 = arith.constant 0 : i32
    %c0_i32_0 = arith.constant 0 : i32
    %c0_i32_1 = arith.constant 0 : i32
    return %c0_i32, %c0_i32_0 : i32, i32
  }
  func.func @transform_4(%arg0: i32, %arg1: i32) -> (i32, i32, i32) {
    %c0_i32 = arith.constant 0 : i32
    %c0_i32_0 = arith.constant 0 : i32
    return %arg0, %arg1, %c0_i32 : i32, i32, i32
  }
}

module attributes {stable_mosaic.version = 11 : i64} {
  func.func @flash_attn_kernel(%arg0: i32, %arg1: i32, %arg2: i32, %arg3: memref<1x64x128xbf16, #tpu.memory_space<vmem>>, %arg4: memref<1x64x128xbf16, #tpu.memory_space<vmem>>, %arg5: memref<1x64x128xbf16, #tpu.memory_space<vmem>>, %arg6: memref<1x64x128xbf16, #tpu.memory_space<vmem>>, %arg7: memref<4x64x1xf32, #tpu.memory_space<vmem>>, %arg8: memref<4x64x1xf32, #tpu.memory_space<vmem>>, %arg9: memref<4x64x32xf32, #tpu.memory_space<vmem>>) attributes {dimension_semantics = [#tpu.dimension_semantics<parallel>, #tpu.dimension_semantics<parallel>, #tpu.dimension_semantics<arbitrary>], iteration_bounds = array<i64: 2, 1, 1>, scalar_prefetch = 0 : i64, scratch_operands = 3 : i64, tpu.core_type = #tpu.core_type<tc>, window_params = [{transform_indices = @transform_0, window_bounds = array<i64: 1, 64, 128>}, {transform_indices = @transform_1, window_bounds = array<i64: 1, 64, 128>}, {transform_indices = @transform_2, window_bounds = array<i64: 1, 64, 128>}, {transform_indices = @transform_3, window_bounds = array<i64: 1, 64, 128>}]} {
    %c0_i32 = arith.constant 0 : i32
    %0 = arith.cmpi eq, %arg2, %c0_i32 : i32
    %1 = arith.extui %0 : i1 to i32
    %c0_i32_0 = arith.constant 0 : i32
    %2 = arith.cmpi ne, %1, %c0_i32_0 : i32
    scf.if %2 {
      %cst_95 = arith.constant -1.000000e+30 : f32
      %156 = vector.broadcast %cst_95 : f32 to vector<4x64x1xf32>
      %c0_96 = arith.constant 0 : index
      %c0_97 = arith.constant 0 : index
      %c0_98 = arith.constant 0 : index
      %157 = vector.load %arg7[%c0_96, %c0_97, %c0_98] : memref<4x64x1xf32, #tpu.memory_space<vmem>>, vector<4x64x1xf32>
      tpu.vector_store %arg7[%c0_96, %c0_97, %c0_98], %156 {strides = array<i32>} : memref<4x64x1xf32, #tpu.memory_space<vmem>>, vector<4x64x1xf32>,
      %cst_99 = arith.constant 0.000000e+00 : f32
      %158 = vector.broadcast %cst_99 : f32 to vector<4x64x1xf32>
      %c0_100 = arith.constant 0 : index
      %c0_101 = arith.constant 0 : index
      %c0_102 = arith.constant 0 : index
      %159 = vector.load %arg8[%c0_100, %c0_101, %c0_102] : memref<4x64x1xf32, #tpu.memory_space<vmem>>, vector<4x64x1xf32>
      tpu.vector_store %arg8[%c0_100, %c0_101, %c0_102], %158 {strides = array<i32>} : memref<4x64x1xf32, #tpu.memory_space<vmem>>, vector<4x64x1xf32>,
      %cst_103 = arith.constant 0.000000e+00 : f32
      %160 = vector.broadcast %cst_103 : f32 to vector<4x64x32xf32>
      %c0_104 = arith.constant 0 : index
      %c0_105 = arith.constant 0 : index
      %c0_106 = arith.constant 0 : index
      %161 = vector.load %arg9[%c0_104, %c0_105, %c0_106] : memref<4x64x32xf32, #tpu.memory_space<vmem>>, vector<4x64x32xf32>
      tpu.vector_store %arg9[%c0_104, %c0_105, %c0_106], %160 {strides = array<i32>} : memref<4x64x32xf32, #tpu.memory_space<vmem>>, vector<4x64x32xf32>,
    } else {
    }
    %c0 = arith.constant 0 : index
    %c0_1 = arith.constant 0 : index
    %c0_2 = arith.constant 0 : index
    %3 = vector.load %arg3[%c0, %c0_1, %c0_2] : memref<1x64x128xbf16, #tpu.memory_space<vmem>>, vector<1x64x128xbf16>
    %4 = vector.shape_cast %3 : vector<1x64x128xbf16> to vector<64x128xbf16>
    %c0_3 = arith.constant 0 : index
    %c0_4 = arith.constant 0 : index
    %c0_5 = arith.constant 0 : index
    %5 = vector.load %arg4[%c0_3, %c0_4, %c0_5] : memref<1x64x128xbf16, #tpu.memory_space<vmem>>, vector<1x64x128xbf16>
    %6 = vector.shape_cast %5 : vector<1x64x128xbf16> to vector<64x128xbf16>
    %c0_6 = arith.constant 0 : index
    %c0_7 = arith.constant 0 : index
    %c0_8 = arith.constant 0 : index
    %7 = vector.load %arg5[%c0_6, %c0_7, %c0_8] : memref<1x64x128xbf16, #tpu.memory_space<vmem>>, vector<1x64x128xbf16>
    %8 = vector.shape_cast %7 : vector<1x64x128xbf16> to vector<64x128xbf16>
    %9 = vector.extract_strided_slice %4 {offsets = [0, 0], sizes = [64, 32], strides = [1, 1]} : vector<64x128xbf16> to vector<64x32xbf16>
    %10 = vector.extract_strided_slice %6 {offsets = [0, 0], sizes = [64, 32], strides = [1, 1]} : vector<64x128xbf16> to vector<64x32xbf16>
    %11 = vector.extract_strided_slice %8 {offsets = [0, 0], sizes = [64, 32], strides = [1, 1]} : vector<64x128xbf16> to vector<64x32xbf16>
    %cst = arith.constant dense<0.000000e+00> : vector<64x64xf32>
    %12 = tpu.matmul %9, %10, %cst {dimension_numbers = #tpu.dot_dimension_numbers<[1], [1], [0], [0], [0, 0, 1, 0], [], []>} : vector<64x32xbf16>, vector<64x32xbf16>, vector<64x64xf32> -> vector<64x64xf32>
    %c0_9 = arith.constant 0 : index
    %c0_10 = arith.constant 0 : index
    %c0_11 = arith.constant 0 : index
    %13 = vector.load %arg7[%c0_9, %c0_10, %c0_11] : memref<4x64x1xf32, #tpu.memory_space<vmem>>, vector<1x64x1xf32>
    %14 = vector.shape_cast %13 : vector<1x64x1xf32> to vector<64x1xf32>
    %cst_12 = arith.constant dense<0xFF800000> : vector<64xf32>
    %15 = vector.multi_reduction <maximumf>, %12, %cst_12 [1] : vector<64x64xf32> to vector<64xf32>
    %16 = vector.shape_cast %15 : vector<64xf32> to vector<64x1xf32>
    %17 = arith.maximumf %14, %16 : vector<64x1xf32>
    %18 = arith.subf %14, %17 : vector<64x1xf32>
    %19 = math.exp %18 : vector<64x1xf32>
    %20 = vector.broadcast %17 : vector<64x1xf32> to vector<64x64xf32>
    %21 = arith.subf %12, %20 : vector<64x64xf32>
    %22 = math.exp %21 : vector<64x64xf32>
    %c0_13 = arith.constant 0 : index
    %c0_14 = arith.constant 0 : index
    %c0_15 = arith.constant 0 : index
    %23 = vector.load %arg8[%c0_13, %c0_14, %c0_15] : memref<4x64x1xf32, #tpu.memory_space<vmem>>, vector<1x64x1xf32>
    %24 = vector.shape_cast %23 : vector<1x64x1xf32> to vector<64x1xf32>
    %25 = arith.mulf %19, %24 : vector<64x1xf32>
    %cst_16 = arith.constant dense<0.000000e+00> : vector<64xf32>
    %26 = vector.multi_reduction <add>, %22, %cst_16 [1] : vector<64x64xf32> to vector<64xf32>
    %27 = vector.shape_cast %26 : vector<64xf32> to vector<64x1xf32>
    %28 = arith.addf %25, %27 : vector<64x1xf32>
    %c0_17 = arith.constant 0 : index
    %c0_18 = arith.constant 0 : index
    %c0_19 = arith.constant 0 : index
    %29 = vector.load %arg8[%c0_17, %c0_18, %c0_19] : memref<4x64x1xf32, #tpu.memory_space<vmem>>, vector<1x64x1xf32>
    %30 = vector.shape_cast %29 : vector<1x64x1xf32> to vector<64x1xf32>
    %31 = vector.shape_cast %28 : vector<64x1xf32> to vector<1x64x1xf32>
    tpu.vector_store %arg8[%c0_17, %c0_18, %c0_19], %31 {strides = array<i32>} : memref<4x64x1xf32, #tpu.memory_space<vmem>>, vector<1x64x1xf32>,
    %c0_20 = arith.constant 0 : index
    %c0_21 = arith.constant 0 : index
    %c0_22 = arith.constant 0 : index
    %32 = vector.load %arg9[%c0_20, %c0_21, %c0_22] : memref<4x64x32xf32, #tpu.memory_space<vmem>>, vector<1x64x32xf32>
    %33 = vector.shape_cast %32 : vector<1x64x32xf32> to vector<64x32xf32>
    %34 = vector.broadcast %19 : vector<64x1xf32> to vector<64x32xf32>
    %35 = arith.mulf %34, %33 : vector<64x32xf32>
    %36 = arith.truncf %22 : vector<64x64xf32> to vector<64x64xbf16>
    %cst_23 = arith.constant dense<0.000000e+00> : vector<64x32xf32>
    %37 = tpu.matmul %36, %11, %cst_23 {dimension_numbers = #tpu.dot_dimension_numbers<[1], [0], [0], [1], [0, 0, 1, 1], [], []>} : vector<64x64xbf16>, vector<64x32xbf16>, vector<64x32xf32> -> vector<64x32xf32>
    %38 = arith.addf %35, %37 : vector<64x32xf32>
    %c0_24 = arith.constant 0 : index
    %c0_25 = arith.constant 0 : index
    %c0_26 = arith.constant 0 : index
    %39 = vector.load %arg9[%c0_24, %c0_25, %c0_26] : memref<4x64x32xf32, #tpu.memory_space<vmem>>, vector<1x64x32xf32>
    %40 = vector.shape_cast %39 : vector<1x64x32xf32> to vector<64x32xf32>
    %41 = vector.shape_cast %38 : vector<64x32xf32> to vector<1x64x32xf32>
    tpu.vector_store %arg9[%c0_24, %c0_25, %c0_26], %41 {strides = array<i32>} : memref<4x64x32xf32, #tpu.memory_space<vmem>>, vector<1x64x32xf32>,
    %c0_27 = arith.constant 0 : index
    %c0_28 = arith.constant 0 : index
    %c0_29 = arith.constant 0 : index
    %42 = vector.load %arg7[%c0_27, %c0_28, %c0_29] : memref<4x64x1xf32, #tpu.memory_space<vmem>>, vector<1x64x1xf32>
    %43 = vector.shape_cast %42 : vector<1x64x1xf32> to vector<64x1xf32>
    %44 = vector.shape_cast %17 : vector<64x1xf32> to vector<1x64x1xf32>
    tpu.vector_store %arg7[%c0_27, %c0_28, %c0_29], %44 {strides = array<i32>} : memref<4x64x1xf32, #tpu.memory_space<vmem>>, vector<1x64x1xf32>,
    %45 = vector.extract_strided_slice %4 {offsets = [0, 32], sizes = [64, 32], strides = [1, 1]} : vector<64x128xbf16> to vector<64x32xbf16>
    %46 = vector.extract_strided_slice %6 {offsets = [0, 32], sizes = [64, 32], strides = [1, 1]} : vector<64x128xbf16> to vector<64x32xbf16>
    %47 = vector.extract_strided_slice %8 {offsets = [0, 32], sizes = [64, 32], strides = [1, 1]} : vector<64x128xbf16> to vector<64x32xbf16>
    %cst_30 = arith.constant dense<0.000000e+00> : vector<64x64xf32>
    %48 = tpu.matmul %45, %46, %cst_30 {dimension_numbers = #tpu.dot_dimension_numbers<[1], [1], [0], [0], [0, 0, 1, 0], [], []>} : vector<64x32xbf16>, vector<64x32xbf16>, vector<64x64xf32> -> vector<64x64xf32>
    %c1 = arith.constant 1 : index
    %c0_31 = arith.constant 0 : index
    %c0_32 = arith.constant 0 : index
    %49 = vector.load %arg7[%c1, %c0_31, %c0_32] : memref<4x64x1xf32, #tpu.memory_space<vmem>>, vector<1x64x1xf32>
    %50 = vector.shape_cast %49 : vector<1x64x1xf32> to vector<64x1xf32>
    %cst_33 = arith.constant dense<0xFF800000> : vector<64xf32>
    %51 = vector.multi_reduction <maximumf>, %48, %cst_33 [1] : vector<64x64xf32> to vector<64xf32>
    %52 = vector.shape_cast %51 : vector<64xf32> to vector<64x1xf32>
    %53 = arith.maximumf %50, %52 : vector<64x1xf32>
    %54 = arith.subf %50, %53 : vector<64x1xf32>
    %55 = math.exp %54 : vector<64x1xf32>
    %56 = vector.broadcast %53 : vector<64x1xf32> to vector<64x64xf32>
    %57 = arith.subf %48, %56 : vector<64x64xf32>
    %58 = math.exp %57 : vector<64x64xf32>
    %c1_34 = arith.constant 1 : index
    %c0_35 = arith.constant 0 : index
    %c0_36 = arith.constant 0 : index
    %59 = vector.load %arg8[%c1_34, %c0_35, %c0_36] : memref<4x64x1xf32, #tpu.memory_space<vmem>>, vector<1x64x1xf32>
    %60 = vector.shape_cast %59 : vector<1x64x1xf32> to vector<64x1xf32>
    %61 = arith.mulf %55, %60 : vector<64x1xf32>
    %cst_37 = arith.constant dense<0.000000e+00> : vector<64xf32>
    %62 = vector.multi_reduction <add>, %58, %cst_37 [1] : vector<64x64xf32> to vector<64xf32>
    %63 = vector.shape_cast %62 : vector<64xf32> to vector<64x1xf32>
    %64 = arith.addf %61, %63 : vector<64x1xf32>
    %c1_38 = arith.constant 1 : index
    %c0_39 = arith.constant 0 : index
    %c0_40 = arith.constant 0 : index
    %65 = vector.load %arg8[%c1_38, %c0_39, %c0_40] : memref<4x64x1xf32, #tpu.memory_space<vmem>>, vector<1x64x1xf32>
    %66 = vector.shape_cast %65 : vector<1x64x1xf32> to vector<64x1xf32>
    %67 = vector.shape_cast %64 : vector<64x1xf32> to vector<1x64x1xf32>
    tpu.vector_store %arg8[%c1_38, %c0_39, %c0_40], %67 {strides = array<i32>} : memref<4x64x1xf32, #tpu.memory_space<vmem>>, vector<1x64x1xf32>,
    %c1_41 = arith.constant 1 : index
    %c0_42 = arith.constant 0 : index
    %c0_43 = arith.constant 0 : index
    %68 = vector.load %arg9[%c1_41, %c0_42, %c0_43] : memref<4x64x32xf32, #tpu.memory_space<vmem>>, vector<1x64x32xf32>
    %69 = vector.shape_cast %68 : vector<1x64x32xf32> to vector<64x32xf32>
    %70 = vector.broadcast %55 : vector<64x1xf32> to vector<64x32xf32>
    %71 = arith.mulf %70, %69 : vector<64x32xf32>
    %72 = arith.truncf %58 : vector<64x64xf32> to vector<64x64xbf16>
    %cst_44 = arith.constant dense<0.000000e+00> : vector<64x32xf32>
    %73 = tpu.matmul %72, %47, %cst_44 {dimension_numbers = #tpu.dot_dimension_numbers<[1], [0], [0], [1], [0, 0, 1, 1], [], []>} : vector<64x64xbf16>, vector<64x32xbf16>, vector<64x32xf32> -> vector<64x32xf32>
    %74 = arith.addf %71, %73 : vector<64x32xf32>
    %c1_45 = arith.constant 1 : index
    %c0_46 = arith.constant 0 : index
    %c0_47 = arith.constant 0 : index
    %75 = vector.load %arg9[%c1_45, %c0_46, %c0_47] : memref<4x64x32xf32, #tpu.memory_space<vmem>>, vector<1x64x32xf32>
    %76 = vector.shape_cast %75 : vector<1x64x32xf32> to vector<64x32xf32>
    %77 = vector.shape_cast %74 : vector<64x32xf32> to vector<1x64x32xf32>
    tpu.vector_store %arg9[%c1_45, %c0_46, %c0_47], %77 {strides = array<i32>} : memref<4x64x32xf32, #tpu.memory_space<vmem>>, vector<1x64x32xf32>,
    %c1_48 = arith.constant 1 : index
    %c0_49 = arith.constant 0 : index
    %c0_50 = arith.constant 0 : index
    %78 = vector.load %arg7[%c1_48, %c0_49, %c0_50] : memref<4x64x1xf32, #tpu.memory_space<vmem>>, vector<1x64x1xf32>
    %79 = vector.shape_cast %78 : vector<1x64x1xf32> to vector<64x1xf32>
    %80 = vector.shape_cast %53 : vector<64x1xf32> to vector<1x64x1xf32>
    tpu.vector_store %arg7[%c1_48, %c0_49, %c0_50], %80 {strides = array<i32>} : memref<4x64x1xf32, #tpu.memory_space<vmem>>, vector<1x64x1xf32>,
    %81 = vector.extract_strided_slice %4 {offsets = [0, 64], sizes = [64, 32], strides = [1, 1]} : vector<64x128xbf16> to vector<64x32xbf16>
    %82 = vector.extract_strided_slice %6 {offsets = [0, 64], sizes = [64, 32], strides = [1, 1]} : vector<64x128xbf16> to vector<64x32xbf16>
    %83 = vector.extract_strided_slice %8 {offsets = [0, 64], sizes = [64, 32], strides = [1, 1]} : vector<64x128xbf16> to vector<64x32xbf16>
    %cst_51 = arith.constant dense<0.000000e+00> : vector<64x64xf32>
    %84 = tpu.matmul %81, %82, %cst_51 {dimension_numbers = #tpu.dot_dimension_numbers<[1], [1], [0], [0], [0, 0, 1, 0], [], []>} : vector<64x32xbf16>, vector<64x32xbf16>, vector<64x64xf32> -> vector<64x64xf32>
    %c2 = arith.constant 2 : index
    %c0_52 = arith.constant 0 : index
    %c0_53 = arith.constant 0 : index
    %85 = vector.load %arg7[%c2, %c0_52, %c0_53] : memref<4x64x1xf32, #tpu.memory_space<vmem>>, vector<1x64x1xf32>
    %86 = vector.shape_cast %85 : vector<1x64x1xf32> to vector<64x1xf32>
    %cst_54 = arith.constant dense<0xFF800000> : vector<64xf32>
    %87 = vector.multi_reduction <maximumf>, %84, %cst_54 [1] : vector<64x64xf32> to vector<64xf32>
    %88 = vector.shape_cast %87 : vector<64xf32> to vector<64x1xf32>
    %89 = arith.maximumf %86, %88 : vector<64x1xf32>
    %90 = arith.subf %86, %89 : vector<64x1xf32>
    %91 = math.exp %90 : vector<64x1xf32>
    %92 = vector.broadcast %89 : vector<64x1xf32> to vector<64x64xf32>
    %93 = arith.subf %84, %92 : vector<64x64xf32>
    %94 = math.exp %93 : vector<64x64xf32>
    %c2_55 = arith.constant 2 : index
    %c0_56 = arith.constant 0 : index
    %c0_57 = arith.constant 0 : index
    %95 = vector.load %arg8[%c2_55, %c0_56, %c0_57] : memref<4x64x1xf32, #tpu.memory_space<vmem>>, vector<1x64x1xf32>
    %96 = vector.shape_cast %95 : vector<1x64x1xf32> to vector<64x1xf32>
    %97 = arith.mulf %91, %96 : vector<64x1xf32>
    %cst_58 = arith.constant dense<0.000000e+00> : vector<64xf32>
    %98 = vector.multi_reduction <add>, %94, %cst_58 [1] : vector<64x64xf32> to vector<64xf32>
    %99 = vector.shape_cast %98 : vector<64xf32> to vector<64x1xf32>
    %100 = arith.addf %97, %99 : vector<64x1xf32>
    %c2_59 = arith.constant 2 : index
    %c0_60 = arith.constant 0 : index
    %c0_61 = arith.constant 0 : index
    %101 = vector.load %arg8[%c2_59, %c0_60, %c0_61] : memref<4x64x1xf32, #tpu.memory_space<vmem>>, vector<1x64x1xf32>
    %102 = vector.shape_cast %101 : vector<1x64x1xf32> to vector<64x1xf32>
    %103 = vector.shape_cast %100 : vector<64x1xf32> to vector<1x64x1xf32>
    tpu.vector_store %arg8[%c2_59, %c0_60, %c0_61], %103 {strides = array<i32>} : memref<4x64x1xf32, #tpu.memory_space<vmem>>, vector<1x64x1xf32>,
    %c2_62 = arith.constant 2 : index
    %c0_63 = arith.constant 0 : index
    %c0_64 = arith.constant 0 : index
    %104 = vector.load %arg9[%c2_62, %c0_63, %c0_64] : memref<4x64x32xf32, #tpu.memory_space<vmem>>, vector<1x64x32xf32>
    %105 = vector.shape_cast %104 : vector<1x64x32xf32> to vector<64x32xf32>
    %106 = vector.broadcast %91 : vector<64x1xf32> to vector<64x32xf32>
    %107 = arith.mulf %106, %105 : vector<64x32xf32>
    %108 = arith.truncf %94 : vector<64x64xf32> to vector<64x64xbf16>
    %cst_65 = arith.constant dense<0.000000e+00> : vector<64x32xf32>
    %109 = tpu.matmul %108, %83, %cst_65 {dimension_numbers = #tpu.dot_dimension_numbers<[1], [0], [0], [1], [0, 0, 1, 1], [], []>} : vector<64x64xbf16>, vector<64x32xbf16>, vector<64x32xf32> -> vector<64x32xf32>
    %110 = arith.addf %107, %109 : vector<64x32xf32>
    %c2_66 = arith.constant 2 : index
    %c0_67 = arith.constant 0 : index
    %c0_68 = arith.constant 0 : index
    %111 = vector.load %arg9[%c2_66, %c0_67, %c0_68] : memref<4x64x32xf32, #tpu.memory_space<vmem>>, vector<1x64x32xf32>
    %112 = vector.shape_cast %111 : vector<1x64x32xf32> to vector<64x32xf32>
    %113 = vector.shape_cast %110 : vector<64x32xf32> to vector<1x64x32xf32>
    tpu.vector_store %arg9[%c2_66, %c0_67, %c0_68], %113 {strides = array<i32>} : memref<4x64x32xf32, #tpu.memory_space<vmem>>, vector<1x64x32xf32>,
    %c2_69 = arith.constant 2 : index
    %c0_70 = arith.constant 0 : index
    %c0_71 = arith.constant 0 : index
    %114 = vector.load %arg7[%c2_69, %c0_70, %c0_71] : memref<4x64x1xf32, #tpu.memory_space<vmem>>, vector<1x64x1xf32>
    %115 = vector.shape_cast %114 : vector<1x64x1xf32> to vector<64x1xf32>
    %116 = vector.shape_cast %89 : vector<64x1xf32> to vector<1x64x1xf32>
    tpu.vector_store %arg7[%c2_69, %c0_70, %c0_71], %116 {strides = array<i32>} : memref<4x64x1xf32, #tpu.memory_space<vmem>>, vector<1x64x1xf32>,
    %117 = vector.extract_strided_slice %4 {offsets = [0, 96], sizes = [64, 32], strides = [1, 1]} : vector<64x128xbf16> to vector<64x32xbf16>
    %118 = vector.extract_strided_slice %6 {offsets = [0, 96], sizes = [64, 32], strides = [1, 1]} : vector<64x128xbf16> to vector<64x32xbf16>
    %119 = vector.extract_strided_slice %8 {offsets = [0, 96], sizes = [64, 32], strides = [1, 1]} : vector<64x128xbf16> to vector<64x32xbf16>
    %cst_72 = arith.constant dense<0.000000e+00> : vector<64x64xf32>
    %120 = tpu.matmul %117, %118, %cst_72 {dimension_numbers = #tpu.dot_dimension_numbers<[1], [1], [0], [0], [0, 0, 1, 0], [], []>} : vector<64x32xbf16>, vector<64x32xbf16>, vector<64x64xf32> -> vector<64x64xf32>
    %c3 = arith.constant 3 : index
    %c0_73 = arith.constant 0 : index
    %c0_74 = arith.constant 0 : index
    %121 = vector.load %arg7[%c3, %c0_73, %c0_74] : memref<4x64x1xf32, #tpu.memory_space<vmem>>, vector<1x64x1xf32>
    %122 = vector.shape_cast %121 : vector<1x64x1xf32> to vector<64x1xf32>
    %cst_75 = arith.constant dense<0xFF800000> : vector<64xf32>
    %123 = vector.multi_reduction <maximumf>, %120, %cst_75 [1] : vector<64x64xf32> to vector<64xf32>
    %124 = vector.shape_cast %123 : vector<64xf32> to vector<64x1xf32>
    %125 = arith.maximumf %122, %124 : vector<64x1xf32>
    %126 = arith.subf %122, %125 : vector<64x1xf32>
    %127 = math.exp %126 : vector<64x1xf32>
    %128 = vector.broadcast %125 : vector<64x1xf32> to vector<64x64xf32>
    %129 = arith.subf %120, %128 : vector<64x64xf32>
    %130 = math.exp %129 : vector<64x64xf32>
    %c3_76 = arith.constant 3 : index
    %c0_77 = arith.constant 0 : index
    %c0_78 = arith.constant 0 : index
    %131 = vector.load %arg8[%c3_76, %c0_77, %c0_78] : memref<4x64x1xf32, #tpu.memory_space<vmem>>, vector<1x64x1xf32>
    %132 = vector.shape_cast %131 : vector<1x64x1xf32> to vector<64x1xf32>
    %133 = arith.mulf %127, %132 : vector<64x1xf32>
    %cst_79 = arith.constant dense<0.000000e+00> : vector<64xf32>
    %134 = vector.multi_reduction <add>, %130, %cst_79 [1] : vector<64x64xf32> to vector<64xf32>
    %135 = vector.shape_cast %134 : vector<64xf32> to vector<64x1xf32>
    %136 = arith.addf %133, %135 : vector<64x1xf32>
    %c3_80 = arith.constant 3 : index
    %c0_81 = arith.constant 0 : index
    %c0_82 = arith.constant 0 : index
    %137 = vector.load %arg8[%c3_80, %c0_81, %c0_82] : memref<4x64x1xf32, #tpu.memory_space<vmem>>, vector<1x64x1xf32>
    %138 = vector.shape_cast %137 : vector<1x64x1xf32> to vector<64x1xf32>
    %139 = vector.shape_cast %136 : vector<64x1xf32> to vector<1x64x1xf32>
    tpu.vector_store %arg8[%c3_80, %c0_81, %c0_82], %139 {strides = array<i32>} : memref<4x64x1xf32, #tpu.memory_space<vmem>>, vector<1x64x1xf32>,
    %c3_83 = arith.constant 3 : index
    %c0_84 = arith.constant 0 : index
    %c0_85 = arith.constant 0 : index
    %140 = vector.load %arg9[%c3_83, %c0_84, %c0_85] : memref<4x64x32xf32, #tpu.memory_space<vmem>>, vector<1x64x32xf32>
    %141 = vector.shape_cast %140 : vector<1x64x32xf32> to vector<64x32xf32>
    %142 = vector.broadcast %127 : vector<64x1xf32> to vector<64x32xf32>
    %143 = arith.mulf %142, %141 : vector<64x32xf32>
    %144 = arith.truncf %130 : vector<64x64xf32> to vector<64x64xbf16>
    %cst_86 = arith.constant dense<0.000000e+00> : vector<64x32xf32>
    %145 = tpu.matmul %144, %119, %cst_86 {dimension_numbers = #tpu.dot_dimension_numbers<[1], [0], [0], [1], [0, 0, 1, 1], [], []>} : vector<64x64xbf16>, vector<64x32xbf16>, vector<64x32xf32> -> vector<64x32xf32>
    %146 = arith.addf %143, %145 : vector<64x32xf32>
    %c3_87 = arith.constant 3 : index
    %c0_88 = arith.constant 0 : index
    %c0_89 = arith.constant 0 : index
    %147 = vector.load %arg9[%c3_87, %c0_88, %c0_89] : memref<4x64x32xf32, #tpu.memory_space<vmem>>, vector<1x64x32xf32>
    %148 = vector.shape_cast %147 : vector<1x64x32xf32> to vector<64x32xf32>
    %149 = vector.shape_cast %146 : vector<64x32xf32> to vector<1x64x32xf32>
    tpu.vector_store %arg9[%c3_87, %c0_88, %c0_89], %149 {strides = array<i32>} : memref<4x64x32xf32, #tpu.memory_space<vmem>>, vector<1x64x32xf32>,
    %c3_90 = arith.constant 3 : index
    %c0_91 = arith.constant 0 : index
    %c0_92 = arith.constant 0 : index
    %150 = vector.load %arg7[%c3_90, %c0_91, %c0_92] : memref<4x64x1xf32, #tpu.memory_space<vmem>>, vector<1x64x1xf32>
    %151 = vector.shape_cast %150 : vector<1x64x1xf32> to vector<64x1xf32>
    %152 = vector.shape_cast %125 : vector<64x1xf32> to vector<1x64x1xf32>
    tpu.vector_store %arg7[%c3_90, %c0_91, %c0_92], %152 {strides = array<i32>} : memref<4x64x1xf32, #tpu.memory_space<vmem>>, vector<1x64x1xf32>,
    %c0_i32_93 = arith.constant 0 : i32
    %153 = arith.cmpi eq, %arg2, %c0_i32_93 : i32
    %154 = arith.extui %153 : i1 to i32
    %c0_i32_94 = arith.constant 0 : i32
    %155 = arith.cmpi ne, %154, %c0_i32_94 : i32
    scf.if %155 {
      %c0_95 = arith.constant 0 : index
      %c0_96 = arith.constant 0 : index
      %c0_97 = arith.constant 0 : index
      %156 = vector.load %arg9[%c0_95, %c0_96, %c0_97] : memref<4x64x32xf32, #tpu.memory_space<vmem>>, vector<1x64x32xf32>
      %157 = vector.shape_cast %156 : vector<1x64x32xf32> to vector<64x32xf32>
      %c0_98 = arith.constant 0 : index
      %c0_99 = arith.constant 0 : index
      %c0_100 = arith.constant 0 : index
      %158 = vector.load %arg8[%c0_98, %c0_99, %c0_100] : memref<4x64x1xf32, #tpu.memory_space<vmem>>, vector<1x64x1xf32>
      %159 = vector.shape_cast %158 : vector<1x64x1xf32> to vector<64x1xf32>
      %160 = vector.broadcast %159 : vector<64x1xf32> to vector<64x32xf32>
      %161 = arith.divf %157, %160 : vector<64x32xf32>
      %c1_101 = arith.constant 1 : index
      %c0_102 = arith.constant 0 : index
      %c0_103 = arith.constant 0 : index
      %162 = vector.load %arg9[%c1_101, %c0_102, %c0_103] : memref<4x64x32xf32, #tpu.memory_space<vmem>>, vector<1x64x32xf32>
      %163 = vector.shape_cast %162 : vector<1x64x32xf32> to vector<64x32xf32>
      %c1_104 = arith.constant 1 : index
      %c0_105 = arith.constant 0 : index
      %c0_106 = arith.constant 0 : index
      %164 = vector.load %arg8[%c1_104, %c0_105, %c0_106] : memref<4x64x1xf32, #tpu.memory_space<vmem>>, vector<1x64x1xf32>
      %165 = vector.shape_cast %164 : vector<1x64x1xf32> to vector<64x1xf32>
      %166 = vector.broadcast %165 : vector<64x1xf32> to vector<64x32xf32>
      %167 = arith.divf %163, %166 : vector<64x32xf32>
      %c2_107 = arith.constant 2 : index
      %c0_108 = arith.constant 0 : index
      %c0_109 = arith.constant 0 : index
      %168 = vector.load %arg9[%c2_107, %c0_108, %c0_109] : memref<4x64x32xf32, #tpu.memory_space<vmem>>, vector<1x64x32xf32>
      %169 = vector.shape_cast %168 : vector<1x64x32xf32> to vector<64x32xf32>
      %c2_110 = arith.constant 2 : index
      %c0_111 = arith.constant 0 : index
      %c0_112 = arith.constant 0 : index
      %170 = vector.load %arg8[%c2_110, %c0_111, %c0_112] : memref<4x64x1xf32, #tpu.memory_space<vmem>>, vector<1x64x1xf32>
      %171 = vector.shape_cast %170 : vector<1x64x1xf32> to vector<64x1xf32>
      %172 = vector.broadcast %171 : vector<64x1xf32> to vector<64x32xf32>
      %173 = arith.divf %169, %172 : vector<64x32xf32>
      %c3_113 = arith.constant 3 : index
      %c0_114 = arith.constant 0 : index
      %c0_115 = arith.constant 0 : index
      %174 = vector.load %arg9[%c3_113, %c0_114, %c0_115] : memref<4x64x32xf32, #tpu.memory_space<vmem>>, vector<1x64x32xf32>
      %175 = vector.shape_cast %174 : vector<1x64x32xf32> to vector<64x32xf32>
      %c3_116 = arith.constant 3 : index
      %c0_117 = arith.constant 0 : index
      %c0_118 = arith.constant 0 : index
      %176 = vector.load %arg8[%c3_116, %c0_117, %c0_118] : memref<4x64x1xf32, #tpu.memory_space<vmem>>, vector<1x64x1xf32>
      %177 = vector.shape_cast %176 : vector<1x64x1xf32> to vector<64x1xf32>
      %178 = vector.broadcast %177 : vector<64x1xf32> to vector<64x32xf32>
      %179 = arith.divf %175, %178 : vector<64x32xf32>
      %180 = tpu.concatenate %161, %167, %173, %179 in 1 : vector<64x32xf32>, vector<64x32xf32>, vector<64x32xf32>, vector<64x32xf32> -> vector<64x128xf32>
      %181 = arith.truncf %180 : vector<64x128xf32> to vector<64x128xbf16>
      %c0_119 = arith.constant 0 : index
      %c0_120 = arith.constant 0 : index
      %c0_121 = arith.constant 0 : index
      %182 = vector.load %arg6[%c0_119, %c0_120, %c0_121] : memref<1x64x128xbf16, #tpu.memory_space<vmem>>, vector<1x64x128xbf16>
      %183 = vector.shape_cast %182 : vector<1x64x128xbf16> to vector<64x128xbf16>
      %184 = vector.shape_cast %181 : vector<64x128xbf16> to vector<1x64x128xbf16>
      tpu.vector_store %arg6[%c0_119, %c0_120, %c0_121], %184 {strides = array<i32>} : memref<1x64x128xbf16, #tpu.memory_space<vmem>>, vector<1x64x128xbf16>,
    } else {
    }
    return
  }
  func.func @transform_0(%arg0: i32, %arg1: i32, %arg2: i32) -> (i32, i32, i32) {
    %c0_i32 = arith.constant 0 : i32
    %c0_i32_0 = arith.constant 0 : i32
    return %arg0, %arg1, %c0_i32 : i32, i32, i32
  }
  func.func @transform_1(%arg0: i32, %arg1: i32, %arg2: i32) -> (i32, i32, i32) {
    %c1_i32 = arith.constant 1 : i32
    %c0_i32 = arith.constant 0 : i32
    return %arg0, %arg2, %c1_i32 : i32, i32, i32
  }
  func.func @transform_2(%arg0: i32, %arg1: i32, %arg2: i32) -> (i32, i32, i32) {
    %c2_i32 = arith.constant 2 : i32
    %c0_i32 = arith.constant 0 : i32
    return %arg0, %arg2, %c2_i32 : i32, i32, i32
  }
  func.func @transform_3(%arg0: i32, %arg1: i32, %arg2: i32) -> (i32, i32, i32) {
    %c0_i32 = arith.constant 0 : i32
    %c0_i32_0 = arith.constant 0 : i32
    return %arg0, %arg1, %c0_i32 : i32, i32, i32
  }
}

module attributes {stable_mosaic.version = 11 : i64} {
  func.func @block_mlp_kernel(%arg0: i32, %arg1: i32, %arg2: i32, %arg3: memref<1x64x128xbf16, #tpu.memory_space<vmem>>, %arg4: memref<1x64x128xbf16, #tpu.memory_space<vmem>>, %arg5: memref<128x128xbf16, #tpu.memory_space<vmem>>, %arg6: memref<1x128xf32, #tpu.memory_space<vmem>>, %arg7: memref<1x128xf32, #tpu.memory_space<vmem>>, %arg8: memref<1x128xf32, #tpu.memory_space<vmem>>, %arg9: memref<128x256xbf16, #tpu.memory_space<vmem>>, %arg10: memref<1x256xf32, #tpu.memory_space<vmem>>, %arg11: memref<256x128xbf16, #tpu.memory_space<vmem>>, %arg12: memref<1x128xf32, #tpu.memory_space<vmem>>, %arg13: memref<1x128xf32, #tpu.memory_space<vmem>>, %arg14: memref<1x128xf32, #tpu.memory_space<vmem>>, %arg15: memref<1x64x128xbf16, #tpu.memory_space<vmem>>, %arg16: memref<1x64x128xf32, #tpu.memory_space<vmem>>, %arg17: memref<64x128xbf16, #tpu.memory_space<vmem>>, %arg18: memref<64x128xf32, #tpu.memory_space<vmem>>) attributes {dimension_semantics = [#tpu.dimension_semantics<parallel>, #tpu.dimension_semantics<parallel>, #tpu.dimension_semantics<arbitrary>], iteration_bounds = array<i64: 2, 1, 1>, scalar_prefetch = 0 : i64, scratch_operands = 2 : i64, tpu.core_type = #tpu.core_type<tc>, window_params = [{transform_indices = @transform_0, window_bounds = array<i64: 1, 64, 128>}, {transform_indices = @transform_1, window_bounds = array<i64: 1, 64, 128>}, {pipeline_mode = #tpu.pipeline_mode<synchronous>, transform_indices = @transform_2, window_bounds = array<i64: 128, 128>}, {pipeline_mode = #tpu.pipeline_mode<synchronous>, transform_indices = @transform_3, window_bounds = array<i64: 1, 128>}, {pipeline_mode = #tpu.pipeline_mode<synchronous>, transform_indices = @transform_4, window_bounds = array<i64: 1, 128>}, {pipeline_mode = #tpu.pipeline_mode<synchronous>, transform_indices = @transform_5, window_bounds = array<i64: 1, 128>}, {transform_indices = @transform_6, window_bounds = array<i64: 128, 256>}, {transform_indices = @transform_7, window_bounds = array<i64: 1, 256>}, {transform_indices = @transform_8, window_bounds = array<i64: 256, 128>}, {pipeline_mode = #tpu.pipeline_mode<synchronous>, transform_indices = @transform_9, window_bounds = array<i64: 1, 128>}, {pipeline_mode = #tpu.pipeline_mode<synchronous>, transform_indices = @transform_10, window_bounds = array<i64: 1, 128>}, {pipeline_mode = #tpu.pipeline_mode<synchronous>, transform_indices = @transform_11, window_bounds = array<i64: 1, 128>}, {transform_indices = @transform_12, window_bounds = array<i64: 1, 64, 128>}, {transform_indices = @transform_13, window_bounds = array<i64: 1, 64, 128>}]} {
    %c0_i32 = arith.constant 0 : i32
    %0 = arith.cmpi eq, %arg2, %c0_i32 : i32
    %1 = arith.extui %0 : i1 to i32
    %c0_i32_0 = arith.constant 0 : i32
    %2 = arith.cmpi ne, %1, %c0_i32_0 : i32
    scf.if %2 {
      %c0_19 = arith.constant 0 : index
      %c0_20 = arith.constant 0 : index
      %c0_21 = arith.constant 0 : index
      %31 = vector.load %arg4[%c0_19, %c0_20, %c0_21] : memref<1x64x128xbf16, #tpu.memory_space<vmem>>, vector<1x64x128xbf16>
      %32 = vector.shape_cast %31 : vector<1x64x128xbf16> to vector<64x128xbf16>
      %c0_22 = arith.constant 0 : index
      %c0_23 = arith.constant 0 : index
      %33 = vector.load %arg5[%c0_22, %c0_23] : memref<128x128xbf16, #tpu.memory_space<vmem>>, vector<128x128xbf16>
      %cst_24 = arith.constant dense<0.000000e+00> : vector<64x128xf32>
      %34 = tpu.matmul %32, %33, %cst_24 {dimension_numbers = #tpu.dot_dimension_numbers<[1], [0], [0], [1], [0, 0, 1, 1], [], []>} : vector<64x128xbf16>, vector<128x128xbf16>, vector<64x128xf32> -> vector<64x128xf32>
      %c0_25 = arith.constant 0 : index
      %c0_26 = arith.constant 0 : index
      %c0_27 = arith.constant 0 : index
      %35 = vector.load %arg3[%c0_25, %c0_26, %c0_27] : memref<1x64x128xbf16, #tpu.memory_space<vmem>>, vector<1x64x128xbf16>
      %36 = vector.shape_cast %35 : vector<1x64x128xbf16> to vector<64x128xbf16>
      %37 = arith.extf %36 : vector<64x128xbf16> to vector<64x128xf32>
      %38 = arith.addf %37, %34 : vector<64x128xf32>
      %c0_28 = arith.constant 0 : index
      %c0_29 = arith.constant 0 : index
      %39 = vector.load %arg6[%c0_28, %c0_29] : memref<1x128xf32, #tpu.memory_space<vmem>>, vector<1x128xf32>
      %40 = vector.broadcast %39 : vector<1x128xf32> to vector<64x128xf32>
      %41 = arith.addf %38, %40 : vector<64x128xf32>
      %c0_30 = arith.constant 0 : index
      %c0_31 = arith.constant 0 : index
      %42 = vector.load %arg7[%c0_30, %c0_31] : memref<1x128xf32, #tpu.memory_space<vmem>>, vector<1x128xf32>
      %c0_32 = arith.constant 0 : index
      %c0_33 = arith.constant 0 : index
      %43 = vector.load %arg8[%c0_32, %c0_33] : memref<1x128xf32, #tpu.memory_space<vmem>>, vector<1x128xf32>
      %cst_34 = arith.constant dense<0.000000e+00> : vector<64xf32>
      %44 = vector.multi_reduction <add>, %41, %cst_34 [1] : vector<64x128xf32> to vector<64xf32>
      %45 = vector.shape_cast %44 : vector<64xf32> to vector<64x1xf32>
      %cst_35 = arith.constant 1.280000e+02 : f32
      %46 = vector.broadcast %cst_35 : f32 to vector<64x1xf32>
      %47 = arith.divf %45, %46 : vector<64x1xf32>
      %48 = vector.broadcast %47 : vector<64x1xf32> to vector<64x128xf32>
      %49 = arith.subf %41, %48 : vector<64x128xf32>
      %50 = arith.mulf %49, %49 : vector<64x128xf32>
      %cst_36 = arith.constant dense<0.000000e+00> : vector<64xf32>
      %51 = vector.multi_reduction <add>, %50, %cst_36 [1] : vector<64x128xf32> to vector<64xf32>
      %52 = vector.shape_cast %51 : vector<64xf32> to vector<64x1xf32>
      %cst_37 = arith.constant 1.280000e+02 : f32
      %53 = vector.broadcast %cst_37 : f32 to vector<64x1xf32>
      %54 = arith.divf %52, %53 : vector<64x1xf32>
      %55 = vector.broadcast %47 : vector<64x1xf32> to vector<64x128xf32>
      %56 = arith.subf %41, %55 : vector<64x128xf32>
      %cst_38 = arith.constant 9.99999974E-6 : f32
      %57 = vector.broadcast %cst_38 : f32 to vector<64x1xf32>
      %58 = arith.addf %54, %57 : vector<64x1xf32>
      %59 = math.rsqrt %58 : vector<64x1xf32>
      %60 = vector.broadcast %59 : vector<64x1xf32> to vector<64x128xf32>
      %61 = arith.mulf %56, %60 : vector<64x128xf32>
      %62 = vector.broadcast %42 : vector<1x128xf32> to vector<64x128xf32>
      %63 = arith.mulf %61, %62 : vector<64x128xf32>
      %64 = vector.broadcast %43 : vector<1x128xf32> to vector<64x128xf32>
      %65 = arith.addf %63, %64 : vector<64x128xf32>
      %66 = arith.truncf %65 : vector<64x128xf32> to vector<64x128xbf16>
      %c0_39 = arith.constant 0 : index
      %c0_40 = arith.constant 0 : index
      %67 = vector.load %arg17[%c0_39, %c0_40] : memref<64x128xbf16, #tpu.memory_space<vmem>>, vector<64x128xbf16>
      tpu.vector_store %arg17[%c0_39, %c0_40], %66 {strides = array<i32>} : memref<64x128xbf16, #tpu.memory_space<vmem>>, vector<64x128xbf16>,
      %c0_41 = arith.constant 0 : index
      %c0_42 = arith.constant 0 : index
      %68 = vector.load %arg18[%c0_41, %c0_42] : memref<64x128xf32, #tpu.memory_space<vmem>>, vector<64x128xf32>
      tpu.vector_store %arg18[%c0_41, %c0_42], %41 {strides = array<i32>} : memref<64x128xf32, #tpu.memory_space<vmem>>, vector<64x128xf32>,
    } else {
    }
    %c0 = arith.constant 0 : index
    %c0_1 = arith.constant 0 : index
    %3 = vector.load %arg17[%c0, %c0_1] : memref<64x128xbf16, #tpu.memory_space<vmem>>, vector<64x128xbf16>
    %c0_2 = arith.constant 0 : index
    %c0_3 = arith.constant 0 : index
    %4 = vector.load %arg9[%c0_2, %c0_3] : memref<128x256xbf16, #tpu.memory_space<vmem>>, vector<128x256xbf16>
    %cst = arith.constant dense<0.000000e+00> : vector<64x256xf32>
    %5 = tpu.matmul %3, %4, %cst {dimension_numbers = #tpu.dot_dimension_numbers<[1], [0], [0], [1], [0, 0, 1, 1], [], []>} : vector<64x128xbf16>, vector<128x256xbf16>, vector<64x256xf32> -> vector<64x256xf32>
    %c0_4 = arith.constant 0 : index
    %c0_5 = arith.constant 0 : index
    %6 = vector.load %arg10[%c0_4, %c0_5] : memref<1x256xf32, #tpu.memory_space<vmem>>, vector<1x256xf32>
    %7 = vector.broadcast %6 : vector<1x256xf32> to vector<64x256xf32>
    %8 = arith.addf %5, %7 : vector<64x256xf32>
    %9 = arith.mulf %8, %8 : vector<64x256xf32>
    %10 = arith.mulf %8, %9 : vector<64x256xf32>
    %cst_6 = arith.constant 4.471500e-02 : f32
    %11 = vector.broadcast %cst_6 : f32 to vector<64x256xf32>
    %12 = arith.mulf %11, %10 : vector<64x256xf32>
    %13 = arith.addf %8, %12 : vector<64x256xf32>
    %cst_7 = arith.constant 0.797884583 : f32
    %14 = vector.broadcast %cst_7 : f32 to vector<64x256xf32>
    %15 = arith.mulf %14, %13 : vector<64x256xf32>
    %16 = math.tanh %15 : vector<64x256xf32>
    %cst_8 = arith.constant 1.000000e+00 : f32
    %17 = vector.broadcast %cst_8 : f32 to vector<64x256xf32>
    %18 = arith.addf %17, %16 : vector<64x256xf32>
    %cst_9 = arith.constant 5.000000e-01 : f32
    %19 = vector.broadcast %cst_9 : f32 to vector<64x256xf32>
    %20 = arith.mulf %19, %18 : vector<64x256xf32>
    %21 = arith.mulf %8, %20 : vector<64x256xf32>
    %22 = arith.truncf %21 : vector<64x256xf32> to vector<64x256xbf16>
    %c0_10 = arith.constant 0 : index
    %c0_11 = arith.constant 0 : index
    %23 = vector.load %arg18[%c0_10, %c0_11] : memref<64x128xf32, #tpu.memory_space<vmem>>, vector<64x128xf32>
    %c0_12 = arith.constant 0 : index
    %c0_13 = arith.constant 0 : index
    %24 = vector.load %arg11[%c0_12, %c0_13] : memref<256x128xbf16, #tpu.memory_space<vmem>>, vector<256x128xbf16>
    %cst_14 = arith.constant dense<0.000000e+00> : vector<64x128xf32>
    %25 = tpu.matmul %22, %24, %cst_14 {dimension_numbers = #tpu.dot_dimension_numbers<[1], [0], [0], [1], [0, 0, 1, 1], [], []>} : vector<64x256xbf16>, vector<256x128xbf16>, vector<64x128xf32> -> vector<64x128xf32>
    %26 = arith.addf %23, %25 : vector<64x128xf32>
    %c0_15 = arith.constant 0 : index
    %c0_16 = arith.constant 0 : index
    %27 = vector.load %arg18[%c0_15, %c0_16] : memref<64x128xf32, #tpu.memory_space<vmem>>, vector<64x128xf32>
    tpu.vector_store %arg18[%c0_15, %c0_16], %26 {strides = array<i32>} : memref<64x128xf32, #tpu.memory_space<vmem>>, vector<64x128xf32>,
    %c0_i32_17 = arith.constant 0 : i32
    %28 = arith.cmpi eq, %arg2, %c0_i32_17 : i32
    %29 = arith.extui %28 : i1 to i32
    %c0_i32_18 = arith.constant 0 : i32
    %30 = arith.cmpi ne, %29, %c0_i32_18 : i32
    scf.if %30 {
      %c0_19 = arith.constant 0 : index
      %c0_20 = arith.constant 0 : index
      %31 = vector.load %arg18[%c0_19, %c0_20] : memref<64x128xf32, #tpu.memory_space<vmem>>, vector<64x128xf32>
      %c0_21 = arith.constant 0 : index
      %c0_22 = arith.constant 0 : index
      %32 = vector.load %arg12[%c0_21, %c0_22] : memref<1x128xf32, #tpu.memory_space<vmem>>, vector<1x128xf32>
      %33 = vector.broadcast %32 : vector<1x128xf32> to vector<64x128xf32>
      %34 = arith.addf %31, %33 : vector<64x128xf32>
      %35 = arith.truncf %34 : vector<64x128xf32> to vector<64x128xbf16>
      %c0_23 = arith.constant 0 : index
      %c0_24 = arith.constant 0 : index
      %c0_25 = arith.constant 0 : index
      %36 = vector.load %arg15[%c0_23, %c0_24, %c0_25] : memref<1x64x128xbf16, #tpu.memory_space<vmem>>, vector<1x64x128xbf16>
      %37 = vector.shape_cast %36 : vector<1x64x128xbf16> to vector<64x128xbf16>
      %38 = vector.shape_cast %35 : vector<64x128xbf16> to vector<1x64x128xbf16>
      tpu.vector_store %arg15[%c0_23, %c0_24, %c0_25], %38 {strides = array<i32>} : memref<1x64x128xbf16, #tpu.memory_space<vmem>>, vector<1x64x128xbf16>,
      %c0_26 = arith.constant 0 : index
      %c0_27 = arith.constant 0 : index
      %39 = vector.load %arg13[%c0_26, %c0_27] : memref<1x128xf32, #tpu.memory_space<vmem>>, vector<1x128xf32>
      %c0_28 = arith.constant 0 : index
      %c0_29 = arith.constant 0 : index
      %40 = vector.load %arg14[%c0_28, %c0_29] : memref<1x128xf32, #tpu.memory_space<vmem>>, vector<1x128xf32>
      %cst_30 = arith.constant dense<0.000000e+00> : vector<64xf32>
      %41 = vector.multi_reduction <add>, %34, %cst_30 [1] : vector<64x128xf32> to vector<64xf32>
      %42 = vector.shape_cast %41 : vector<64xf32> to vector<64x1xf32>
      %cst_31 = arith.constant 1.280000e+02 : f32
      %43 = vector.broadcast %cst_31 : f32 to vector<64x1xf32>
      %44 = arith.divf %42, %43 : vector<64x1xf32>
      %45 = vector.broadcast %44 : vector<64x1xf32> to vector<64x128xf32>
      %46 = arith.subf %34, %45 : vector<64x128xf32>
      %47 = arith.mulf %46, %46 : vector<64x128xf32>
      %cst_32 = arith.constant dense<0.000000e+00> : vector<64xf32>
      %48 = vector.multi_reduction <add>, %47, %cst_32 [1] : vector<64x128xf32> to vector<64xf32>
      %49 = vector.shape_cast %48 : vector<64xf32> to vector<64x1xf32>
      %cst_33 = arith.constant 1.280000e+02 : f32
      %50 = vector.broadcast %cst_33 : f32 to vector<64x1xf32>
      %51 = arith.divf %49, %50 : vector<64x1xf32>
      %52 = vector.broadcast %44 : vector<64x1xf32> to vector<64x128xf32>
      %53 = arith.subf %34, %52 : vector<64x128xf32>
      %cst_34 = arith.constant 9.99999974E-6 : f32
      %54 = vector.broadcast %cst_34 : f32 to vector<64x1xf32>
      %55 = arith.addf %51, %54 : vector<64x1xf32>
      %56 = math.rsqrt %55 : vector<64x1xf32>
      %57 = vector.broadcast %56 : vector<64x1xf32> to vector<64x128xf32>
      %58 = arith.mulf %53, %57 : vector<64x128xf32>
      %59 = vector.broadcast %39 : vector<1x128xf32> to vector<64x128xf32>
      %60 = arith.mulf %58, %59 : vector<64x128xf32>
      %61 = vector.broadcast %40 : vector<1x128xf32> to vector<64x128xf32>
      %62 = arith.addf %60, %61 : vector<64x128xf32>
      %c0_35 = arith.constant 0 : index
      %c0_36 = arith.constant 0 : index
      %c0_37 = arith.constant 0 : index
      %63 = vector.load %arg16[%c0_35, %c0_36, %c0_37] : memref<1x64x128xf32, #tpu.memory_space<vmem>>, vector<1x64x128xf32>
      %64 = vector.shape_cast %63 : vector<1x64x128xf32> to vector<64x128xf32>
      %65 = vector.shape_cast %62 : vector<64x128xf32> to vector<1x64x128xf32>
      tpu.vector_store %arg16[%c0_35, %c0_36, %c0_37], %65 {strides = array<i32>} : memref<1x64x128xf32, #tpu.memory_space<vmem>>, vector<1x64x128xf32>,
    } else {
    }
    return
  }
  func.func @transform_0(%arg0: i32, %arg1: i32, %arg2: i32) -> (i32, i32, i32) {
    %c0_i32 = arith.constant 0 : i32
    %c0_i32_0 = arith.constant 0 : i32
    return %arg0, %arg1, %c0_i32 : i32, i32, i32
  }
  func.func @transform_1(%arg0: i32, %arg1: i32, %arg2: i32) -> (i32, i32, i32) {
    %c0_i32 = arith.constant 0 : i32
    %c0_i32_0 = arith.constant 0 : i32
    return %arg0, %arg1, %c0_i32 : i32, i32, i32
  }
  func.func @transform_2(%arg0: i32, %arg1: i32, %arg2: i32) -> (i32, i32) {
    %c0_i32 = arith.constant 0 : i32
    %c0_i32_0 = arith.constant 0 : i32
    %c0_i32_1 = arith.constant 0 : i32
    return %c0_i32, %c0_i32_0 : i32, i32
  }
  func.func @transform_3(%arg0: i32, %arg1: i32, %arg2: i32) -> (i32, i32) {
    %c0_i32 = arith.constant 0 : i32
    %c0_i32_0 = arith.constant 0 : i32
    %c0_i32_1 = arith.constant 0 : i32
    return %c0_i32, %c0_i32_0 : i32, i32
  }
  func.func @transform_4(%arg0: i32, %arg1: i32, %arg2: i32) -> (i32, i32) {
    %c0_i32 = arith.constant 0 : i32
    %c0_i32_0 = arith.constant 0 : i32
    %c0_i32_1 = arith.constant 0 : i32
    return %c0_i32, %c0_i32_0 : i32, i32
  }
  func.func @transform_5(%arg0: i32, %arg1: i32, %arg2: i32) -> (i32, i32) {
    %c0_i32 = arith.constant 0 : i32
    %c0_i32_0 = arith.constant 0 : i32
    %c0_i32_1 = arith.constant 0 : i32
    return %c0_i32, %c0_i32_0 : i32, i32
  }
  func.func @transform_6(%arg0: i32, %arg1: i32, %arg2: i32) -> (i32, i32) {
    %c0_i32 = arith.constant 0 : i32
    %c0_i32_0 = arith.constant 0 : i32
    return %c0_i32, %arg2 : i32, i32
  }
  func.func @transform_7(%arg0: i32, %arg1: i32, %arg2: i32) -> (i32, i32) {
    %c0_i32 = arith.constant 0 : i32
    %c0_i32_0 = arith.constant 0 : i32
    return %c0_i32, %arg2 : i32, i32
  }
  func.func @transform_8(%arg0: i32, %arg1: i32, %arg2: i32) -> (i32, i32) {
    %c0_i32 = arith.constant 0 : i32
    %c0_i32_0 = arith.constant 0 : i32
    return %arg2, %c0_i32 : i32, i32
  }
  func.func @transform_9(%arg0: i32, %arg1: i32, %arg2: i32) -> (i32, i32) {
    %c0_i32 = arith.constant 0 : i32
    %c0_i32_0 = arith.constant 0 : i32
    %c0_i32_1 = arith.constant 0 : i32
    return %c0_i32, %c0_i32_0 : i32, i32
  }
  func.func @transform_10(%arg0: i32, %arg1: i32, %arg2: i32) -> (i32, i32) {
    %c0_i32 = arith.constant 0 : i32
    %c0_i32_0 = arith.constant 0 : i32
    %c0_i32_1 = arith.constant 0 : i32
    return %c0_i32, %c0_i32_0 : i32, i32
  }
  func.func @transform_11(%arg0: i32, %arg1: i32, %arg2: i32) -> (i32, i32) {
    %c0_i32 = arith.constant 0 : i32
    %c0_i32_0 = arith.constant 0 : i32
    %c0_i32_1 = arith.constant 0 : i32
    return %c0_i32, %c0_i32_0 : i32, i32
  }
  func.func @transform_12(%arg0: i32, %arg1: i32, %arg2: i32) -> (i32, i32, i32) {
    %c0_i32 = arith.constant 0 : i32
    %c0_i32_0 = arith.constant 0 : i32
    return %arg0, %arg1, %c0_i32 : i32, i32, i32
  }
  func.func @transform_13(%arg0: i32, %arg1: i32, %arg2: i32) -> (i32, i32, i32) {
    %c0_i32 = arith.constant 0 : i32
    %c0_i32_0 = arith.constant 0 : i32
    return %arg0, %arg1, %c0_i32 : i32, i32, i32
  }
}

module attributes {stable_mosaic.version = 11 : i64} {
  func.func @block_mlp_kernel(%arg0: i32, %arg1: i32, %arg2: i32, %arg3: memref<1x64x128xbf16, #tpu.memory_space<vmem>>, %arg4: memref<1x64x128xbf16, #tpu.memory_space<vmem>>, %arg5: memref<128x128xbf16, #tpu.memory_space<vmem>>, %arg6: memref<1x128xf32, #tpu.memory_space<vmem>>, %arg7: memref<1x128xf32, #tpu.memory_space<vmem>>, %arg8: memref<1x128xf32, #tpu.memory_space<vmem>>, %arg9: memref<128x256xbf16, #tpu.memory_space<vmem>>, %arg10: memref<1x256xf32, #tpu.memory_space<vmem>>, %arg11: memref<256x128xbf16, #tpu.memory_space<vmem>>, %arg12: memref<1x128xf32, #tpu.memory_space<vmem>>, %arg13: memref<1x64x128xbf16, #tpu.memory_space<vmem>>, %arg14: memref<64x128xbf16, #tpu.memory_space<vmem>>, %arg15: memref<64x128xf32, #tpu.memory_space<vmem>>) attributes {dimension_semantics = [#tpu.dimension_semantics<parallel>, #tpu.dimension_semantics<parallel>, #tpu.dimension_semantics<arbitrary>], iteration_bounds = array<i64: 2, 1, 1>, scalar_prefetch = 0 : i64, scratch_operands = 2 : i64, tpu.core_type = #tpu.core_type<tc>, window_params = [{transform_indices = @transform_0, window_bounds = array<i64: 1, 64, 128>}, {transform_indices = @transform_1, window_bounds = array<i64: 1, 64, 128>}, {pipeline_mode = #tpu.pipeline_mode<synchronous>, transform_indices = @transform_2, window_bounds = array<i64: 128, 128>}, {pipeline_mode = #tpu.pipeline_mode<synchronous>, transform_indices = @transform_3, window_bounds = array<i64: 1, 128>}, {pipeline_mode = #tpu.pipeline_mode<synchronous>, transform_indices = @transform_4, window_bounds = array<i64: 1, 128>}, {pipeline_mode = #tpu.pipeline_mode<synchronous>, transform_indices = @transform_5, window_bounds = array<i64: 1, 128>}, {transform_indices = @transform_6, window_bounds = array<i64: 128, 256>}, {transform_indices = @transform_7, window_bounds = array<i64: 1, 256>}, {transform_indices = @transform_8, window_bounds = array<i64: 256, 128>}, {pipeline_mode = #tpu.pipeline_mode<synchronous>, transform_indices = @transform_9, window_bounds = array<i64: 1, 128>}, {transform_indices = @transform_10, window_bounds = array<i64: 1, 64, 128>}]} {
    %c0_i32 = arith.constant 0 : i32
    %0 = arith.cmpi eq, %arg2, %c0_i32 : i32
    %1 = arith.extui %0 : i1 to i32
    %c0_i32_0 = arith.constant 0 : i32
    %2 = arith.cmpi ne, %1, %c0_i32_0 : i32
    scf.if %2 {
      %c0_19 = arith.constant 0 : index
      %c0_20 = arith.constant 0 : index
      %c0_21 = arith.constant 0 : index
      %31 = vector.load %arg4[%c0_19, %c0_20, %c0_21] : memref<1x64x128xbf16, #tpu.memory_space<vmem>>, vector<1x64x128xbf16>
      %32 = vector.shape_cast %31 : vector<1x64x128xbf16> to vector<64x128xbf16>
      %c0_22 = arith.constant 0 : index
      %c0_23 = arith.constant 0 : index
      %33 = vector.load %arg5[%c0_22, %c0_23] : memref<128x128xbf16, #tpu.memory_space<vmem>>, vector<128x128xbf16>
      %cst_24 = arith.constant dense<0.000000e+00> : vector<64x128xf32>
      %34 = tpu.matmul %32, %33, %cst_24 {dimension_numbers = #tpu.dot_dimension_numbers<[1], [0], [0], [1], [0, 0, 1, 1], [], []>} : vector<64x128xbf16>, vector<128x128xbf16>, vector<64x128xf32> -> vector<64x128xf32>
      %c0_25 = arith.constant 0 : index
      %c0_26 = arith.constant 0 : index
      %c0_27 = arith.constant 0 : index
      %35 = vector.load %arg3[%c0_25, %c0_26, %c0_27] : memref<1x64x128xbf16, #tpu.memory_space<vmem>>, vector<1x64x128xbf16>
      %36 = vector.shape_cast %35 : vector<1x64x128xbf16> to vector<64x128xbf16>
      %37 = arith.extf %36 : vector<64x128xbf16> to vector<64x128xf32>
      %38 = arith.addf %37, %34 : vector<64x128xf32>
      %c0_28 = arith.constant 0 : index
      %c0_29 = arith.constant 0 : index
      %39 = vector.load %arg6[%c0_28, %c0_29] : memref<1x128xf32, #tpu.memory_space<vmem>>, vector<1x128xf32>
      %40 = vector.broadcast %39 : vector<1x128xf32> to vector<64x128xf32>
      %41 = arith.addf %38, %40 : vector<64x128xf32>
      %c0_30 = arith.constant 0 : index
      %c0_31 = arith.constant 0 : index
      %42 = vector.load %arg7[%c0_30, %c0_31] : memref<1x128xf32, #tpu.memory_space<vmem>>, vector<1x128xf32>
      %c0_32 = arith.constant 0 : index
      %c0_33 = arith.constant 0 : index
      %43 = vector.load %arg8[%c0_32, %c0_33] : memref<1x128xf32, #tpu.memory_space<vmem>>, vector<1x128xf32>
      %cst_34 = arith.constant dense<0.000000e+00> : vector<64xf32>
      %44 = vector.multi_reduction <add>, %41, %cst_34 [1] : vector<64x128xf32> to vector<64xf32>
      %45 = vector.shape_cast %44 : vector<64xf32> to vector<64x1xf32>
      %cst_35 = arith.constant 1.280000e+02 : f32
      %46 = vector.broadcast %cst_35 : f32 to vector<64x1xf32>
      %47 = arith.divf %45, %46 : vector<64x1xf32>
      %48 = vector.broadcast %47 : vector<64x1xf32> to vector<64x128xf32>
      %49 = arith.subf %41, %48 : vector<64x128xf32>
      %50 = arith.mulf %49, %49 : vector<64x128xf32>
      %cst_36 = arith.constant dense<0.000000e+00> : vector<64xf32>
      %51 = vector.multi_reduction <add>, %50, %cst_36 [1] : vector<64x128xf32> to vector<64xf32>
      %52 = vector.shape_cast %51 : vector<64xf32> to vector<64x1xf32>
      %cst_37 = arith.constant 1.280000e+02 : f32
      %53 = vector.broadcast %cst_37 : f32 to vector<64x1xf32>
      %54 = arith.divf %52, %53 : vector<64x1xf32>
      %55 = vector.broadcast %47 : vector<64x1xf32> to vector<64x128xf32>
      %56 = arith.subf %41, %55 : vector<64x128xf32>
      %cst_38 = arith.constant 9.99999974E-6 : f32
      %57 = vector.broadcast %cst_38 : f32 to vector<64x1xf32>
      %58 = arith.addf %54, %57 : vector<64x1xf32>
      %59 = math.rsqrt %58 : vector<64x1xf32>
      %60 = vector.broadcast %59 : vector<64x1xf32> to vector<64x128xf32>
      %61 = arith.mulf %56, %60 : vector<64x128xf32>
      %62 = vector.broadcast %42 : vector<1x128xf32> to vector<64x128xf32>
      %63 = arith.mulf %61, %62 : vector<64x128xf32>
      %64 = vector.broadcast %43 : vector<1x128xf32> to vector<64x128xf32>
      %65 = arith.addf %63, %64 : vector<64x128xf32>
      %66 = arith.truncf %65 : vector<64x128xf32> to vector<64x128xbf16>
      %c0_39 = arith.constant 0 : index
      %c0_40 = arith.constant 0 : index
      %67 = vector.load %arg14[%c0_39, %c0_40] : memref<64x128xbf16, #tpu.memory_space<vmem>>, vector<64x128xbf16>
      tpu.vector_store %arg14[%c0_39, %c0_40], %66 {strides = array<i32>} : memref<64x128xbf16, #tpu.memory_space<vmem>>, vector<64x128xbf16>,
      %c0_41 = arith.constant 0 : index
      %c0_42 = arith.constant 0 : index
      %68 = vector.load %arg15[%c0_41, %c0_42] : memref<64x128xf32, #tpu.memory_space<vmem>>, vector<64x128xf32>
      tpu.vector_store %arg15[%c0_41, %c0_42], %41 {strides = array<i32>} : memref<64x128xf32, #tpu.memory_space<vmem>>, vector<64x128xf32>,
    } else {
    }
    %c0 = arith.constant 0 : index
    %c0_1 = arith.constant 0 : index
    %3 = vector.load %arg14[%c0, %c0_1] : memref<64x128xbf16, #tpu.memory_space<vmem>>, vector<64x128xbf16>
    %c0_2 = arith.constant 0 : index
    %c0_3 = arith.constant 0 : index
    %4 = vector.load %arg9[%c0_2, %c0_3] : memref<128x256xbf16, #tpu.memory_space<vmem>>, vector<128x256xbf16>
    %cst = arith.constant dense<0.000000e+00> : vector<64x256xf32>
    %5 = tpu.matmul %3, %4, %cst {dimension_numbers = #tpu.dot_dimension_numbers<[1], [0], [0], [1], [0, 0, 1, 1], [], []>} : vector<64x128xbf16>, vector<128x256xbf16>, vector<64x256xf32> -> vector<64x256xf32>
    %c0_4 = arith.constant 0 : index
    %c0_5 = arith.constant 0 : index
    %6 = vector.load %arg10[%c0_4, %c0_5] : memref<1x256xf32, #tpu.memory_space<vmem>>, vector<1x256xf32>
    %7 = vector.broadcast %6 : vector<1x256xf32> to vector<64x256xf32>
    %8 = arith.addf %5, %7 : vector<64x256xf32>
    %9 = arith.mulf %8, %8 : vector<64x256xf32>
    %10 = arith.mulf %8, %9 : vector<64x256xf32>
    %cst_6 = arith.constant 4.471500e-02 : f32
    %11 = vector.broadcast %cst_6 : f32 to vector<64x256xf32>
    %12 = arith.mulf %11, %10 : vector<64x256xf32>
    %13 = arith.addf %8, %12 : vector<64x256xf32>
    %cst_7 = arith.constant 0.797884583 : f32
    %14 = vector.broadcast %cst_7 : f32 to vector<64x256xf32>
    %15 = arith.mulf %14, %13 : vector<64x256xf32>
    %16 = math.tanh %15 : vector<64x256xf32>
    %cst_8 = arith.constant 1.000000e+00 : f32
    %17 = vector.broadcast %cst_8 : f32 to vector<64x256xf32>
    %18 = arith.addf %17, %16 : vector<64x256xf32>
    %cst_9 = arith.constant 5.000000e-01 : f32
    %19 = vector.broadcast %cst_9 : f32 to vector<64x256xf32>
    %20 = arith.mulf %19, %18 : vector<64x256xf32>
    %21 = arith.mulf %8, %20 : vector<64x256xf32>
    %22 = arith.truncf %21 : vector<64x256xf32> to vector<64x256xbf16>
    %c0_10 = arith.constant 0 : index
    %c0_11 = arith.constant 0 : index
    %23 = vector.load %arg15[%c0_10, %c0_11] : memref<64x128xf32, #tpu.memory_space<vmem>>, vector<64x128xf32>
    %c0_12 = arith.constant 0 : index
    %c0_13 = arith.constant 0 : index
    %24 = vector.load %arg11[%c0_12, %c0_13] : memref<256x128xbf16, #tpu.memory_space<vmem>>, vector<256x128xbf16>
    %cst_14 = arith.constant dense<0.000000e+00> : vector<64x128xf32>
    %25 = tpu.matmul %22, %24, %cst_14 {dimension_numbers = #tpu.dot_dimension_numbers<[1], [0], [0], [1], [0, 0, 1, 1], [], []>} : vector<64x256xbf16>, vector<256x128xbf16>, vector<64x128xf32> -> vector<64x128xf32>
    %26 = arith.addf %23, %25 : vector<64x128xf32>
    %c0_15 = arith.constant 0 : index
    %c0_16 = arith.constant 0 : index
    %27 = vector.load %arg15[%c0_15, %c0_16] : memref<64x128xf32, #tpu.memory_space<vmem>>, vector<64x128xf32>
    tpu.vector_store %arg15[%c0_15, %c0_16], %26 {strides = array<i32>} : memref<64x128xf32, #tpu.memory_space<vmem>>, vector<64x128xf32>,
    %c0_i32_17 = arith.constant 0 : i32
    %28 = arith.cmpi eq, %arg2, %c0_i32_17 : i32
    %29 = arith.extui %28 : i1 to i32
    %c0_i32_18 = arith.constant 0 : i32
    %30 = arith.cmpi ne, %29, %c0_i32_18 : i32
    scf.if %30 {
      %c0_19 = arith.constant 0 : index
      %c0_20 = arith.constant 0 : index
      %31 = vector.load %arg15[%c0_19, %c0_20] : memref<64x128xf32, #tpu.memory_space<vmem>>, vector<64x128xf32>
      %c0_21 = arith.constant 0 : index
      %c0_22 = arith.constant 0 : index
      %32 = vector.load %arg12[%c0_21, %c0_22] : memref<1x128xf32, #tpu.memory_space<vmem>>, vector<1x128xf32>
      %33 = vector.broadcast %32 : vector<1x128xf32> to vector<64x128xf32>
      %34 = arith.addf %31, %33 : vector<64x128xf32>
      %35 = arith.truncf %34 : vector<64x128xf32> to vector<64x128xbf16>
      %c0_23 = arith.constant 0 : index
      %c0_24 = arith.constant 0 : index
      %c0_25 = arith.constant 0 : index
      %36 = vector.load %arg13[%c0_23, %c0_24, %c0_25] : memref<1x64x128xbf16, #tpu.memory_space<vmem>>, vector<1x64x128xbf16>
      %37 = vector.shape_cast %36 : vector<1x64x128xbf16> to vector<64x128xbf16>
      %38 = vector.shape_cast %35 : vector<64x128xbf16> to vector<1x64x128xbf16>
      tpu.vector_store %arg13[%c0_23, %c0_24, %c0_25], %38 {strides = array<i32>} : memref<1x64x128xbf16, #tpu.memory_space<vmem>>, vector<1x64x128xbf16>,
    } else {
    }
    return
  }
  func.func @transform_0(%arg0: i32, %arg1: i32, %arg2: i32) -> (i32, i32, i32) {
    %c0_i32 = arith.constant 0 : i32
    %c0_i32_0 = arith.constant 0 : i32
    return %arg0, %arg1, %c0_i32 : i32, i32, i32
  }
  func.func @transform_1(%arg0: i32, %arg1: i32, %arg2: i32) -> (i32, i32, i32) {
    %c0_i32 = arith.constant 0 : i32
    %c0_i32_0 = arith.constant 0 : i32
    return %arg0, %arg1, %c0_i32 : i32, i32, i32
  }
  func.func @transform_2(%arg0: i32, %arg1: i32, %arg2: i32) -> (i32, i32) {
    %c0_i32 = arith.constant 0 : i32
    %c0_i32_0 = arith.constant 0 : i32
    %c0_i32_1 = arith.constant 0 : i32
    return %c0_i32, %c0_i32_0 : i32, i32
  }
  func.func @transform_3(%arg0: i32, %arg1: i32, %arg2: i32) -> (i32, i32) {
    %c0_i32 = arith.constant 0 : i32
    %c0_i32_0 = arith.constant 0 : i32
    %c0_i32_1 = arith.constant 0 : i32
    return %c0_i32, %c0_i32_0 : i32, i32
  }
  func.func @transform_4(%arg0: i32, %arg1: i32, %arg2: i32) -> (i32, i32) {
    %c0_i32 = arith.constant 0 : i32
    %c0_i32_0 = arith.constant 0 : i32
    %c0_i32_1 = arith.constant 0 : i32
    return %c0_i32, %c0_i32_0 : i32, i32
  }
  func.func @transform_5(%arg0: i32, %arg1: i32, %arg2: i32) -> (i32, i32) {
    %c0_i32 = arith.constant 0 : i32
    %c0_i32_0 = arith.constant 0 : i32
    %c0_i32_1 = arith.constant 0 : i32
    return %c0_i32, %c0_i32_0 : i32, i32
  }
  func.func @transform_6(%arg0: i32, %arg1: i32, %arg2: i32) -> (i32, i32) {
    %c0_i32 = arith.constant 0 : i32
    %c0_i32_0 = arith.constant 0 : i32
    return %c0_i32, %arg2 : i32, i32
  }
  func.func @transform_7(%arg0: i32, %arg1: i32, %arg2: i32) -> (i32, i32) {
    %c0_i32 = arith.constant 0 : i32
    %c0_i32_0 = arith.constant 0 : i32
    return %c0_i32, %arg2 : i32, i32
  }
  func.func @transform_8(%arg0: i32, %arg1: i32, %arg2: i32) -> (i32, i32) {
    %c0_i32 = arith.constant 0 : i32
    %c0_i32_0 = arith.constant 0 : i32
    return %arg2, %c0_i32 : i32, i32
  }
  func.func @transform_9(%arg0: i32, %arg1: i32, %arg2: i32) -> (i32, i32) {
    %c0_i32 = arith.constant 0 : i32
    %c0_i32_0 = arith.constant 0 : i32
    %c0_i32_1 = arith.constant 0 : i32
    return %c0_i32, %c0_i32_0 : i32, i32
  }
  func.func @transform_10(%arg0: i32, %arg1: i32, %arg2: i32) -> (i32, i32, i32) {
    %c0_i32 = arith.constant 0 : i32
    %c0_i32_0 = arith.constant 0 : i32
    return %arg0, %arg1, %c0_i32 : i32, i32, i32
  }
}

</mosaic_0001>

<llo_original>
// kernel: vit_forward.7
$region0: #{vit_forward.7}
  #allocation0 [shape = 'u32[]', space=smem, size = 0x4, offset = 0x4, fixed_abs, tag = 'smem constant byte address 0x4 - core index']
  #allocation1 [shape = 'u32[144,128]{1,0:T(1,128)}', space=vmem, size = 0x12000, scoped, tag = 'internal scratch']
  %s0 = inlined_call_operand.vmem [shape: bf16[2,64,64], index: 0, kind: input, shape index: {}]
  %s1 = inlined_call_operand.vmem [shape: bf16[64,128], index: 1, kind: input, shape index: {}]
  %s2 = inlined_call_operand.vmem [shape: f32[1,128], index: 2, kind: input, shape index: {}]
  %s3 = inlined_call_operand.vmem [shape: f32[64,128], index: 3, kind: input, shape index: {}]
  %s4 = inlined_call_operand.vmem [shape: bf16[2,64,128], index: 4, kind: output, shape index: {}]
  %s5 = sld [smem:[#allocation0]]
  $region49: #{vit_forward.7} parent=0
    _
  %s7 = ssub.s32 1, %s5
  %s8 = scalar_select 0, %s7, %s5
  loop: start=0, step=1, limit=4
  $region2: #{vit_forward.7} parent=0 // loop_pre_header
    _
  $region3: #{vit_forward.7} parent=0 // loop_header
    %s10 = sphi 0, %s14
    %p11 = scmp.ge.s32.totalorder %s10, 4
    %s17 = sphi 0, %s29
    %s18 = sphi 0, %s25
    %s19 = sphi 0, %s17
    %s20 = sphi 0, %s18
    %s21 = sphi 0, %s19
    %s22 = sphi 0, %s20
    %s34 = sphi 0, %s36
    %s37 = sphi 0, %s34
    %s38 = sphi 0, %s37
    %s54 = sphi 0, %s38
    %s58 = sphi 0, %s58
    %s60 = sphi 0, %s58
    %s61 = sphi 0, %s60
    %s75 = sphi 0, %s61
    %s79 = sphi 0, %s79
    %s81 = sphi 0, %s79
    %s82 = sphi 0, %s81
    %s96 = sphi 0, %s82
    %s102 = sphi 0, %s104
    %s105 = sphi 0, %s102
    %s106 = sphi 0, %s105
    %s122 = sphi 0, %s106
    %s130 = sphi 0, %s132
    %s133 = sphi 0, %s130
    %s134 = sphi 0, %s133
    %s150 = sphi 0, %s134
  $region4: #{vit_forward.7} parent=0 // loop_header_branch
    %13 = sbr.rel (%p11) target = $region8
  $region5: #{vit_forward.7} parent=0 // loop_body
    %s15 = ssub.s32 %s10, 1
    %s16 = ssub.s32 %s10, 2
    %s23 = sadd.s32 1, %s18
    %p24 = scmp.ge.s32.totalorder %s23, 1
    %s25 = scalar_select %p24, 0, %s23
    %s26 = sadd.s32 1, %s17
    %s27 = scalar_select %p24, %s26, %s17
    %p28 = scmp.ge.s32.totalorder %s27, 2
    %s29 = scalar_select %p28, 0, %s27
    %s30 = ssub.s32 %s17, %s29
    %s31 = ssub.s32 %s18, %s25
    %s32 = sor.u32 %s30, %s31
    %p33 = scmp.eq.s32.totalorder %s32, 0
    %s35 = sadd.s32 %s34, 1
    %s36 = scalar_select %p33, %s34, %s35
    %p39 = pneg %p33
    %p40 = scmp.eq.s32.totalorder %s10, 1
    %p41 = por %p39, %p40
    %p42 = scmp.ne.s32.totalorder %s34, %s37
    %p43 = scmp.eq.s32.totalorder %s10, 0
    %p44 = por %p42, %p43
    %p45 = scmp.ne.s32.totalorder %s34, %s37
    %p46 = scmp.eq.s32.totalorder %s15, 1
    %p47 = por %p45, %p46
    %p48 = scmp.ne.s32.totalorder %s37, %s38
    %p49 = scmp.eq.s32.totalorder %s15, 0
    %p50 = por %p48, %p49
    %p51 = scmp.ne.s32.totalorder %s37, %s38
    %p52 = scmp.eq.s32.totalorder %s16, 1
    %p53 = por %p51, %p52
    %p55 = scmp.ne.s32.totalorder %s38, %s54
    %p56 = scmp.eq.s32.totalorder %s16, 0
    %p57 = por %p55, %p56
    %s59 = sadd.s32 %s58, 1
    %p62 = scmp.eq.s32.totalorder %s10, 1
    %p63 = scmp.ne.s32.totalorder %s58, %s60
    %p64 = scmp.eq.s32.totalorder %s10, 0
    %p65 = por %p63, %p64
    %p66 = scmp.ne.s32.totalorder %s58, %s60
    %p67 = scmp.eq.s32.totalorder %s15, 1
    %p68 = por %p66, %p67
    %p69 = scmp.ne.s32.totalorder %s60, %s61
    %p70 = scmp.eq.s32.totalorder %s15, 0
    %p71 = por %p69, %p70
    %p72 = scmp.ne.s32.totalorder %s60, %s61
    %p73 = scmp.eq.s32.totalorder %s16, 1
    %p74 = por %p72, %p73
    %p76 = scmp.ne.s32.totalorder %s61, %s75
    %p77 = scmp.eq.s32.totalorder %s16, 0
    %p78 = por %p76, %p77
    %s80 = sadd.s32 %s79, 1
    %p83 = scmp.eq.s32.totalorder %s10, 1
    %p84 = scmp.ne.s32.totalorder %s79, %s81
    %p85 = scmp.eq.s32.totalorder %s10, 0
    %p86 = por %p84, %p85
    %p87 = scmp.ne.s32.totalorder %s79, %s81
    %p88 = scmp.eq.s32.totalorder %s15, 1
    %p89 = por %p87, %p88
    %p90 = scmp.ne.s32.totalorder %s81, %s82
    %p91 = scmp.eq.s32.totalorder %s15, 0
    %p92 = por %p90, %p91
    %p93 = scmp.ne.s32.totalorder %s81, %s82
    %p94 = scmp.eq.s32.totalorder %s16, 1
    %p95 = por %p93, %p94
    %p97 = scmp.ne.s32.totalorder %s82, %s96
    %p98 = scmp.eq.s32.totalorder %s16, 0
    %p99 = por %p97, %p98
    %s100 = ssub.s32 %s18, %s25
    %p101 = scmp.eq.s32.totalorder %s100, 0
    %s103 = sadd.s32 %s102, 1
    %s104 = scalar_select %p101, %s102, %s103
    %p107 = pneg %p101
    %p108 = scmp.eq.s32.totalorder %s10, 1
    %p109 = por %p107, %p108
    %p110 = scmp.ne.s32.totalorder %s102, %s105
    %p111 = scmp.eq.s32.totalorder %s10, 0
    %p112 = por %p110, %p111
    %p113 = scmp.ne.s32.totalorder %s102, %s105
    %p114 = scmp.eq.s32.totalorder %s15, 1
    %p115 = por %p113, %p114
    %p116 = scmp.ne.s32.totalorder %s105, %s106
    %p117 = scmp.eq.s32.totalorder %s15, 0
    %p118 = por %p116, %p117
    %p119 = scmp.ne.s32.totalorder %s105, %s106
    %p120 = scmp.eq.s32.totalorder %s16, 1
    %p121 = por %p119, %p120
    %p123 = scmp.ne.s32.totalorder %s106, %s122
    %p124 = scmp.eq.s32.totalorder %s16, 0
    %p125 = por %p123, %p124
    %s126 = ssub.s32 %s17, %s29
    %s127 = ssub.s32 %s18, %s25
    %s128 = sor.u32 %s126, %s127
    %p129 = scmp.eq.s32.totalorder %s128, 0
    %s131 = sadd.s32 %s130, 1
    %s132 = scalar_select %p129, %s130, %s131
    %p135 = pneg %p129
    %p136 = scmp.eq.s32.totalorder %s10, 1
    %p137 = por %p135, %p136
    %p138 = scmp.ne.s32.totalorder %s130, %s133
    %p139 = scmp.eq.s32.totalorder %s10, 0
    %p140 = por %p138, %p139
    %p141 = scmp.ne.s32.totalorder %s130, %s133
    %p142 = scmp.eq.s32.totalorder %s15, 1
    %p143 = por %p141, %p142
    %p144 = scmp.ne.s32.totalorder %s133, %s134
    %p145 = scmp.eq.s32.totalorder %s15, 0
    %p146 = por %p144, %p145
    %p147 = scmp.ne.s32.totalorder %s133, %s134
    %p148 = scmp.eq.s32.totalorder %s16, 1
    %p149 = por %p147, %p148
    %p151 = scmp.ne.s32.totalorder %s134, %s150
    %p152 = scmp.eq.s32.totalorder %s16, 0
    %p153 = por %p151, %p152
    %p154 = scmp.le.s32.totalorder 1, %s10
    %p155 = scmp.lt.s32.totalorder %s10, 3
    %p156 = pnand %p154, %p155
    %p157 = pneg %p156
    // Predicated region
    $region9: #{vit_forward.7} parent=5 // pred_check
      _
    $region10: #{vit_forward.7} parent=5 // pred_check_branch
      %159 = sbr.rel (%p156) target = $region12
    $region11: #{vit_forward.7} parent=5 // pred_region
      %s160 = ssub.s32 %s10, 1
      // Predicated region
      $region13: #{vit_forward.7} parent=11 // pred_check
        %p161 = pneg %p71
      $region14: #{vit_forward.7} parent=11 // pred_check_branch
        %163 = sbr.rel (%p161) target = $region16
      $region15: #{vit_forward.7} parent=11 // pred_region
        _
      $region16: #{vit_forward.7} parent=11 // pred_fallthru
        _
      // Predicated region
      $region17: #{vit_forward.7} parent=11 // pred_check
        %p164 = pneg %p92
      $region18: #{vit_forward.7} parent=11 // pred_check_branch
        %166 = sbr.rel (%p164) target = $region20
      $region19: #{vit_forward.7} parent=11 // pred_region
        _
      $region20: #{vit_forward.7} parent=11 // pred_fallthru
        _
      // Predicated region
      $region21: #{vit_forward.7} parent=11 // pred_check
        %p167 = pneg %p118
      $region22: #{vit_forward.7} parent=11 // pred_check_branch
        %169 = sbr.rel (%p167) target = $region24
      $region23: #{vit_forward.7} parent=11 // pred_region
        %s170 = smul.u32 8, %s20
        %p171 = scmp.lt.s32.totalorder %s170, 7
        %s172 = scalar_select %p171, %s170, 7
        %s173 = smul.addr %s172, 8
        %s174 = scalar_lea.vmem %s3, %s173
        %s175 = smul.u32 8, %s20
      $region24: #{vit_forward.7} parent=11 // pred_fallthru
        _
    $region12: #{vit_forward.7} parent=5 // pred_fallthru
      _
    %p176 = scmp.lt.s32.totalorder %s10, 2
    // Predicated region
    $region25: #{vit_forward.7} parent=5 // pred_check
      %p177 = pneg %p176
    $region26: #{vit_forward.7} parent=5 // pred_check_branch
      %179 = sbr.rel (%p177) target = $region28
    $region27: #{vit_forward.7} parent=5 // pred_region
      // Predicated region
      $region29: #{vit_forward.7} parent=27 // pred_check
        %p180 = pneg %p44
      $region30: #{vit_forward.7} parent=27 // pred_check_branch
        %182 = sbr.rel (%p180) target = $region32
      $region31: #{vit_forward.7} parent=27 // pred_region
        %s183 = smul.u32 8, %s18
        %p184 = scmp.lt.s32.totalorder %s17, 1
        %s185 = scalar_select %p184, %s17, 1
        %p186 = scmp.lt.s32.totalorder %s183, 7
        %s187 = scalar_select %p186, %s183, 7
        %s188 = smul.addr %s185, 8
        %s189 = sadd.s32 %s187, %s188
        %s190 = smul.addr %s189, 4
        %s191 = scalar_lea.vmem %s0, %s190
        %s192 = smul.u32 8, %s18
      $region32: #{vit_forward.7} parent=27 // pred_fallthru
        _
    $region28: #{vit_forward.7} parent=5 // pred_fallthru
      _
    %p193 = scmp.le.s32.totalorder 1, %s10
    %p194 = scmp.lt.s32.totalorder %s10, 3
    %p195 = pnand %p193, %p194
    %p196 = pneg %p195
    // Predicated region
    $region33: #{vit_forward.7} parent=5 // pred_check
      _
    $region34: #{vit_forward.7} parent=5 // pred_check_branch
      %198 = sbr.rel (%p195) target = $region36
    $region35: #{vit_forward.7} parent=5 // pred_region
      %s199 = ssub.s32 %s10, 1
      %s200 = smul.u32 8, %s20
      %p201 = scmp.lt.s32.totalorder %s19, 1
      %s202 = scalar_select %p201, %s19, 1
      %p203 = scmp.lt.s32.totalorder %s200, 7
      %s204 = scalar_select %p203, %s200, 7
      %s205 = smul.addr %s202, 8
      %s206 = sadd.s32 %s204, %s205
      %s207 = smul.addr %s206, 4
      %s208 = scalar_lea.vmem %s0, %s207
      %p209 = pneg %p50
      %p210 = pneg %p47
      %p211 = pneg %p71
      %p212 = pneg %p68
      %p213 = pneg %p92
      %p214 = pneg %p89
      %s215 = smul.u32 8, %s20
      %p216 = scmp.lt.s32.totalorder %s215, 7
      %s217 = scalar_select %p216, %s215, 7
      %s218 = smul.addr %s217, 8
      %s219 = scalar_lea.vmem %s3, %s218
      %p220 = pneg %p118
      %p221 = pneg %p115
      %p222 = pneg %p146
      %p223 = pneg %p143
      %s224 = smul.u32 8, %s20
      %p225 = scmp.lt.s32.totalorder %s19, 1
      %s226 = scalar_select %p225, %s19, 1
      %p227 = scmp.lt.s32.totalorder %s224, 7
      %s228 = scalar_select %p227, %s224, 7
      %s229 = smul.addr %s226, 8
      %s230 = sadd.s32 %s228, %s229
      %s231 = smul.addr %s230, 4
      %s232 = scalar_lea.vmem %s4, %s231
      %s233 = smul.u32 8, %s20
      %p234 = scmp.lt.s32.totalorder %s19, 1
      %s235 = scalar_select %p234, %s19, 1
      %p236 = scmp.lt.s32.totalorder %s233, 7
      %s237 = scalar_select %p236, %s233, 7
      %s238 = smul.addr %s235, 8
      %s239 = sadd.s32 %s237, %s238
      %s240 = smul.addr %s239, 4
      %s241 = scalar_lea.vmem %s0, %s240
      %s242 = smul.u32 8, %s20
      %s243 = smul.u32 8, %s20
      %p244 = scmp.lt.s32.totalorder %s243, 7
      %s245 = scalar_select %p244, %s243, 7
      %s246 = smul.addr %s245, 8
      %s247 = scalar_lea.vmem %s3, %s246
      %s248 = smul.u32 8, %s20
      %s249 = smul.u32 8, %s20
      %p250 = scmp.lt.s32.totalorder %s19, 1
      %s251 = scalar_select %p250, %s19, 1
      %p252 = scmp.lt.s32.totalorder %s249, 7
      %s253 = scalar_select %p252, %s249, 7
      %s254 = smul.addr %s251, 8
      %s255 = sadd.s32 %s253, %s254
      %s256 = smul.addr %s255, 4
      %s257 = scalar_lea.vmem %s4, %s256
      %s258 = smul.u32 8, %s20
      %v260 = vld [vmem:[%s241] sm:$0xf]
      %v261 = vld [vmem:[%s241 + $0x4] sm:$0xf]
      %v262 = vld [vmem:[%s241 + $0x8] sm:$0xf]
      %v263 = vld [vmem:[%s241 + $0xc] sm:$0xf]
      %v264 = vld [vmem:[%s241 + $0x10] sm:$0xf]
      %v265 = vld [vmem:[%s241 + $0x14] sm:$0xf]
      %v266 = vld [vmem:[%s241 + $0x18] sm:$0xf]
      %v267 = vld [vmem:[%s241 + $0x1c] sm:$0xf]
      %v268 = vld [vmem:[%s1] sm:$0xf]
      %v269 = vld [vmem:[%s1 + $0x4] sm:$0xf]
      %v270 = vld [vmem:[%s1 + $0x8] sm:$0xf]
      %v271 = vld [vmem:[%s1 + $0xc] sm:$0xf]
      %v272 = vld [vmem:[%s1 + $0x10] sm:$0xf]
      %v273 = vld [vmem:[%s1 + $0x14] sm:$0xf]
      %v274 = vld [vmem:[%s1 + $0x18] sm:$0xf]
      %v275 = vld [vmem:[%s1 + $0x1c] sm:$0xf]
      %v276 = vld [vmem:[%s2] sm:$0x1]
      %v278 = vlaneseq
      %v279 = vshrl.u32 %v278, 7
      %v280 = vsub.s32 0, %v279
      %v281 = vrot.slane %v276, %v280
      %v291 = vunpack.c.l.b16 %v260
      %v292 = vunpack.c.l.b16 %v261
      %v293 = vunpack.c.l.b16 %v262
      %v294 = vunpack.c.l.b16 %v263
      %v295 = vunpack.c.l.b16 %v264
      %v296 = vunpack.c.l.b16 %v265
      %v297 = vunpack.c.l.b16 %v266
      %v298 = vunpack.c.l.b16 %v267
      %v299 = vpack.c.b16 %v292, %v291
      %v300 = vpack.c.b16 %v294, %v293
      %v301 = vpack.c.b16 %v296, %v295
      %v302 = vpack.c.b16 %v298, %v297
      %v311 = vunpack.c.l.b16 %v268
      %v312 = vunpack.c.l.b16 %v269
      %v313 = vunpack.c.l.b16 %v270
      %v314 = vunpack.c.l.b16 %v271
      %v315 = vunpack.c.l.b16 %v272
      %v316 = vunpack.c.l.b16 %v273
      %v317 = vunpack.c.l.b16 %v274
      %v318 = vunpack.c.l.b16 %v275
      %v319 = vpack.c.b16 %v312, %v311
      %v320 = vpack.c.b16 %v314, %v313
      %v321 = vpack.c.b16 %v316, %v315
      %v322 = vpack.c.b16 %v318, %v317
      %vm327 = vcmask 523264
      %v329 = vsel %vm327, %v299, 0
      %v332 = vsel %vm327, %v300, 0
      %v335 = vsel %vm327, %v301, 0
      %v338 = vsel %vm327, %v302, 0
      %340 = vmatprep.subr.bf16.mxu0 0
      %341 = vmatpush1.bf16.msra.mxu0 0
      %342 = vmatprep.subr.bf16.mxu0 0
      %343 = vmatpush1.bf16.msra.mxu0 0
      %344 = vmatprep.subr.bf16.mxu0 0
      %345 = vmatpush1.bf16.msra.mxu0 0
      %346 = vmatprep.subr.bf16.mxu0 0
      %347 = vmatpush1.bf16.msra.mxu0 0
      %348 = vmatprep.subr.bf16.mxu0 0
      %349 = vmatpush1.bf16.msra.mxu0 %v322
      %350 = vmatprep.subr.bf16.mxu0 0
      %351 = vmatpush1.bf16.msra.mxu0 %v321
      %352 = vmatprep.subr.bf16.mxu0 0
      %353 = vmatpush1.bf16.msra.mxu0 %v320
      %354 = vmatprep.subr.bf16.mxu0 0
      %355 = vmatpush1.bf16.msra.mxu0 %v319
      %356 = vmatprep.subr.bf16.mxu0 0
      %357 = vmatpush2.bf16.msra.mxu0 0
      %358 = vmatprep.subr.bf16.mxu0 0
      %359 = vmatpush2.bf16.msra.mxu0 0
      %360 = vmatprep.subr.bf16.mxu0 0
      %361 = vmatpush2.bf16.msra.mxu0 0
      %362 = vmatprep.subr.bf16.mxu0 0
      %363 = vmatpush2.bf16.msra.mxu0 0
      %364 = vmatprep.subr.bf16.mxu0 0
      %365 = vmatpush2.bf16.msra.mxu0 0
      %366 = vmatprep.subr.bf16.mxu0 0
      %367 = vmatpush2.bf16.msra.mxu0 0
      %368 = vmatprep.subr.bf16.mxu0 0
      %369 = vmatpush2.bf16.msra.mxu0 0
      %370 = vmatprep.subr.bf16.mxu0 0
      %371 = vmatpush2.bf16.msra.mxu0 0
      %372 = vmatprep.mubr.bf16.mxu0 0
      %373 = vmatmul.mubr.bf16.gmra.mxu0 %v329
      %v374 = vpop.f32.mrf.mxu0
      %v375 = vadd.f32 %v281, %v374
      %v376 = vpop.f32.mrf.mxu0
      %v377 = vpop.f32.mrf.mxu0
      %v378 = vadd.f32 %v281, %v377
      %v379 = vpop.f32.mrf.mxu0
      %380 = vmatprep.mubr.bf16.mxu0 0
      %381 = vmatmul.mubr.bf16.gmra.mxu0 %v332
      %v382 = vpop.f32.mrf.mxu0
      %v383 = vadd.f32 %v281, %v382
      %v384 = vpop.f32.mrf.mxu0
      %v385 = vpop.f32.mrf.mxu0
      %v386 = vadd.f32 %v281, %v385
      %v387 = vpop.f32.mrf.mxu0
      %388 = vmatprep.mubr.bf16.mxu0 0
      %389 = vmatmul.mubr.bf16.gmra.mxu0 %v335
      %v390 = vpop.f32.mrf.mxu0
      %v391 = vadd.f32 %v281, %v390
      %v392 = vpop.f32.mrf.mxu0
      %v393 = vpop.f32.mrf.mxu0
      %v394 = vadd.f32 %v281, %v393
      %v395 = vpop.f32.mrf.mxu0
      %396 = vmatprep.mubr.bf16.mxu0 0
      %397 = vmatmul.mubr.bf16.gmra.mxu0 %v338
      %v398 = vpop.f32.mrf.mxu0
      %v399 = vadd.f32 %v281, %v398
      %v400 = vpop.f32.mrf.mxu0
      %v401 = vpop.f32.mrf.mxu0
      %v402 = vadd.f32 %v281, %v401
      %v403 = vpop.f32.mrf.mxu0
      %404 = vdwg.mxu0
      %v405 = vld [vmem:[%s247] sm:$0xff]
      %v406 = vld [vmem:[%s247 + $0x8] sm:$0xff]
      %v407 = vld [vmem:[%s247 + $0x10] sm:$0xff]
      %v408 = vld [vmem:[%s247 + $0x18] sm:$0xff]
      %v409 = vld [vmem:[%s247 + $0x20] sm:$0xff]
      %v410 = vld [vmem:[%s247 + $0x28] sm:$0xff]
      %v411 = vld [vmem:[%s247 + $0x30] sm:$0xff]
      %v412 = vld [vmem:[%s247 + $0x38] sm:$0xff]
      %v413 = vadd.f32 %v375, %v405
      %v414 = vadd.f32 %v378, %v406
      %v415 = vadd.f32 %v383, %v407
      %v416 = vadd.f32 %v386, %v408
      %v417 = vadd.f32 %v391, %v409
      %v418 = vadd.f32 %v394, %v410
      %v419 = vadd.f32 %v399, %v411
      %v420 = vadd.f32 %v402, %v412
      %v421 = vpack.c.bf16 %v414, %v413
      %v422 = vpack.c.bf16 %v416, %v415
      %v423 = vpack.c.bf16 %v418, %v417
      %v424 = vpack.c.bf16 %v420, %v419
      %v429 = vunpack.c.l.b16 %v421
      %v430 = vunpack.c.h.b16 %v421
      %v431 = vunpack.c.l.b16 %v422
      %v432 = vunpack.c.h.b16 %v422
      %v433 = vunpack.c.l.b16 %v423
      %v434 = vunpack.c.h.b16 %v423
      %v435 = vunpack.c.l.b16 %v424
      %v436 = vunpack.c.h.b16 %v424
      %v437 = vpack.c.b16 %v429, %v429
      %v438 = vpack.c.b16 %v430, %v430
      %v439 = vpack.c.b16 %v431, %v431
      %v440 = vpack.c.b16 %v432, %v432
      %v441 = vpack.c.b16 %v433, %v433
      %v442 = vpack.c.b16 %v434, %v434
      %v443 = vpack.c.b16 %v435, %v435
      %v444 = vpack.c.b16 %v436, %v436
      %453 = vst [vmem:[%s257] sm:$0xf] %v437
      %454 = vst [vmem:[%s257 + $0x4] sm:$0xf] %v438
      %455 = vst [vmem:[%s257 + $0x8] sm:$0xf] %v439
      %456 = vst [vmem:[%s257 + $0xc] sm:$0xf] %v440
      %457 = vst [vmem:[%s257 + $0x10] sm:$0xf] %v441
      %458 = vst [vmem:[%s257 + $0x14] sm:$0xf] %v442
      %459 = vst [vmem:[%s257 + $0x18] sm:$0xf] %v443
      %460 = vst [vmem:[%s257 + $0x1c] sm:$0xf] %v444
      %s461 = smul.u32 8, %s20
      %p462 = scmp.lt.s32.totalorder %s19, 1
      %s463 = scalar_select %p462, %s19, 1
      %p464 = scmp.lt.s32.totalorder %s461, 7
      %s465 = scalar_select %p464, %s461, 7
      %s466 = smul.addr %s463, 8
      %s467 = sadd.s32 %s465, %s466
      %s468 = smul.addr %s467, 4
      %s469 = scalar_lea.vmem %s4, %s468
      // Predicated region
      $region37: #{vit_forward.7} parent=35 // pred_check
        %p470 = pneg %p143
      $region38: #{vit_forward.7} parent=35 // pred_check_branch
        %472 = sbr.rel (%p470) target = $region40
      $region39: #{vit_forward.7} parent=35 // pred_region
        %s473 = smul.u32 8, %s20
      $region40: #{vit_forward.7} parent=35 // pred_fallthru
        _
    $region36: #{vit_forward.7} parent=5 // pred_fallthru
      _
    %p474 = scmp.le.s32.totalorder 2, %s10
    // Predicated region
    $region41: #{vit_forward.7} parent=5 // pred_check
      %p475 = pneg %p474
    $region42: #{vit_forward.7} parent=5 // pred_check_branch
      %477 = sbr.rel (%p475) target = $region44
    $region43: #{vit_forward.7} parent=5 // pred_region
      %s478 = ssub.s32 %s10, 2
      // Predicated region
      $region45: #{vit_forward.7} parent=43 // pred_check
        %p479 = pneg %p149
      $region46: #{vit_forward.7} parent=43 // pred_check_branch
        %481 = sbr.rel (%p479) target = $region48
      $region47: #{vit_forward.7} parent=43 // pred_region
        %s482 = smul.u32 8, %s22
        %p483 = scmp.lt.s32.totalorder %s21, 1
        %s484 = scalar_select %p483, %s21, 1
        %p485 = scmp.lt.s32.totalorder %s482, 7
        %s486 = scalar_select %p485, %s482, 7
        %s487 = smul.addr %s484, 8
        %s488 = sadd.s32 %s486, %s487
        %s489 = smul.addr %s488, 4
        %s490 = scalar_lea.vmem %s4, %s489
      $region48: #{vit_forward.7} parent=43 // pred_fallthru
        _
    $region44: #{vit_forward.7} parent=5 // pred_fallthru
      _
  $region6: #{vit_forward.7} parent=0 // loop_footer
    %s14 = sadd.s32 1, %s10
  $region7: #{vit_forward.7} parent=0 // loop_footer_branch
    %9 = sbr.rel target = $region3
  $region8: #{vit_forward.7} parent=0 // loop_exit
    _

// kernel: vit_forward.8
$region0: #{vit_forward.8}
  #allocation0 [shape = 'u32[]', space=smem, size = 0x4, offset = 0x4, fixed_abs, tag = 'smem constant byte address 0x4 - core index']
  #allocation1 [shape = 'u32[144,128]{1,0:T(1,128)}', space=vmem, size = 0x12000, scoped, tag = 'internal scratch']
  %s0 = inlined_call_operand.vmem [shape: bf16[2,64,128], index: 0, kind: input, shape index: {}]
  %s1 = inlined_call_operand.vmem [shape: f32[1,128], index: 1, kind: input, shape index: {}]
  %s2 = inlined_call_operand.vmem [shape: f32[1,128], index: 2, kind: input, shape index: {}]
  %s3 = inlined_call_operand.vmem [shape: bf16[128,384], index: 3, kind: input, shape index: {}]
  %s4 = inlined_call_operand.vmem [shape: bf16[2,64,384], index: 4, kind: output, shape index: {}]
  %s5 = sld [smem:[#allocation0]]
  $region49: #{vit_forward.8} parent=0
    _
  %s7 = ssub.s32 1, %s5
  %s8 = scalar_select 0, %s7, %s5
  loop: start=0, step=1, limit=4
  $region2: #{vit_forward.8} parent=0 // loop_pre_header
    _
  $region3: #{vit_forward.8} parent=0 // loop_header
    %s10 = sphi 0, %s14
    %p11 = scmp.ge.s32.totalorder %s10, 4
    %s17 = sphi 0, %s29
    %s18 = sphi 0, %s25
    %s19 = sphi 0, %s17
    %s20 = sphi 0, %s18
    %s21 = sphi 0, %s19
    %s22 = sphi 0, %s20
    %s34 = sphi 0, %s36
    %s37 = sphi 0, %s34
    %s38 = sphi 0, %s37
    %s54 = sphi 0, %s38
    %s58 = sphi 0, %s58
    %s60 = sphi 0, %s58
    %s61 = sphi 0, %s60
    %s75 = sphi 0, %s61
    %s79 = sphi 0, %s79
    %s81 = sphi 0, %s79
    %s82 = sphi 0, %s81
    %s96 = sphi 0, %s82
    %s100 = sphi 0, %s100
    %s102 = sphi 0, %s100
    %s103 = sphi 0, %s102
    %s117 = sphi 0, %s103
    %s125 = sphi 0, %s127
    %s128 = sphi 0, %s125
    %s129 = sphi 0, %s128
    %s145 = sphi 0, %s129
  $region4: #{vit_forward.8} parent=0 // loop_header_branch
    %13 = sbr.rel (%p11) target = $region8
  $region5: #{vit_forward.8} parent=0 // loop_body
    %s15 = ssub.s32 %s10, 1
    %s16 = ssub.s32 %s10, 2
    %s23 = sadd.s32 1, %s18
    %p24 = scmp.ge.s32.totalorder %s23, 1
    %s25 = scalar_select %p24, 0, %s23
    %s26 = sadd.s32 1, %s17
    %s27 = scalar_select %p24, %s26, %s17
    %p28 = scmp.ge.s32.totalorder %s27, 2
    %s29 = scalar_select %p28, 0, %s27
    %s30 = ssub.s32 %s17, %s29
    %s31 = ssub.s32 %s18, %s25
    %s32 = sor.u32 %s30, %s31
    %p33 = scmp.eq.s32.totalorder %s32, 0
    %s35 = sadd.s32 %s34, 1
    %s36 = scalar_select %p33, %s34, %s35
    %p39 = pneg %p33
    %p40 = scmp.eq.s32.totalorder %s10, 1
    %p41 = por %p39, %p40
    %p42 = scmp.ne.s32.totalorder %s34, %s37
    %p43 = scmp.eq.s32.totalorder %s10, 0
    %p44 = por %p42, %p43
    %p45 = scmp.ne.s32.totalorder %s34, %s37
    %p46 = scmp.eq.s32.totalorder %s15, 1
    %p47 = por %p45, %p46
    %p48 = scmp.ne.s32.totalorder %s37, %s38
    %p49 = scmp.eq.s32.totalorder %s15, 0
    %p50 = por %p48, %p49
    %p51 = scmp.ne.s32.totalorder %s37, %s38
    %p52 = scmp.eq.s32.totalorder %s16, 1
    %p53 = por %p51, %p52
    %p55 = scmp.ne.s32.totalorder %s38, %s54
    %p56 = scmp.eq.s32.totalorder %s16, 0
    %p57 = por %p55, %p56
    %s59 = sadd.s32 %s58, 1
    %p62 = scmp.eq.s32.totalorder %s10, 1
    %p63 = scmp.ne.s32.totalorder %s58, %s60
    %p64 = scmp.eq.s32.totalorder %s10, 0
    %p65 = por %p63, %p64
    %p66 = scmp.ne.s32.totalorder %s58, %s60
    %p67 = scmp.eq.s32.totalorder %s15, 1
    %p68 = por %p66, %p67
    %p69 = scmp.ne.s32.totalorder %s60, %s61
    %p70 = scmp.eq.s32.totalorder %s15, 0
    %p71 = por %p69, %p70
    %p72 = scmp.ne.s32.totalorder %s60, %s61
    %p73 = scmp.eq.s32.totalorder %s16, 1
    %p74 = por %p72, %p73
    %p76 = scmp.ne.s32.totalorder %s61, %s75
    %p77 = scmp.eq.s32.totalorder %s16, 0
    %p78 = por %p76, %p77
    %s80 = sadd.s32 %s79, 1
    %p83 = scmp.eq.s32.totalorder %s10, 1
    %p84 = scmp.ne.s32.totalorder %s79, %s81
    %p85 = scmp.eq.s32.totalorder %s10, 0
    %p86 = por %p84, %p85
    %p87 = scmp.ne.s32.totalorder %s79, %s81
    %p88 = scmp.eq.s32.totalorder %s15, 1
    %p89 = por %p87, %p88
    %p90 = scmp.ne.s32.totalorder %s81, %s82
    %p91 = scmp.eq.s32.totalorder %s15, 0
    %p92 = por %p90, %p91
    %p93 = scmp.ne.s32.totalorder %s81, %s82
    %p94 = scmp.eq.s32.totalorder %s16, 1
    %p95 = por %p93, %p94
    %p97 = scmp.ne.s32.totalorder %s82, %s96
    %p98 = scmp.eq.s32.totalorder %s16, 0
    %p99 = por %p97, %p98
    %s101 = sadd.s32 %s100, 1
    %p104 = scmp.eq.s32.totalorder %s10, 1
    %p105 = scmp.ne.s32.totalorder %s100, %s102
    %p106 = scmp.eq.s32.totalorder %s10, 0
    %p107 = por %p105, %p106
    %p108 = scmp.ne.s32.totalorder %s100, %s102
    %p109 = scmp.eq.s32.totalorder %s15, 1
    %p110 = por %p108, %p109
    %p111 = scmp.ne.s32.totalorder %s102, %s103
    %p112 = scmp.eq.s32.totalorder %s15, 0
    %p113 = por %p111, %p112
    %p114 = scmp.ne.s32.totalorder %s102, %s103
    %p115 = scmp.eq.s32.totalorder %s16, 1
    %p116 = por %p114, %p115
    %p118 = scmp.ne.s32.totalorder %s103, %s117
    %p119 = scmp.eq.s32.totalorder %s16, 0
    %p120 = por %p118, %p119
    %s121 = ssub.s32 %s17, %s29
    %s122 = ssub.s32 %s18, %s25
    %s123 = sor.u32 %s121, %s122
    %p124 = scmp.eq.s32.totalorder %s123, 0
    %s126 = sadd.s32 %s125, 1
    %s127 = scalar_select %p124, %s125, %s126
    %p130 = pneg %p124
    %p131 = scmp.eq.s32.totalorder %s10, 1
    %p132 = por %p130, %p131
    %p133 = scmp.ne.s32.totalorder %s125, %s128
    %p134 = scmp.eq.s32.totalorder %s10, 0
    %p135 = por %p133, %p134
    %p136 = scmp.ne.s32.totalorder %s125, %s128
    %p137 = scmp.eq.s32.totalorder %s15, 1
    %p138 = por %p136, %p137
    %p139 = scmp.ne.s32.totalorder %s128, %s129
    %p140 = scmp.eq.s32.totalorder %s15, 0
    %p141 = por %p139, %p140
    %p142 = scmp.ne.s32.totalorder %s128, %s129
    %p143 = scmp.eq.s32.totalorder %s16, 1
    %p144 = por %p142, %p143
    %p146 = scmp.ne.s32.totalorder %s129, %s145
    %p147 = scmp.eq.s32.totalorder %s16, 0
    %p148 = por %p146, %p147
    %p149 = scmp.le.s32.totalorder 1, %s10
    %p150 = scmp.lt.s32.totalorder %s10, 3
    %p151 = pnand %p149, %p150
    %p152 = pneg %p151
    // Predicated region
    $region9: #{vit_forward.8} parent=5 // pred_check
      _
    $region10: #{vit_forward.8} parent=5 // pred_check_branch
      %154 = sbr.rel (%p151) target = $region12
    $region11: #{vit_forward.8} parent=5 // pred_region
      %s155 = ssub.s32 %s10, 1
      // Predicated region
      $region13: #{vit_forward.8} parent=11 // pred_check
        %p156 = pneg %p71
      $region14: #{vit_forward.8} parent=11 // pred_check_branch
        %158 = sbr.rel (%p156) target = $region16
      $region15: #{vit_forward.8} parent=11 // pred_region
        _
      $region16: #{vit_forward.8} parent=11 // pred_fallthru
        _
      // Predicated region
      $region17: #{vit_forward.8} parent=11 // pred_check
        %p159 = pneg %p92
      $region18: #{vit_forward.8} parent=11 // pred_check_branch
        %161 = sbr.rel (%p159) target = $region20
      $region19: #{vit_forward.8} parent=11 // pred_region
        _
      $region20: #{vit_forward.8} parent=11 // pred_fallthru
        _
      // Predicated region
      $region21: #{vit_forward.8} parent=11 // pred_check
        %p162 = pneg %p113
      $region22: #{vit_forward.8} parent=11 // pred_check_branch
        %164 = sbr.rel (%p162) target = $region24
      $region23: #{vit_forward.8} parent=11 // pred_region
        _
      $region24: #{vit_forward.8} parent=11 // pred_fallthru
        _
    $region12: #{vit_forward.8} parent=5 // pred_fallthru
      _
    %p165 = scmp.lt.s32.totalorder %s10, 2
    // Predicated region
    $region25: #{vit_forward.8} parent=5 // pred_check
      %p166 = pneg %p165
    $region26: #{vit_forward.8} parent=5 // pred_check_branch
      %168 = sbr.rel (%p166) target = $region28
    $region27: #{vit_forward.8} parent=5 // pred_region
      // Predicated region
      $region29: #{vit_forward.8} parent=27 // pred_check
        %p169 = pneg %p44
      $region30: #{vit_forward.8} parent=27 // pred_check_branch
        %171 = sbr.rel (%p169) target = $region32
      $region31: #{vit_forward.8} parent=27 // pred_region
        %s172 = smul.u32 8, %s18
        %p173 = scmp.lt.s32.totalorder %s17, 1
        %s174 = scalar_select %p173, %s17, 1
        %p175 = scmp.lt.s32.totalorder %s172, 7
        %s176 = scalar_select %p175, %s172, 7
        %s177 = smul.addr %s174, 8
        %s178 = sadd.s32 %s176, %s177
        %s179 = smul.addr %s178, 4
        %s180 = scalar_lea.vmem %s0, %s179
        %s181 = smul.u32 8, %s18
      $region32: #{vit_forward.8} parent=27 // pred_fallthru
        _
    $region28: #{vit_forward.8} parent=5 // pred_fallthru
      _
    %p182 = scmp.le.s32.totalorder 1, %s10
    %p183 = scmp.lt.s32.totalorder %s10, 3
    %p184 = pnand %p182, %p183
    %p185 = pneg %p184
    // Predicated region
    $region33: #{vit_forward.8} parent=5 // pred_check
      _
    $region34: #{vit_forward.8} parent=5 // pred_check_branch
      %187 = sbr.rel (%p184) target = $region36
    $region35: #{vit_forward.8} parent=5 // pred_region
      %s188 = ssub.s32 %s10, 1
      %s189 = smul.u32 8, %s20
      %p190 = scmp.lt.s32.totalorder %s19, 1
      %s191 = scalar_select %p190, %s19, 1
      %p192 = scmp.lt.s32.totalorder %s189, 7
      %s193 = scalar_select %p192, %s189, 7
      %s194 = smul.addr %s191, 8
      %s195 = sadd.s32 %s193, %s194
      %s196 = smul.addr %s195, 4
      %s197 = scalar_lea.vmem %s0, %s196
      %p198 = pneg %p50
      %p199 = pneg %p47
      %p200 = pneg %p71
      %p201 = pneg %p68
      %p202 = pneg %p92
      %p203 = pneg %p89
      %p204 = pneg %p113
      %p205 = pneg %p110
      %p206 = pneg %p141
      %p207 = pneg %p138
      %s208 = smul.u32 8, %s20
      %p209 = scmp.lt.s32.totalorder %s19, 1
      %s210 = scalar_select %p209, %s19, 1
      %p211 = scmp.lt.s32.totalorder %s208, 7
      %s212 = scalar_select %p211, %s208, 7
      %s213 = smul.addr %s212, 3
      %s214 = smul.addr %s210, 24
      %s215 = sadd.s32 %s213, %s214
      %s216 = smul.addr %s215, 4
      %s217 = scalar_lea.vmem %s4, %s216
      %s218 = smul.u32 8, %s20
      %p219 = scmp.lt.s32.totalorder %s19, 1
      %s220 = scalar_select %p219, %s19, 1
      %p221 = scmp.lt.s32.totalorder %s218, 7
      %s222 = scalar_select %p221, %s218, 7
      %s223 = smul.addr %s220, 8
      %s224 = sadd.s32 %s222, %s223
      %s225 = smul.addr %s224, 4
      %s226 = scalar_lea.vmem %s0, %s225
      %s227 = smul.u32 8, %s20
      %s228 = smul.u32 8, %s20
      %p229 = scmp.lt.s32.totalorder %s19, 1
      %s230 = scalar_select %p229, %s19, 1
      %p231 = scmp.lt.s32.totalorder %s228, 7
      %s232 = scalar_select %p231, %s228, 7
      %s233 = smul.addr %s232, 3
      %s234 = smul.addr %s230, 24
      %s235 = sadd.s32 %s233, %s234
      %s236 = smul.addr %s235, 4
      %s237 = scalar_lea.vmem %s4, %s236
      %s238 = smul.u32 8, %s20
      %v240 = vld [vmem:[%s226] sm:$0xf]
      %v241 = vld [vmem:[%s226 + $0x4] sm:$0xf]
      %v242 = vld [vmem:[%s226 + $0x8] sm:$0xf]
      %v243 = vld [vmem:[%s226 + $0xc] sm:$0xf]
      %v244 = vld [vmem:[%s226 + $0x10] sm:$0xf]
      %v245 = vld [vmem:[%s226 + $0x14] sm:$0xf]
      %v246 = vld [vmem:[%s226 + $0x18] sm:$0xf]
      %v247 = vld [vmem:[%s226 + $0x1c] sm:$0xf]
      %v248 = vunpack.c.l.bf16 %v240
      %v249 = vunpack.c.l.bf16 %v241
      %v250 = vunpack.c.l.bf16 %v242
      %v251 = vunpack.c.l.bf16 %v243
      %v252 = vunpack.c.l.bf16 %v244
      %v253 = vunpack.c.l.bf16 %v245
      %v254 = vunpack.c.l.bf16 %v246
      %v255 = vunpack.c.l.bf16 %v247
      %v256 = vld [vmem:[%s1] sm:$0x1]
      %v257 = vld [vmem:[%s2] sm:$0x1]
      %258 = vadd.xlane.f32.xlu0 %v248
      %v259 = vpop.xlane.xlu0 %258
      %260 = vadd.xlane.f32.xlu0 %v249
      %v261 = vpop.xlane.xlu0 %260
      %262 = vadd.xlane.f32.xlu0 %v250
      %v263 = vpop.xlane.xlu0 %262
      %264 = vadd.xlane.f32.xlu0 %v251
      %v265 = vpop.xlane.xlu0 %264
      %266 = vadd.xlane.f32.xlu0 %v252
      %v267 = vpop.xlane.xlu0 %266
      %268 = vadd.xlane.f32.xlu0 %v253
      %v269 = vpop.xlane.xlu0 %268
      %270 = vadd.xlane.f32.xlu0 %v254
      %v271 = vpop.xlane.xlu0 %270
      %272 = vadd.xlane.f32.xlu0 %v255
      %v273 = vpop.xlane.xlu0 %272
      %v274 = vrcp.pop 128.0
      %v275 = vmul.f32 %v259, %v274
      %v276 = vmul.f32 %v261, %v274
      %v277 = vmul.f32 %v263, %v274
      %v278 = vmul.f32 %v265, %v274
      %v279 = vmul.f32 %v267, %v274
      %v280 = vmul.f32 %v269, %v274
      %v281 = vmul.f32 %v271, %v274
      %v282 = vmul.f32 %v273, %v274
      %v283 = vsub.f32 %v248, %v275
      %v284 = vsub.f32 %v249, %v276
      %v285 = vsub.f32 %v250, %v277
      %v286 = vsub.f32 %v251, %v278
      %v287 = vsub.f32 %v252, %v279
      %v288 = vsub.f32 %v253, %v280
      %v289 = vsub.f32 %v254, %v281
      %v290 = vsub.f32 %v255, %v282
      %v291 = vmul.f32 %v283, %v283
      %v292 = vmul.f32 %v284, %v284
      %v293 = vmul.f32 %v285, %v285
      %v294 = vmul.f32 %v286, %v286
      %v295 = vmul.f32 %v287, %v287
      %v296 = vmul.f32 %v288, %v288
      %v297 = vmul.f32 %v289, %v289
      %v298 = vmul.f32 %v290, %v290
      %299 = vadd.xlane.f32.xlu0 %v291
      %v300 = vpop.xlane.xlu0 %299
      %301 = vadd.xlane.f32.xlu0 %v292
      %v302 = vpop.xlane.xlu0 %301
      %303 = vadd.xlane.f32.xlu0 %v293
      %v304 = vpop.xlane.xlu0 %303
      %305 = vadd.xlane.f32.xlu0 %v294
      %v306 = vpop.xlane.xlu0 %305
      %307 = vadd.xlane.f32.xlu0 %v295
      %v308 = vpop.xlane.xlu0 %307
      %309 = vadd.xlane.f32.xlu0 %v296
      %v310 = vpop.xlane.xlu0 %309
      %311 = vadd.xlane.f32.xlu0 %v297
      %v312 = vpop.xlane.xlu0 %311
      %313 = vadd.xlane.f32.xlu0 %v298
      %v314 = vpop.xlane.xlu0 %313
      %v315 = vmul.f32 %v300, %v274
      %v316 = vmul.f32 %v302, %v274
      %v317 = vmul.f32 %v304, %v274
      %v318 = vmul.f32 %v306, %v274
      %v319 = vmul.f32 %v308, %v274
      %v320 = vmul.f32 %v310, %v274
      %v321 = vmul.f32 %v312, %v274
      %v322 = vmul.f32 %v314, %v274
      %v323 = vadd.f32 %v315, 1e-05
      %v324 = vadd.f32 %v316, 1e-05
      %v325 = vadd.f32 %v317, 1e-05
      %v326 = vadd.f32 %v318, 1e-05
      %v327 = vadd.f32 %v319, 1e-05
      %v328 = vadd.f32 %v320, 1e-05
      %v329 = vadd.f32 %v321, 1e-05
      %v330 = vadd.f32 %v322, 1e-05
      %v331 = vrsqrt.pop %v323
      %v332 = vrsqrt.pop %v324
      %v333 = vrsqrt.pop %v325
      %v334 = vrsqrt.pop %v326
      %v335 = vrsqrt.pop %v327
      %v336 = vrsqrt.pop %v328
      %v337 = vrsqrt.pop %v329
      %v338 = vrsqrt.pop %v330
      %v339 = vmul.f32 %v283, %v331
      %v340 = vmul.f32 %v284, %v332
      %v341 = vmul.f32 %v285, %v333
      %v342 = vmul.f32 %v286, %v334
      %v343 = vmul.f32 %v287, %v335
      %v344 = vmul.f32 %v288, %v336
      %v345 = vmul.f32 %v289, %v337
      %v346 = vmul.f32 %v290, %v338
      %v348 = vlaneseq
      %v349 = vshrl.u32 %v348, 7
      %v350 = vsub.s32 0, %v349
      %v351 = vrot.slane %v256, %v350
      %v353 = vmul.f32 %v339, %v351
      %v354 = vmul.f32 %v340, %v351
      %v355 = vmul.f32 %v341, %v351
      %v356 = vmul.f32 %v342, %v351
      %v357 = vmul.f32 %v343, %v351
      %v358 = vmul.f32 %v344, %v351
      %v359 = vmul.f32 %v345, %v351
      %v360 = vmul.f32 %v346, %v351
      %v362 = vlaneseq
      %v363 = vshrl.u32 %v362, 7
      %v364 = vsub.s32 0, %v363
      %v365 = vrot.slane %v257, %v364
      %v367 = vadd.f32 %v353, %v365
      %v368 = vadd.f32 %v354, %v365
      %v369 = vadd.f32 %v355, %v365
      %v370 = vadd.f32 %v356, %v365
      %v371 = vadd.f32 %v357, %v365
      %v372 = vadd.f32 %v358, %v365
      %v373 = vadd.f32 %v359, %v365
      %v374 = vadd.f32 %v360, %v365
      %v375 = vpack.c.bf16 %v368, %v367
      %v376 = vpack.c.bf16 %v370, %v369
      %v377 = vpack.c.bf16 %v372, %v371
      %v378 = vpack.c.bf16 %v374, %v373
      %v379 = vld [vmem:[%s3] sm:$0xff]
      %v380 = vld [vmem:[%s3 + $0x8] sm:$0xf]
      %v381 = vld [vmem:[%s3 + $0xc] sm:$0xff]
      %v382 = vld [vmem:[%s3 + $0x14] sm:$0xf]
      %v383 = vld [vmem:[%s3 + $0x18] sm:$0xff]
      %v384 = vld [vmem:[%s3 + $0x20] sm:$0xf]
      %v385 = vld [vmem:[%s3 + $0x24] sm:$0xff]
      %v386 = vld [vmem:[%s3 + $0x2c] sm:$0xf]
      %v387 = vld [vmem:[%s3 + $0x30] sm:$0xff]
      %v388 = vld [vmem:[%s3 + $0x38] sm:$0xf]
      %v389 = vld [vmem:[%s3 + $0x3c] sm:$0xff]
      %v390 = vld [vmem:[%s3 + $0x44] sm:$0xf]
      %v391 = vld [vmem:[%s3 + $0x48] sm:$0xff]
      %v392 = vld [vmem:[%s3 + $0x50] sm:$0xf]
      %v393 = vld [vmem:[%s3 + $0x54] sm:$0xff]
      %v394 = vld [vmem:[%s3 + $0x5c] sm:$0xf]
      %v395 = vld [vmem:[%s3 + $0x60] sm:$0xff]
      %v396 = vld [vmem:[%s3 + $0x68] sm:$0xf]
      %v397 = vld [vmem:[%s3 + $0x6c] sm:$0xff]
      %v398 = vld [vmem:[%s3 + $0x74] sm:$0xf]
      %v399 = vld [vmem:[%s3 + $0x78] sm:$0xff]
      %v400 = vld [vmem:[%s3 + $0x80] sm:$0xf]
      %v401 = vld [vmem:[%s3 + $0x84] sm:$0xff]
      %v402 = vld [vmem:[%s3 + $0x8c] sm:$0xf]
      %v403 = vld [vmem:[%s3 + $0x90] sm:$0xff]
      %v404 = vld [vmem:[%s3 + $0x98] sm:$0xf]
      %v405 = vld [vmem:[%s3 + $0x9c] sm:$0xff]
      %v406 = vld [vmem:[%s3 + $0xa4] sm:$0xf]
      %v407 = vld [vmem:[%s3 + $0xa8] sm:$0xff]
      %v408 = vld [vmem:[%s3 + $0xb0] sm:$0xf]
      %v409 = vld [vmem:[%s3 + $0xb4] sm:$0xff]
      %v410 = vld [vmem:[%s3 + $0xbc] sm:$0xf]
      %v443 = vunpack.c.l.b16 %v379
      %v444 = vunpack.c.h.b16 %v379
      %v445 = vunpack.c.l.b16 %v380
      %v446 = vunpack.c.l.b16 %v381
      %v447 = vunpack.c.h.b16 %v381
      %v448 = vunpack.c.l.b16 %v382
      %v449 = vunpack.c.l.b16 %v383
      %v450 = vunpack.c.h.b16 %v383
      %v451 = vunpack.c.l.b16 %v384
      %v452 = vunpack.c.l.b16 %v385
      %v453 = vunpack.c.h.b16 %v385
      %v454 = vunpack.c.l.b16 %v386
      %v455 = vunpack.c.l.b16 %v387
      %v456 = vunpack.c.h.b16 %v387
      %v457 = vunpack.c.l.b16 %v388
      %v458 = vunpack.c.l.b16 %v389
      %v459 = vunpack.c.h.b16 %v389
      %v460 = vunpack.c.l.b16 %v390
      %v461 = vunpack.c.l.b16 %v391
      %v462 = vunpack.c.h.b16 %v391
      %v463 = vunpack.c.l.b16 %v392
      %v464 = vunpack.c.l.b16 %v393
      %v465 = vunpack.c.h.b16 %v393
      %v466 = vunpack.c.l.b16 %v394
      %v467 = vunpack.c.l.b16 %v395
      %v468 = vunpack.c.h.b16 %v395
      %v469 = vunpack.c.l.b16 %v396
      %v470 = vunpack.c.l.b16 %v397
      %v471 = vunpack.c.h.b16 %v397
      %v472 = vunpack.c.l.b16 %v398
      %v473 = vunpack.c.l.b16 %v399
      %v474 = vunpack.c.h.b16 %v399
      %v475 = vunpack.c.l.b16 %v400
      %v476 = vunpack.c.l.b16 %v401
      %v477 = vunpack.c.h.b16 %v401
      %v478 = vunpack.c.l.b16 %v402
      %v479 = vunpack.c.l.b16 %v403
      %v480 = vunpack.c.h.b16 %v403
      %v481 = vunpack.c.l.b16 %v404
      %v482 = vunpack.c.l.b16 %v405
      %v483 = vunpack.c.h.b16 %v405
      %v484 = vunpack.c.l.b16 %v406
      %v485 = vunpack.c.l.b16 %v407
      %v486 = vunpack.c.h.b16 %v407
      %v487 = vunpack.c.l.b16 %v408
      %v488 = vunpack.c.l.b16 %v409
      %v489 = vunpack.c.h.b16 %v409
      %v490 = vunpack.c.l.b16 %v410
      %v491 = vpack.c.b16 %v446, %v443
      %v492 = vpack.c.b16 %v447, %v444
      %v493 = vpack.c.b16 %v448, %v445
      %v494 = vpack.c.b16 %v452, %v449
      %v495 = vpack.c.b16 %v453, %v450
      %v496 = vpack.c.b16 %v454, %v451
      %v497 = vpack.c.b16 %v458, %v455
      %v498 = vpack.c.b16 %v459, %v456
      %v499 = vpack.c.b16 %v460, %v457
      %v500 = vpack.c.b16 %v464, %v461
      %v501 = vpack.c.b16 %v465, %v462
      %v502 = vpack.c.b16 %v466, %v463
      %v503 = vpack.c.b16 %v470, %v467
      %v504 = vpack.c.b16 %v471, %v468
      %v505 = vpack.c.b16 %v472, %v469
      %v506 = vpack.c.b16 %v476, %v473
      %v507 = vpack.c.b16 %v477, %v474
      %v508 = vpack.c.b16 %v478, %v475
      %v509 = vpack.c.b16 %v482, %v479
      %v510 = vpack.c.b16 %v483, %v480
      %v511 = vpack.c.b16 %v484, %v481
      %v512 = vpack.c.b16 %v488, %v485
      %v513 = vpack.c.b16 %v489, %v486
      %v514 = vpack.c.b16 %v490, %v487
      %539 = vmatprep.subr.bf16.mxu0 %v513
      %540 = vmatpush1.bf16.msra.mxu0 %v512
      %541 = vmatprep.subr.bf16.mxu0 %v510
      %542 = vmatpush1.bf16.msra.mxu0 %v509
      %543 = vmatprep.subr.bf16.mxu0 %v507
      %544 = vmatpush1.bf16.msra.mxu0 %v506
      %545 = vmatprep.subr.bf16.mxu0 %v504
      %546 = vmatpush1.bf16.msra.mxu0 %v503
      %547 = vmatprep.subr.bf16.mxu0 %v501
      %548 = vmatpush1.bf16.msra.mxu0 %v500
      %549 = vmatprep.subr.bf16.mxu0 %v498
      %550 = vmatpush1.bf16.msra.mxu0 %v497
      %551 = vmatprep.subr.bf16.mxu0 %v495
      %552 = vmatpush1.bf16.msra.mxu0 %v494
      %553 = vmatprep.subr.bf16.mxu0 %v492
      %554 = vmatpush1.bf16.msra.mxu0 %v491
      %555 = vmatprep.subr.bf16.mxu0 0
      %556 = vmatpush2.bf16.msra.mxu0 0
      %557 = vmatprep.subr.bf16.mxu0 0
      %558 = vmatpush2.bf16.msra.mxu0 0
      %559 = vmatprep.subr.bf16.mxu0 0
      %560 = vmatpush2.bf16.msra.mxu0 0
      %561 = vmatprep.subr.bf16.mxu0 0
      %562 = vmatpush2.bf16.msra.mxu0 0
      %563 = vmatprep.subr.bf16.mxu0 0
      %564 = vmatpush2.bf16.msra.mxu0 0
      %565 = vmatprep.subr.bf16.mxu0 0
      %566 = vmatpush2.bf16.msra.mxu0 0
      %567 = vmatprep.subr.bf16.mxu0 0
      %568 = vmatpush2.bf16.msra.mxu0 0
      %569 = vmatprep.subr.bf16.mxu0 0
      %570 = vmatpush2.bf16.msra.mxu0 0
      %571 = vmatprep.mubr.bf16.mxu0 0
      %572 = vmatmul.mubr.bf16.gmra.mxu0 %v375
      %v573 = vpop.f32.mrf.mxu0
      %v574 = vadd.f32 0.0, %v573
      %v575 = vpop.f32.mrf.mxu0
      %v576 = vadd.f32 0.0, %v575
      %v577 = vpop.f32.mrf.mxu0
      %v578 = vadd.f32 0.0, %v577
      %v579 = vpop.f32.mrf.mxu0
      %v580 = vadd.f32 0.0, %v579
      %581 = vmatprep.mubr.bf16.mxu0 0
      %582 = vmatmul.mubr.bf16.gmra.mxu0 %v376
      %v583 = vpop.f32.mrf.mxu0
      %v584 = vadd.f32 0.0, %v583
      %v585 = vpop.f32.mrf.mxu0
      %v586 = vadd.f32 0.0, %v585
      %v587 = vpop.f32.mrf.mxu0
      %v588 = vadd.f32 0.0, %v587
      %v589 = vpop.f32.mrf.mxu0
      %v590 = vadd.f32 0.0, %v589
      %591 = vmatprep.mubr.bf16.mxu0 0
      %592 = vmatmul.mubr.bf16.gmra.mxu0 %v377
      %v593 = vpop.f32.mrf.mxu0
      %v594 = vadd.f32 0.0, %v593
      %v595 = vpop.f32.mrf.mxu0
      %v596 = vadd.f32 0.0, %v595
      %v597 = vpop.f32.mrf.mxu0
      %v598 = vadd.f32 0.0, %v597
      %v599 = vpop.f32.mrf.mxu0
      %v600 = vadd.f32 0.0, %v599
      %601 = vmatprep.mubr.bf16.mxu0 0
      %602 = vmatmul.mubr.bf16.gmra.mxu0 %v378
      %v603 = vpop.f32.mrf.mxu0
      %v604 = vadd.f32 0.0, %v603
      %v605 = vpop.f32.mrf.mxu0
      %v606 = vadd.f32 0.0, %v605
      %v607 = vpop.f32.mrf.mxu0
      %v608 = vadd.f32 0.0, %v607
      %v609 = vpop.f32.mrf.mxu0
      %v610 = vadd.f32 0.0, %v609
      %611 = vdwg.mxu0
      %612 = vmatprep.subr.bf16.mxu0 0
      %613 = vmatpush1.bf16.msra.mxu0 %v514
      %614 = vmatprep.subr.bf16.mxu0 0
      %615 = vmatpush1.bf16.msra.mxu0 %v511
      %616 = vmatprep.subr.bf16.mxu0 0
      %617 = vmatpush1.bf16.msra.mxu0 %v508
      %618 = vmatprep.subr.bf16.mxu0 0
      %619 = vmatpush1.bf16.msra.mxu0 %v505
      %620 = vmatprep.subr.bf16.mxu0 0
      %621 = vmatpush1.bf16.msra.mxu0 %v502
      %622 = vmatprep.subr.bf16.mxu0 0
      %623 = vmatpush1.bf16.msra.mxu0 %v499
      %624 = vmatprep.subr.bf16.mxu0 0
      %625 = vmatpush1.bf16.msra.mxu0 %v496
      %626 = vmatprep.subr.bf16.mxu0 0
      %627 = vmatpush1.bf16.msra.mxu0 %v493
      %628 = vmatprep.subr.bf16.mxu0 0
      %629 = vmatpush2.bf16.msra.mxu0 0
      %630 = vmatprep.subr.bf16.mxu0 0
      %631 = vmatpush2.bf16.msra.mxu0 0
      %632 = vmatprep.subr.bf16.mxu0 0
      %633 = vmatpush2.bf16.msra.mxu0 0
      %634 = vmatprep.subr.bf16.mxu0 0
      %635 = vmatpush2.bf16.msra.mxu0 0
      %636 = vmatprep.subr.bf16.mxu0 0
      %637 = vmatpush2.bf16.msra.mxu0 0
      %638 = vmatprep.subr.bf16.mxu0 0
      %639 = vmatpush2.bf16.msra.mxu0 0
      %640 = vmatprep.subr.bf16.mxu0 0
      %641 = vmatpush2.bf16.msra.mxu0 0
      %642 = vmatprep.subr.bf16.mxu0 0
      %643 = vmatpush2.bf16.msra.mxu0 0
      %644 = vmatprep.mubr.bf16.mxu0 0
      %645 = vmatmul.mubr.bf16.gmra.mxu0 %v375
      %v646 = vpop.f32.mrf.mxu0
      %v647 = vadd.f32 0.0, %v646
      %v648 = vpop.f32.mrf.mxu0
      %v649 = vpop.f32.mrf.mxu0
      %v650 = vadd.f32 0.0, %v649
      %v651 = vpop.f32.mrf.mxu0
      %652 = vmatprep.mubr.bf16.mxu0 0
      %653 = vmatmul.mubr.bf16.gmra.mxu0 %v376
      %v654 = vpop.f32.mrf.mxu0
      %v655 = vadd.f32 0.0, %v654
      %v656 = vpop.f32.mrf.mxu0
      %v657 = vpop.f32.mrf.mxu0
      %v658 = vadd.f32 0.0, %v657
      %v659 = vpop.f32.mrf.mxu0
      %660 = vmatprep.mubr.bf16.mxu0 0
      %661 = vmatmul.mubr.bf16.gmra.mxu0 %v377
      %v662 = vpop.f32.mrf.mxu0
      %v663 = vadd.f32 0.0, %v662
      %v664 = vpop.f32.mrf.mxu0
      %v665 = vpop.f32.mrf.mxu0
      %v666 = vadd.f32 0.0, %v665
      %v667 = vpop.f32.mrf.mxu0
      %668 = vmatprep.mubr.bf16.mxu0 0
      %669 = vmatmul.mubr.bf16.gmra.mxu0 %v378
      %v670 = vpop.f32.mrf.mxu0
      %v671 = vadd.f32 0.0, %v670
      %v672 = vpop.f32.mrf.mxu0
      %v673 = vpop.f32.mrf.mxu0
      %v674 = vadd.f32 0.0, %v673
      %v675 = vpop.f32.mrf.mxu0
      %676 = vdwg.mxu0
      %v677 = vpack.c.bf16 %v578, %v574
      %v678 = vpack.c.bf16 %v580, %v576
      %v679 = vpack.c.bf16 %v650, %v647
      %v680 = vpack.c.bf16 %v588, %v584
      %v681 = vpack.c.bf16 %v590, %v586
      %v682 = vpack.c.bf16 %v658, %v655
      %v683 = vpack.c.bf16 %v598, %v594
      %v684 = vpack.c.bf16 %v600, %v596
      %v685 = vpack.c.bf16 %v666, %v663
      %v686 = vpack.c.bf16 %v608, %v604
      %v687 = vpack.c.bf16 %v610, %v606
      %v688 = vpack.c.bf16 %v674, %v671
      %v701 = vunpack.c.l.b16 %v677
      %v702 = vunpack.c.l.b16 %v678
      %v703 = vunpack.c.l.b16 %v679
      %v704 = vunpack.c.h.b16 %v677
      %v705 = vunpack.c.h.b16 %v678
      %v706 = vunpack.c.h.b16 %v679
      %v707 = vunpack.c.l.b16 %v680
      %v708 = vunpack.c.l.b16 %v681
      %v709 = vunpack.c.l.b16 %v682
      %v710 = vunpack.c.h.b16 %v680
      %v711 = vunpack.c.h.b16 %v681
      %v712 = vunpack.c.h.b16 %v682
      %v713 = vunpack.c.l.b16 %v683
      %v714 = vunpack.c.l.b16 %v684
      %v715 = vunpack.c.l.b16 %v685
      %v716 = vunpack.c.h.b16 %v683
      %v717 = vunpack.c.h.b16 %v684
      %v718 = vunpack.c.h.b16 %v685
      %v719 = vunpack.c.l.b16 %v686
      %v720 = vunpack.c.l.b16 %v687
      %v721 = vunpack.c.l.b16 %v688
      %v722 = vunpack.c.h.b16 %v686
      %v723 = vunpack.c.h.b16 %v687
      %v724 = vunpack.c.h.b16 %v688
      %v725 = vpack.c.b16 %v702, %v701
      %v726 = vpack.c.b16 %v703, %v703
      %v727 = vpack.c.b16 %v705, %v704
      %v728 = vpack.c.b16 %v706, %v706
      %v729 = vpack.c.b16 %v708, %v707
      %v730 = vpack.c.b16 %v709, %v709
      %v731 = vpack.c.b16 %v711, %v710
      %v732 = vpack.c.b16 %v712, %v712
      %v733 = vpack.c.b16 %v714, %v713
      %v734 = vpack.c.b16 %v715, %v715
      %v735 = vpack.c.b16 %v717, %v716
      %v736 = vpack.c.b16 %v718, %v718
      %v737 = vpack.c.b16 %v720, %v719
      %v738 = vpack.c.b16 %v721, %v721
      %v739 = vpack.c.b16 %v723, %v722
      %v740 = vpack.c.b16 %v724, %v724
      %757 = vst [vmem:[%s237] sm:$0xff] %v725
      %758 = vst [vmem:[%s237 + $0x8] sm:$0xf] %v726
      %759 = vst [vmem:[%s237 + $0xc] sm:$0xff] %v727
      %760 = vst [vmem:[%s237 + $0x14] sm:$0xf] %v728
      %761 = vst [vmem:[%s237 + $0x18] sm:$0xff] %v729
      %762 = vst [vmem:[%s237 + $0x20] sm:$0xf] %v730
      %763 = vst [vmem:[%s237 + $0x24] sm:$0xff] %v731
      %764 = vst [vmem:[%s237 + $0x2c] sm:$0xf] %v732
      %765 = vst [vmem:[%s237 + $0x30] sm:$0xff] %v733
      %766 = vst [vmem:[%s237 + $0x38] sm:$0xf] %v734
      %767 = vst [vmem:[%s237 + $0x3c] sm:$0xff] %v735
      %768 = vst [vmem:[%s237 + $0x44] sm:$0xf] %v736
      %769 = vst [vmem:[%s237 + $0x48] sm:$0xff] %v737
      %770 = vst [vmem:[%s237 + $0x50] sm:$0xf] %v738
      %771 = vst [vmem:[%s237 + $0x54] sm:$0xff] %v739
      %772 = vst [vmem:[%s237 + $0x5c] sm:$0xf] %v740
      %s773 = smul.u32 8, %s20
      %p774 = scmp.lt.s32.totalorder %s19, 1
      %s775 = scalar_select %p774, %s19, 1
      %p776 = scmp.lt.s32.totalorder %s773, 7
      %s777 = scalar_select %p776, %s773, 7
      %s778 = smul.addr %s777, 3
      %s779 = smul.addr %s775, 24
      %s780 = sadd.s32 %s778, %s779
      %s781 = smul.addr %s780, 4
      %s782 = scalar_lea.vmem %s4, %s781
      // Predicated region
      $region37: #{vit_forward.8} parent=35 // pred_check
        %p783 = pneg %p138
      $region38: #{vit_forward.8} parent=35 // pred_check_branch
        %785 = sbr.rel (%p783) target = $region40
      $region39: #{vit_forward.8} parent=35 // pred_region
        %s786 = smul.u32 8, %s20
      $region40: #{vit_forward.8} parent=35 // pred_fallthru
        _
    $region36: #{vit_forward.8} parent=5 // pred_fallthru
      _
    %p787 = scmp.le.s32.totalorder 2, %s10
    // Predicated region
    $region41: #{vit_forward.8} parent=5 // pred_check
      %p788 = pneg %p787
    $region42: #{vit_forward.8} parent=5 // pred_check_branch
      %790 = sbr.rel (%p788) target = $region44
    $region43: #{vit_forward.8} parent=5 // pred_region
      %s791 = ssub.s32 %s10, 2
      // Predicated region
      $region45: #{vit_forward.8} parent=43 // pred_check
        %p792 = pneg %p144
      $region46: #{vit_forward.8} parent=43 // pred_check_branch
        %794 = sbr.rel (%p792) target = $region48
      $region47: #{vit_forward.8} parent=43 // pred_region
        %s795 = smul.u32 8, %s22
        %p796 = scmp.lt.s32.totalorder %s21, 1
        %s797 = scalar_select %p796, %s21, 1
        %p798 = scmp.lt.s32.totalorder %s795, 7
        %s799 = scalar_select %p798, %s795, 7
        %s800 = smul.addr %s799, 3
        %s801 = smul.addr %s797, 24
        %s802 = sadd.s32 %s800, %s801
        %s803 = smul.addr %s802, 4
        %s804 = scalar_lea.vmem %s4, %s803
      $region48: #{vit_forward.8} parent=43 // pred_fallthru
        _
    $region44: #{vit_forward.8} parent=5 // pred_fallthru
      _
  $region6: #{vit_forward.8} parent=0 // loop_footer
    %s14 = sadd.s32 1, %s10
  $region7: #{vit_forward.8} parent=0 // loop_footer_branch
    %9 = sbr.rel target = $region3
  $region8: #{vit_forward.8} parent=0 // loop_exit
    _

// kernel: vit_forward.13
$region0: #{vit_forward.13}
  #allocation0 [shape = 'u32[]', space=smem, size = 0x4, offset = 0x4, fixed_abs, tag = 'smem constant byte address 0x4 - core index']
  #allocation1 [shape = 'u32[144,128]{1,0:T(1,128)}', space=vmem, size = 0x12000, scoped, tag = 'internal scratch']
  #allocation2 [shape = 'bf16[64,128]{1,0:T(8,128)(2,1)}', space=vmem, size = 0x4000, scoped, tag = 'scratch operand']
  #allocation3 [shape = 'f32[64,128]{1,0:T(8,128)}', space=vmem, size = 0x8000, scoped, tag = 'scratch operand']
  %s0 = inlined_call_operand.vmem [shape: bf16[2,64,128], index: 0, kind: input, shape index: {}]
  %s1 = inlined_call_operand.vmem [shape: bf16[2,64,128], index: 1, kind: input, shape index: {}]
  %s2 = inlined_call_operand.vmem [shape: bf16[128,128], index: 2, kind: input, shape index: {}]
  %s3 = inlined_call_operand.vmem [shape: f32[1,128], index: 3, kind: input, shape index: {}]
  %s4 = inlined_call_operand.vmem [shape: f32[1,128], index: 4, kind: input, shape index: {}]
  %s5 = inlined_call_operand.vmem [shape: f32[1,128], index: 5, kind: input, shape index: {}]
  %s6 = inlined_call_operand.vmem [shape: bf16[128,256], index: 6, kind: input, shape index: {}]
  %s7 = inlined_call_operand.vmem [shape: f32[1,256], index: 7, kind: input, shape index: {}]
  %s8 = inlined_call_operand.vmem [shape: bf16[256,128], index: 8, kind: input, shape index: {}]
  %s9 = inlined_call_operand.vmem [shape: f32[1,128], index: 9, kind: input, shape index: {}]
  %s10 = inlined_call_operand.vmem [shape: f32[1,128], index: 10, kind: input, shape index: {}]
  %s11 = inlined_call_operand.vmem [shape: f32[1,128], index: 11, kind: input, shape index: {}]
  %s12 = inlined_call_operand.hbm [shape: bf16[2,64,128], index: 12, kind: output, shape index: {0}]
  %s13 = inlined_call_operand.hbm [shape: f32[2,64,128], index: 13, kind: output, shape index: {1}]
  %14 = xla_tuple %s12, %s13
  %s15 = sld [smem:[#allocation0]]
  $region97: #{vit_forward.13} parent=0
    _
  %s17 = ssub.s32 1, %s15
  %s18 = scalar_select 0, %s17, %s15
  $region1: #{vit_forward.13} parent=0
    #allocation4 [shape = 'u8[32768]{0}', space=vmem, size = 0x8000, scoped, tag = 'output window, operand 0']
    #allocation5 [shape = 's32[2]{0}', space=sflag, size = 0x8, scoped, tag = 'scoped memory for vit_forward.13']
    #allocation6 [shape = 'u8[65536]{0}', space=vmem, size = 0x10000, scoped, tag = 'output window, operand 1']
    #allocation7 [shape = 's32[2]{0}', space=sflag, size = 0x8, scoped, tag = 'scoped memory for vit_forward.13']
    %19 = vsyncpa [#allocation5], 0
    %s20 = scalar_lea.sflag [#allocation5], 1
    %21 = vsyncpa %s20, 0
    %22 = vsyncpa [#allocation7], 0
    %s23 = scalar_lea.sflag [#allocation7], 1
    %24 = vsyncpa %s23, 0
    loop: start=0, step=1, limit=4
    $region2: #{vit_forward.13} parent=1 // loop_pre_header
      _
    $region3: #{vit_forward.13} parent=1 // loop_header
      %s26 = sphi 0, %s30
      %p27 = scmp.ge.s32.totalorder %s26, 4
      %s33 = sphi 0, %s52
      %s34 = sphi 0, %s48
      %s35 = sphi 0, %s44
      %s36 = sphi 0, %s33
      %s37 = sphi 0, %s34
      %s38 = sphi 0, %s35
      %s39 = sphi 0, %s36
      %s40 = sphi 0, %s37
      %s41 = sphi 0, %s38
      %s57 = sphi 0, %s59
      %s60 = sphi 0, %s57
      %s61 = sphi 0, %s60
      %s77 = sphi 0, %s61
      %s85 = sphi 0, %s87
      %s88 = sphi 0, %s85
      %s89 = sphi 0, %s88
      %s105 = sphi 0, %s89
      %s109 = sphi 0, %s109
      %s111 = sphi 0, %s109
      %s112 = sphi 0, %s111
      %s126 = sphi 0, %s112
      %s130 = sphi 0, %s130
      %s132 = sphi 0, %s130
      %s133 = sphi 0, %s132
      %s147 = sphi 0, %s133
      %s151 = sphi 0, %s151
      %s153 = sphi 0, %s151
      %s154 = sphi 0, %s153
      %s168 = sphi 0, %s154
      %s172 = sphi 0, %s172
      %s174 = sphi 0, %s172
      %s175 = sphi 0, %s174
      %s189 = sphi 0, %s175
      %s195 = sphi 0, %s197
      %s198 = sphi 0, %s195
      %s199 = sphi 0, %s198
      %s215 = sphi 0, %s199
      %s221 = sphi 0, %s223
      %s224 = sphi 0, %s221
      %s225 = sphi 0, %s224
      %s241 = sphi 0, %s225
      %s247 = sphi 0, %s249
      %s250 = sphi 0, %s247
      %s251 = sphi 0, %s250
      %s267 = sphi 0, %s251
      %s271 = sphi 0, %s271
      %s273 = sphi 0, %s271
      %s274 = sphi 0, %s273
      %s288 = sphi 0, %s274
      %s292 = sphi 0, %s292
      %s294 = sphi 0, %s292
      %s295 = sphi 0, %s294
      %s309 = sphi 0, %s295
      %s313 = sphi 0, %s313
      %s315 = sphi 0, %s313
      %s316 = sphi 0, %s315
      %s330 = sphi 0, %s316
      %s338 = sphi 0, %s340
      %s341 = sphi 0, %s338
      %s342 = sphi 0, %s341
      %s358 = sphi 0, %s342
      %s366 = sphi 0, %s368
      %s369 = sphi 0, %s366
      %s370 = sphi 0, %s369
      %s386 = sphi 0, %s370
    $region4: #{vit_forward.13} parent=1 // loop_header_branch
      %29 = sbr.rel (%p27) target = $region8
    $region5: #{vit_forward.13} parent=1 // loop_body
      %s31 = ssub.s32 %s26, 1
      %s32 = ssub.s32 %s26, 2
      %s42 = sadd.s32 1, %s35
      %p43 = scmp.ge.s32.totalorder %s42, 1
      %s44 = scalar_select %p43, 0, %s42
      %s45 = sadd.s32 1, %s34
      %s46 = scalar_select %p43, %s45, %s34
      %p47 = scmp.ge.s32.totalorder %s46, 1
      %s48 = scalar_select %p47, 0, %s46
      %s49 = sadd.s32 1, %s33
      %s50 = scalar_select %p47, %s49, %s33
      %p51 = scmp.ge.s32.totalorder %s50, 2
      %s52 = scalar_select %p51, 0, %s50
      %s53 = ssub.s32 %s33, %s52
      %s54 = ssub.s32 %s34, %s48
      %s55 = sor.u32 %s53, %s54
      %p56 = scmp.eq.s32.totalorder %s55, 0
      %s58 = sadd.s32 %s57, 1
      %s59 = scalar_select %p56, %s57, %s58
      %p62 = pneg %p56
      %p63 = scmp.eq.s32.totalorder %s26, 1
      %p64 = por %p62, %p63
      %p65 = scmp.ne.s32.totalorder %s57, %s60
      %p66 = scmp.eq.s32.totalorder %s26, 0
      %p67 = por %p65, %p66
      %p68 = scmp.ne.s32.totalorder %s57, %s60
      %p69 = scmp.eq.s32.totalorder %s31, 1
      %p70 = por %p68, %p69
      %p71 = scmp.ne.s32.totalorder %s60, %s61
      %p72 = scmp.eq.s32.totalorder %s31, 0
      %p73 = por %p71, %p72
      %p74 = scmp.ne.s32.totalorder %s60, %s61
      %p75 = scmp.eq.s32.totalorder %s32, 1
      %p76 = por %p74, %p75
      %p78 = scmp.ne.s32.totalorder %s61, %s77
      %p79 = scmp.eq.s32.totalorder %s32, 0
      %p80 = por %p78, %p79
      %s81 = ssub.s32 %s33, %s52
      %s82 = ssub.s32 %s34, %s48
      %s83 = sor.u32 %s81, %s82
      %p84 = scmp.eq.s32.totalorder %s83, 0
      %s86 = sadd.s32 %s85, 1
      %s87 = scalar_select %p84, %s85, %s86
      %p90 = pneg %p84
      %p91 = scmp.eq.s32.totalorder %s26, 1
      %p92 = por %p90, %p91
      %p93 = scmp.ne.s32.totalorder %s85, %s88
      %p94 = scmp.eq.s32.totalorder %s26, 0
      %p95 = por %p93, %p94
      %p96 = scmp.ne.s32.totalorder %s85, %s88
      %p97 = scmp.eq.s32.totalorder %s31, 1
      %p98 = por %p96, %p97
      %p99 = scmp.ne.s32.totalorder %s88, %s89
      %p100 = scmp.eq.s32.totalorder %s31, 0
      %p101 = por %p99, %p100
      %p102 = scmp.ne.s32.totalorder %s88, %s89
      %p103 = scmp.eq.s32.totalorder %s32, 1
      %p104 = por %p102, %p103
      %p106 = scmp.ne.s32.totalorder %s89, %s105
      %p107 = scmp.eq.s32.totalorder %s32, 0
      %p108 = por %p106, %p107
      %s110 = sadd.s32 %s109, 1
      %p113 = scmp.eq.s32.totalorder %s26, 1
      %p114 = scmp.ne.s32.totalorder %s109, %s111
      %p115 = scmp.eq.s32.totalorder %s26, 0
      %p116 = por %p114, %p115
      %p117 = scmp.ne.s32.totalorder %s109, %s111
      %p118 = scmp.eq.s32.totalorder %s31, 1
      %p119 = por %p117, %p118
      %p120 = scmp.ne.s32.totalorder %s111, %s112
      %p121 = scmp.eq.s32.totalorder %s31, 0
      %p122 = por %p120, %p121
      %p123 = scmp.ne.s32.totalorder %s111, %s112
      %p124 = scmp.eq.s32.totalorder %s32, 1
      %p125 = por %p123, %p124
      %p127 = scmp.ne.s32.totalorder %s112, %s126
      %p128 = scmp.eq.s32.totalorder %s32, 0
      %p129 = por %p127, %p128
      %s131 = sadd.s32 %s130, 1
      %p134 = scmp.eq.s32.totalorder %s26, 1
      %p135 = scmp.ne.s32.totalorder %s130, %s132
      %p136 = scmp.eq.s32.totalorder %s26, 0
      %p137 = por %p135, %p136
      %p138 = scmp.ne.s32.totalorder %s130, %s132
      %p139 = scmp.eq.s32.totalorder %s31, 1
      %p140 = por %p138, %p139
      %p141 = scmp.ne.s32.totalorder %s132, %s133
      %p142 = scmp.eq.s32.totalorder %s31, 0
      %p143 = por %p141, %p142
      %p144 = scmp.ne.s32.totalorder %s132, %s133
      %p145 = scmp.eq.s32.totalorder %s32, 1
      %p146 = por %p144, %p145
      %p148 = scmp.ne.s32.totalorder %s133, %s147
      %p149 = scmp.eq.s32.totalorder %s32, 0
      %p150 = por %p148, %p149
      %s152 = sadd.s32 %s151, 1
      %p155 = scmp.eq.s32.totalorder %s26, 1
      %p156 = scmp.ne.s32.totalorder %s151, %s153
      %p157 = scmp.eq.s32.totalorder %s26, 0
      %p158 = por %p156, %p157
      %p159 = scmp.ne.s32.totalorder %s151, %s153
      %p160 = scmp.eq.s32.totalorder %s31, 1
      %p161 = por %p159, %p160
      %p162 = scmp.ne.s32.totalorder %s153, %s154
      %p163 = scmp.eq.s32.totalorder %s31, 0
      %p164 = por %p162, %p163
      %p165 = scmp.ne.s32.totalorder %s153, %s154
      %p166 = scmp.eq.s32.totalorder %s32, 1
      %p167 = por %p165, %p166
      %p169 = scmp.ne.s32.totalorder %s154, %s168
      %p170 = scmp.eq.s32.totalorder %s32, 0
      %p171 = por %p169, %p170
      %s173 = sadd.s32 %s172, 1
      %p176 = scmp.eq.s32.totalorder %s26, 1
      %p177 = scmp.ne.s32.totalorder %s172, %s174
      %p178 = scmp.eq.s32.totalorder %s26, 0
      %p179 = por %p177, %p178
      %p180 = scmp.ne.s32.totalorder %s172, %s174
      %p181 = scmp.eq.s32.totalorder %s31, 1
      %p182 = por %p180, %p181
      %p183 = scmp.ne.s32.totalorder %s174, %s175
      %p184 = scmp.eq.s32.totalorder %s31, 0
      %p185 = por %p183, %p184
      %p186 = scmp.ne.s32.totalorder %s174, %s175
      %p187 = scmp.eq.s32.totalorder %s32, 1
      %p188 = por %p186, %p187
      %p190 = scmp.ne.s32.totalorder %s175, %s189
      %p191 = scmp.eq.s32.totalorder %s32, 0
      %p192 = por %p190, %p191
      %s193 = ssub.s32 %s35, %s44
      %p194 = scmp.eq.s32.totalorder %s193, 0
      %s196 = sadd.s32 %s195, 1
      %s197 = scalar_select %p194, %s195, %s196
      %p200 = pneg %p194
      %p201 = scmp.eq.s32.totalorder %s26, 1
      %p202 = por %p200, %p201
      %p203 = scmp.ne.s32.totalorder %s195, %s198
      %p204 = scmp.eq.s32.totalorder %s26, 0
      %p205 = por %p203, %p204
      %p206 = scmp.ne.s32.totalorder %s195, %s198
      %p207 = scmp.eq.s32.totalorder %s31, 1
      %p208 = por %p206, %p207
      %p209 = scmp.ne.s32.totalorder %s198, %s199
      %p210 = scmp.eq.s32.totalorder %s31, 0
      %p211 = por %p209, %p210
      %p212 = scmp.ne.s32.totalorder %s198, %s199
      %p213 = scmp.eq.s32.totalorder %s32, 1
      %p214 = por %p212, %p213
      %p216 = scmp.ne.s32.totalorder %s199, %s215
      %p217 = scmp.eq.s32.totalorder %s32, 0
      %p218 = por %p216, %p217
      %s219 = ssub.s32 %s35, %s44
      %p220 = scmp.eq.s32.totalorder %s219, 0
      %s222 = sadd.s32 %s221, 1
      %s223 = scalar_select %p220, %s221, %s222
      %p226 = pneg %p220
      %p227 = scmp.eq.s32.totalorder %s26, 1
      %p228 = por %p226, %p227
      %p229 = scmp.ne.s32.totalorder %s221, %s224
      %p230 = scmp.eq.s32.totalorder %s26, 0
      %p231 = por %p229, %p230
      %p232 = scmp.ne.s32.totalorder %s221, %s224
      %p233 = scmp.eq.s32.totalorder %s31, 1
      %p234 = por %p232, %p233
      %p235 = scmp.ne.s32.totalorder %s224, %s225
      %p236 = scmp.eq.s32.totalorder %s31, 0
      %p237 = por %p235, %p236
      %p238 = scmp.ne.s32.totalorder %s224, %s225
      %p239 = scmp.eq.s32.totalorder %s32, 1
      %p240 = por %p238, %p239
      %p242 = scmp.ne.s32.totalorder %s225, %s241
      %p243 = scmp.eq.s32.totalorder %s32, 0
      %p244 = por %p242, %p243
      %s245 = ssub.s32 %s35, %s44
      %p246 = scmp.eq.s32.totalorder %s245, 0
      %s248 = sadd.s32 %s247, 1
      %s249 = scalar_select %p246, %s247, %s248
      %p252 = pneg %p246
      %p253 = scmp.eq.s32.totalorder %s26, 1
      %p254 = por %p252, %p253
      %p255 = scmp.ne.s32.totalorder %s247, %s250
      %p256 = scmp.eq.s32.totalorder %s26, 0
      %p257 = por %p255, %p256
      %p258 = scmp.ne.s32.totalorder %s247, %s250
      %p259 = scmp.eq.s32.totalorder %s31, 1
      %p260 = por %p258, %p259
      %p261 = scmp.ne.s32.totalorder %s250, %s251
      %p262 = scmp.eq.s32.totalorder %s31, 0
      %p263 = por %p261, %p262
      %p264 = scmp.ne.s32.totalorder %s250, %s251
      %p265 = scmp.eq.s32.totalorder %s32, 1
      %p266 = por %p264, %p265
      %p268 = scmp.ne.s32.totalorder %s251, %s267
      %p269 = scmp.eq.s32.totalorder %s32, 0
      %p270 = por %p268, %p269
      %s272 = sadd.s32 %s271, 1
      %p275 = scmp.eq.s32.totalorder %s26, 1
      %p276 = scmp.ne.s32.totalorder %s271, %s273
      %p277 = scmp.eq.s32.totalorder %s26, 0
      %p278 = por %p276, %p277
      %p279 = scmp.ne.s32.totalorder %s271, %s273
      %p280 = scmp.eq.s32.totalorder %s31, 1
      %p281 = por %p279, %p280
      %p282 = scmp.ne.s32.totalorder %s273, %s274
      %p283 = scmp.eq.s32.totalorder %s31, 0
      %p284 = por %p282, %p283
      %p285 = scmp.ne.s32.totalorder %s273, %s274
      %p286 = scmp.eq.s32.totalorder %s32, 1
      %p287 = por %p285, %p286
      %p289 = scmp.ne.s32.totalorder %s274, %s288
      %p290 = scmp.eq.s32.totalorder %s32, 0
      %p291 = por %p289, %p290
      %s293 = sadd.s32 %s292, 1
      %p296 = scmp.eq.s32.totalorder %s26, 1
      %p297 = scmp.ne.s32.totalorder %s292, %s294
      %p298 = scmp.eq.s32.totalorder %s26, 0
      %p299 = por %p297, %p298
      %p300 = scmp.ne.s32.totalorder %s292, %s294
      %p301 = scmp.eq.s32.totalorder %s31, 1
      %p302 = por %p300, %p301
      %p303 = scmp.ne.s32.totalorder %s294, %s295
      %p304 = scmp.eq.s32.totalorder %s31, 0
      %p305 = por %p303, %p304
      %p306 = scmp.ne.s32.totalorder %s294, %s295
      %p307 = scmp.eq.s32.totalorder %s32, 1
      %p308 = por %p306, %p307
      %p310 = scmp.ne.s32.totalorder %s295, %s309
      %p311 = scmp.eq.s32.totalorder %s32, 0
      %p312 = por %p310, %p311
      %s314 = sadd.s32 %s313, 1
      %p317 = scmp.eq.s32.totalorder %s26, 1
      %p318 = scmp.ne.s32.totalorder %s313, %s315
      %p319 = scmp.eq.s32.totalorder %s26, 0
      %p320 = por %p318, %p319
      %p321 = scmp.ne.s32.totalorder %s313, %s315
      %p322 = scmp.eq.s32.totalorder %s31, 1
      %p323 = por %p321, %p322
      %p324 = scmp.ne.s32.totalorder %s315, %s316
      %p325 = scmp.eq.s32.totalorder %s31, 0
      %p326 = por %p324, %p325
      %p327 = scmp.ne.s32.totalorder %s315, %s316
      %p328 = scmp.eq.s32.totalorder %s32, 1
      %p329 = por %p327, %p328
      %p331 = scmp.ne.s32.totalorder %s316, %s330
      %p332 = scmp.eq.s32.totalorder %s32, 0
      %p333 = por %p331, %p332
      %s334 = ssub.s32 %s33, %s52
      %s335 = ssub.s32 %s34, %s48
      %s336 = sor.u32 %s334, %s335
      %p337 = scmp.eq.s32.totalorder %s336, 0
      %s339 = sadd.s32 %s338, 1
      %s340 = scalar_select %p337, %s338, %s339
      %p343 = pneg %p337
      %p344 = scmp.eq.s32.totalorder %s26, 1
      %p345 = por %p343, %p344
      %p346 = scmp.ne.s32.totalorder %s338, %s341
      %p347 = scmp.eq.s32.totalorder %s26, 0
      %p348 = por %p346, %p347
      %p349 = scmp.ne.s32.totalorder %s338, %s341
      %p350 = scmp.eq.s32.totalorder %s31, 1
      %p351 = por %p349, %p350
      %p352 = scmp.ne.s32.totalorder %s341, %s342
      %p353 = scmp.eq.s32.totalorder %s31, 0
      %p354 = por %p352, %p353
      %p355 = scmp.ne.s32.totalorder %s341, %s342
      %p356 = scmp.eq.s32.totalorder %s32, 1
      %p357 = por %p355, %p356
      %p359 = scmp.ne.s32.totalorder %s342, %s358
      %p360 = scmp.eq.s32.totalorder %s32, 0
      %p361 = por %p359, %p360
      %s362 = ssub.s32 %s33, %s52
      %s363 = ssub.s32 %s34, %s48
      %s364 = sor.u32 %s362, %s363
      %p365 = scmp.eq.s32.totalorder %s364, 0
      %s367 = sadd.s32 %s366, 1
      %s368 = scalar_select %p365, %s366, %s367
      %p371 = pneg %p365
      %p372 = scmp.eq.s32.totalorder %s26, 1
      %p373 = por %p371, %p372
      %p374 = scmp.ne.s32.totalorder %s366, %s369
      %p375 = scmp.eq.s32.totalorder %s26, 0
      %p376 = por %p374, %p375
      %p377 = scmp.ne.s32.totalorder %s366, %s369
      %p378 = scmp.eq.s32.totalorder %s31, 1
      %p379 = por %p377, %p378
      %p380 = scmp.ne.s32.totalorder %s369, %s370
      %p381 = scmp.eq.s32.totalorder %s31, 0
      %p382 = por %p380, %p381
      %p383 = scmp.ne.s32.totalorder %s369, %s370
      %p384 = scmp.eq.s32.totalorder %s32, 1
      %p385 = por %p383, %p384
      %p387 = scmp.ne.s32.totalorder %s370, %s386
      %p388 = scmp.eq.s32.totalorder %s32, 0
      %p389 = por %p387, %p388
      %p390 = scmp.le.s32.totalorder 1, %s26
      %p391 = scmp.lt.s32.totalorder %s26, 3
      %p392 = pnand %p390, %p391
      %p393 = pneg %p392
      // Predicated region
      $region9: #{vit_forward.13} parent=5 // pred_check
        _
      $region10: #{vit_forward.13} parent=5 // pred_check_branch
        %395 = sbr.rel (%p392) target = $region12
      $region11: #{vit_forward.13} parent=5 // pred_region
        %s396 = ssub.s32 %s26, 1
        // Predicated region
        $region13: #{vit_forward.13} parent=11 // pred_check
          %p397 = pneg %p122
        $region14: #{vit_forward.13} parent=11 // pred_check_branch
          %399 = sbr.rel (%p397) target = $region16
        $region15: #{vit_forward.13} parent=11 // pred_region
          _
        $region16: #{vit_forward.13} parent=11 // pred_fallthru
          _
        // Predicated region
        $region17: #{vit_forward.13} parent=11 // pred_check
          %p400 = pneg %p143
        $region18: #{vit_forward.13} parent=11 // pred_check_branch
          %402 = sbr.rel (%p400) target = $region20
        $region19: #{vit_forward.13} parent=11 // pred_region
          _
        $region20: #{vit_forward.13} parent=11 // pred_fallthru
          _
        // Predicated region
        $region21: #{vit_forward.13} parent=11 // pred_check
          %p403 = pneg %p164
        $region22: #{vit_forward.13} parent=11 // pred_check_branch
          %405 = sbr.rel (%p403) target = $region24
        $region23: #{vit_forward.13} parent=11 // pred_region
          _
        $region24: #{vit_forward.13} parent=11 // pred_fallthru
          _
        // Predicated region
        $region25: #{vit_forward.13} parent=11 // pred_check
          %p406 = pneg %p185
        $region26: #{vit_forward.13} parent=11 // pred_check_branch
          %408 = sbr.rel (%p406) target = $region28
        $region27: #{vit_forward.13} parent=11 // pred_region
          _
        $region28: #{vit_forward.13} parent=11 // pred_fallthru
          _
        // Predicated region
        $region29: #{vit_forward.13} parent=11 // pred_check
          %p409 = pneg %p211
        $region30: #{vit_forward.13} parent=11 // pred_check_branch
          %411 = sbr.rel (%p409) target = $region32
        $region31: #{vit_forward.13} parent=11 // pred_region
          %s412 = smul.u32 2, %s38
          %p413 = scmp.lt.s32.totalorder %s412, 1
          %s414 = scalar_select %p413, %s412, 1
          %s415 = smul.addr %s414, 4
          %s416 = scalar_lea.vmem %s6, %s415
          %s417 = smul.u32 2, %s38
        $region32: #{vit_forward.13} parent=11 // pred_fallthru
          _
        // Predicated region
        $region33: #{vit_forward.13} parent=11 // pred_check
          %p418 = pneg %p237
        $region34: #{vit_forward.13} parent=11 // pred_check_branch
          %420 = sbr.rel (%p418) target = $region36
        $region35: #{vit_forward.13} parent=11 // pred_region
          %s421 = smul.u32 2, %s38
          %p422 = scmp.lt.s32.totalorder %s421, 1
          %s423 = scalar_select %p422, %s421, 1
          %s424 = scalar_lea.vmem %s7, %s423
          %s425 = smul.u32 2, %s38
        $region36: #{vit_forward.13} parent=11 // pred_fallthru
          _
        // Predicated region
        $region37: #{vit_forward.13} parent=11 // pred_check
          %p426 = pneg %p263
        $region38: #{vit_forward.13} parent=11 // pred_check_branch
          %428 = sbr.rel (%p426) target = $region40
        $region39: #{vit_forward.13} parent=11 // pred_region
          %s429 = smul.u32 32, %s38
          %p430 = scmp.lt.s32.totalorder %s429, 31
          %s431 = scalar_select %p430, %s429, 31
          %s432 = smul.addr %s431, 4
          %s433 = scalar_lea.vmem %s8, %s432
          %s434 = smul.u32 32, %s38
        $region40: #{vit_forward.13} parent=11 // pred_fallthru
          _
        // Predicated region
        $region41: #{vit_forward.13} parent=11 // pred_check
          %p435 = pneg %p284
        $region42: #{vit_forward.13} parent=11 // pred_check_branch
          %437 = sbr.rel (%p435) target = $region44
        $region43: #{vit_forward.13} parent=11 // pred_region
          _
        $region44: #{vit_forward.13} parent=11 // pred_fallthru
          _
        // Predicated region
        $region45: #{vit_forward.13} parent=11 // pred_check
          %p438 = pneg %p305
        $region46: #{vit_forward.13} parent=11 // pred_check_branch
          %440 = sbr.rel (%p438) target = $region48
        $region47: #{vit_forward.13} parent=11 // pred_region
          _
        $region48: #{vit_forward.13} parent=11 // pred_fallthru
          _
        // Predicated region
        $region49: #{vit_forward.13} parent=11 // pred_check
          %p441 = pneg %p326
        $region50: #{vit_forward.13} parent=11 // pred_check_branch
          %443 = sbr.rel (%p441) target = $region52
        $region51: #{vit_forward.13} parent=11 // pred_region
          _
        $region52: #{vit_forward.13} parent=11 // pred_fallthru
          _
      $region12: #{vit_forward.13} parent=5 // pred_fallthru
        _
      %p444 = scmp.lt.s32.totalorder %s26, 2
      // Predicated region
      $region53: #{vit_forward.13} parent=5 // pred_check
        %p445 = pneg %p444
      $region54: #{vit_forward.13} parent=5 // pred_check_branch
        %447 = sbr.rel (%p445) target = $region56
      $region55: #{vit_forward.13} parent=5 // pred_region
        // Predicated region
        $region57: #{vit_forward.13} parent=55 // pred_check
          %p448 = pneg %p67
        $region58: #{vit_forward.13} parent=55 // pred_check_branch
          %450 = sbr.rel (%p448) target = $region60
        $region59: #{vit_forward.13} parent=55 // pred_region
          %s451 = smul.u32 8, %s34
          %p452 = scmp.lt.s32.totalorder %s33, 1
          %s453 = scalar_select %p452, %s33, 1
          %p454 = scmp.lt.s32.totalorder %s451, 7
          %s455 = scalar_select %p454, %s451, 7
          %s456 = smul.addr %s453, 8
          %s457 = sadd.s32 %s455, %s456
          %s458 = smul.addr %s457, 4
          %s459 = scalar_lea.vmem %s0, %s458
          %s460 = smul.u32 8, %s34
        $region60: #{vit_forward.13} parent=55 // pred_fallthru
          _
        // Predicated region
        $region61: #{vit_forward.13} parent=55 // pred_check
          %p461 = pneg %p95
        $region62: #{vit_forward.13} parent=55 // pred_check_branch
          %463 = sbr.rel (%p461) target = $region64
        $region63: #{vit_forward.13} parent=55 // pred_region
          %s464 = smul.u32 8, %s34
          %p465 = scmp.lt.s32.totalorder %s33, 1
          %s466 = scalar_select %p465, %s33, 1
          %p467 = scmp.lt.s32.totalorder %s464, 7
          %s468 = scalar_select %p467, %s464, 7
          %s469 = smul.addr %s466, 8
          %s470 = sadd.s32 %s468, %s469
          %s471 = smul.addr %s470, 4
          %s472 = scalar_lea.vmem %s1, %s471
          %s473 = smul.u32 8, %s34
        $region64: #{vit_forward.13} parent=55 // pred_fallthru
          _
      $region56: #{vit_forward.13} parent=5 // pred_fallthru
        _
      %p474 = scmp.le.s32.totalorder 1, %s26
      %p475 = scmp.lt.s32.totalorder %s26, 3
      %p476 = pnand %p474, %p475
      %p477 = pneg %p476
      // Predicated region
      $region65: #{vit_forward.13} parent=5 // pred_check
        _
      $region66: #{vit_forward.13} parent=5 // pred_check_branch
        %479 = sbr.rel (%p476) target = $region68
      $region67: #{vit_forward.13} parent=5 // pred_region
        %s480 = ssub.s32 %s26, 1
        %s481 = smul.u32 8, %s37
        %p482 = scmp.lt.s32.totalorder %s36, 1
        %s483 = scalar_select %p482, %s36, 1
        %p484 = scmp.lt.s32.totalorder %s481, 7
        %s485 = scalar_select %p484, %s481, 7
        %s486 = smul.addr %s483, 8
        %s487 = sadd.s32 %s485, %s486
        %s488 = smul.addr %s487, 4
        %s489 = scalar_lea.vmem %s0, %s488
        %p490 = pneg %p73
        %p491 = pneg %p70
        %s492 = smul.u32 8, %s37
        %p493 = scmp.lt.s32.totalorder %s36, 1
        %s494 = scalar_select %p493, %s36, 1
        %p495 = scmp.lt.s32.totalorder %s492, 7
        %s496 = scalar_select %p495, %s492, 7
        %s497 = smul.addr %s494, 8
        %s498 = sadd.s32 %s496, %s497
        %s499 = smul.addr %s498, 4
        %s500 = scalar_lea.vmem %s1, %s499
        %p501 = pneg %p101
        %p502 = pneg %p98
        %p503 = pneg %p122
        %p504 = pneg %p119
        %p505 = pneg %p143
        %p506 = pneg %p140
        %p507 = pneg %p164
        %p508 = pneg %p161
        %p509 = pneg %p185
        %p510 = pneg %p182
        %s511 = smul.u32 2, %s38
        %p512 = scmp.lt.s32.totalorder %s511, 1
        %s513 = scalar_select %p512, %s511, 1
        %s514 = smul.addr %s513, 4
        %s515 = scalar_lea.vmem %s6, %s514
        %p516 = pneg %p211
        %p517 = pneg %p208
        %s518 = smul.u32 2, %s38
        %p519 = scmp.lt.s32.totalorder %s518, 1
        %s520 = scalar_select %p519, %s518, 1
        %s521 = scalar_lea.vmem %s7, %s520
        %p522 = pneg %p237
        %p523 = pneg %p234
        %s524 = smul.u32 32, %s38
        %p525 = scmp.lt.s32.totalorder %s524, 31
        %s526 = scalar_select %p525, %s524, 31
        %s527 = smul.addr %s526, 4
        %s528 = scalar_lea.vmem %s8, %s527
        %p529 = pneg %p263
        %p530 = pneg %p260
        %p531 = pneg %p284
        %p532 = pneg %p281
        %p533 = pneg %p305
        %p534 = pneg %p302
        %p535 = pneg %p326
        %p536 = pneg %p323
        %p537 = pneg %p354
        %p538 = pneg %p351
        %s539 = sand.u32 %s341, 1
        %s540 = scalar_lea.sflag [#allocation5], %s539
        %s541 = sand.u32 %s341, 1
        %s542 = smul.addr %s541, 32
        %s543 = scalar_lea.vmem [#allocation4], %s542
        %p544 = pneg %p382
        %p545 = pneg %p379
        %s546 = sand.u32 %s369, 1
        %s547 = scalar_lea.sflag [#allocation7], %s546
        %s548 = sand.u32 %s369, 1
        %s549 = smul.addr %s548, 64
        %s550 = scalar_lea.vmem [#allocation6], %s549
        %s551 = smul.u32 8, %s37
        %p552 = scmp.lt.s32.totalorder %s36, 1
        %s553 = scalar_select %p552, %s36, 1
        %p554 = scmp.lt.s32.totalorder %s551, 7
        %s555 = scalar_select %p554, %s551, 7
        %s556 = smul.addr %s553, 8
        %s557 = sadd.s32 %s555, %s556
        %s558 = smul.addr %s557, 4
        %s559 = scalar_lea.vmem %s0, %s558
        %s560 = smul.u32 8, %s37
        %s561 = smul.u32 8, %s37
        %p562 = scmp.lt.s32.totalorder %s36, 1
        %s563 = scalar_select %p562, %s36, 1
        %p564 = scmp.lt.s32.totalorder %s561, 7
        %s565 = scalar_select %p564, %s561, 7
        %s566 = smul.addr %s563, 8
        %s567 = sadd.s32 %s565, %s566
        %s568 = smul.addr %s567, 4
        %s569 = scalar_lea.vmem %s1, %s568
        %s570 = smul.u32 8, %s37
        %s571 = smul.u32 2, %s38
        %p572 = scmp.lt.s32.totalorder %s571, 1
        %s573 = scalar_select %p572, %s571, 1
        %s574 = smul.addr %s573, 4
        %s575 = scalar_lea.vmem %s6, %s574
        %s576 = smul.u32 2, %s38
        %s577 = smul.u32 2, %s38
        %p578 = scmp.lt.s32.totalorder %s577, 1
        %s579 = scalar_select %p578, %s577, 1
        %s580 = scalar_lea.vmem %s7, %s579
        %s581 = smul.u32 2, %s38
        %s582 = smul.u32 32, %s38
        %p583 = scmp.lt.s32.totalorder %s582, 31
        %s584 = scalar_select %p583, %s582, 31
        %s585 = smul.addr %s584, 4
        %s586 = scalar_lea.vmem %s8, %s585
        %s587 = smul.u32 32, %s38
        %s588 = smul.u32 8, %s37
        %s589 = smul.u32 8, %s37
        %p591 = scmp.eq.s32.totalorder %s38, 0
        // Predicated region
        $region69: #{vit_forward.13} parent=67 // pred_check
          %p592 = pneg %p591
        $region70: #{vit_forward.13} parent=67 // pred_check_branch
          %594 = sbr.rel (%p592) target = $region72
        $region71: #{vit_forward.13} parent=67 // pred_region
          %v595 = vld [vmem:[%s569] sm:$0xf]
          %v596 = vld [vmem:[%s569 + $0x4] sm:$0xf]
          %v597 = vld [vmem:[%s569 + $0x8] sm:$0xf]
          %v598 = vld [vmem:[%s569 + $0xc] sm:$0xf]
          %v599 = vld [vmem:[%s569 + $0x10] sm:$0xf]
          %v600 = vld [vmem:[%s569 + $0x14] sm:$0xf]
          %v601 = vld [vmem:[%s569 + $0x18] sm:$0xf]
          %v602 = vld [vmem:[%s569 + $0x1c] sm:$0xf]
          %v603 = vld [vmem:[%s2] sm:$0xf]
          %v604 = vld [vmem:[%s2 + $0x4] sm:$0xf]
          %v605 = vld [vmem:[%s2 + $0x8] sm:$0xf]
          %v606 = vld [vmem:[%s2 + $0xc] sm:$0xf]
          %v607 = vld [vmem:[%s2 + $0x10] sm:$0xf]
          %v608 = vld [vmem:[%s2 + $0x14] sm:$0xf]
          %v609 = vld [vmem:[%s2 + $0x18] sm:$0xf]
          %v610 = vld [vmem:[%s2 + $0x1c] sm:$0xf]
          %v611 = vld [vmem:[%s2 + $0x20] sm:$0xf]
          %v612 = vld [vmem:[%s2 + $0x24] sm:$0xf]
          %v613 = vld [vmem:[%s2 + $0x28] sm:$0xf]
          %v614 = vld [vmem:[%s2 + $0x2c] sm:$0xf]
          %v615 = vld [vmem:[%s2 + $0x30] sm:$0xf]
          %v616 = vld [vmem:[%s2 + $0x34] sm:$0xf]
          %v617 = vld [vmem:[%s2 + $0x38] sm:$0xf]
          %v618 = vld [vmem:[%s2 + $0x3c] sm:$0xf]
          %v627 = vunpack.c.l.b16 %v595
          %v628 = vunpack.c.l.b16 %v596
          %v629 = vunpack.c.l.b16 %v597
          %v630 = vunpack.c.l.b16 %v598
          %v631 = vunpack.c.l.b16 %v599
          %v632 = vunpack.c.l.b16 %v600
          %v633 = vunpack.c.l.b16 %v601
          %v634 = vunpack.c.l.b16 %v602
          %v635 = vpack.c.b16 %v628, %v627
          %v636 = vpack.c.b16 %v630, %v629
          %v637 = vpack.c.b16 %v632, %v631
          %v638 = vpack.c.b16 %v634, %v633
          %v659 = vunpack.c.l.b16 %v603
          %v660 = vunpack.c.l.b16 %v604
          %v661 = vunpack.c.l.b16 %v605
          %v662 = vunpack.c.l.b16 %v606
          %v663 = vunpack.c.l.b16 %v607
          %v664 = vunpack.c.l.b16 %v608
          %v665 = vunpack.c.l.b16 %v609
          %v666 = vunpack.c.l.b16 %v610
          %v667 = vunpack.c.l.b16 %v611
          %v668 = vunpack.c.l.b16 %v612
          %v669 = vunpack.c.l.b16 %v613
          %v670 = vunpack.c.l.b16 %v614
          %v671 = vunpack.c.l.b16 %v615
          %v672 = vunpack.c.l.b16 %v616
          %v673 = vunpack.c.l.b16 %v617
          %v674 = vunpack.c.l.b16 %v618
          %v675 = vpack.c.b16 %v660, %v659
          %v676 = vpack.c.b16 %v662, %v661
          %v677 = vpack.c.b16 %v664, %v663
          %v678 = vpack.c.b16 %v666, %v665
          %v679 = vpack.c.b16 %v668, %v667
          %v680 = vpack.c.b16 %v670, %v669
          %v681 = vpack.c.b16 %v672, %v671
          %v682 = vpack.c.b16 %v674, %v673
          %691 = vmatprep.subr.bf16.mxu0 0
          %692 = vmatpush1.bf16.msra.mxu0 %v682
          %693 = vmatprep.subr.bf16.mxu0 0
          %694 = vmatpush1.bf16.msra.mxu0 %v681
          %695 = vmatprep.subr.bf16.mxu0 0
          %696 = vmatpush1.bf16.msra.mxu0 %v680
          %697 = vmatprep.subr.bf16.mxu0 0
          %698 = vmatpush1.bf16.msra.mxu0 %v679
          %699 = vmatprep.subr.bf16.mxu0 0
          %700 = vmatpush1.bf16.msra.mxu0 %v678
          %701 = vmatprep.subr.bf16.mxu0 0
          %702 = vmatpush1.bf16.msra.mxu0 %v677
          %703 = vmatprep.subr.bf16.mxu0 0
          %704 = vmatpush1.bf16.msra.mxu0 %v676
          %705 = vmatprep.subr.bf16.mxu0 0
          %706 = vmatpush1.bf16.msra.mxu0 %v675
          %707 = vmatprep.subr.bf16.mxu0 0
          %708 = vmatpush2.bf16.msra.mxu0 0
          %709 = vmatprep.subr.bf16.mxu0 0
          %710 = vmatpush2.bf16.msra.mxu0 0
          %711 = vmatprep.subr.bf16.mxu0 0
          %712 = vmatpush2.bf16.msra.mxu0 0
          %713 = vmatprep.subr.bf16.mxu0 0
          %714 = vmatpush2.bf16.msra.mxu0 0
          %715 = vmatprep.subr.bf16.mxu0 0
          %716 = vmatpush2.bf16.msra.mxu0 0
          %717 = vmatprep.subr.bf16.mxu0 0
          %718 = vmatpush2.bf16.msra.mxu0 0
          %719 = vmatprep.subr.bf16.mxu0 0
          %720 = vmatpush2.bf16.msra.mxu0 0
          %721 = vmatprep.subr.bf16.mxu0 0
          %722 = vmatpush2.bf16.msra.mxu0 0
          %723 = vmatprep.mubr.bf16.mxu0 0
          %724 = vmatmul.mubr.bf16.gmra.mxu0 %v635
          %v725 = vpop.f32.mrf.mxu0
          %v726 = vadd.f32 0.0, %v725
          %v727 = vpop.f32.mrf.mxu0
          %v728 = vpop.f32.mrf.mxu0
          %v729 = vadd.f32 0.0, %v728
          %v730 = vpop.f32.mrf.mxu0
          %731 = vmatprep.mubr.bf16.mxu0 0
          %732 = vmatmul.mubr.bf16.gmra.mxu0 %v636
          %v733 = vpop.f32.mrf.mxu0
          %v734 = vadd.f32 0.0, %v733
          %v735 = vpop.f32.mrf.mxu0
          %v736 = vpop.f32.mrf.mxu0
          %v737 = vadd.f32 0.0, %v736
          %v738 = vpop.f32.mrf.mxu0
          %739 = vmatprep.mubr.bf16.mxu0 0
          %740 = vmatmul.mubr.bf16.gmra.mxu0 %v637
          %v741 = vpop.f32.mrf.mxu0
          %v742 = vadd.f32 0.0, %v741
          %v743 = vpop.f32.mrf.mxu0
          %v744 = vpop.f32.mrf.mxu0
          %v745 = vadd.f32 0.0, %v744
          %v746 = vpop.f32.mrf.mxu0
          %747 = vmatprep.mubr.bf16.mxu0 0
          %748 = vmatmul.mubr.bf16.gmra.mxu0 %v638
          %v749 = vpop.f32.mrf.mxu0
          %v750 = vadd.f32 0.0, %v749
          %v751 = vpop.f32.mrf.mxu0
          %v752 = vpop.f32.mrf.mxu0
          %v753 = vadd.f32 0.0, %v752
          %v754 = vpop.f32.mrf.mxu0
          %755 = vdwg.mxu0
          %v756 = vld [vmem:[%s559] sm:$0xf]
          %v757 = vld [vmem:[%s559 + $0x4] sm:$0xf]
          %v758 = vld [vmem:[%s559 + $0x8] sm:$0xf]
          %v759 = vld [vmem:[%s559 + $0xc] sm:$0xf]
          %v760 = vld [vmem:[%s559 + $0x10] sm:$0xf]
          %v761 = vld [vmem:[%s559 + $0x14] sm:$0xf]
          %v762 = vld [vmem:[%s559 + $0x18] sm:$0xf]
          %v763 = vld [vmem:[%s559 + $0x1c] sm:$0xf]
          %v764 = vunpack.c.l.bf16 %v756
          %v765 = vunpack.c.l.bf16 %v757
          %v766 = vunpack.c.l.bf16 %v758
          %v767 = vunpack.c.l.bf16 %v759
          %v768 = vunpack.c.l.bf16 %v760
          %v769 = vunpack.c.l.bf16 %v761
          %v770 = vunpack.c.l.bf16 %v762
          %v771 = vunpack.c.l.bf16 %v763
          %v772 = vadd.f32 %v764, %v726
          %v773 = vadd.f32 %v765, %v729
          %v774 = vadd.f32 %v766, %v734
          %v775 = vadd.f32 %v767, %v737
          %v776 = vadd.f32 %v768, %v742
          %v777 = vadd.f32 %v769, %v745
          %v778 = vadd.f32 %v770, %v750
          %v779 = vadd.f32 %v771, %v753
          %v780 = vld [vmem:[%s3] sm:$0x1]
          %v782 = vlaneseq
          %v783 = vshrl.u32 %v782, 7
          %v784 = vsub.s32 0, %v783
          %v785 = vrot.slane %v780, %v784
          %v787 = vadd.f32 %v772, %v785
          %v788 = vadd.f32 %v773, %v785
          %v789 = vadd.f32 %v774, %v785
          %v790 = vadd.f32 %v775, %v785
          %v791 = vadd.f32 %v776, %v785
          %v792 = vadd.f32 %v777, %v785
          %v793 = vadd.f32 %v778, %v785
          %v794 = vadd.f32 %v779, %v785
          %v795 = vld [vmem:[%s4] sm:$0x1]
          %v796 = vld [vmem:[%s5] sm:$0x1]
          %797 = vadd.xlane.f32.xlu0 %v787
          %v798 = vpop.xlane.xlu0 %797
          %799 = vadd.xlane.f32.xlu0 %v788
          %v800 = vpop.xlane.xlu0 %799
          %801 = vadd.xlane.f32.xlu0 %v789
          %v802 = vpop.xlane.xlu0 %801
          %803 = vadd.xlane.f32.xlu0 %v790
          %v804 = vpop.xlane.xlu0 %803
          %805 = vadd.xlane.f32.xlu0 %v791
          %v806 = vpop.xlane.xlu0 %805
          %807 = vadd.xlane.f32.xlu0 %v792
          %v808 = vpop.xlane.xlu0 %807
          %809 = vadd.xlane.f32.xlu0 %v793
          %v810 = vpop.xlane.xlu0 %809
          %811 = vadd.xlane.f32.xlu0 %v794
          %v812 = vpop.xlane.xlu0 %811
          %v813 = vrcp.pop 128.0
          %v814 = vmul.f32 %v798, %v813
          %v815 = vmul.f32 %v800, %v813
          %v816 = vmul.f32 %v802, %v813
          %v817 = vmul.f32 %v804, %v813
          %v818 = vmul.f32 %v806, %v813
          %v819 = vmul.f32 %v808, %v813
          %v820 = vmul.f32 %v810, %v813
          %v821 = vmul.f32 %v812, %v813
          %v822 = vsub.f32 %v787, %v814
          %v823 = vsub.f32 %v788, %v815
          %v824 = vsub.f32 %v789, %v816
          %v825 = vsub.f32 %v790, %v817
          %v826 = vsub.f32 %v791, %v818
          %v827 = vsub.f32 %v792, %v819
          %v828 = vsub.f32 %v793, %v820
          %v829 = vsub.f32 %v794, %v821
          %v830 = vmul.f32 %v822, %v822
          %v831 = vmul.f32 %v823, %v823
          %v832 = vmul.f32 %v824, %v824
          %v833 = vmul.f32 %v825, %v825
          %v834 = vmul.f32 %v826, %v826
          %v835 = vmul.f32 %v827, %v827
          %v836 = vmul.f32 %v828, %v828
          %v837 = vmul.f32 %v829, %v829
          %838 = vadd.xlane.f32.xlu0 %v830
          %v839 = vpop.xlane.xlu0 %838
          %840 = vadd.xlane.f32.xlu0 %v831
          %v841 = vpop.xlane.xlu0 %840
          %842 = vadd.xlane.f32.xlu0 %v832
          %v843 = vpop.xlane.xlu0 %842
          %844 = vadd.xlane.f32.xlu0 %v833
          %v845 = vpop.xlane.xlu0 %844
          %846 = vadd.xlane.f32.xlu0 %v834
          %v847 = vpop.xlane.xlu0 %846
          %848 = vadd.xlane.f32.xlu0 %v835
          %v849 = vpop.xlane.xlu0 %848
          %850 = vadd.xlane.f32.xlu0 %v836
          %v851 = vpop.xlane.xlu0 %850
          %852 = vadd.xlane.f32.xlu0 %v837
          %v853 = vpop.xlane.xlu0 %852
          %v854 = vmul.f32 %v839, %v813
          %v855 = vmul.f32 %v841, %v813
          %v856 = vmul.f32 %v843, %v813
          %v857 = vmul.f32 %v845, %v813
          %v858 = vmul.f32 %v847, %v813
          %v859 = vmul.f32 %v849, %v813
          %v860 = vmul.f32 %v851, %v813
          %v861 = vmul.f32 %v853, %v813
          %v862 = vadd.f32 %v854, 1e-05
          %v863 = vadd.f32 %v855, 1e-05
          %v864 = vadd.f32 %v856, 1e-05
          %v865 = vadd.f32 %v857, 1e-05
          %v866 = vadd.f32 %v858, 1e-05
          %v867 = vadd.f32 %v859, 1e-05
          %v868 = vadd.f32 %v860, 1e-05
          %v869 = vadd.f32 %v861, 1e-05
          %v870 = vrsqrt.pop %v862
          %v871 = vrsqrt.pop %v863
          %v872 = vrsqrt.pop %v864
          %v873 = vrsqrt.pop %v865
          %v874 = vrsqrt.pop %v866
          %v875 = vrsqrt.pop %v867
          %v876 = vrsqrt.pop %v868
          %v877 = vrsqrt.pop %v869
          %v878 = vmul.f32 %v822, %v870
          %v879 = vmul.f32 %v823, %v871
          %v880 = vmul.f32 %v824, %v872
          %v881 = vmul.f32 %v825, %v873
          %v882 = vmul.f32 %v826, %v874
          %v883 = vmul.f32 %v827, %v875
          %v884 = vmul.f32 %v828, %v876
          %v885 = vmul.f32 %v829, %v877
          %v887 = vlaneseq
          %v888 = vshrl.u32 %v887, 7
          %v889 = vsub.s32 0, %v888
          %v890 = vrot.slane %v795, %v889
          %v892 = vmul.f32 %v878, %v890
          %v893 = vmul.f32 %v879, %v890
          %v894 = vmul.f32 %v880, %v890
          %v895 = vmul.f32 %v881, %v890
          %v896 = vmul.f32 %v882, %v890
          %v897 = vmul.f32 %v883, %v890
          %v898 = vmul.f32 %v884, %v890
          %v899 = vmul.f32 %v885, %v890
          %v901 = vlaneseq
          %v902 = vshrl.u32 %v901, 7
          %v903 = vsub.s32 0, %v902
          %v904 = vrot.slane %v796, %v903
          %v906 = vadd.f32 %v892, %v904
          %v907 = vadd.f32 %v893, %v904
          %v908 = vadd.f32 %v894, %v904
          %v909 = vadd.f32 %v895, %v904
          %v910 = vadd.f32 %v896, %v904
          %v911 = vadd.f32 %v897, %v904
          %v912 = vadd.f32 %v898, %v904
          %v913 = vadd.f32 %v899, %v904
          %v914 = vpack.c.bf16 %v907, %v906
          %v915 = vpack.c.bf16 %v909, %v908
          %v916 = vpack.c.bf16 %v911, %v910
          %v917 = vpack.c.bf16 %v913, %v912
          %v922 = vunpack.c.l.b16 %v914
          %v923 = vunpack.c.h.b16 %v914
          %v924 = vunpack.c.l.b16 %v915
          %v925 = vunpack.c.h.b16 %v915
          %v926 = vunpack.c.l.b16 %v916
          %v927 = vunpack.c.h.b16 %v916
          %v928 = vunpack.c.l.b16 %v917
          %v929 = vunpack.c.h.b16 %v917
          %v930 = vpack.c.b16 %v922, %v922
          %v931 = vpack.c.b16 %v923, %v923
          %v932 = vpack.c.b16 %v924, %v924
          %v933 = vpack.c.b16 %v925, %v925
          %v934 = vpack.c.b16 %v926, %v926
          %v935 = vpack.c.b16 %v927, %v927
          %v936 = vpack.c.b16 %v928, %v928
          %v937 = vpack.c.b16 %v929, %v929
          %946 = vst [vmem:[#allocation2] sm:$0xf] %v930
          %947 = vst [vmem:[#allocation2 + $0x4] sm:$0xf] %v931
          %948 = vst [vmem:[#allocation2 + $0x8] sm:$0xf] %v932
          %949 = vst [vmem:[#allocation2 + $0xc] sm:$0xf] %v933
          %950 = vst [vmem:[#allocation2 + $0x10] sm:$0xf] %v934
          %951 = vst [vmem:[#allocation2 + $0x14] sm:$0xf] %v935
          %952 = vst [vmem:[#allocation2 + $0x18] sm:$0xf] %v936
          %953 = vst [vmem:[#allocation2 + $0x1c] sm:$0xf] %v937
          %954 = vst [vmem:[#allocation3] sm:$0xff] %v787
          %955 = vst [vmem:[#allocation3 + $0x8] sm:$0xff] %v788
          %956 = vst [vmem:[#allocation3 + $0x10] sm:$0xff] %v789
          %957 = vst [vmem:[#allocation3 + $0x18] sm:$0xff] %v790
          %958 = vst [vmem:[#allocation3 + $0x20] sm:$0xff] %v791
          %959 = vst [vmem:[#allocation3 + $0x28] sm:$0xff] %v792
          %960 = vst [vmem:[#allocation3 + $0x30] sm:$0xff] %v793
          %961 = vst [vmem:[#allocation3 + $0x38] sm:$0xff] %v794
        $region72: #{vit_forward.13} parent=67 // pred_fallthru
          _
        %v962 = vld [vmem:[#allocation2] sm:$0xf]
        %v963 = vld [vmem:[#allocation2 + $0x4] sm:$0xf]
        %v964 = vld [vmem:[#allocation2 + $0x8] sm:$0xf]
        %v965 = vld [vmem:[#allocation2 + $0xc] sm:$0xf]
        %v966 = vld [vmem:[#allocation2 + $0x10] sm:$0xf]
        %v967 = vld [vmem:[#allocation2 + $0x14] sm:$0xf]
        %v968 = vld [vmem:[#allocation2 + $0x18] sm:$0xf]
        %v969 = vld [vmem:[#allocation2 + $0x1c] sm:$0xf]
        %v970 = vld [vmem:[%s575] sm:$0xff]
        %v971 = vld [vmem:[%s575 + $0x8] sm:$0xff]
        %v972 = vld [vmem:[%s575 + $0x10] sm:$0xff]
        %v973 = vld [vmem:[%s575 + $0x18] sm:$0xff]
        %v974 = vld [vmem:[%s575 + $0x20] sm:$0xff]
        %v975 = vld [vmem:[%s575 + $0x28] sm:$0xff]
        %v976 = vld [vmem:[%s575 + $0x30] sm:$0xff]
        %v977 = vld [vmem:[%s575 + $0x38] sm:$0xff]
        %v978 = vld [vmem:[%s575 + $0x40] sm:$0xff]
        %v979 = vld [vmem:[%s575 + $0x48] sm:$0xff]
        %v980 = vld [vmem:[%s575 + $0x50] sm:$0xff]
        %v981 = vld [vmem:[%s575 + $0x58] sm:$0xff]
        %v982 = vld [vmem:[%s575 + $0x60] sm:$0xff]
        %v983 = vld [vmem:[%s575 + $0x68] sm:$0xff]
        %v984 = vld [vmem:[%s575 + $0x70] sm:$0xff]
        %v985 = vld [vmem:[%s575 + $0x78] sm:$0xff]
        %v986 = vld [vmem:[%s580] sm:$0x3]
        %v988 = vlaneseq
        %v989 = vshrl.u32 %v988, 7
        %v990 = vsub.s32 0, %v989
        %v991 = vrot.slane %v986, %v990
        %v992 = vlaneseq
        %v993 = vshrl.u32 %v992, 7
        %v994 = vsub.s32 1, %v993
        %v995 = vrot.slane %v986, %v994
        %v1006 = vunpack.c.l.b16 %v962
        %v1007 = vunpack.c.l.b16 %v963
        %v1008 = vunpack.c.l.b16 %v964
        %v1009 = vunpack.c.l.b16 %v965
        %v1010 = vunpack.c.l.b16 %v966
        %v1011 = vunpack.c.l.b16 %v967
        %v1012 = vunpack.c.l.b16 %v968
        %v1013 = vunpack.c.l.b16 %v969
        %v1014 = vpack.c.b16 %v1007, %v1006
        %v1015 = vpack.c.b16 %v1009, %v1008
        %v1016 = vpack.c.b16 %v1011, %v1010
        %v1017 = vpack.c.b16 %v1013, %v1012
        %v1038 = vunpack.c.l.b16 %v970
        %v1039 = vunpack.c.h.b16 %v970
        %v1040 = vunpack.c.l.b16 %v971
        %v1041 = vunpack.c.h.b16 %v971
        %v1042 = vunpack.c.l.b16 %v972
        %v1043 = vunpack.c.h.b16 %v972
        %v1044 = vunpack.c.l.b16 %v973
        %v1045 = vunpack.c.h.b16 %v973
        %v1046 = vunpack.c.l.b16 %v974
        %v1047 = vunpack.c.h.b16 %v974
        %v1048 = vunpack.c.l.b16 %v975
        %v1049 = vunpack.c.h.b16 %v975
        %v1050 = vunpack.c.l.b16 %v976
        %v1051 = vunpack.c.h.b16 %v976
        %v1052 = vunpack.c.l.b16 %v977
        %v1053 = vunpack.c.h.b16 %v977
        %v1054 = vunpack.c.l.b16 %v978
        %v1055 = vunpack.c.h.b16 %v978
        %v1056 = vunpack.c.l.b16 %v979
        %v1057 = vunpack.c.h.b16 %v979
        %v1058 = vunpack.c.l.b16 %v980
        %v1059 = vunpack.c.h.b16 %v980
        %v1060 = vunpack.c.l.b16 %v981
        %v1061 = vunpack.c.h.b16 %v981
        %v1062 = vunpack.c.l.b16 %v982
        %v1063 = vunpack.c.h.b16 %v982
        %v1064 = vunpack.c.l.b16 %v983
        %v1065 = vunpack.c.h.b16 %v983
        %v1066 = vunpack.c.l.b16 %v984
        %v1067 = vunpack.c.h.b16 %v984
        %v1068 = vunpack.c.l.b16 %v985
        %v1069 = vunpack.c.h.b16 %v985
        %v1070 = vpack.c.b16 %v1040, %v1038
        %v1071 = vpack.c.b16 %v1041, %v1039
        %v1072 = vpack.c.b16 %v1044, %v1042
        %v1073 = vpack.c.b16 %v1045, %v1043
        %v1074 = vpack.c.b16 %v1048, %v1046
        %v1075 = vpack.c.b16 %v1049, %v1047
        %v1076 = vpack.c.b16 %v1052, %v1050
        %v1077 = vpack.c.b16 %v1053, %v1051
        %v1078 = vpack.c.b16 %v1056, %v1054
        %v1079 = vpack.c.b16 %v1057, %v1055
        %v1080 = vpack.c.b16 %v1060, %v1058
        %v1081 = vpack.c.b16 %v1061, %v1059
        %v1082 = vpack.c.b16 %v1064, %v1062
        %v1083 = vpack.c.b16 %v1065, %v1063
        %v1084 = vpack.c.b16 %v1068, %v1066
        %v1085 = vpack.c.b16 %v1069, %v1067
        %1102 = vmatprep.subr.bf16.mxu0 %v1085
        %1103 = vmatpush1.bf16.msra.mxu0 %v1084
        %1104 = vmatprep.subr.bf16.mxu0 %v1083
        %1105 = vmatpush1.bf16.msra.mxu0 %v1082
        %1106 = vmatprep.subr.bf16.mxu0 %v1081
        %1107 = vmatpush1.bf16.msra.mxu0 %v1080
        %1108 = vmatprep.subr.bf16.mxu0 %v1079
        %1109 = vmatpush1.bf16.msra.mxu0 %v1078
        %1110 = vmatprep.subr.bf16.mxu0 %v1077
        %1111 = vmatpush1.bf16.msra.mxu0 %v1076
        %1112 = vmatprep.subr.bf16.mxu0 %v1075
        %1113 = vmatpush1.bf16.msra.mxu0 %v1074
        %1114 = vmatprep.subr.bf16.mxu0 %v1073
        %1115 = vmatpush1.bf16.msra.mxu0 %v1072
        %1116 = vmatprep.subr.bf16.mxu0 %v1071
        %1117 = vmatpush1.bf16.msra.mxu0 %v1070
        %1118 = vmatprep.subr.bf16.mxu0 0
        %1119 = vmatpush2.bf16.msra.mxu0 0
        %1120 = vmatprep.subr.bf16.mxu0 0
        %1121 = vmatpush2.bf16.msra.mxu0 0
        %1122 = vmatprep.subr.bf16.mxu0 0
        %1123 = vmatpush2.bf16.msra.mxu0 0
        %1124 = vmatprep.subr.bf16.mxu0 0
        %1125 = vmatpush2.bf16.msra.mxu0 0
        %1126 = vmatprep.subr.bf16.mxu0 0
        %1127 = vmatpush2.bf16.msra.mxu0 0
        %1128 = vmatprep.subr.bf16.mxu0 0
        %1129 = vmatpush2.bf16.msra.mxu0 0
        %1130 = vmatprep.subr.bf16.mxu0 0
        %1131 = vmatpush2.bf16.msra.mxu0 0
        %1132 = vmatprep.subr.bf16.mxu0 0
        %1133 = vmatpush2.bf16.msra.mxu0 0
        %1134 = vmatprep.mubr.bf16.mxu0 0
        %1135 = vmatmul.mubr.bf16.gmra.mxu0 %v1014
        %v1136 = vpop.f32.mrf.mxu0
        %v1137 = vadd.f32 %v991, %v1136
        %v1138 = vpop.f32.mrf.mxu0
        %v1139 = vadd.f32 %v995, %v1138
        %v1140 = vpop.f32.mrf.mxu0
        %v1141 = vadd.f32 %v991, %v1140
        %v1142 = vpop.f32.mrf.mxu0
        %v1143 = vadd.f32 %v995, %v1142
        %1144 = vmatprep.mubr.bf16.mxu0 0
        %1145 = vmatmul.mubr.bf16.gmra.mxu0 %v1015
        %v1146 = vpop.f32.mrf.mxu0
        %v1147 = vadd.f32 %v991, %v1146
        %v1148 = vpop.f32.mrf.mxu0
        %v1149 = vadd.f32 %v995, %v1148
        %v1150 = vpop.f32.mrf.mxu0
        %v1151 = vadd.f32 %v991, %v1150
        %v1152 = vpop.f32.mrf.mxu0
        %v1153 = vadd.f32 %v995, %v1152
        %1154 = vmatprep.mubr.bf16.mxu0 0
        %1155 = vmatmul.mubr.bf16.gmra.mxu0 %v1016
        %v1156 = vpop.f32.mrf.mxu0
        %v1157 = vadd.f32 %v991, %v1156
        %v1158 = vpop.f32.mrf.mxu0
        %v1159 = vadd.f32 %v995, %v1158
        %v1160 = vpop.f32.mrf.mxu0
        %v1161 = vadd.f32 %v991, %v1160
        %v1162 = vpop.f32.mrf.mxu0
        %v1163 = vadd.f32 %v995, %v1162
        %1164 = vmatprep.mubr.bf16.mxu0 0
        %1165 = vmatmul.mubr.bf16.gmra.mxu0 %v1017
        %v1166 = vpop.f32.mrf.mxu0
        %v1167 = vadd.f32 %v991, %v1166
        %v1168 = vpop.f32.mrf.mxu0
        %v1169 = vadd.f32 %v995, %v1168
        %v1170 = vpop.f32.mrf.mxu0
        %v1171 = vadd.f32 %v991, %v1170
        %v1172 = vpop.f32.mrf.mxu0
        %v1173 = vadd.f32 %v995, %v1172
        %1174 = vdwg.mxu0
        %v1175 = vmul.f32 %v1137, %v1137
        %v1176 = vmul.f32 %v1139, %v1139
        %v1177 = vmul.f32 %v1141, %v1141
        %v1178 = vmul.f32 %v1143, %v1143
        %v1179 = vmul.f32 %v1147, %v1147
        %v1180 = vmul.f32 %v1149, %v1149
        %v1181 = vmul.f32 %v1151, %v1151
        %v1182 = vmul.f32 %v1153, %v1153
        %v1183 = vmul.f32 %v1157, %v1157
        %v1184 = vmul.f32 %v1159, %v1159
        %v1185 = vmul.f32 %v1161, %v1161
        %v1186 = vmul.f32 %v1163, %v1163
        %v1187 = vmul.f32 %v1167, %v1167
        %v1188 = vmul.f32 %v1169, %v1169
        %v1189 = vmul.f32 %v1171, %v1171
        %v1190 = vmul.f32 %v1173, %v1173
        %v1191 = vmul.f32 %v1137, %v1175
        %v1192 = vmul.f32 %v1139, %v1176
        %v1193 = vmul.f32 %v1141, %v1177
        %v1194 = vmul.f32 %v1143, %v1178
        %v1195 = vmul.f32 %v1147, %v1179
        %v1196 = vmul.f32 %v1149, %v1180
        %v1197 = vmul.f32 %v1151, %v1181
        %v1198 = vmul.f32 %v1153, %v1182
        %v1199 = vmul.f32 %v1157, %v1183
        %v1200 = vmul.f32 %v1159, %v1184
        %v1201 = vmul.f32 %v1161, %v1185
        %v1202 = vmul.f32 %v1163, %v1186
        %v1203 = vmul.f32 %v1167, %v1187
        %v1204 = vmul.f32 %v1169, %v1188
        %v1205 = vmul.f32 %v1171, %v1189
        %v1206 = vmul.f32 %v1173, %v1190
        %v1207 = vmul.f32 %v1191, 0.044715
        %v1208 = vmul.f32 %v1192, 0.044715
        %v1209 = vmul.f32 %v1193, 0.044715
        %v1210 = vmul.f32 %v1194, 0.044715
        %v1211 = vmul.f32 %v1195, 0.044715
        %v1212 = vmul.f32 %v1196, 0.044715
        %v1213 = vmul.f32 %v1197, 0.044715
        %v1214 = vmul.f32 %v1198, 0.044715
        %v1215 = vmul.f32 %v1199, 0.044715
        %v1216 = vmul.f32 %v1200, 0.044715
        %v1217 = vmul.f32 %v1201, 0.044715
        %v1218 = vmul.f32 %v1202, 0.044715
        %v1219 = vmul.f32 %v1203, 0.044715
        %v1220 = vmul.f32 %v1204, 0.044715
        %v1221 = vmul.f32 %v1205, 0.044715
        %v1222 = vmul.f32 %v1206, 0.044715
        %v1223 = vadd.f32 %v1137, %v1207
        %v1224 = vadd.f32 %v1139, %v1208
        %v1225 = vadd.f32 %v1141, %v1209
        %v1226 = vadd.f32 %v1143, %v1210
        %v1227 = vadd.f32 %v1147, %v1211
        %v1228 = vadd.f32 %v1149, %v1212
        %v1229 = vadd.f32 %v1151, %v1213
        %v1230 = vadd.f32 %v1153, %v1214
        %v1231 = vadd.f32 %v1157, %v1215
        %v1232 = vadd.f32 %v1159, %v1216
        %v1233 = vadd.f32 %v1161, %v1217
        %v1234 = vadd.f32 %v1163, %v1218
        %v1235 = vadd.f32 %v1167, %v1219
        %v1236 = vadd.f32 %v1169, %v1220
        %v1237 = vadd.f32 %v1171, %v1221
        %v1238 = vadd.f32 %v1173, %v1222
        %v1239 = vmul.f32 %v1223, 0.7978846
        %v1240 = vmul.f32 %v1224, 0.7978846
        %v1241 = vmul.f32 %v1225, 0.7978846
        %v1242 = vmul.f32 %v1226, 0.7978846
        %v1243 = vmul.f32 %v1227, 0.7978846
        %v1244 = vmul.f32 %v1228, 0.7978846
        %v1245 = vmul.f32 %v1229, 0.7978846
        %v1246 = vmul.f32 %v1230, 0.7978846
        %v1247 = vmul.f32 %v1231, 0.7978846
        %v1248 = vmul.f32 %v1232, 0.7978846
        %v1249 = vmul.f32 %v1233, 0.7978846
        %v1250 = vmul.f32 %v1234, 0.7978846
        %v1251 = vmul.f32 %v1235, 0.7978846
        %v1252 = vmul.f32 %v1236, 0.7978846
        %v1253 = vmul.f32 %v1237, 0.7978846
        %v1254 = vmul.f32 %v1238, 0.7978846
        %v1255 = vtanh.pop %v1239
        %v1256 = vtanh.pop %v1240
        %v1257 = vtanh.pop %v1241
        %v1258 = vtanh.pop %v1242
        %v1259 = vtanh.pop %v1243
        %v1260 = vtanh.pop %v1244
        %v1261 = vtanh.pop %v1245
        %v1262 = vtanh.pop %v1246
        %v1263 = vtanh.pop %v1247
        %v1264 = vtanh.pop %v1248
        %v1265 = vtanh.pop %v1249
        %v1266 = vtanh.pop %v1250
        %v1267 = vtanh.pop %v1251
        %v1268 = vtanh.pop %v1252
        %v1269 = vtanh.pop %v1253
        %v1270 = vtanh.pop %v1254
        %v1271 = vadd.f32 %v1255, 1.0
        %v1272 = vadd.f32 %v1256, 1.0
        %v1273 = vadd.f32 %v1257, 1.0
        %v1274 = vadd.f32 %v1258, 1.0
        %v1275 = vadd.f32 %v1259, 1.0
        %v1276 = vadd.f32 %v1260, 1.0
        %v1277 = vadd.f32 %v1261, 1.0
        %v1278 = vadd.f32 %v1262, 1.0
        %v1279 = vadd.f32 %v1263, 1.0
        %v1280 = vadd.f32 %v1264, 1.0
        %v1281 = vadd.f32 %v1265, 1.0
        %v1282 = vadd.f32 %v1266, 1.0
        %v1283 = vadd.f32 %v1267, 1.0
        %v1284 = vadd.f32 %v1268, 1.0
        %v1285 = vadd.f32 %v1269, 1.0
        %v1286 = vadd.f32 %v1270, 1.0
        %v1287 = vmul.f32 %v1271, 0.5
        %v1288 = vmul.f32 %v1272, 0.5
        %v1289 = vmul.f32 %v1273, 0.5
        %v1290 = vmul.f32 %v1274, 0.5
        %v1291 = vmul.f32 %v1275, 0.5
        %v1292 = vmul.f32 %v1276, 0.5
        %v1293 = vmul.f32 %v1277, 0.5
        %v1294 = vmul.f32 %v1278, 0.5
        %v1295 = vmul.f32 %v1279, 0.5
        %v1296 = vmul.f32 %v1280, 0.5
        %v1297 = vmul.f32 %v1281, 0.5
        %v1298 = vmul.f32 %v1282, 0.5
        %v1299 = vmul.f32 %v1283, 0.5
        %v1300 = vmul.f32 %v1284, 0.5
        %v1301 = vmul.f32 %v1285, 0.5
        %v1302 = vmul.f32 %v1286, 0.5
        %v1303 = vmul.f32 %v1137, %v1287
        %v1304 = vmul.f32 %v1139, %v1288
        %v1305 = vmul.f32 %v1141, %v1289
        %v1306 = vmul.f32 %v1143, %v1290
        %v1307 = vmul.f32 %v1147, %v1291
        %v1308 = vmul.f32 %v1149, %v1292
        %v1309 = vmul.f32 %v1151, %v1293
        %v1310 = vmul.f32 %v1153, %v1294
        %v1311 = vmul.f32 %v1157, %v1295
        %v1312 = vmul.f32 %v1159, %v1296
        %v1313 = vmul.f32 %v1161, %v1297
        %v1314 = vmul.f32 %v1163, %v1298
        %v1315 = vmul.f32 %v1167, %v1299
        %v1316 = vmul.f32 %v1169, %v1300
        %v1317 = vmul.f32 %v1171, %v1301
        %v1318 = vmul.f32 %v1173, %v1302
        %v1319 = vpack.c.bf16 %v1305, %v1303
        %v1320 = vpack.c.bf16 %v1306, %v1304
        %v1321 = vpack.c.bf16 %v1309, %v1307
        %v1322 = vpack.c.bf16 %v1310, %v1308
        %v1323 = vpack.c.bf16 %v1313, %v1311
        %v1324 = vpack.c.bf16 %v1314, %v1312
        %v1325 = vpack.c.bf16 %v1317, %v1315
        %v1326 = vpack.c.bf16 %v1318, %v1316
        %v1327 = vld [vmem:[#allocation3] sm:$0xff]
        %v1328 = vld [vmem:[#allocation3 + $0x8] sm:$0xff]
        %v1329 = vld [vmem:[#allocation3 + $0x10] sm:$0xff]
        %v1330 = vld [vmem:[#allocation3 + $0x18] sm:$0xff]
        %v1331 = vld [vmem:[#allocation3 + $0x20] sm:$0xff]
        %v1332 = vld [vmem:[#allocation3 + $0x28] sm:$0xff]
        %v1333 = vld [vmem:[#allocation3 + $0x30] sm:$0xff]
        %v1334 = vld [vmem:[#allocation3 + $0x38] sm:$0xff]
        %v1335 = vld [vmem:[%s586] sm:$0xf]
        %v1336 = vld [vmem:[%s586 + $0x4] sm:$0xf]
        %v1337 = vld [vmem:[%s586 + $0x8] sm:$0xf]
        %v1338 = vld [vmem:[%s586 + $0xc] sm:$0xf]
        %v1339 = vld [vmem:[%s586 + $0x10] sm:$0xf]
        %v1340 = vld [vmem:[%s586 + $0x14] sm:$0xf]
        %v1341 = vld [vmem:[%s586 + $0x18] sm:$0xf]
        %v1342 = vld [vmem:[%s586 + $0x1c] sm:$0xf]
        %v1343 = vld [vmem:[%s586 + $0x20] sm:$0xf]
        %v1344 = vld [vmem:[%s586 + $0x24] sm:$0xf]
        %v1345 = vld [vmem:[%s586 + $0x28] sm:$0xf]
        %v1346 = vld [vmem:[%s586 + $0x2c] sm:$0xf]
        %v1347 = vld [vmem:[%s586 + $0x30] sm:$0xf]
        %v1348 = vld [vmem:[%s586 + $0x34] sm:$0xf]
        %v1349 = vld [vmem:[%s586 + $0x38] sm:$0xf]
        %v1350 = vld [vmem:[%s586 + $0x3c] sm:$0xf]
        %v1351 = vld [vmem:[%s586 + $0x40] sm:$0xf]
        %v1352 = vld [vmem:[%s586 + $0x44] sm:$0xf]
        %v1353 = vld [vmem:[%s586 + $0x48] sm:$0xf]
        %v1354 = vld [vmem:[%s586 + $0x4c] sm:$0xf]
        %v1355 = vld [vmem:[%s586 + $0x50] sm:$0xf]
        %v1356 = vld [vmem:[%s586 + $0x54] sm:$0xf]
        %v1357 = vld [vmem:[%s586 + $0x58] sm:$0xf]
        %v1358 = vld [vmem:[%s586 + $0x5c] sm:$0xf]
        %v1359 = vld [vmem:[%s586 + $0x60] sm:$0xf]
        %v1360 = vld [vmem:[%s586 + $0x64] sm:$0xf]
        %v1361 = vld [vmem:[%s586 + $0x68] sm:$0xf]
        %v1362 = vld [vmem:[%s586 + $0x6c] sm:$0xf]
        %v1363 = vld [vmem:[%s586 + $0x70] sm:$0xf]
        %v1364 = vld [vmem:[%s586 + $0x74] sm:$0xf]
        %v1365 = vld [vmem:[%s586 + $0x78] sm:$0xf]
        %v1366 = vld [vmem:[%s586 + $0x7c] sm:$0xf]
        %v1399 = vunpack.c.l.b16 %v1335
        %v1400 = vunpack.c.l.b16 %v1336
        %v1401 = vunpack.c.l.b16 %v1337
        %v1402 = vunpack.c.l.b16 %v1338
        %v1403 = vunpack.c.l.b16 %v1339
        %v1404 = vunpack.c.l.b16 %v1340
        %v1405 = vunpack.c.l.b16 %v1341
        %v1406 = vunpack.c.l.b16 %v1342
        %v1407 = vunpack.c.l.b16 %v1343
        %v1408 = vunpack.c.l.b16 %v1344
        %v1409 = vunpack.c.l.b16 %v1345
        %v1410 = vunpack.c.l.b16 %v1346
        %v1411 = vunpack.c.l.b16 %v1347
        %v1412 = vunpack.c.l.b16 %v1348
        %v1413 = vunpack.c.l.b16 %v1349
        %v1414 = vunpack.c.l.b16 %v1350
        %v1415 = vunpack.c.l.b16 %v1351
        %v1416 = vunpack.c.l.b16 %v1352
        %v1417 = vunpack.c.l.b16 %v1353
        %v1418 = vunpack.c.l.b16 %v1354
        %v1419 = vunpack.c.l.b16 %v1355
        %v1420 = vunpack.c.l.b16 %v1356
        %v1421 = vunpack.c.l.b16 %v1357
        %v1422 = vunpack.c.l.b16 %v1358
        %v1423 = vunpack.c.l.b16 %v1359
        %v1424 = vunpack.c.l.b16 %v1360
        %v1425 = vunpack.c.l.b16 %v1361
        %v1426 = vunpack.c.l.b16 %v1362
        %v1427 = vunpack.c.l.b16 %v1363
        %v1428 = vunpack.c.l.b16 %v1364
        %v1429 = vunpack.c.l.b16 %v1365
        %v1430 = vunpack.c.l.b16 %v1366
        %v1431 = vpack.c.b16 %v1400, %v1399
        %v1432 = vpack.c.b16 %v1402, %v1401
        %v1433 = vpack.c.b16 %v1404, %v1403
        %v1434 = vpack.c.b16 %v1406, %v1405
        %v1435 = vpack.c.b16 %v1408, %v1407
        %v1436 = vpack.c.b16 %v1410, %v1409
        %v1437 = vpack.c.b16 %v1412, %v1411
        %v1438 = vpack.c.b16 %v1414, %v1413
        %v1439 = vpack.c.b16 %v1416, %v1415
        %v1440 = vpack.c.b16 %v1418, %v1417
        %v1441 = vpack.c.b16 %v1420, %v1419
        %v1442 = vpack.c.b16 %v1422, %v1421
        %v1443 = vpack.c.b16 %v1424, %v1423
        %v1444 = vpack.c.b16 %v1426, %v1425
        %v1445 = vpack.c.b16 %v1428, %v1427
        %v1446 = vpack.c.b16 %v1430, %v1429
        %1463 = vmatprep.subr.bf16.mxu0 0
        %1464 = vmatpush1.bf16.msra.mxu0 %v1438
        %1465 = vmatprep.subr.bf16.mxu0 0
        %1466 = vmatpush1.bf16.msra.mxu0 %v1437
        %1467 = vmatprep.subr.bf16.mxu0 0
        %1468 = vmatpush1.bf16.msra.mxu0 %v1436
        %1469 = vmatprep.subr.bf16.mxu0 0
        %1470 = vmatpush1.bf16.msra.mxu0 %v1435
        %1471 = vmatprep.subr.bf16.mxu0 0
        %1472 = vmatpush1.bf16.msra.mxu0 %v1434
        %1473 = vmatprep.subr.bf16.mxu0 0
        %1474 = vmatpush1.bf16.msra.mxu0 %v1433
        %1475 = vmatprep.subr.bf16.mxu0 0
        %1476 = vmatpush1.bf16.msra.mxu0 %v1432
        %1477 = vmatprep.subr.bf16.mxu0 0
        %1478 = vmatpush1.bf16.msra.mxu0 %v1431
        %1479 = vmatprep.subr.bf16.mxu0 0
        %1480 = vmatpush2.bf16.msra.mxu0 %v1446
        %1481 = vmatprep.subr.bf16.mxu0 0
        %1482 = vmatpush2.bf16.msra.mxu0 %v1445
        %1483 = vmatprep.subr.bf16.mxu0 0
        %1484 = vmatpush2.bf16.msra.mxu0 %v1444
        %1485 = vmatprep.subr.bf16.mxu0 0
        %1486 = vmatpush2.bf16.msra.mxu0 %v1443
        %1487 = vmatprep.subr.bf16.mxu0 0
        %1488 = vmatpush2.bf16.msra.mxu0 %v1442
        %1489 = vmatprep.subr.bf16.mxu0 0
        %1490 = vmatpush2.bf16.msra.mxu0 %v1441
        %1491 = vmatprep.subr.bf16.mxu0 0
        %1492 = vmatpush2.bf16.msra.mxu0 %v1440
        %1493 = vmatprep.subr.bf16.mxu0 0
        %1494 = vmatpush2.bf16.msra.mxu0 %v1439
        %1495 = vmatprep.mubr.bf16.mxu0 %v1320
        %1496 = vmatmul.mubr.bf16.gmra.mxu0 %v1319
        %v1497 = vpop.f32.mrf.mxu0
        %v1498 = vadd.f32 0.0, %v1497
        %v1499 = vpop.f32.mrf.mxu0
        %v1500 = vpop.f32.mrf.mxu0
        %v1501 = vadd.f32 0.0, %v1500
        %v1502 = vpop.f32.mrf.mxu0
        %1503 = vmatprep.mubr.bf16.mxu0 %v1322
        %1504 = vmatmul.mubr.bf16.gmra.mxu0 %v1321
        %v1505 = vpop.f32.mrf.mxu0
        %v1506 = vadd.f32 0.0, %v1505
        %v1507 = vpop.f32.mrf.mxu0
        %v1508 = vpop.f32.mrf.mxu0
        %v1509 = vadd.f32 0.0, %v1508
        %v1510 = vpop.f32.mrf.mxu0
        %1511 = vmatprep.mubr.bf16.mxu0 %v1324
        %1512 = vmatmul.mubr.bf16.gmra.mxu0 %v1323
        %v1513 = vpop.f32.mrf.mxu0
        %v1514 = vadd.f32 0.0, %v1513
        %v1515 = vpop.f32.mrf.mxu0
        %v1516 = vpop.f32.mrf.mxu0
        %v1517 = vadd.f32 0.0, %v1516
        %v1518 = vpop.f32.mrf.mxu0
        %1519 = vmatprep.mubr.bf16.mxu0 %v1326
        %1520 = vmatmul.mubr.bf16.gmra.mxu0 %v1325
        %v1521 = vpop.f32.mrf.mxu0
        %v1522 = vadd.f32 0.0, %v1521
        %v1523 = vpop.f32.mrf.mxu0
        %v1524 = vpop.f32.mrf.mxu0
        %v1525 = vadd.f32 0.0, %v1524
        %v1526 = vpop.f32.mrf.mxu0
        %1527 = vdwg.mxu0
        %v1528 = vadd.f32 %v1327, %v1498
        %v1529 = vadd.f32 %v1328, %v1501
        %v1530 = vadd.f32 %v1329, %v1506
        %v1531 = vadd.f32 %v1330, %v1509
        %v1532 = vadd.f32 %v1331, %v1514
        %v1533 = vadd.f32 %v1332, %v1517
        %v1534 = vadd.f32 %v1333, %v1522
        %v1535 = vadd.f32 %v1334, %v1525
        %1536 = vst [vmem:[#allocation3] sm:$0xff] %v1528
        %1537 = vst [vmem:[#allocation3 + $0x8] sm:$0xff] %v1529
        %1538 = vst [vmem:[#allocation3 + $0x10] sm:$0xff] %v1530
        %1539 = vst [vmem:[#allocation3 + $0x18] sm:$0xff] %v1531
        %1540 = vst [vmem:[#allocation3 + $0x20] sm:$0xff] %v1532
        %1541 = vst [vmem:[#allocation3 + $0x28] sm:$0xff] %v1533
        %1542 = vst [vmem:[#allocation3 + $0x30] sm:$0xff] %v1534
        %1543 = vst [vmem:[#allocation3 + $0x38] sm:$0xff] %v1535
        // Predicated region
        $region73: #{vit_forward.13} parent=67 // pred_check
          %p1544 = pneg %p591
        $region74: #{vit_forward.13} parent=67 // pred_check_branch
          %1546 = sbr.rel (%p1544) target = $region76
        $region75: #{vit_forward.13} parent=67 // pred_region
          %v1547 = vld [vmem:[#allocation3] sm:$0xff]
          %v1548 = vld [vmem:[#allocation3 + $0x8] sm:$0xff]
          %v1549 = vld [vmem:[#allocation3 + $0x10] sm:$0xff]
          %v1550 = vld [vmem:[#allocation3 + $0x18] sm:$0xff]
          %v1551 = vld [vmem:[#allocation3 + $0x20] sm:$0xff]
          %v1552 = vld [vmem:[#allocation3 + $0x28] sm:$0xff]
          %v1553 = vld [vmem:[#allocation3 + $0x30] sm:$0xff]
          %v1554 = vld [vmem:[#allocation3 + $0x38] sm:$0xff]
          %v1555 = vld [vmem:[%s9] sm:$0x1]
          %v1557 = vlaneseq
          %v1558 = vshrl.u32 %v1557, 7
          %v1559 = vsub.s32 0, %v1558
          %v1560 = vrot.slane %v1555, %v1559
          %v1562 = vadd.f32 %v1547, %v1560
          %v1563 = vadd.f32 %v1548, %v1560
          %v1564 = vadd.f32 %v1549, %v1560
          %v1565 = vadd.f32 %v1550, %v1560
          %v1566 = vadd.f32 %v1551, %v1560
          %v1567 = vadd.f32 %v1552, %v1560
          %v1568 = vadd.f32 %v1553, %v1560
          %v1569 = vadd.f32 %v1554, %v1560
          %v1570 = vpack.c.bf16 %v1563, %v1562
          %v1571 = vpack.c.bf16 %v1565, %v1564
          %v1572 = vpack.c.bf16 %v1567, %v1566
          %v1573 = vpack.c.bf16 %v1569, %v1568
          %v1578 = vunpack.c.l.b16 %v1570
          %v1579 = vunpack.c.h.b16 %v1570
          %v1580 = vunpack.c.l.b16 %v1571
          %v1581 = vunpack.c.h.b16 %v1571
          %v1582 = vunpack.c.l.b16 %v1572
          %v1583 = vunpack.c.h.b16 %v1572
          %v1584 = vunpack.c.l.b16 %v1573
          %v1585 = vunpack.c.h.b16 %v1573
          %v1586 = vpack.c.b16 %v1578, %v1578
          %v1587 = vpack.c.b16 %v1579, %v1579
          %v1588 = vpack.c.b16 %v1580, %v1580
          %v1589 = vpack.c.b16 %v1581, %v1581
          %v1590 = vpack.c.b16 %v1582, %v1582
          %v1591 = vpack.c.b16 %v1583, %v1583
          %v1592 = vpack.c.b16 %v1584, %v1584
          %v1593 = vpack.c.b16 %v1585, %v1585
          %1602 = vst [vmem:[%s543] sm:$0xf] %v1586
          %1603 = vst [vmem:[%s543 + $0x4] sm:$0xf] %v1587
          %1604 = vst [vmem:[%s543 + $0x8] sm:$0xf] %v1588
          %1605 = vst [vmem:[%s543 + $0xc] sm:$0xf] %v1589
          %1606 = vst [vmem:[%s543 + $0x10] sm:$0xf] %v1590
          %1607 = vst [vmem:[%s543 + $0x14] sm:$0xf] %v1591
          %1608 = vst [vmem:[%s543 + $0x18] sm:$0xf] %v1592
          %1609 = vst [vmem:[%s543 + $0x1c] sm:$0xf] %v1593
          %v1610 = vld [vmem:[%s10] sm:$0x1]
          %v1611 = vld [vmem:[%s11] sm:$0x1]
          %1612 = vadd.xlane.f32.xlu0 %v1562
          %v1613 = vpop.xlane.xlu0 %1612
          %1614 = vadd.xlane.f32.xlu0 %v1563
          %v1615 = vpop.xlane.xlu0 %1614
          %1616 = vadd.xlane.f32.xlu0 %v1564
          %v1617 = vpop.xlane.xlu0 %1616
          %1618 = vadd.xlane.f32.xlu0 %v1565
          %v1619 = vpop.xlane.xlu0 %1618
          %1620 = vadd.xlane.f32.xlu0 %v1566
          %v1621 = vpop.xlane.xlu0 %1620
          %1622 = vadd.xlane.f32.xlu0 %v1567
          %v1623 = vpop.xlane.xlu0 %1622
          %1624 = vadd.xlane.f32.xlu0 %v1568
          %v1625 = vpop.xlane.xlu0 %1624
          %1626 = vadd.xlane.f32.xlu0 %v1569
          %v1627 = vpop.xlane.xlu0 %1626
          %v1628 = vrcp.pop 128.0
          %v1629 = vmul.f32 %v1613, %v1628
          %v1630 = vmul.f32 %v1615, %v1628
          %v1631 = vmul.f32 %v1617, %v1628
          %v1632 = vmul.f32 %v1619, %v1628
          %v1633 = vmul.f32 %v1621, %v1628
          %v1634 = vmul.f32 %v1623, %v1628
          %v1635 = vmul.f32 %v1625, %v1628
          %v1636 = vmul.f32 %v1627, %v1628
          %v1637 = vsub.f32 %v1562, %v1629
          %v1638 = vsub.f32 %v1563, %v1630
          %v1639 = vsub.f32 %v1564, %v1631
          %v1640 = vsub.f32 %v1565, %v1632
          %v1641 = vsub.f32 %v1566, %v1633
          %v1642 = vsub.f32 %v1567, %v1634
          %v1643 = vsub.f32 %v1568, %v1635
          %v1644 = vsub.f32 %v1569, %v1636
          %v1645 = vmul.f32 %v1637, %v1637
          %v1646 = vmul.f32 %v1638, %v1638
          %v1647 = vmul.f32 %v1639, %v1639
          %v1648 = vmul.f32 %v1640, %v1640
          %v1649 = vmul.f32 %v1641, %v1641
          %v1650 = vmul.f32 %v1642, %v1642
          %v1651 = vmul.f32 %v1643, %v1643
          %v1652 = vmul.f32 %v1644, %v1644
          %1653 = vadd.xlane.f32.xlu0 %v1645
          %v1654 = vpop.xlane.xlu0 %1653
          %1655 = vadd.xlane.f32.xlu0 %v1646
          %v1656 = vpop.xlane.xlu0 %1655
          %1657 = vadd.xlane.f32.xlu0 %v1647
          %v1658 = vpop.xlane.xlu0 %1657
          %1659 = vadd.xlane.f32.xlu0 %v1648
          %v1660 = vpop.xlane.xlu0 %1659
          %1661 = vadd.xlane.f32.xlu0 %v1649
          %v1662 = vpop.xlane.xlu0 %1661
          %1663 = vadd.xlane.f32.xlu0 %v1650
          %v1664 = vpop.xlane.xlu0 %1663
          %1665 = vadd.xlane.f32.xlu0 %v1651
          %v1666 = vpop.xlane.xlu0 %1665
          %1667 = vadd.xlane.f32.xlu0 %v1652
          %v1668 = vpop.xlane.xlu0 %1667
          %v1669 = vmul.f32 %v1654, %v1628
          %v1670 = vmul.f32 %v1656, %v1628
          %v1671 = vmul.f32 %v1658, %v1628
          %v1672 = vmul.f32 %v1660, %v1628
          %v1673 = vmul.f32 %v1662, %v1628
          %v1674 = vmul.f32 %v1664, %v1628
          %v1675 = vmul.f32 %v1666, %v1628
          %v1676 = vmul.f32 %v1668, %v1628
          %v1677 = vadd.f32 %v1669, 1e-05
          %v1678 = vadd.f32 %v1670, 1e-05
          %v1679 = vadd.f32 %v1671, 1e-05
          %v1680 = vadd.f32 %v1672, 1e-05
          %v1681 = vadd.f32 %v1673, 1e-05
          %v1682 = vadd.f32 %v1674, 1e-05
          %v1683 = vadd.f32 %v1675, 1e-05
          %v1684 = vadd.f32 %v1676, 1e-05
          %v1685 = vrsqrt.pop %v1677
          %v1686 = vrsqrt.pop %v1678
          %v1687 = vrsqrt.pop %v1679
          %v1688 = vrsqrt.pop %v1680
          %v1689 = vrsqrt.pop %v1681
          %v1690 = vrsqrt.pop %v1682
          %v1691 = vrsqrt.pop %v1683
          %v1692 = vrsqrt.pop %v1684
          %v1693 = vmul.f32 %v1637, %v1685
          %v1694 = vmul.f32 %v1638, %v1686
          %v1695 = vmul.f32 %v1639, %v1687
          %v1696 = vmul.f32 %v1640, %v1688
          %v1697 = vmul.f32 %v1641, %v1689
          %v1698 = vmul.f32 %v1642, %v1690
          %v1699 = vmul.f32 %v1643, %v1691
          %v1700 = vmul.f32 %v1644, %v1692
          %v1702 = vlaneseq
          %v1703 = vshrl.u32 %v1702, 7
          %v1704 = vsub.s32 0, %v1703
          %v1705 = vrot.slane %v1610, %v1704
          %v1707 = vmul.f32 %v1693, %v1705
          %v1708 = vmul.f32 %v1694, %v1705
          %v1709 = vmul.f32 %v1695, %v1705
          %v1710 = vmul.f32 %v1696, %v1705
          %v1711 = vmul.f32 %v1697, %v1705
          %v1712 = vmul.f32 %v1698, %v1705
          %v1713 = vmul.f32 %v1699, %v1705
          %v1714 = vmul.f32 %v1700, %v1705
          %v1716 = vlaneseq
          %v1717 = vshrl.u32 %v1716, 7
          %v1718 = vsub.s32 0, %v1717
          %v1719 = vrot.slane %v1611, %v1718
          %v1721 = vadd.f32 %v1707, %v1719
          %v1722 = vadd.f32 %v1708, %v1719
          %v1723 = vadd.f32 %v1709, %v1719
          %v1724 = vadd.f32 %v1710, %v1719
          %v1725 = vadd.f32 %v1711, %v1719
          %v1726 = vadd.f32 %v1712, %v1719
          %v1727 = vadd.f32 %v1713, %v1719
          %v1728 = vadd.f32 %v1714, %v1719
          %1729 = vst [vmem:[%s550] sm:$0xff] %v1721
          %1730 = vst [vmem:[%s550 + $0x8] sm:$0xff] %v1722
          %1731 = vst [vmem:[%s550 + $0x10] sm:$0xff] %v1723
          %1732 = vst [vmem:[%s550 + $0x18] sm:$0xff] %v1724
          %1733 = vst [vmem:[%s550 + $0x20] sm:$0xff] %v1725
          %1734 = vst [vmem:[%s550 + $0x28] sm:$0xff] %v1726
          %1735 = vst [vmem:[%s550 + $0x30] sm:$0xff] %v1727
          %1736 = vst [vmem:[%s550 + $0x38] sm:$0xff] %v1728
        $region76: #{vit_forward.13} parent=67 // pred_fallthru
          _
        %s1737 = sand.u32 %s341, 1
        %s1738 = scalar_lea.sflag [#allocation5], %s1737
        %s1739 = sand.u32 %s341, 1
        %s1740 = smul.addr %s1739, 32
        %s1741 = scalar_lea.vmem [#allocation4], %s1740
        %s1742 = sand.u32 %s369, 1
        %s1743 = scalar_lea.sflag [#allocation7], %s1742
        %s1744 = sand.u32 %s369, 1
        %s1745 = smul.addr %s1744, 64
        %s1746 = scalar_lea.vmem [#allocation6], %s1745
        // Predicated region
        $region77: #{vit_forward.13} parent=67 // pred_check
          %p1747 = pneg %p351
        $region78: #{vit_forward.13} parent=67 // pred_check_branch
          %1749 = sbr.rel (%p1747) target = $region80
        $region79: #{vit_forward.13} parent=67 // pred_region
          %s1750 = smul.u32 8, %s37
          %s1752 = ssub.s32 512, 512
          %1753 = vsyncadd %s1738, %s1752
          %s1754 = smul.addr %s36, 8
          %s1755 = sadd.s32 %s1750, %s1754
          %s1756 = smul.addr %s1755, 64
          %s1757 = scalar_lea.hbm %s12, %s1756
          %s1758 = sshll.u32 %s1741, 4
          %s1759 = int_to_ptr.vmem [resolvable:$true] %s1758
          %1764 = dma.vmem_to_hbm [thread:$0]  %s1759, 512, %s1757, %s1738, 64, 64, 4
        $region80: #{vit_forward.13} parent=67 // pred_fallthru
          _
        // Predicated region
        $region81: #{vit_forward.13} parent=67 // pred_check
          %p1765 = pneg %p379
        $region82: #{vit_forward.13} parent=67 // pred_check_branch
          %1767 = sbr.rel (%p1765) target = $region84
        $region83: #{vit_forward.13} parent=67 // pred_region
          %s1768 = smul.u32 8, %s37
          %s1770 = ssub.s32 1024, 1024
          %1771 = vsyncadd %s1743, %s1770
          %s1772 = smul.addr %s36, 8
          %s1773 = sadd.s32 %s1768, %s1772
          %s1774 = smul.addr %s1773, 128
          %s1775 = scalar_lea.hbm %s13, %s1774
          %s1776 = sshll.u32 %s1746, 4
          %s1777 = int_to_ptr.vmem [resolvable:$true] %s1776
          %1782 = dma.vmem_to_hbm [thread:$0]  %s1777, 1024, %s1775, %s1743, 128, 128, 8
        $region84: #{vit_forward.13} parent=67 // pred_fallthru
          _
      $region68: #{vit_forward.13} parent=5 // pred_fallthru
        _
      %p1783 = scmp.le.s32.totalorder 2, %s26
      // Predicated region
      $region85: #{vit_forward.13} parent=5 // pred_check
        %p1784 = pneg %p1783
      $region86: #{vit_forward.13} parent=5 // pred_check_branch
        %1786 = sbr.rel (%p1784) target = $region88
      $region87: #{vit_forward.13} parent=5 // pred_region
        %s1787 = ssub.s32 %s26, 2
        // Predicated region
        $region89: #{vit_forward.13} parent=87 // pred_check
          %p1788 = pneg %p357
        $region90: #{vit_forward.13} parent=87 // pred_check_branch
          %1790 = sbr.rel (%p1788) target = $region92
        $region91: #{vit_forward.13} parent=87 // pred_region
          %s1791 = sand.u32 %s342, 1
          %s1792 = scalar_lea.sflag [#allocation5], %s1791
          %s1793 = sand.u32 %s342, 1
          %s1794 = smul.addr %s1793, 32
          %s1795 = scalar_lea.vmem [#allocation4], %s1794
          %1796 = dma.done %s1792, 512
        $region92: #{vit_forward.13} parent=87 // pred_fallthru
          _
        // Predicated region
        $region93: #{vit_forward.13} parent=87 // pred_check
          %p1797 = pneg %p385
        $region94: #{vit_forward.13} parent=87 // pred_check_branch
          %1799 = sbr.rel (%p1797) target = $region96
        $region95: #{vit_forward.13} parent=87 // pred_region
          %s1800 = sand.u32 %s370, 1
          %s1801 = scalar_lea.sflag [#allocation7], %s1800
          %s1802 = sand.u32 %s370, 1
          %s1803 = smul.addr %s1802, 64
          %s1804 = scalar_lea.vmem [#allocation6], %s1803
          %1805 = dma.done %s1801, 1024
        $region96: #{vit_forward.13} parent=87 // pred_fallthru
          _
      $region88: #{vit_forward.13} parent=5 // pred_fallthru
        _
    $region6: #{vit_forward.13} parent=1 // loop_footer
      %s30 = sadd.s32 1, %s26
    $region7: #{vit_forward.13} parent=1 // loop_footer_branch
      %25 = sbr.rel target = $region3
    $region8: #{vit_forward.13} parent=1 // loop_exit
      _
    %1806 = vsyncpa [#allocation5], 1
    %s1807 = scalar_lea.sflag [#allocation5], 1
    %1808 = vsyncpa %s1807, 1
    %1809 = vsyncpa [#allocation7], 1
    %s1810 = scalar_lea.sflag [#allocation7], 1
    %1811 = vsyncpa %s1810, 1

// kernel: vit_forward.10
$region0: #{vit_forward.10}
  #allocation0 [shape = 'u32[]', space=smem, size = 0x4, offset = 0x4, fixed_abs, tag = 'smem constant byte address 0x4 - core index']
  #allocation1 [shape = 'u32[144,128]{1,0:T(1,128)}', space=vmem, size = 0x12000, scoped, tag = 'internal scratch']
  #allocation2 [shape = 'bf16[64,128]{1,0:T(8,128)(2,1)}', space=vmem, size = 0x4000, scoped, tag = 'scratch operand']
  #allocation3 [shape = 'f32[64,128]{1,0:T(8,128)}', space=vmem, size = 0x8000, scoped, tag = 'scratch operand']
  %s0 = inlined_call_operand.vmem [shape: bf16[2,64,128], index: 0, kind: input, shape index: {}]
  %s1 = inlined_call_operand.vmem [shape: bf16[2,64,128], index: 1, kind: input, shape index: {}]
  %s2 = inlined_call_operand.vmem [shape: bf16[128,128], index: 2, kind: input, shape index: {}]
  %s3 = inlined_call_operand.vmem [shape: f32[1,128], index: 3, kind: input, shape index: {}]
  %s4 = inlined_call_operand.vmem [shape: f32[1,128], index: 4, kind: input, shape index: {}]
  %s5 = inlined_call_operand.vmem [shape: f32[1,128], index: 5, kind: input, shape index: {}]
  %s6 = inlined_call_operand.vmem [shape: bf16[128,256], index: 6, kind: input, shape index: {}]
  %s7 = inlined_call_operand.vmem [shape: f32[1,256], index: 7, kind: input, shape index: {}]
  %s8 = inlined_call_operand.vmem [shape: bf16[256,128], index: 8, kind: input, shape index: {}]
  %s9 = inlined_call_operand.vmem [shape: f32[1,128], index: 9, kind: input, shape index: {}]
  %s10 = inlined_call_operand.vmem [shape: bf16[2,64,128], index: 10, kind: output, shape index: {}]
  %s11 = sld [smem:[#allocation0]]
  $region81: #{vit_forward.10} parent=0
    _
  %s13 = ssub.s32 1, %s11
  %s14 = scalar_select 0, %s13, %s11
  loop: start=0, step=1, limit=4
  $region2: #{vit_forward.10} parent=0 // loop_pre_header
    _
  $region3: #{vit_forward.10} parent=0 // loop_header
    %s16 = sphi 0, %s20
    %p17 = scmp.ge.s32.totalorder %s16, 4
    %s23 = sphi 0, %s42
    %s24 = sphi 0, %s38
    %s25 = sphi 0, %s34
    %s26 = sphi 0, %s23
    %s27 = sphi 0, %s24
    %s28 = sphi 0, %s25
    %s29 = sphi 0, %s26
    %s30 = sphi 0, %s27
    %s31 = sphi 0, %s28
    %s47 = sphi 0, %s49
    %s50 = sphi 0, %s47
    %s51 = sphi 0, %s50
    %s67 = sphi 0, %s51
    %s75 = sphi 0, %s77
    %s78 = sphi 0, %s75
    %s79 = sphi 0, %s78
    %s95 = sphi 0, %s79
    %s99 = sphi 0, %s99
    %s101 = sphi 0, %s99
    %s102 = sphi 0, %s101
    %s116 = sphi 0, %s102
    %s120 = sphi 0, %s120
    %s122 = sphi 0, %s120
    %s123 = sphi 0, %s122
    %s137 = sphi 0, %s123
    %s141 = sphi 0, %s141
    %s143 = sphi 0, %s141
    %s144 = sphi 0, %s143
    %s158 = sphi 0, %s144
    %s162 = sphi 0, %s162
    %s164 = sphi 0, %s162
    %s165 = sphi 0, %s164
    %s179 = sphi 0, %s165
    %s185 = sphi 0, %s187
    %s188 = sphi 0, %s185
    %s189 = sphi 0, %s188
    %s205 = sphi 0, %s189
    %s211 = sphi 0, %s213
    %s214 = sphi 0, %s211
    %s215 = sphi 0, %s214
    %s231 = sphi 0, %s215
    %s237 = sphi 0, %s239
    %s240 = sphi 0, %s237
    %s241 = sphi 0, %s240
    %s257 = sphi 0, %s241
    %s261 = sphi 0, %s261
    %s263 = sphi 0, %s261
    %s264 = sphi 0, %s263
    %s278 = sphi 0, %s264
    %s286 = sphi 0, %s288
    %s289 = sphi 0, %s286
    %s290 = sphi 0, %s289
    %s306 = sphi 0, %s290
  $region4: #{vit_forward.10} parent=0 // loop_header_branch
    %19 = sbr.rel (%p17) target = $region8
  $region5: #{vit_forward.10} parent=0 // loop_body
    %s21 = ssub.s32 %s16, 1
    %s22 = ssub.s32 %s16, 2
    %s32 = sadd.s32 1, %s25
    %p33 = scmp.ge.s32.totalorder %s32, 1
    %s34 = scalar_select %p33, 0, %s32
    %s35 = sadd.s32 1, %s24
    %s36 = scalar_select %p33, %s35, %s24
    %p37 = scmp.ge.s32.totalorder %s36, 1
    %s38 = scalar_select %p37, 0, %s36
    %s39 = sadd.s32 1, %s23
    %s40 = scalar_select %p37, %s39, %s23
    %p41 = scmp.ge.s32.totalorder %s40, 2
    %s42 = scalar_select %p41, 0, %s40
    %s43 = ssub.s32 %s23, %s42
    %s44 = ssub.s32 %s24, %s38
    %s45 = sor.u32 %s43, %s44
    %p46 = scmp.eq.s32.totalorder %s45, 0
    %s48 = sadd.s32 %s47, 1
    %s49 = scalar_select %p46, %s47, %s48
    %p52 = pneg %p46
    %p53 = scmp.eq.s32.totalorder %s16, 1
    %p54 = por %p52, %p53
    %p55 = scmp.ne.s32.totalorder %s47, %s50
    %p56 = scmp.eq.s32.totalorder %s16, 0
    %p57 = por %p55, %p56
    %p58 = scmp.ne.s32.totalorder %s47, %s50
    %p59 = scmp.eq.s32.totalorder %s21, 1
    %p60 = por %p58, %p59
    %p61 = scmp.ne.s32.totalorder %s50, %s51
    %p62 = scmp.eq.s32.totalorder %s21, 0
    %p63 = por %p61, %p62
    %p64 = scmp.ne.s32.totalorder %s50, %s51
    %p65 = scmp.eq.s32.totalorder %s22, 1
    %p66 = por %p64, %p65
    %p68 = scmp.ne.s32.totalorder %s51, %s67
    %p69 = scmp.eq.s32.totalorder %s22, 0
    %p70 = por %p68, %p69
    %s71 = ssub.s32 %s23, %s42
    %s72 = ssub.s32 %s24, %s38
    %s73 = sor.u32 %s71, %s72
    %p74 = scmp.eq.s32.totalorder %s73, 0
    %s76 = sadd.s32 %s75, 1
    %s77 = scalar_select %p74, %s75, %s76
    %p80 = pneg %p74
    %p81 = scmp.eq.s32.totalorder %s16, 1
    %p82 = por %p80, %p81
    %p83 = scmp.ne.s32.totalorder %s75, %s78
    %p84 = scmp.eq.s32.totalorder %s16, 0
    %p85 = por %p83, %p84
    %p86 = scmp.ne.s32.totalorder %s75, %s78
    %p87 = scmp.eq.s32.totalorder %s21, 1
    %p88 = por %p86, %p87
    %p89 = scmp.ne.s32.totalorder %s78, %s79
    %p90 = scmp.eq.s32.totalorder %s21, 0
    %p91 = por %p89, %p90
    %p92 = scmp.ne.s32.totalorder %s78, %s79
    %p93 = scmp.eq.s32.totalorder %s22, 1
    %p94 = por %p92, %p93
    %p96 = scmp.ne.s32.totalorder %s79, %s95
    %p97 = scmp.eq.s32.totalorder %s22, 0
    %p98 = por %p96, %p97
    %s100 = sadd.s32 %s99, 1
    %p103 = scmp.eq.s32.totalorder %s16, 1
    %p104 = scmp.ne.s32.totalorder %s99, %s101
    %p105 = scmp.eq.s32.totalorder %s16, 0
    %p106 = por %p104, %p105
    %p107 = scmp.ne.s32.totalorder %s99, %s101
    %p108 = scmp.eq.s32.totalorder %s21, 1
    %p109 = por %p107, %p108
    %p110 = scmp.ne.s32.totalorder %s101, %s102
    %p111 = scmp.eq.s32.totalorder %s21, 0
    %p112 = por %p110, %p111
    %p113 = scmp.ne.s32.totalorder %s101, %s102
    %p114 = scmp.eq.s32.totalorder %s22, 1
    %p115 = por %p113, %p114
    %p117 = scmp.ne.s32.totalorder %s102, %s116
    %p118 = scmp.eq.s32.totalorder %s22, 0
    %p119 = por %p117, %p118
    %s121 = sadd.s32 %s120, 1
    %p124 = scmp.eq.s32.totalorder %s16, 1
    %p125 = scmp.ne.s32.totalorder %s120, %s122
    %p126 = scmp.eq.s32.totalorder %s16, 0
    %p127 = por %p125, %p126
    %p128 = scmp.ne.s32.totalorder %s120, %s122
    %p129 = scmp.eq.s32.totalorder %s21, 1
    %p130 = por %p128, %p129
    %p131 = scmp.ne.s32.totalorder %s122, %s123
    %p132 = scmp.eq.s32.totalorder %s21, 0
    %p133 = por %p131, %p132
    %p134 = scmp.ne.s32.totalorder %s122, %s123
    %p135 = scmp.eq.s32.totalorder %s22, 1
    %p136 = por %p134, %p135
    %p138 = scmp.ne.s32.totalorder %s123, %s137
    %p139 = scmp.eq.s32.totalorder %s22, 0
    %p140 = por %p138, %p139
    %s142 = sadd.s32 %s141, 1
    %p145 = scmp.eq.s32.totalorder %s16, 1
    %p146 = scmp.ne.s32.totalorder %s141, %s143
    %p147 = scmp.eq.s32.totalorder %s16, 0
    %p148 = por %p146, %p147
    %p149 = scmp.ne.s32.totalorder %s141, %s143
    %p150 = scmp.eq.s32.totalorder %s21, 1
    %p151 = por %p149, %p150
    %p152 = scmp.ne.s32.totalorder %s143, %s144
    %p153 = scmp.eq.s32.totalorder %s21, 0
    %p154 = por %p152, %p153
    %p155 = scmp.ne.s32.totalorder %s143, %s144
    %p156 = scmp.eq.s32.totalorder %s22, 1
    %p157 = por %p155, %p156
    %p159 = scmp.ne.s32.totalorder %s144, %s158
    %p160 = scmp.eq.s32.totalorder %s22, 0
    %p161 = por %p159, %p160
    %s163 = sadd.s32 %s162, 1
    %p166 = scmp.eq.s32.totalorder %s16, 1
    %p167 = scmp.ne.s32.totalorder %s162, %s164
    %p168 = scmp.eq.s32.totalorder %s16, 0
    %p169 = por %p167, %p168
    %p170 = scmp.ne.s32.totalorder %s162, %s164
    %p171 = scmp.eq.s32.totalorder %s21, 1
    %p172 = por %p170, %p171
    %p173 = scmp.ne.s32.totalorder %s164, %s165
    %p174 = scmp.eq.s32.totalorder %s21, 0
    %p175 = por %p173, %p174
    %p176 = scmp.ne.s32.totalorder %s164, %s165
    %p177 = scmp.eq.s32.totalorder %s22, 1
    %p178 = por %p176, %p177
    %p180 = scmp.ne.s32.totalorder %s165, %s179
    %p181 = scmp.eq.s32.totalorder %s22, 0
    %p182 = por %p180, %p181
    %s183 = ssub.s32 %s25, %s34
    %p184 = scmp.eq.s32.totalorder %s183, 0
    %s186 = sadd.s32 %s185, 1
    %s187 = scalar_select %p184, %s185, %s186
    %p190 = pneg %p184
    %p191 = scmp.eq.s32.totalorder %s16, 1
    %p192 = por %p190, %p191
    %p193 = scmp.ne.s32.totalorder %s185, %s188
    %p194 = scmp.eq.s32.totalorder %s16, 0
    %p195 = por %p193, %p194
    %p196 = scmp.ne.s32.totalorder %s185, %s188
    %p197 = scmp.eq.s32.totalorder %s21, 1
    %p198 = por %p196, %p197
    %p199 = scmp.ne.s32.totalorder %s188, %s189
    %p200 = scmp.eq.s32.totalorder %s21, 0
    %p201 = por %p199, %p200
    %p202 = scmp.ne.s32.totalorder %s188, %s189
    %p203 = scmp.eq.s32.totalorder %s22, 1
    %p204 = por %p202, %p203
    %p206 = scmp.ne.s32.totalorder %s189, %s205
    %p207 = scmp.eq.s32.totalorder %s22, 0
    %p208 = por %p206, %p207
    %s209 = ssub.s32 %s25, %s34
    %p210 = scmp.eq.s32.totalorder %s209, 0
    %s212 = sadd.s32 %s211, 1
    %s213 = scalar_select %p210, %s211, %s212
    %p216 = pneg %p210
    %p217 = scmp.eq.s32.totalorder %s16, 1
    %p218 = por %p216, %p217
    %p219 = scmp.ne.s32.totalorder %s211, %s214
    %p220 = scmp.eq.s32.totalorder %s16, 0
    %p221 = por %p219, %p220
    %p222 = scmp.ne.s32.totalorder %s211, %s214
    %p223 = scmp.eq.s32.totalorder %s21, 1
    %p224 = por %p222, %p223
    %p225 = scmp.ne.s32.totalorder %s214, %s215
    %p226 = scmp.eq.s32.totalorder %s21, 0
    %p227 = por %p225, %p226
    %p228 = scmp.ne.s32.totalorder %s214, %s215
    %p229 = scmp.eq.s32.totalorder %s22, 1
    %p230 = por %p228, %p229
    %p232 = scmp.ne.s32.totalorder %s215, %s231
    %p233 = scmp.eq.s32.totalorder %s22, 0
    %p234 = por %p232, %p233
    %s235 = ssub.s32 %s25, %s34
    %p236 = scmp.eq.s32.totalorder %s235, 0
    %s238 = sadd.s32 %s237, 1
    %s239 = scalar_select %p236, %s237, %s238
    %p242 = pneg %p236
    %p243 = scmp.eq.s32.totalorder %s16, 1
    %p244 = por %p242, %p243
    %p245 = scmp.ne.s32.totalorder %s237, %s240
    %p246 = scmp.eq.s32.totalorder %s16, 0
    %p247 = por %p245, %p246
    %p248 = scmp.ne.s32.totalorder %s237, %s240
    %p249 = scmp.eq.s32.totalorder %s21, 1
    %p250 = por %p248, %p249
    %p251 = scmp.ne.s32.totalorder %s240, %s241
    %p252 = scmp.eq.s32.totalorder %s21, 0
    %p253 = por %p251, %p252
    %p254 = scmp.ne.s32.totalorder %s240, %s241
    %p255 = scmp.eq.s32.totalorder %s22, 1
    %p256 = por %p254, %p255
    %p258 = scmp.ne.s32.totalorder %s241, %s257
    %p259 = scmp.eq.s32.totalorder %s22, 0
    %p260 = por %p258, %p259
    %s262 = sadd.s32 %s261, 1
    %p265 = scmp.eq.s32.totalorder %s16, 1
    %p266 = scmp.ne.s32.totalorder %s261, %s263
    %p267 = scmp.eq.s32.totalorder %s16, 0
    %p268 = por %p266, %p267
    %p269 = scmp.ne.s32.totalorder %s261, %s263
    %p270 = scmp.eq.s32.totalorder %s21, 1
    %p271 = por %p269, %p270
    %p272 = scmp.ne.s32.totalorder %s263, %s264
    %p273 = scmp.eq.s32.totalorder %s21, 0
    %p274 = por %p272, %p273
    %p275 = scmp.ne.s32.totalorder %s263, %s264
    %p276 = scmp.eq.s32.totalorder %s22, 1
    %p277 = por %p275, %p276
    %p279 = scmp.ne.s32.totalorder %s264, %s278
    %p280 = scmp.eq.s32.totalorder %s22, 0
    %p281 = por %p279, %p280
    %s282 = ssub.s32 %s23, %s42
    %s283 = ssub.s32 %s24, %s38
    %s284 = sor.u32 %s282, %s283
    %p285 = scmp.eq.s32.totalorder %s284, 0
    %s287 = sadd.s32 %s286, 1
    %s288 = scalar_select %p285, %s286, %s287
    %p291 = pneg %p285
    %p292 = scmp.eq.s32.totalorder %s16, 1
    %p293 = por %p291, %p292
    %p294 = scmp.ne.s32.totalorder %s286, %s289
    %p295 = scmp.eq.s32.totalorder %s16, 0
    %p296 = por %p294, %p295
    %p297 = scmp.ne.s32.totalorder %s286, %s289
    %p298 = scmp.eq.s32.totalorder %s21, 1
    %p299 = por %p297, %p298
    %p300 = scmp.ne.s32.totalorder %s289, %s290
    %p301 = scmp.eq.s32.totalorder %s21, 0
    %p302 = por %p300, %p301
    %p303 = scmp.ne.s32.totalorder %s289, %s290
    %p304 = scmp.eq.s32.totalorder %s22, 1
    %p305 = por %p303, %p304
    %p307 = scmp.ne.s32.totalorder %s290, %s306
    %p308 = scmp.eq.s32.totalorder %s22, 0
    %p309 = por %p307, %p308
    %p310 = scmp.le.s32.totalorder 1, %s16
    %p311 = scmp.lt.s32.totalorder %s16, 3
    %p312 = pnand %p310, %p311
    %p313 = pneg %p312
    // Predicated region
    $region9: #{vit_forward.10} parent=5 // pred_check
      _
    $region10: #{vit_forward.10} parent=5 // pred_check_branch
      %315 = sbr.rel (%p312) target = $region12
    $region11: #{vit_forward.10} parent=5 // pred_region
      %s316 = ssub.s32 %s16, 1
      // Predicated region
      $region13: #{vit_forward.10} parent=11 // pred_check
        %p317 = pneg %p112
      $region14: #{vit_forward.10} parent=11 // pred_check_branch
        %319 = sbr.rel (%p317) target = $region16
      $region15: #{vit_forward.10} parent=11 // pred_region
        _
      $region16: #{vit_forward.10} parent=11 // pred_fallthru
        _
      // Predicated region
      $region17: #{vit_forward.10} parent=11 // pred_check
        %p320 = pneg %p133
      $region18: #{vit_forward.10} parent=11 // pred_check_branch
        %322 = sbr.rel (%p320) target = $region20
      $region19: #{vit_forward.10} parent=11 // pred_region
        _
      $region20: #{vit_forward.10} parent=11 // pred_fallthru
        _
      // Predicated region
      $region21: #{vit_forward.10} parent=11 // pred_check
        %p323 = pneg %p154
      $region22: #{vit_forward.10} parent=11 // pred_check_branch
        %325 = sbr.rel (%p323) target = $region24
      $region23: #{vit_forward.10} parent=11 // pred_region
        _
      $region24: #{vit_forward.10} parent=11 // pred_fallthru
        _
      // Predicated region
      $region25: #{vit_forward.10} parent=11 // pred_check
        %p326 = pneg %p175
      $region26: #{vit_forward.10} parent=11 // pred_check_branch
        %328 = sbr.rel (%p326) target = $region28
      $region27: #{vit_forward.10} parent=11 // pred_region
        _
      $region28: #{vit_forward.10} parent=11 // pred_fallthru
        _
      // Predicated region
      $region29: #{vit_forward.10} parent=11 // pred_check
        %p329 = pneg %p201
      $region30: #{vit_forward.10} parent=11 // pred_check_branch
        %331 = sbr.rel (%p329) target = $region32
      $region31: #{vit_forward.10} parent=11 // pred_region
        %s332 = smul.u32 2, %s28
        %p333 = scmp.lt.s32.totalorder %s332, 1
        %s334 = scalar_select %p333, %s332, 1
        %s335 = smul.addr %s334, 4
        %s336 = scalar_lea.vmem %s6, %s335
        %s337 = smul.u32 2, %s28
      $region32: #{vit_forward.10} parent=11 // pred_fallthru
        _
      // Predicated region
      $region33: #{vit_forward.10} parent=11 // pred_check
        %p338 = pneg %p227
      $region34: #{vit_forward.10} parent=11 // pred_check_branch
        %340 = sbr.rel (%p338) target = $region36
      $region35: #{vit_forward.10} parent=11 // pred_region
        %s341 = smul.u32 2, %s28
        %p342 = scmp.lt.s32.totalorder %s341, 1
        %s343 = scalar_select %p342, %s341, 1
        %s344 = scalar_lea.vmem %s7, %s343
        %s345 = smul.u32 2, %s28
      $region36: #{vit_forward.10} parent=11 // pred_fallthru
        _
      // Predicated region
      $region37: #{vit_forward.10} parent=11 // pred_check
        %p346 = pneg %p253
      $region38: #{vit_forward.10} parent=11 // pred_check_branch
        %348 = sbr.rel (%p346) target = $region40
      $region39: #{vit_forward.10} parent=11 // pred_region
        %s349 = smul.u32 32, %s28
        %p350 = scmp.lt.s32.totalorder %s349, 31
        %s351 = scalar_select %p350, %s349, 31
        %s352 = smul.addr %s351, 4
        %s353 = scalar_lea.vmem %s8, %s352
        %s354 = smul.u32 32, %s28
      $region40: #{vit_forward.10} parent=11 // pred_fallthru
        _
      // Predicated region
      $region41: #{vit_forward.10} parent=11 // pred_check
        %p355 = pneg %p274
      $region42: #{vit_forward.10} parent=11 // pred_check_branch
        %357 = sbr.rel (%p355) target = $region44
      $region43: #{vit_forward.10} parent=11 // pred_region
        _
      $region44: #{vit_forward.10} parent=11 // pred_fallthru
        _
    $region12: #{vit_forward.10} parent=5 // pred_fallthru
      _
    %p358 = scmp.lt.s32.totalorder %s16, 2
    // Predicated region
    $region45: #{vit_forward.10} parent=5 // pred_check
      %p359 = pneg %p358
    $region46: #{vit_forward.10} parent=5 // pred_check_branch
      %361 = sbr.rel (%p359) target = $region48
    $region47: #{vit_forward.10} parent=5 // pred_region
      // Predicated region
      $region49: #{vit_forward.10} parent=47 // pred_check
        %p362 = pneg %p57
      $region50: #{vit_forward.10} parent=47 // pred_check_branch
        %364 = sbr.rel (%p362) target = $region52
      $region51: #{vit_forward.10} parent=47 // pred_region
        %s365 = smul.u32 8, %s24
        %p366 = scmp.lt.s32.totalorder %s23, 1
        %s367 = scalar_select %p366, %s23, 1
        %p368 = scmp.lt.s32.totalorder %s365, 7
        %s369 = scalar_select %p368, %s365, 7
        %s370 = smul.addr %s367, 8
        %s371 = sadd.s32 %s369, %s370
        %s372 = smul.addr %s371, 4
        %s373 = scalar_lea.vmem %s0, %s372
        %s374 = smul.u32 8, %s24
      $region52: #{vit_forward.10} parent=47 // pred_fallthru
        _
      // Predicated region
      $region53: #{vit_forward.10} parent=47 // pred_check
        %p375 = pneg %p85
      $region54: #{vit_forward.10} parent=47 // pred_check_branch
        %377 = sbr.rel (%p375) target = $region56
      $region55: #{vit_forward.10} parent=47 // pred_region
        %s378 = smul.u32 8, %s24
        %p379 = scmp.lt.s32.totalorder %s23, 1
        %s380 = scalar_select %p379, %s23, 1
        %p381 = scmp.lt.s32.totalorder %s378, 7
        %s382 = scalar_select %p381, %s378, 7
        %s383 = smul.addr %s380, 8
        %s384 = sadd.s32 %s382, %s383
        %s385 = smul.addr %s384, 4
        %s386 = scalar_lea.vmem %s1, %s385
        %s387 = smul.u32 8, %s24
      $region56: #{vit_forward.10} parent=47 // pred_fallthru
        _
    $region48: #{vit_forward.10} parent=5 // pred_fallthru
      _
    %p388 = scmp.le.s32.totalorder 1, %s16
    %p389 = scmp.lt.s32.totalorder %s16, 3
    %p390 = pnand %p388, %p389
    %p391 = pneg %p390
    // Predicated region
    $region57: #{vit_forward.10} parent=5 // pred_check
      _
    $region58: #{vit_forward.10} parent=5 // pred_check_branch
      %393 = sbr.rel (%p390) target = $region60
    $region59: #{vit_forward.10} parent=5 // pred_region
      %s394 = ssub.s32 %s16, 1
      %s395 = smul.u32 8, %s27
      %p396 = scmp.lt.s32.totalorder %s26, 1
      %s397 = scalar_select %p396, %s26, 1
      %p398 = scmp.lt.s32.totalorder %s395, 7
      %s399 = scalar_select %p398, %s395, 7
      %s400 = smul.addr %s397, 8
      %s401 = sadd.s32 %s399, %s400
      %s402 = smul.addr %s401, 4
      %s403 = scalar_lea.vmem %s0, %s402
      %p404 = pneg %p63
      %p405 = pneg %p60
      %s406 = smul.u32 8, %s27
      %p407 = scmp.lt.s32.totalorder %s26, 1
      %s408 = scalar_select %p407, %s26, 1
      %p409 = scmp.lt.s32.totalorder %s406, 7
      %s410 = scalar_select %p409, %s406, 7
      %s411 = smul.addr %s408, 8
      %s412 = sadd.s32 %s410, %s411
      %s413 = smul.addr %s412, 4
      %s414 = scalar_lea.vmem %s1, %s413
      %p415 = pneg %p91
      %p416 = pneg %p88
      %p417 = pneg %p112
      %p418 = pneg %p109
      %p419 = pneg %p133
      %p420 = pneg %p130
      %p421 = pneg %p154
      %p422 = pneg %p151
      %p423 = pneg %p175
      %p424 = pneg %p172
      %s425 = smul.u32 2, %s28
      %p426 = scmp.lt.s32.totalorder %s425, 1
      %s427 = scalar_select %p426, %s425, 1
      %s428 = smul.addr %s427, 4
      %s429 = scalar_lea.vmem %s6, %s428
      %p430 = pneg %p201
      %p431 = pneg %p198
      %s432 = smul.u32 2, %s28
      %p433 = scmp.lt.s32.totalorder %s432, 1
      %s434 = scalar_select %p433, %s432, 1
      %s435 = scalar_lea.vmem %s7, %s434
      %p436 = pneg %p227
      %p437 = pneg %p224
      %s438 = smul.u32 32, %s28
      %p439 = scmp.lt.s32.totalorder %s438, 31
      %s440 = scalar_select %p439, %s438, 31
      %s441 = smul.addr %s440, 4
      %s442 = scalar_lea.vmem %s8, %s441
      %p443 = pneg %p253
      %p444 = pneg %p250
      %p445 = pneg %p274
      %p446 = pneg %p271
      %p447 = pneg %p302
      %p448 = pneg %p299
      %s449 = smul.u32 8, %s27
      %p450 = scmp.lt.s32.totalorder %s26, 1
      %s451 = scalar_select %p450, %s26, 1
      %p452 = scmp.lt.s32.totalorder %s449, 7
      %s453 = scalar_select %p452, %s449, 7
      %s454 = smul.addr %s451, 8
      %s455 = sadd.s32 %s453, %s454
      %s456 = smul.addr %s455, 4
      %s457 = scalar_lea.vmem %s10, %s456
      %s458 = smul.u32 8, %s27
      %p459 = scmp.lt.s32.totalorder %s26, 1
      %s460 = scalar_select %p459, %s26, 1
      %p461 = scmp.lt.s32.totalorder %s458, 7
      %s462 = scalar_select %p461, %s458, 7
      %s463 = smul.addr %s460, 8
      %s464 = sadd.s32 %s462, %s463
      %s465 = smul.addr %s464, 4
      %s466 = scalar_lea.vmem %s0, %s465
      %s467 = smul.u32 8, %s27
      %s468 = smul.u32 8, %s27
      %p469 = scmp.lt.s32.totalorder %s26, 1
      %s470 = scalar_select %p469, %s26, 1
      %p471 = scmp.lt.s32.totalorder %s468, 7
      %s472 = scalar_select %p471, %s468, 7
      %s473 = smul.addr %s470, 8
      %s474 = sadd.s32 %s472, %s473
      %s475 = smul.addr %s474, 4
      %s476 = scalar_lea.vmem %s1, %s475
      %s477 = smul.u32 8, %s27
      %s478 = smul.u32 2, %s28
      %p479 = scmp.lt.s32.totalorder %s478, 1
      %s480 = scalar_select %p479, %s478, 1
      %s481 = smul.addr %s480, 4
      %s482 = scalar_lea.vmem %s6, %s481
      %s483 = smul.u32 2, %s28
      %s484 = smul.u32 2, %s28
      %p485 = scmp.lt.s32.totalorder %s484, 1
      %s486 = scalar_select %p485, %s484, 1
      %s487 = scalar_lea.vmem %s7, %s486
      %s488 = smul.u32 2, %s28
      %s489 = smul.u32 32, %s28
      %p490 = scmp.lt.s32.totalorder %s489, 31
      %s491 = scalar_select %p490, %s489, 31
      %s492 = smul.addr %s491, 4
      %s493 = scalar_lea.vmem %s8, %s492
      %s494 = smul.u32 32, %s28
      %s495 = smul.u32 8, %s27
      %p496 = scmp.lt.s32.totalorder %s26, 1
      %s497 = scalar_select %p496, %s26, 1
      %p498 = scmp.lt.s32.totalorder %s495, 7
      %s499 = scalar_select %p498, %s495, 7
      %s500 = smul.addr %s497, 8
      %s501 = sadd.s32 %s499, %s500
      %s502 = smul.addr %s501, 4
      %s503 = scalar_lea.vmem %s10, %s502
      %s504 = smul.u32 8, %s27
      %p506 = scmp.eq.s32.totalorder %s28, 0
      // Predicated region
      $region61: #{vit_forward.10} parent=59 // pred_check
        %p507 = pneg %p506
      $region62: #{vit_forward.10} parent=59 // pred_check_branch
        %509 = sbr.rel (%p507) target = $region64
      $region63: #{vit_forward.10} parent=59 // pred_region
        %v510 = vld [vmem:[%s476] sm:$0xf]
        %v511 = vld [vmem:[%s476 + $0x4] sm:$0xf]
        %v512 = vld [vmem:[%s476 + $0x8] sm:$0xf]
        %v513 = vld [vmem:[%s476 + $0xc] sm:$0xf]
        %v514 = vld [vmem:[%s476 + $0x10] sm:$0xf]
        %v515 = vld [vmem:[%s476 + $0x14] sm:$0xf]
        %v516 = vld [vmem:[%s476 + $0x18] sm:$0xf]
        %v517 = vld [vmem:[%s476 + $0x1c] sm:$0xf]
        %v518 = vld [vmem:[%s2] sm:$0xf]
        %v519 = vld [vmem:[%s2 + $0x4] sm:$0xf]
        %v520 = vld [vmem:[%s2 + $0x8] sm:$0xf]
        %v521 = vld [vmem:[%s2 + $0xc] sm:$0xf]
        %v522 = vld [vmem:[%s2 + $0x10] sm:$0xf]
        %v523 = vld [vmem:[%s2 + $0x14] sm:$0xf]
        %v524 = vld [vmem:[%s2 + $0x18] sm:$0xf]
        %v525 = vld [vmem:[%s2 + $0x1c] sm:$0xf]
        %v526 = vld [vmem:[%s2 + $0x20] sm:$0xf]
        %v527 = vld [vmem:[%s2 + $0x24] sm:$0xf]
        %v528 = vld [vmem:[%s2 + $0x28] sm:$0xf]
        %v529 = vld [vmem:[%s2 + $0x2c] sm:$0xf]
        %v530 = vld [vmem:[%s2 + $0x30] sm:$0xf]
        %v531 = vld [vmem:[%s2 + $0x34] sm:$0xf]
        %v532 = vld [vmem:[%s2 + $0x38] sm:$0xf]
        %v533 = vld [vmem:[%s2 + $0x3c] sm:$0xf]
        %v542 = vunpack.c.l.b16 %v510
        %v543 = vunpack.c.l.b16 %v511
        %v544 = vunpack.c.l.b16 %v512
        %v545 = vunpack.c.l.b16 %v513
        %v546 = vunpack.c.l.b16 %v514
        %v547 = vunpack.c.l.b16 %v515
        %v548 = vunpack.c.l.b16 %v516
        %v549 = vunpack.c.l.b16 %v517
        %v550 = vpack.c.b16 %v543, %v542
        %v551 = vpack.c.b16 %v545, %v544
        %v552 = vpack.c.b16 %v547, %v546
        %v553 = vpack.c.b16 %v549, %v548
        %v574 = vunpack.c.l.b16 %v518
        %v575 = vunpack.c.l.b16 %v519
        %v576 = vunpack.c.l.b16 %v520
        %v577 = vunpack.c.l.b16 %v521
        %v578 = vunpack.c.l.b16 %v522
        %v579 = vunpack.c.l.b16 %v523
        %v580 = vunpack.c.l.b16 %v524
        %v581 = vunpack.c.l.b16 %v525
        %v582 = vunpack.c.l.b16 %v526
        %v583 = vunpack.c.l.b16 %v527
        %v584 = vunpack.c.l.b16 %v528
        %v585 = vunpack.c.l.b16 %v529
        %v586 = vunpack.c.l.b16 %v530
        %v587 = vunpack.c.l.b16 %v531
        %v588 = vunpack.c.l.b16 %v532
        %v589 = vunpack.c.l.b16 %v533
        %v590 = vpack.c.b16 %v575, %v574
        %v591 = vpack.c.b16 %v577, %v576
        %v592 = vpack.c.b16 %v579, %v578
        %v593 = vpack.c.b16 %v581, %v580
        %v594 = vpack.c.b16 %v583, %v582
        %v595 = vpack.c.b16 %v585, %v584
        %v596 = vpack.c.b16 %v587, %v586
        %v597 = vpack.c.b16 %v589, %v588
        %606 = vmatprep.subr.bf16.mxu0 0
        %607 = vmatpush1.bf16.msra.mxu0 %v597
        %608 = vmatprep.subr.bf16.mxu0 0
        %609 = vmatpush1.bf16.msra.mxu0 %v596
        %610 = vmatprep.subr.bf16.mxu0 0
        %611 = vmatpush1.bf16.msra.mxu0 %v595
        %612 = vmatprep.subr.bf16.mxu0 0
        %613 = vmatpush1.bf16.msra.mxu0 %v594
        %614 = vmatprep.subr.bf16.mxu0 0
        %615 = vmatpush1.bf16.msra.mxu0 %v593
        %616 = vmatprep.subr.bf16.mxu0 0
        %617 = vmatpush1.bf16.msra.mxu0 %v592
        %618 = vmatprep.subr.bf16.mxu0 0
        %619 = vmatpush1.bf16.msra.mxu0 %v591
        %620 = vmatprep.subr.bf16.mxu0 0
        %621 = vmatpush1.bf16.msra.mxu0 %v590
        %622 = vmatprep.subr.bf16.mxu0 0
        %623 = vmatpush2.bf16.msra.mxu0 0
        %624 = vmatprep.subr.bf16.mxu0 0
        %625 = vmatpush2.bf16.msra.mxu0 0
        %626 = vmatprep.subr.bf16.mxu0 0
        %627 = vmatpush2.bf16.msra.mxu0 0
        %628 = vmatprep.subr.bf16.mxu0 0
        %629 = vmatpush2.bf16.msra.mxu0 0
        %630 = vmatprep.subr.bf16.mxu0 0
        %631 = vmatpush2.bf16.msra.mxu0 0
        %632 = vmatprep.subr.bf16.mxu0 0
        %633 = vmatpush2.bf16.msra.mxu0 0
        %634 = vmatprep.subr.bf16.mxu0 0
        %635 = vmatpush2.bf16.msra.mxu0 0
        %636 = vmatprep.subr.bf16.mxu0 0
        %637 = vmatpush2.bf16.msra.mxu0 0
        %638 = vmatprep.mubr.bf16.mxu0 0
        %639 = vmatmul.mubr.bf16.gmra.mxu0 %v550
        %v640 = vpop.f32.mrf.mxu0
        %v641 = vadd.f32 0.0, %v640
        %v642 = vpop.f32.mrf.mxu0
        %v643 = vpop.f32.mrf.mxu0
        %v644 = vadd.f32 0.0, %v643
        %v645 = vpop.f32.mrf.mxu0
        %646 = vmatprep.mubr.bf16.mxu0 0
        %647 = vmatmul.mubr.bf16.gmra.mxu0 %v551
        %v648 = vpop.f32.mrf.mxu0
        %v649 = vadd.f32 0.0, %v648
        %v650 = vpop.f32.mrf.mxu0
        %v651 = vpop.f32.mrf.mxu0
        %v652 = vadd.f32 0.0, %v651
        %v653 = vpop.f32.mrf.mxu0
        %654 = vmatprep.mubr.bf16.mxu0 0
        %655 = vmatmul.mubr.bf16.gmra.mxu0 %v552
        %v656 = vpop.f32.mrf.mxu0
        %v657 = vadd.f32 0.0, %v656
        %v658 = vpop.f32.mrf.mxu0
        %v659 = vpop.f32.mrf.mxu0
        %v660 = vadd.f32 0.0, %v659
        %v661 = vpop.f32.mrf.mxu0
        %662 = vmatprep.mubr.bf16.mxu0 0
        %663 = vmatmul.mubr.bf16.gmra.mxu0 %v553
        %v664 = vpop.f32.mrf.mxu0
        %v665 = vadd.f32 0.0, %v664
        %v666 = vpop.f32.mrf.mxu0
        %v667 = vpop.f32.mrf.mxu0
        %v668 = vadd.f32 0.0, %v667
        %v669 = vpop.f32.mrf.mxu0
        %670 = vdwg.mxu0
        %v671 = vld [vmem:[%s466] sm:$0xf]
        %v672 = vld [vmem:[%s466 + $0x4] sm:$0xf]
        %v673 = vld [vmem:[%s466 + $0x8] sm:$0xf]
        %v674 = vld [vmem:[%s466 + $0xc] sm:$0xf]
        %v675 = vld [vmem:[%s466 + $0x10] sm:$0xf]
        %v676 = vld [vmem:[%s466 + $0x14] sm:$0xf]
        %v677 = vld [vmem:[%s466 + $0x18] sm:$0xf]
        %v678 = vld [vmem:[%s466 + $0x1c] sm:$0xf]
        %v679 = vunpack.c.l.bf16 %v671
        %v680 = vunpack.c.l.bf16 %v672
        %v681 = vunpack.c.l.bf16 %v673
        %v682 = vunpack.c.l.bf16 %v674
        %v683 = vunpack.c.l.bf16 %v675
        %v684 = vunpack.c.l.bf16 %v676
        %v685 = vunpack.c.l.bf16 %v677
        %v686 = vunpack.c.l.bf16 %v678
        %v687 = vadd.f32 %v679, %v641
        %v688 = vadd.f32 %v680, %v644
        %v689 = vadd.f32 %v681, %v649
        %v690 = vadd.f32 %v682, %v652
        %v691 = vadd.f32 %v683, %v657
        %v692 = vadd.f32 %v684, %v660
        %v693 = vadd.f32 %v685, %v665
        %v694 = vadd.f32 %v686, %v668
        %v695 = vld [vmem:[%s3] sm:$0x1]
        %v697 = vlaneseq
        %v698 = vshrl.u32 %v697, 7
        %v699 = vsub.s32 0, %v698
        %v700 = vrot.slane %v695, %v699
        %v702 = vadd.f32 %v687, %v700
        %v703 = vadd.f32 %v688, %v700
        %v704 = vadd.f32 %v689, %v700
        %v705 = vadd.f32 %v690, %v700
        %v706 = vadd.f32 %v691, %v700
        %v707 = vadd.f32 %v692, %v700
        %v708 = vadd.f32 %v693, %v700
        %v709 = vadd.f32 %v694, %v700
        %v710 = vld [vmem:[%s4] sm:$0x1]
        %v711 = vld [vmem:[%s5] sm:$0x1]
        %712 = vadd.xlane.f32.xlu0 %v702
        %v713 = vpop.xlane.xlu0 %712
        %714 = vadd.xlane.f32.xlu0 %v703
        %v715 = vpop.xlane.xlu0 %714
        %716 = vadd.xlane.f32.xlu0 %v704
        %v717 = vpop.xlane.xlu0 %716
        %718 = vadd.xlane.f32.xlu0 %v705
        %v719 = vpop.xlane.xlu0 %718
        %720 = vadd.xlane.f32.xlu0 %v706
        %v721 = vpop.xlane.xlu0 %720
        %722 = vadd.xlane.f32.xlu0 %v707
        %v723 = vpop.xlane.xlu0 %722
        %724 = vadd.xlane.f32.xlu0 %v708
        %v725 = vpop.xlane.xlu0 %724
        %726 = vadd.xlane.f32.xlu0 %v709
        %v727 = vpop.xlane.xlu0 %726
        %v728 = vrcp.pop 128.0
        %v729 = vmul.f32 %v713, %v728
        %v730 = vmul.f32 %v715, %v728
        %v731 = vmul.f32 %v717, %v728
        %v732 = vmul.f32 %v719, %v728
        %v733 = vmul.f32 %v721, %v728
        %v734 = vmul.f32 %v723, %v728
        %v735 = vmul.f32 %v725, %v728
        %v736 = vmul.f32 %v727, %v728
        %v737 = vsub.f32 %v702, %v729
        %v738 = vsub.f32 %v703, %v730
        %v739 = vsub.f32 %v704, %v731
        %v740 = vsub.f32 %v705, %v732
        %v741 = vsub.f32 %v706, %v733
        %v742 = vsub.f32 %v707, %v734
        %v743 = vsub.f32 %v708, %v735
        %v744 = vsub.f32 %v709, %v736
        %v745 = vmul.f32 %v737, %v737
        %v746 = vmul.f32 %v738, %v738
        %v747 = vmul.f32 %v739, %v739
        %v748 = vmul.f32 %v740, %v740
        %v749 = vmul.f32 %v741, %v741
        %v750 = vmul.f32 %v742, %v742
        %v751 = vmul.f32 %v743, %v743
        %v752 = vmul.f32 %v744, %v744
        %753 = vadd.xlane.f32.xlu0 %v745
        %v754 = vpop.xlane.xlu0 %753
        %755 = vadd.xlane.f32.xlu0 %v746
        %v756 = vpop.xlane.xlu0 %755
        %757 = vadd.xlane.f32.xlu0 %v747
        %v758 = vpop.xlane.xlu0 %757
        %759 = vadd.xlane.f32.xlu0 %v748
        %v760 = vpop.xlane.xlu0 %759
        %761 = vadd.xlane.f32.xlu0 %v749
        %v762 = vpop.xlane.xlu0 %761
        %763 = vadd.xlane.f32.xlu0 %v750
        %v764 = vpop.xlane.xlu0 %763
        %765 = vadd.xlane.f32.xlu0 %v751
        %v766 = vpop.xlane.xlu0 %765
        %767 = vadd.xlane.f32.xlu0 %v752
        %v768 = vpop.xlane.xlu0 %767
        %v769 = vmul.f32 %v754, %v728
        %v770 = vmul.f32 %v756, %v728
        %v771 = vmul.f32 %v758, %v728
        %v772 = vmul.f32 %v760, %v728
        %v773 = vmul.f32 %v762, %v728
        %v774 = vmul.f32 %v764, %v728
        %v775 = vmul.f32 %v766, %v728
        %v776 = vmul.f32 %v768, %v728
        %v777 = vadd.f32 %v769, 1e-05
        %v778 = vadd.f32 %v770, 1e-05
        %v779 = vadd.f32 %v771, 1e-05
        %v780 = vadd.f32 %v772, 1e-05
        %v781 = vadd.f32 %v773, 1e-05
        %v782 = vadd.f32 %v774, 1e-05
        %v783 = vadd.f32 %v775, 1e-05
        %v784 = vadd.f32 %v776, 1e-05
        %v785 = vrsqrt.pop %v777
        %v786 = vrsqrt.pop %v778
        %v787 = vrsqrt.pop %v779
        %v788 = vrsqrt.pop %v780
        %v789 = vrsqrt.pop %v781
        %v790 = vrsqrt.pop %v782
        %v791 = vrsqrt.pop %v783
        %v792 = vrsqrt.pop %v784
        %v793 = vmul.f32 %v737, %v785
        %v794 = vmul.f32 %v738, %v786
        %v795 = vmul.f32 %v739, %v787
        %v796 = vmul.f32 %v740, %v788
        %v797 = vmul.f32 %v741, %v789
        %v798 = vmul.f32 %v742, %v790
        %v799 = vmul.f32 %v743, %v791
        %v800 = vmul.f32 %v744, %v792
        %v802 = vlaneseq
        %v803 = vshrl.u32 %v802, 7
        %v804 = vsub.s32 0, %v803
        %v805 = vrot.slane %v710, %v804
        %v807 = vmul.f32 %v793, %v805
        %v808 = vmul.f32 %v794, %v805
        %v809 = vmul.f32 %v795, %v805
        %v810 = vmul.f32 %v796, %v805
        %v811 = vmul.f32 %v797, %v805
        %v812 = vmul.f32 %v798, %v805
        %v813 = vmul.f32 %v799, %v805
        %v814 = vmul.f32 %v800, %v805
        %v816 = vlaneseq
        %v817 = vshrl.u32 %v816, 7
        %v818 = vsub.s32 0, %v817
        %v819 = vrot.slane %v711, %v818
        %v821 = vadd.f32 %v807, %v819
        %v822 = vadd.f32 %v808, %v819
        %v823 = vadd.f32 %v809, %v819
        %v824 = vadd.f32 %v810, %v819
        %v825 = vadd.f32 %v811, %v819
        %v826 = vadd.f32 %v812, %v819
        %v827 = vadd.f32 %v813, %v819
        %v828 = vadd.f32 %v814, %v819
        %v829 = vpack.c.bf16 %v822, %v821
        %v830 = vpack.c.bf16 %v824, %v823
        %v831 = vpack.c.bf16 %v826, %v825
        %v832 = vpack.c.bf16 %v828, %v827
        %v837 = vunpack.c.l.b16 %v829
        %v838 = vunpack.c.h.b16 %v829
        %v839 = vunpack.c.l.b16 %v830
        %v840 = vunpack.c.h.b16 %v830
        %v841 = vunpack.c.l.b16 %v831
        %v842 = vunpack.c.h.b16 %v831
        %v843 = vunpack.c.l.b16 %v832
        %v844 = vunpack.c.h.b16 %v832
        %v845 = vpack.c.b16 %v837, %v837
        %v846 = vpack.c.b16 %v838, %v838
        %v847 = vpack.c.b16 %v839, %v839
        %v848 = vpack.c.b16 %v840, %v840
        %v849 = vpack.c.b16 %v841, %v841
        %v850 = vpack.c.b16 %v842, %v842
        %v851 = vpack.c.b16 %v843, %v843
        %v852 = vpack.c.b16 %v844, %v844
        %861 = vst [vmem:[#allocation2] sm:$0xf] %v845
        %862 = vst [vmem:[#allocation2 + $0x4] sm:$0xf] %v846
        %863 = vst [vmem:[#allocation2 + $0x8] sm:$0xf] %v847
        %864 = vst [vmem:[#allocation2 + $0xc] sm:$0xf] %v848
        %865 = vst [vmem:[#allocation2 + $0x10] sm:$0xf] %v849
        %866 = vst [vmem:[#allocation2 + $0x14] sm:$0xf] %v850
        %867 = vst [vmem:[#allocation2 + $0x18] sm:$0xf] %v851
        %868 = vst [vmem:[#allocation2 + $0x1c] sm:$0xf] %v852
        %869 = vst [vmem:[#allocation3] sm:$0xff] %v702
        %870 = vst [vmem:[#allocation3 + $0x8] sm:$0xff] %v703
        %871 = vst [vmem:[#allocation3 + $0x10] sm:$0xff] %v704
        %872 = vst [vmem:[#allocation3 + $0x18] sm:$0xff] %v705
        %873 = vst [vmem:[#allocation3 + $0x20] sm:$0xff] %v706
        %874 = vst [vmem:[#allocation3 + $0x28] sm:$0xff] %v707
        %875 = vst [vmem:[#allocation3 + $0x30] sm:$0xff] %v708
        %876 = vst [vmem:[#allocation3 + $0x38] sm:$0xff] %v709
      $region64: #{vit_forward.10} parent=59 // pred_fallthru
        _
      %v877 = vld [vmem:[#allocation2] sm:$0xf]
      %v878 = vld [vmem:[#allocation2 + $0x4] sm:$0xf]
      %v879 = vld [vmem:[#allocation2 + $0x8] sm:$0xf]
      %v880 = vld [vmem:[#allocation2 + $0xc] sm:$0xf]
      %v881 = vld [vmem:[#allocation2 + $0x10] sm:$0xf]
      %v882 = vld [vmem:[#allocation2 + $0x14] sm:$0xf]
      %v883 = vld [vmem:[#allocation2 + $0x18] sm:$0xf]
      %v884 = vld [vmem:[#allocation2 + $0x1c] sm:$0xf]
      %v885 = vld [vmem:[%s482] sm:$0xff]
      %v886 = vld [vmem:[%s482 + $0x8] sm:$0xff]
      %v887 = vld [vmem:[%s482 + $0x10] sm:$0xff]
      %v888 = vld [vmem:[%s482 + $0x18] sm:$0xff]
      %v889 = vld [vmem:[%s482 + $0x20] sm:$0xff]
      %v890 = vld [vmem:[%s482 + $0x28] sm:$0xff]
      %v891 = vld [vmem:[%s482 + $0x30] sm:$0xff]
      %v892 = vld [vmem:[%s482 + $0x38] sm:$0xff]
      %v893 = vld [vmem:[%s482 + $0x40] sm:$0xff]
      %v894 = vld [vmem:[%s482 + $0x48] sm:$0xff]
      %v895 = vld [vmem:[%s482 + $0x50] sm:$0xff]
      %v896 = vld [vmem:[%s482 + $0x58] sm:$0xff]
      %v897 = vld [vmem:[%s482 + $0x60] sm:$0xff]
      %v898 = vld [vmem:[%s482 + $0x68] sm:$0xff]
      %v899 = vld [vmem:[%s482 + $0x70] sm:$0xff]
      %v900 = vld [vmem:[%s482 + $0x78] sm:$0xff]
      %v901 = vld [vmem:[%s487] sm:$0x3]
      %v903 = vlaneseq
      %v904 = vshrl.u32 %v903, 7
      %v905 = vsub.s32 0, %v904
      %v906 = vrot.slane %v901, %v905
      %v907 = vlaneseq
      %v908 = vshrl.u32 %v907, 7
      %v909 = vsub.s32 1, %v908
      %v910 = vrot.slane %v901, %v909
      %v921 = vunpack.c.l.b16 %v877
      %v922 = vunpack.c.l.b16 %v878
      %v923 = vunpack.c.l.b16 %v879
      %v924 = vunpack.c.l.b16 %v880
      %v925 = vunpack.c.l.b16 %v881
      %v926 = vunpack.c.l.b16 %v882
      %v927 = vunpack.c.l.b16 %v883
      %v928 = vunpack.c.l.b16 %v884
      %v929 = vpack.c.b16 %v922, %v921
      %v930 = vpack.c.b16 %v924, %v923
      %v931 = vpack.c.b16 %v926, %v925
      %v932 = vpack.c.b16 %v928, %v927
      %v953 = vunpack.c.l.b16 %v885
      %v954 = vunpack.c.h.b16 %v885
      %v955 = vunpack.c.l.b16 %v886
      %v956 = vunpack.c.h.b16 %v886
      %v957 = vunpack.c.l.b16 %v887
      %v958 = vunpack.c.h.b16 %v887
      %v959 = vunpack.c.l.b16 %v888
      %v960 = vunpack.c.h.b16 %v888
      %v961 = vunpack.c.l.b16 %v889
      %v962 = vunpack.c.h.b16 %v889
      %v963 = vunpack.c.l.b16 %v890
      %v964 = vunpack.c.h.b16 %v890
      %v965 = vunpack.c.l.b16 %v891
      %v966 = vunpack.c.h.b16 %v891
      %v967 = vunpack.c.l.b16 %v892
      %v968 = vunpack.c.h.b16 %v892
      %v969 = vunpack.c.l.b16 %v893
      %v970 = vunpack.c.h.b16 %v893
      %v971 = vunpack.c.l.b16 %v894
      %v972 = vunpack.c.h.b16 %v894
      %v973 = vunpack.c.l.b16 %v895
      %v974 = vunpack.c.h.b16 %v895
      %v975 = vunpack.c.l.b16 %v896
      %v976 = vunpack.c.h.b16 %v896
      %v977 = vunpack.c.l.b16 %v897
      %v978 = vunpack.c.h.b16 %v897
      %v979 = vunpack.c.l.b16 %v898
      %v980 = vunpack.c.h.b16 %v898
      %v981 = vunpack.c.l.b16 %v899
      %v982 = vunpack.c.h.b16 %v899
      %v983 = vunpack.c.l.b16 %v900
      %v984 = vunpack.c.h.b16 %v900
      %v985 = vpack.c.b16 %v955, %v953
      %v986 = vpack.c.b16 %v956, %v954
      %v987 = vpack.c.b16 %v959, %v957
      %v988 = vpack.c.b16 %v960, %v958
      %v989 = vpack.c.b16 %v963, %v961
      %v990 = vpack.c.b16 %v964, %v962
      %v991 = vpack.c.b16 %v967, %v965
      %v992 = vpack.c.b16 %v968, %v966
      %v993 = vpack.c.b16 %v971, %v969
      %v994 = vpack.c.b16 %v972, %v970
      %v995 = vpack.c.b16 %v975, %v973
      %v996 = vpack.c.b16 %v976, %v974
      %v997 = vpack.c.b16 %v979, %v977
      %v998 = vpack.c.b16 %v980, %v978
      %v999 = vpack.c.b16 %v983, %v981
      %v1000 = vpack.c.b16 %v984, %v982
      %1017 = vmatprep.subr.bf16.mxu0 %v1000
      %1018 = vmatpush1.bf16.msra.mxu0 %v999
      %1019 = vmatprep.subr.bf16.mxu0 %v998
      %1020 = vmatpush1.bf16.msra.mxu0 %v997
      %1021 = vmatprep.subr.bf16.mxu0 %v996
      %1022 = vmatpush1.bf16.msra.mxu0 %v995
      %1023 = vmatprep.subr.bf16.mxu0 %v994
      %1024 = vmatpush1.bf16.msra.mxu0 %v993
      %1025 = vmatprep.subr.bf16.mxu0 %v992
      %1026 = vmatpush1.bf16.msra.mxu0 %v991
      %1027 = vmatprep.subr.bf16.mxu0 %v990
      %1028 = vmatpush1.bf16.msra.mxu0 %v989
      %1029 = vmatprep.subr.bf16.mxu0 %v988
      %1030 = vmatpush1.bf16.msra.mxu0 %v987
      %1031 = vmatprep.subr.bf16.mxu0 %v986
      %1032 = vmatpush1.bf16.msra.mxu0 %v985
      %1033 = vmatprep.subr.bf16.mxu0 0
      %1034 = vmatpush2.bf16.msra.mxu0 0
      %1035 = vmatprep.subr.bf16.mxu0 0
      %1036 = vmatpush2.bf16.msra.mxu0 0
      %1037 = vmatprep.subr.bf16.mxu0 0
      %1038 = vmatpush2.bf16.msra.mxu0 0
      %1039 = vmatprep.subr.bf16.mxu0 0
      %1040 = vmatpush2.bf16.msra.mxu0 0
      %1041 = vmatprep.subr.bf16.mxu0 0
      %1042 = vmatpush2.bf16.msra.mxu0 0
      %1043 = vmatprep.subr.bf16.mxu0 0
      %1044 = vmatpush2.bf16.msra.mxu0 0
      %1045 = vmatprep.subr.bf16.mxu0 0
      %1046 = vmatpush2.bf16.msra.mxu0 0
      %1047 = vmatprep.subr.bf16.mxu0 0
      %1048 = vmatpush2.bf16.msra.mxu0 0
      %1049 = vmatprep.mubr.bf16.mxu0 0
      %1050 = vmatmul.mubr.bf16.gmra.mxu0 %v929
      %v1051 = vpop.f32.mrf.mxu0
      %v1052 = vadd.f32 %v906, %v1051
      %v1053 = vpop.f32.mrf.mxu0
      %v1054 = vadd.f32 %v910, %v1053
      %v1055 = vpop.f32.mrf.mxu0
      %v1056 = vadd.f32 %v906, %v1055
      %v1057 = vpop.f32.mrf.mxu0
      %v1058 = vadd.f32 %v910, %v1057
      %1059 = vmatprep.mubr.bf16.mxu0 0
      %1060 = vmatmul.mubr.bf16.gmra.mxu0 %v930
      %v1061 = vpop.f32.mrf.mxu0
      %v1062 = vadd.f32 %v906, %v1061
      %v1063 = vpop.f32.mrf.mxu0
      %v1064 = vadd.f32 %v910, %v1063
      %v1065 = vpop.f32.mrf.mxu0
      %v1066 = vadd.f32 %v906, %v1065
      %v1067 = vpop.f32.mrf.mxu0
      %v1068 = vadd.f32 %v910, %v1067
      %1069 = vmatprep.mubr.bf16.mxu0 0
      %1070 = vmatmul.mubr.bf16.gmra.mxu0 %v931
      %v1071 = vpop.f32.mrf.mxu0
      %v1072 = vadd.f32 %v906, %v1071
      %v1073 = vpop.f32.mrf.mxu0
      %v1074 = vadd.f32 %v910, %v1073
      %v1075 = vpop.f32.mrf.mxu0
      %v1076 = vadd.f32 %v906, %v1075
      %v1077 = vpop.f32.mrf.mxu0
      %v1078 = vadd.f32 %v910, %v1077
      %1079 = vmatprep.mubr.bf16.mxu0 0
      %1080 = vmatmul.mubr.bf16.gmra.mxu0 %v932
      %v1081 = vpop.f32.mrf.mxu0
      %v1082 = vadd.f32 %v906, %v1081
      %v1083 = vpop.f32.mrf.mxu0
      %v1084 = vadd.f32 %v910, %v1083
      %v1085 = vpop.f32.mrf.mxu0
      %v1086 = vadd.f32 %v906, %v1085
      %v1087 = vpop.f32.mrf.mxu0
      %v1088 = vadd.f32 %v910, %v1087
      %1089 = vdwg.mxu0
      %v1090 = vmul.f32 %v1052, %v1052
      %v1091 = vmul.f32 %v1054, %v1054
      %v1092 = vmul.f32 %v1056, %v1056
      %v1093 = vmul.f32 %v1058, %v1058
      %v1094 = vmul.f32 %v1062, %v1062
      %v1095 = vmul.f32 %v1064, %v1064
      %v1096 = vmul.f32 %v1066, %v1066
      %v1097 = vmul.f32 %v1068, %v1068
      %v1098 = vmul.f32 %v1072, %v1072
      %v1099 = vmul.f32 %v1074, %v1074
      %v1100 = vmul.f32 %v1076, %v1076
      %v1101 = vmul.f32 %v1078, %v1078
      %v1102 = vmul.f32 %v1082, %v1082
      %v1103 = vmul.f32 %v1084, %v1084
      %v1104 = vmul.f32 %v1086, %v1086
      %v1105 = vmul.f32 %v1088, %v1088
      %v1106 = vmul.f32 %v1052, %v1090
      %v1107 = vmul.f32 %v1054, %v1091
      %v1108 = vmul.f32 %v1056, %v1092
      %v1109 = vmul.f32 %v1058, %v1093
      %v1110 = vmul.f32 %v1062, %v1094
      %v1111 = vmul.f32 %v1064, %v1095
      %v1112 = vmul.f32 %v1066, %v1096
      %v1113 = vmul.f32 %v1068, %v1097
      %v1114 = vmul.f32 %v1072, %v1098
      %v1115 = vmul.f32 %v1074, %v1099
      %v1116 = vmul.f32 %v1076, %v1100
      %v1117 = vmul.f32 %v1078, %v1101
      %v1118 = vmul.f32 %v1082, %v1102
      %v1119 = vmul.f32 %v1084, %v1103
      %v1120 = vmul.f32 %v1086, %v1104
      %v1121 = vmul.f32 %v1088, %v1105
      %v1122 = vmul.f32 %v1106, 0.044715
      %v1123 = vmul.f32 %v1107, 0.044715
      %v1124 = vmul.f32 %v1108, 0.044715
      %v1125 = vmul.f32 %v1109, 0.044715
      %v1126 = vmul.f32 %v1110, 0.044715
      %v1127 = vmul.f32 %v1111, 0.044715
      %v1128 = vmul.f32 %v1112, 0.044715
      %v1129 = vmul.f32 %v1113, 0.044715
      %v1130 = vmul.f32 %v1114, 0.044715
      %v1131 = vmul.f32 %v1115, 0.044715
      %v1132 = vmul.f32 %v1116, 0.044715
      %v1133 = vmul.f32 %v1117, 0.044715
      %v1134 = vmul.f32 %v1118, 0.044715
      %v1135 = vmul.f32 %v1119, 0.044715
      %v1136 = vmul.f32 %v1120, 0.044715
      %v1137 = vmul.f32 %v1121, 0.044715
      %v1138 = vadd.f32 %v1052, %v1122
      %v1139 = vadd.f32 %v1054, %v1123
      %v1140 = vadd.f32 %v1056, %v1124
      %v1141 = vadd.f32 %v1058, %v1125
      %v1142 = vadd.f32 %v1062, %v1126
      %v1143 = vadd.f32 %v1064, %v1127
      %v1144 = vadd.f32 %v1066, %v1128
      %v1145 = vadd.f32 %v1068, %v1129
      %v1146 = vadd.f32 %v1072, %v1130
      %v1147 = vadd.f32 %v1074, %v1131
      %v1148 = vadd.f32 %v1076, %v1132
      %v1149 = vadd.f32 %v1078, %v1133
      %v1150 = vadd.f32 %v1082, %v1134
      %v1151 = vadd.f32 %v1084, %v1135
      %v1152 = vadd.f32 %v1086, %v1136
      %v1153 = vadd.f32 %v1088, %v1137
      %v1154 = vmul.f32 %v1138, 0.7978846
      %v1155 = vmul.f32 %v1139, 0.7978846
      %v1156 = vmul.f32 %v1140, 0.7978846
      %v1157 = vmul.f32 %v1141, 0.7978846
      %v1158 = vmul.f32 %v1142, 0.7978846
      %v1159 = vmul.f32 %v1143, 0.7978846
      %v1160 = vmul.f32 %v1144, 0.7978846
      %v1161 = vmul.f32 %v1145, 0.7978846
      %v1162 = vmul.f32 %v1146, 0.7978846
      %v1163 = vmul.f32 %v1147, 0.7978846
      %v1164 = vmul.f32 %v1148, 0.7978846
      %v1165 = vmul.f32 %v1149, 0.7978846
      %v1166 = vmul.f32 %v1150, 0.7978846
      %v1167 = vmul.f32 %v1151, 0.7978846
      %v1168 = vmul.f32 %v1152, 0.7978846
      %v1169 = vmul.f32 %v1153, 0.7978846
      %v1170 = vtanh.pop %v1154
      %v1171 = vtanh.pop %v1155
      %v1172 = vtanh.pop %v1156
      %v1173 = vtanh.pop %v1157
      %v1174 = vtanh.pop %v1158
      %v1175 = vtanh.pop %v1159
      %v1176 = vtanh.pop %v1160
      %v1177 = vtanh.pop %v1161
      %v1178 = vtanh.pop %v1162
      %v1179 = vtanh.pop %v1163
      %v1180 = vtanh.pop %v1164
      %v1181 = vtanh.pop %v1165
      %v1182 = vtanh.pop %v1166
      %v1183 = vtanh.pop %v1167
      %v1184 = vtanh.pop %v1168
      %v1185 = vtanh.pop %v1169
      %v1186 = vadd.f32 %v1170, 1.0
      %v1187 = vadd.f32 %v1171, 1.0
      %v1188 = vadd.f32 %v1172, 1.0
      %v1189 = vadd.f32 %v1173, 1.0
      %v1190 = vadd.f32 %v1174, 1.0
      %v1191 = vadd.f32 %v1175, 1.0
      %v1192 = vadd.f32 %v1176, 1.0
      %v1193 = vadd.f32 %v1177, 1.0
      %v1194 = vadd.f32 %v1178, 1.0
      %v1195 = vadd.f32 %v1179, 1.0
      %v1196 = vadd.f32 %v1180, 1.0
      %v1197 = vadd.f32 %v1181, 1.0
      %v1198 = vadd.f32 %v1182, 1.0
      %v1199 = vadd.f32 %v1183, 1.0
      %v1200 = vadd.f32 %v1184, 1.0
      %v1201 = vadd.f32 %v1185, 1.0
      %v1202 = vmul.f32 %v1186, 0.5
      %v1203 = vmul.f32 %v1187, 0.5
      %v1204 = vmul.f32 %v1188, 0.5
      %v1205 = vmul.f32 %v1189, 0.5
      %v1206 = vmul.f32 %v1190, 0.5
      %v1207 = vmul.f32 %v1191, 0.5
      %v1208 = vmul.f32 %v1192, 0.5
      %v1209 = vmul.f32 %v1193, 0.5
      %v1210 = vmul.f32 %v1194, 0.5
      %v1211 = vmul.f32 %v1195, 0.5
      %v1212 = vmul.f32 %v1196, 0.5
      %v1213 = vmul.f32 %v1197, 0.5
      %v1214 = vmul.f32 %v1198, 0.5
      %v1215 = vmul.f32 %v1199, 0.5
      %v1216 = vmul.f32 %v1200, 0.5
      %v1217 = vmul.f32 %v1201, 0.5
      %v1218 = vmul.f32 %v1052, %v1202
      %v1219 = vmul.f32 %v1054, %v1203
      %v1220 = vmul.f32 %v1056, %v1204
      %v1221 = vmul.f32 %v1058, %v1205
      %v1222 = vmul.f32 %v1062, %v1206
      %v1223 = vmul.f32 %v1064, %v1207
      %v1224 = vmul.f32 %v1066, %v1208
      %v1225 = vmul.f32 %v1068, %v1209
      %v1226 = vmul.f32 %v1072, %v1210
      %v1227 = vmul.f32 %v1074, %v1211
      %v1228 = vmul.f32 %v1076, %v1212
      %v1229 = vmul.f32 %v1078, %v1213
      %v1230 = vmul.f32 %v1082, %v1214
      %v1231 = vmul.f32 %v1084, %v1215
      %v1232 = vmul.f32 %v1086, %v1216
      %v1233 = vmul.f32 %v1088, %v1217
      %v1234 = vpack.c.bf16 %v1220, %v1218
      %v1235 = vpack.c.bf16 %v1221, %v1219
      %v1236 = vpack.c.bf16 %v1224, %v1222
      %v1237 = vpack.c.bf16 %v1225, %v1223
      %v1238 = vpack.c.bf16 %v1228, %v1226
      %v1239 = vpack.c.bf16 %v1229, %v1227
      %v1240 = vpack.c.bf16 %v1232, %v1230
      %v1241 = vpack.c.bf16 %v1233, %v1231
      %v1242 = vld [vmem:[#allocation3] sm:$0xff]
      %v1243 = vld [vmem:[#allocation3 + $0x8] sm:$0xff]
      %v1244 = vld [vmem:[#allocation3 + $0x10] sm:$0xff]
      %v1245 = vld [vmem:[#allocation3 + $0x18] sm:$0xff]
      %v1246 = vld [vmem:[#allocation3 + $0x20] sm:$0xff]
      %v1247 = vld [vmem:[#allocation3 + $0x28] sm:$0xff]
      %v1248 = vld [vmem:[#allocation3 + $0x30] sm:$0xff]
      %v1249 = vld [vmem:[#allocation3 + $0x38] sm:$0xff]
      %v1250 = vld [vmem:[%s493] sm:$0xf]
      %v1251 = vld [vmem:[%s493 + $0x4] sm:$0xf]
      %v1252 = vld [vmem:[%s493 + $0x8] sm:$0xf]
      %v1253 = vld [vmem:[%s493 + $0xc] sm:$0xf]
      %v1254 = vld [vmem:[%s493 + $0x10] sm:$0xf]
      %v1255 = vld [vmem:[%s493 + $0x14] sm:$0xf]
      %v1256 = vld [vmem:[%s493 + $0x18] sm:$0xf]
      %v1257 = vld [vmem:[%s493 + $0x1c] sm:$0xf]
      %v1258 = vld [vmem:[%s493 + $0x20] sm:$0xf]
      %v1259 = vld [vmem:[%s493 + $0x24] sm:$0xf]
      %v1260 = vld [vmem:[%s493 + $0x28] sm:$0xf]
      %v1261 = vld [vmem:[%s493 + $0x2c] sm:$0xf]
      %v1262 = vld [vmem:[%s493 + $0x30] sm:$0xf]
      %v1263 = vld [vmem:[%s493 + $0x34] sm:$0xf]
      %v1264 = vld [vmem:[%s493 + $0x38] sm:$0xf]
      %v1265 = vld [vmem:[%s493 + $0x3c] sm:$0xf]
      %v1266 = vld [vmem:[%s493 + $0x40] sm:$0xf]
      %v1267 = vld [vmem:[%s493 + $0x44] sm:$0xf]
      %v1268 = vld [vmem:[%s493 + $0x48] sm:$0xf]
      %v1269 = vld [vmem:[%s493 + $0x4c] sm:$0xf]
      %v1270 = vld [vmem:[%s493 + $0x50] sm:$0xf]
      %v1271 = vld [vmem:[%s493 + $0x54] sm:$0xf]
      %v1272 = vld [vmem:[%s493 + $0x58] sm:$0xf]
      %v1273 = vld [vmem:[%s493 + $0x5c] sm:$0xf]
      %v1274 = vld [vmem:[%s493 + $0x60] sm:$0xf]
      %v1275 = vld [vmem:[%s493 + $0x64] sm:$0xf]
      %v1276 = vld [vmem:[%s493 + $0x68] sm:$0xf]
      %v1277 = vld [vmem:[%s493 + $0x6c] sm:$0xf]
      %v1278 = vld [vmem:[%s493 + $0x70] sm:$0xf]
      %v1279 = vld [vmem:[%s493 + $0x74] sm:$0xf]
      %v1280 = vld [vmem:[%s493 + $0x78] sm:$0xf]
      %v1281 = vld [vmem:[%s493 + $0x7c] sm:$0xf]
      %v1314 = vunpack.c.l.b16 %v1250
      %v1315 = vunpack.c.l.b16 %v1251
      %v1316 = vunpack.c.l.b16 %v1252
      %v1317 = vunpack.c.l.b16 %v1253
      %v1318 = vunpack.c.l.b16 %v1254
      %v1319 = vunpack.c.l.b16 %v1255
      %v1320 = vunpack.c.l.b16 %v1256
      %v1321 = vunpack.c.l.b16 %v1257
      %v1322 = vunpack.c.l.b16 %v1258
      %v1323 = vunpack.c.l.b16 %v1259
      %v1324 = vunpack.c.l.b16 %v1260
      %v1325 = vunpack.c.l.b16 %v1261
      %v1326 = vunpack.c.l.b16 %v1262
      %v1327 = vunpack.c.l.b16 %v1263
      %v1328 = vunpack.c.l.b16 %v1264
      %v1329 = vunpack.c.l.b16 %v1265
      %v1330 = vunpack.c.l.b16 %v1266
      %v1331 = vunpack.c.l.b16 %v1267
      %v1332 = vunpack.c.l.b16 %v1268
      %v1333 = vunpack.c.l.b16 %v1269
      %v1334 = vunpack.c.l.b16 %v1270
      %v1335 = vunpack.c.l.b16 %v1271
      %v1336 = vunpack.c.l.b16 %v1272
      %v1337 = vunpack.c.l.b16 %v1273
      %v1338 = vunpack.c.l.b16 %v1274
      %v1339 = vunpack.c.l.b16 %v1275
      %v1340 = vunpack.c.l.b16 %v1276
      %v1341 = vunpack.c.l.b16 %v1277
      %v1342 = vunpack.c.l.b16 %v1278
      %v1343 = vunpack.c.l.b16 %v1279
      %v1344 = vunpack.c.l.b16 %v1280
      %v1345 = vunpack.c.l.b16 %v1281
      %v1346 = vpack.c.b16 %v1315, %v1314
      %v1347 = vpack.c.b16 %v1317, %v1316
      %v1348 = vpack.c.b16 %v1319, %v1318
      %v1349 = vpack.c.b16 %v1321, %v1320
      %v1350 = vpack.c.b16 %v1323, %v1322
      %v1351 = vpack.c.b16 %v1325, %v1324
      %v1352 = vpack.c.b16 %v1327, %v1326
      %v1353 = vpack.c.b16 %v1329, %v1328
      %v1354 = vpack.c.b16 %v1331, %v1330
      %v1355 = vpack.c.b16 %v1333, %v1332
      %v1356 = vpack.c.b16 %v1335, %v1334
      %v1357 = vpack.c.b16 %v1337, %v1336
      %v1358 = vpack.c.b16 %v1339, %v1338
      %v1359 = vpack.c.b16 %v1341, %v1340
      %v1360 = vpack.c.b16 %v1343, %v1342
      %v1361 = vpack.c.b16 %v1345, %v1344
      %1378 = vmatprep.subr.bf16.mxu0 0
      %1379 = vmatpush1.bf16.msra.mxu0 %v1353
      %1380 = vmatprep.subr.bf16.mxu0 0
      %1381 = vmatpush1.bf16.msra.mxu0 %v1352
      %1382 = vmatprep.subr.bf16.mxu0 0
      %1383 = vmatpush1.bf16.msra.mxu0 %v1351
      %1384 = vmatprep.subr.bf16.mxu0 0
      %1385 = vmatpush1.bf16.msra.mxu0 %v1350
      %1386 = vmatprep.subr.bf16.mxu0 0
      %1387 = vmatpush1.bf16.msra.mxu0 %v1349
      %1388 = vmatprep.subr.bf16.mxu0 0
      %1389 = vmatpush1.bf16.msra.mxu0 %v1348
      %1390 = vmatprep.subr.bf16.mxu0 0
      %1391 = vmatpush1.bf16.msra.mxu0 %v1347
      %1392 = vmatprep.subr.bf16.mxu0 0
      %1393 = vmatpush1.bf16.msra.mxu0 %v1346
      %1394 = vmatprep.subr.bf16.mxu0 0
      %1395 = vmatpush2.bf16.msra.mxu0 %v1361
      %1396 = vmatprep.subr.bf16.mxu0 0
      %1397 = vmatpush2.bf16.msra.mxu0 %v1360
      %1398 = vmatprep.subr.bf16.mxu0 0
      %1399 = vmatpush2.bf16.msra.mxu0 %v1359
      %1400 = vmatprep.subr.bf16.mxu0 0
      %1401 = vmatpush2.bf16.msra.mxu0 %v1358
      %1402 = vmatprep.subr.bf16.mxu0 0
      %1403 = vmatpush2.bf16.msra.mxu0 %v1357
      %1404 = vmatprep.subr.bf16.mxu0 0
      %1405 = vmatpush2.bf16.msra.mxu0 %v1356
      %1406 = vmatprep.subr.bf16.mxu0 0
      %1407 = vmatpush2.bf16.msra.mxu0 %v1355
      %1408 = vmatprep.subr.bf16.mxu0 0
      %1409 = vmatpush2.bf16.msra.mxu0 %v1354
      %1410 = vmatprep.mubr.bf16.mxu0 %v1235
      %1411 = vmatmul.mubr.bf16.gmra.mxu0 %v1234
      %v1412 = vpop.f32.mrf.mxu0
      %v1413 = vadd.f32 0.0, %v1412
      %v1414 = vpop.f32.mrf.mxu0
      %v1415 = vpop.f32.mrf.mxu0
      %v1416 = vadd.f32 0.0, %v1415
      %v1417 = vpop.f32.mrf.mxu0
      %1418 = vmatprep.mubr.bf16.mxu0 %v1237
      %1419 = vmatmul.mubr.bf16.gmra.mxu0 %v1236
      %v1420 = vpop.f32.mrf.mxu0
      %v1421 = vadd.f32 0.0, %v1420
      %v1422 = vpop.f32.mrf.mxu0
      %v1423 = vpop.f32.mrf.mxu0
      %v1424 = vadd.f32 0.0, %v1423
      %v1425 = vpop.f32.mrf.mxu0
      %1426 = vmatprep.mubr.bf16.mxu0 %v1239
      %1427 = vmatmul.mubr.bf16.gmra.mxu0 %v1238
      %v1428 = vpop.f32.mrf.mxu0
      %v1429 = vadd.f32 0.0, %v1428
      %v1430 = vpop.f32.mrf.mxu0
      %v1431 = vpop.f32.mrf.mxu0
      %v1432 = vadd.f32 0.0, %v1431
      %v1433 = vpop.f32.mrf.mxu0
      %1434 = vmatprep.mubr.bf16.mxu0 %v1241
      %1435 = vmatmul.mubr.bf16.gmra.mxu0 %v1240
      %v1436 = vpop.f32.mrf.mxu0
      %v1437 = vadd.f32 0.0, %v1436
      %v1438 = vpop.f32.mrf.mxu0
      %v1439 = vpop.f32.mrf.mxu0
      %v1440 = vadd.f32 0.0, %v1439
      %v1441 = vpop.f32.mrf.mxu0
      %1442 = vdwg.mxu0
      %v1443 = vadd.f32 %v1242, %v1413
      %v1444 = vadd.f32 %v1243, %v1416
      %v1445 = vadd.f32 %v1244, %v1421
      %v1446 = vadd.f32 %v1245, %v1424
      %v1447 = vadd.f32 %v1246, %v1429
      %v1448 = vadd.f32 %v1247, %v1432
      %v1449 = vadd.f32 %v1248, %v1437
      %v1450 = vadd.f32 %v1249, %v1440
      %1451 = vst [vmem:[#allocation3] sm:$0xff] %v1443
      %1452 = vst [vmem:[#allocation3 + $0x8] sm:$0xff] %v1444
      %1453 = vst [vmem:[#allocation3 + $0x10] sm:$0xff] %v1445
      %1454 = vst [vmem:[#allocation3 + $0x18] sm:$0xff] %v1446
      %1455 = vst [vmem:[#allocation3 + $0x20] sm:$0xff] %v1447
      %1456 = vst [vmem:[#allocation3 + $0x28] sm:$0xff] %v1448
      %1457 = vst [vmem:[#allocation3 + $0x30] sm:$0xff] %v1449
      %1458 = vst [vmem:[#allocation3 + $0x38] sm:$0xff] %v1450
      // Predicated region
      $region65: #{vit_forward.10} parent=59 // pred_check
        %p1459 = pneg %p506
      $region66: #{vit_forward.10} parent=59 // pred_check_branch
        %1461 = sbr.rel (%p1459) target = $region68
      $region67: #{vit_forward.10} parent=59 // pred_region
        %v1462 = vld [vmem:[#allocation3] sm:$0xff]
        %v1463 = vld [vmem:[#allocation3 + $0x8] sm:$0xff]
        %v1464 = vld [vmem:[#allocation3 + $0x10] sm:$0xff]
        %v1465 = vld [vmem:[#allocation3 + $0x18] sm:$0xff]
        %v1466 = vld [vmem:[#allocation3 + $0x20] sm:$0xff]
        %v1467 = vld [vmem:[#allocation3 + $0x28] sm:$0xff]
        %v1468 = vld [vmem:[#allocation3 + $0x30] sm:$0xff]
        %v1469 = vld [vmem:[#allocation3 + $0x38] sm:$0xff]
        %v1470 = vld [vmem:[%s9] sm:$0x1]
        %v1472 = vlaneseq
        %v1473 = vshrl.u32 %v1472, 7
        %v1474 = vsub.s32 0, %v1473
        %v1475 = vrot.slane %v1470, %v1474
        %v1477 = vadd.f32 %v1462, %v1475
        %v1478 = vadd.f32 %v1463, %v1475
        %v1479 = vadd.f32 %v1464, %v1475
        %v1480 = vadd.f32 %v1465, %v1475
        %v1481 = vadd.f32 %v1466, %v1475
        %v1482 = vadd.f32 %v1467, %v1475
        %v1483 = vadd.f32 %v1468, %v1475
        %v1484 = vadd.f32 %v1469, %v1475
        %v1485 = vpack.c.bf16 %v1478, %v1477
        %v1486 = vpack.c.bf16 %v1480, %v1479
        %v1487 = vpack.c.bf16 %v1482, %v1481
        %v1488 = vpack.c.bf16 %v1484, %v1483
        %v1493 = vunpack.c.l.b16 %v1485
        %v1494 = vunpack.c.h.b16 %v1485
        %v1495 = vunpack.c.l.b16 %v1486
        %v1496 = vunpack.c.h.b16 %v1486
        %v1497 = vunpack.c.l.b16 %v1487
        %v1498 = vunpack.c.h.b16 %v1487
        %v1499 = vunpack.c.l.b16 %v1488
        %v1500 = vunpack.c.h.b16 %v1488
        %v1501 = vpack.c.b16 %v1493, %v1493
        %v1502 = vpack.c.b16 %v1494, %v1494
        %v1503 = vpack.c.b16 %v1495, %v1495
        %v1504 = vpack.c.b16 %v1496, %v1496
        %v1505 = vpack.c.b16 %v1497, %v1497
        %v1506 = vpack.c.b16 %v1498, %v1498
        %v1507 = vpack.c.b16 %v1499, %v1499
        %v1508 = vpack.c.b16 %v1500, %v1500
        %1517 = vst [vmem:[%s503] sm:$0xf] %v1501
        %1518 = vst [vmem:[%s503 + $0x4] sm:$0xf] %v1502
        %1519 = vst [vmem:[%s503 + $0x8] sm:$0xf] %v1503
        %1520 = vst [vmem:[%s503 + $0xc] sm:$0xf] %v1504
        %1521 = vst [vmem:[%s503 + $0x10] sm:$0xf] %v1505
        %1522 = vst [vmem:[%s503 + $0x14] sm:$0xf] %v1506
        %1523 = vst [vmem:[%s503 + $0x18] sm:$0xf] %v1507
        %1524 = vst [vmem:[%s503 + $0x1c] sm:$0xf] %v1508
      $region68: #{vit_forward.10} parent=59 // pred_fallthru
        _
      %s1525 = smul.u32 8, %s27
      %p1526 = scmp.lt.s32.totalorder %s26, 1
      %s1527 = scalar_select %p1526, %s26, 1
      %p1528 = scmp.lt.s32.totalorder %s1525, 7
      %s1529 = scalar_select %p1528, %s1525, 7
      %s1530 = smul.addr %s1527, 8
      %s1531 = sadd.s32 %s1529, %s1530
      %s1532 = smul.addr %s1531, 4
      %s1533 = scalar_lea.vmem %s10, %s1532
      // Predicated region
      $region69: #{vit_forward.10} parent=59 // pred_check
        %p1534 = pneg %p299
      $region70: #{vit_forward.10} parent=59 // pred_check_branch
        %1536 = sbr.rel (%p1534) target = $region72
      $region71: #{vit_forward.10} parent=59 // pred_region
        %s1537 = smul.u32 8, %s27
      $region72: #{vit_forward.10} parent=59 // pred_fallthru
        _
    $region60: #{vit_forward.10} parent=5 // pred_fallthru
      _
    %p1538 = scmp.le.s32.totalorder 2, %s16
    // Predicated region
    $region73: #{vit_forward.10} parent=5 // pred_check
      %p1539 = pneg %p1538
    $region74: #{vit_forward.10} parent=5 // pred_check_branch
      %1541 = sbr.rel (%p1539) target = $region76
    $region75: #{vit_forward.10} parent=5 // pred_region
      %s1542 = ssub.s32 %s16, 2
      // Predicated region
      $region77: #{vit_forward.10} parent=75 // pred_check
        %p1543 = pneg %p305
      $region78: #{vit_forward.10} parent=75 // pred_check_branch
        %1545 = sbr.rel (%p1543) target = $region80
      $region79: #{vit_forward.10} parent=75 // pred_region
        %s1546 = smul.u32 8, %s30
        %p1547 = scmp.lt.s32.totalorder %s29, 1
        %s1548 = scalar_select %p1547, %s29, 1
        %p1549 = scmp.lt.s32.totalorder %s1546, 7
        %s1550 = scalar_select %p1549, %s1546, 7
        %s1551 = smul.addr %s1548, 8
        %s1552 = sadd.s32 %s1550, %s1551
        %s1553 = smul.addr %s1552, 4
        %s1554 = scalar_lea.vmem %s10, %s1553
      $region80: #{vit_forward.10} parent=75 // pred_fallthru
        _
    $region76: #{vit_forward.10} parent=5 // pred_fallthru
      _
  $region6: #{vit_forward.10} parent=0 // loop_footer
    %s20 = sadd.s32 1, %s16
  $region7: #{vit_forward.10} parent=0 // loop_footer_branch
    %15 = sbr.rel target = $region3
  $region8: #{vit_forward.10} parent=0 // loop_exit
    _

// kernel: vit_forward.9
$region0: #{vit_forward.9}
  #allocation0 [shape = 'u32[]', space=smem, size = 0x4, offset = 0x4, fixed_abs, tag = 'smem constant byte address 0x4 - core index']
  #allocation1 [shape = 'u32[144,128]{1,0:T(1,128)}', space=vmem, size = 0x12000, scoped, tag = 'internal scratch']
  #allocation2 [shape = 'f32[4,64,1]{2,1,0:T(8,128)}', space=vmem, size = 0x20000, scoped, tag = 'scratch operand']
  #allocation3 [shape = 'f32[4,64,1]{2,1,0:T(8,128)}', space=vmem, size = 0x20000, scoped, tag = 'scratch operand']
  #allocation4 [shape = 'f32[4,64,32]{2,1,0:T(8,128)}', space=vmem, size = 0x20000, scoped, tag = 'scratch operand']
  %s0 = inlined_call_operand.vmem [shape: bf16[2,64,384], index: 0, kind: input, shape index: {}, may-alias: {0,1,2}]
  %s1 = inlined_call_operand.vmem [shape: bf16[2,64,384], index: 1, kind: input, shape index: {}, may-alias: {0,1,2}]
  %s2 = inlined_call_operand.vmem [shape: bf16[2,64,384], index: 2, kind: input, shape index: {}, may-alias: {0,1,2}]
  %s3 = inlined_call_operand.vmem [shape: bf16[2,64,128], index: 3, kind: output, shape index: {}]
  %s4 = sld [smem:[#allocation0]]
  $region176: #{vit_forward.9} parent=0
    _
  %s6 = ssub.s32 1, %s4
  %s7 = scalar_select 0, %s6, %s4
  $region1: #{vit_forward.9} parent=0
    #allocation5 [shape = 'u8[32768]{0}', space=vmem, size = 0x8000, scoped, tag = 'input window, operand 0']
    #allocation6 [shape = 'u8[32768]{0}', space=vmem, size = 0x8000, scoped, tag = 'input window, operand 1']
    #allocation7 [shape = 'u8[32768]{0}', space=vmem, size = 0x8000, scoped, tag = 'input window, operand 2']
    loop: start=0, step=1, limit=4
    $region2: #{vit_forward.9} parent=1 // loop_pre_header
      _
    $region3: #{vit_forward.9} parent=1 // loop_header
      %s9 = sphi 0, %s13
      %p10 = scmp.ge.s32.totalorder %s9, 4
      %s16 = sphi 0, %s35
      %s17 = sphi 0, %s31
      %s18 = sphi 0, %s27
      %s19 = sphi 0, %s16
      %s20 = sphi 0, %s17
      %s21 = sphi 0, %s18
      %s22 = sphi 0, %s19
      %s23 = sphi 0, %s20
      %s24 = sphi 0, %s21
      %s40 = sphi 0, %s42
      %s43 = sphi 0, %s40
      %s44 = sphi 0, %s43
      %s60 = sphi 0, %s44
      %s68 = sphi 0, %s70
      %s71 = sphi 0, %s68
      %s72 = sphi 0, %s71
      %s88 = sphi 0, %s72
      %s96 = sphi 0, %s98
      %s99 = sphi 0, %s96
      %s100 = sphi 0, %s99
      %s116 = sphi 0, %s100
      %s124 = sphi 0, %s126
      %s127 = sphi 0, %s124
      %s128 = sphi 0, %s127
      %s144 = sphi 0, %s128
    $region4: #{vit_forward.9} parent=1 // loop_header_branch
      %12 = sbr.rel (%p10) target = $region8
    $region5: #{vit_forward.9} parent=1 // loop_body
      %s14 = ssub.s32 %s9, 1
      %s15 = ssub.s32 %s9, 2
      %s25 = sadd.s32 1, %s18
      %p26 = scmp.ge.s32.totalorder %s25, 1
      %s27 = scalar_select %p26, 0, %s25
      %s28 = sadd.s32 1, %s17
      %s29 = scalar_select %p26, %s28, %s17
      %p30 = scmp.ge.s32.totalorder %s29, 1
      %s31 = scalar_select %p30, 0, %s29
      %s32 = sadd.s32 1, %s16
      %s33 = scalar_select %p30, %s32, %s16
      %p34 = scmp.ge.s32.totalorder %s33, 2
      %s35 = scalar_select %p34, 0, %s33
      %s36 = ssub.s32 %s16, %s35
      %s37 = ssub.s32 %s17, %s31
      %s38 = sor.u32 %s36, %s37
      %p39 = scmp.eq.s32.totalorder %s38, 0
      %s41 = sadd.s32 %s40, 1
      %s42 = scalar_select %p39, %s40, %s41
      %p45 = pneg %p39
      %p46 = scmp.eq.s32.totalorder %s9, 1
      %p47 = por %p45, %p46
      %p48 = scmp.ne.s32.totalorder %s40, %s43
      %p49 = scmp.eq.s32.totalorder %s9, 0
      %p50 = por %p48, %p49
      %p51 = scmp.ne.s32.totalorder %s40, %s43
      %p52 = scmp.eq.s32.totalorder %s14, 1
      %p53 = por %p51, %p52
      %p54 = scmp.ne.s32.totalorder %s43, %s44
      %p55 = scmp.eq.s32.totalorder %s14, 0
      %p56 = por %p54, %p55
      %p57 = scmp.ne.s32.totalorder %s43, %s44
      %p58 = scmp.eq.s32.totalorder %s15, 1
      %p59 = por %p57, %p58
      %p61 = scmp.ne.s32.totalorder %s44, %s60
      %p62 = scmp.eq.s32.totalorder %s15, 0
      %p63 = por %p61, %p62
      %s64 = ssub.s32 %s16, %s35
      %s65 = ssub.s32 %s18, %s27
      %s66 = sor.u32 %s64, %s65
      %p67 = scmp.eq.s32.totalorder %s66, 0
      %s69 = sadd.s32 %s68, 1
      %s70 = scalar_select %p67, %s68, %s69
      %p73 = pneg %p67
      %p74 = scmp.eq.s32.totalorder %s9, 1
      %p75 = por %p73, %p74
      %p76 = scmp.ne.s32.totalorder %s68, %s71
      %p77 = scmp.eq.s32.totalorder %s9, 0
      %p78 = por %p76, %p77
      %p79 = scmp.ne.s32.totalorder %s68, %s71
      %p80 = scmp.eq.s32.totalorder %s14, 1
      %p81 = por %p79, %p80
      %p82 = scmp.ne.s32.totalorder %s71, %s72
      %p83 = scmp.eq.s32.totalorder %s14, 0
      %p84 = por %p82, %p83
      %p85 = scmp.ne.s32.totalorder %s71, %s72
      %p86 = scmp.eq.s32.totalorder %s15, 1
      %p87 = por %p85, %p86
      %p89 = scmp.ne.s32.totalorder %s72, %s88
      %p90 = scmp.eq.s32.totalorder %s15, 0
      %p91 = por %p89, %p90
      %s92 = ssub.s32 %s16, %s35
      %s93 = ssub.s32 %s18, %s27
      %s94 = sor.u32 %s92, %s93
      %p95 = scmp.eq.s32.totalorder %s94, 0
      %s97 = sadd.s32 %s96, 1
      %s98 = scalar_select %p95, %s96, %s97
      %p101 = pneg %p95
      %p102 = scmp.eq.s32.totalorder %s9, 1
      %p103 = por %p101, %p102
      %p104 = scmp.ne.s32.totalorder %s96, %s99
      %p105 = scmp.eq.s32.totalorder %s9, 0
      %p106 = por %p104, %p105
      %p107 = scmp.ne.s32.totalorder %s96, %s99
      %p108 = scmp.eq.s32.totalorder %s14, 1
      %p109 = por %p107, %p108
      %p110 = scmp.ne.s32.totalorder %s99, %s100
      %p111 = scmp.eq.s32.totalorder %s14, 0
      %p112 = por %p110, %p111
      %p113 = scmp.ne.s32.totalorder %s99, %s100
      %p114 = scmp.eq.s32.totalorder %s15, 1
      %p115 = por %p113, %p114
      %p117 = scmp.ne.s32.totalorder %s100, %s116
      %p118 = scmp.eq.s32.totalorder %s15, 0
      %p119 = por %p117, %p118
      %s120 = ssub.s32 %s16, %s35
      %s121 = ssub.s32 %s17, %s31
      %s122 = sor.u32 %s120, %s121
      %p123 = scmp.eq.s32.totalorder %s122, 0
      %s125 = sadd.s32 %s124, 1
      %s126 = scalar_select %p123, %s124, %s125
      %p129 = pneg %p123
      %p130 = scmp.eq.s32.totalorder %s9, 1
      %p131 = por %p129, %p130
      %p132 = scmp.ne.s32.totalorder %s124, %s127
      %p133 = scmp.eq.s32.totalorder %s9, 0
      %p134 = por %p132, %p133
      %p135 = scmp.ne.s32.totalorder %s124, %s127
      %p136 = scmp.eq.s32.totalorder %s14, 1
      %p137 = por %p135, %p136
      %p138 = scmp.ne.s32.totalorder %s127, %s128
      %p139 = scmp.eq.s32.totalorder %s14, 0
      %p140 = por %p138, %p139
      %p141 = scmp.ne.s32.totalorder %s127, %s128
      %p142 = scmp.eq.s32.totalorder %s15, 1
      %p143 = por %p141, %p142
      %p145 = scmp.ne.s32.totalorder %s128, %s144
      %p146 = scmp.eq.s32.totalorder %s15, 0
      %p147 = por %p145, %p146
      %p148 = scmp.le.s32.totalorder 1, %s9
      %p149 = scmp.lt.s32.totalorder %s9, 3
      %p150 = pnand %p148, %p149
      %p151 = pneg %p150
      // Predicated region
      $region9: #{vit_forward.9} parent=5 // pred_check
        _
      $region10: #{vit_forward.9} parent=5 // pred_check_branch
        %153 = sbr.rel (%p150) target = $region12
      $region11: #{vit_forward.9} parent=5 // pred_region
        %s154 = ssub.s32 %s9, 1
      $region12: #{vit_forward.9} parent=5 // pred_fallthru
        _
      %p155 = scmp.lt.s32.totalorder %s9, 2
      // Predicated region
      $region13: #{vit_forward.9} parent=5 // pred_check
        %p156 = pneg %p155
      $region14: #{vit_forward.9} parent=5 // pred_check_branch
        %158 = sbr.rel (%p156) target = $region16
      $region15: #{vit_forward.9} parent=5 // pred_region
        // Predicated region
        $region17: #{vit_forward.9} parent=15 // pred_check
          %p159 = pneg %p50
        $region18: #{vit_forward.9} parent=15 // pred_check_branch
          %161 = sbr.rel (%p159) target = $region20
        $region19: #{vit_forward.9} parent=15 // pred_region
          %s162 = sand.u32 %s40, 1
          %s163 = sand.u32 %s40, 1
          %s164 = smul.addr %s163, 32
          %s165 = scalar_lea.vmem [#allocation5], %s164
          %s166 = smul.u32 8, %s17
          %s167 = smul.addr %s166, 3
          %s168 = smul.addr %s16, 24
          %s169 = sadd.s32 %s167, %s168
          %s170 = smul.addr %s169, 4
          %s171 = scalar_lea.vmem %s0, %s170
          // Predicated region
          $region21: #{vit_forward.9} parent=19 // pred_check
            _
          $region22: #{vit_forward.9} parent=19 // pred_check_branch
            %173 = sbr.rel (0) target = $region24
          $region23: #{vit_forward.9} parent=19 // pred_region
            // Predicated region
            $region25: #{vit_forward.9} parent=23 // pred_check
              _
            $region26: #{vit_forward.9} parent=23 // pred_check_branch
              %175 = sbr.rel target = $region28
            $region27: #{vit_forward.9} parent=23 // pred_region
              // Predicated region
              $region40: #{vit_forward.9} parent=27 // pred_check
                _
              $region41: #{vit_forward.9} parent=27 // pred_check_branch
                %205 = sbr.rel (0) target = $region43
              $region42: #{vit_forward.9} parent=27 // pred_region
                loop: start=0, step=1, limit=1
                $region44: #{vit_forward.9} parent=42 // loop_pre_header
                  _
                $region45: #{vit_forward.9} parent=42 // loop_header
                  %s207 = sphi 0, %s211
                  %p208 = scmp.ge.s32.totalorder %s207, 1
                  %s212 = sphi %s171, %s171
                  %s213 = sphi %s165, %s165
                $region46: #{vit_forward.9} parent=42 // loop_header_branch
                  %210 = sbr.rel (%p208) target = $region50
                $region47: #{vit_forward.9} parent=42 // loop_body
                  _
                $region48: #{vit_forward.9} parent=42 // loop_footer
                  %s211 = sadd.s32 1, %s207
                $region49: #{vit_forward.9} parent=42 // loop_footer_branch
                  %206 = sbr.rel target = $region45
                $region50: #{vit_forward.9} parent=42 // loop_exit
                  _
                %s215 = ssub.s32 16, 1
                loop: start=0, step=1, limit=1
                $region51: #{vit_forward.9} parent=42 // loop_pre_header
                  _
                $region52: #{vit_forward.9} parent=42 // loop_header
                  %s217 = sphi 0, %s221
                  %p218 = scmp.ge.s32.totalorder %s217, 1
                  %s222 = sphi %s171, %s171
                  %s223 = sphi %s165, %s165
                $region53: #{vit_forward.9} parent=42 // loop_header_branch
                  %220 = sbr.rel (%p218) target = $region57
                $region54: #{vit_forward.9} parent=42 // loop_body
                  %v224 = vld [vmem:[%s222] sm:%s215]
                  %225 = vst [vmem:[%s223] sm:%s215] %v224
                  %v226 = vld [vmem:[%s222 + $0xc] sm:%s215]
                  %227 = vst [vmem:[%s223 + $0x4] sm:%s215] %v226
                  %v228 = vld [vmem:[%s222 + $0x18] sm:%s215]
                  %229 = vst [vmem:[%s223 + $0x8] sm:%s215] %v228
                  %v230 = vld [vmem:[%s222 + $0x24] sm:%s215]
                  %231 = vst [vmem:[%s223 + $0xc] sm:%s215] %v230
                  %v232 = vld [vmem:[%s222 + $0x30] sm:%s215]
                  %233 = vst [vmem:[%s223 + $0x10] sm:%s215] %v232
                  %v234 = vld [vmem:[%s222 + $0x3c] sm:%s215]
                  %235 = vst [vmem:[%s223 + $0x14] sm:%s215] %v234
                  %v236 = vld [vmem:[%s222 + $0x48] sm:%s215]
                  %237 = vst [vmem:[%s223 + $0x18] sm:%s215] %v236
                  %v238 = vld [vmem:[%s222 + $0x54] sm:%s215]
                  %239 = vst [vmem:[%s223 + $0x1c] sm:%s215] %v238
                $region55: #{vit_forward.9} parent=42 // loop_footer
                  %s221 = sadd.s32 1, %s217
                $region56: #{vit_forward.9} parent=42 // loop_footer_branch
                  %216 = sbr.rel target = $region52
                $region57: #{vit_forward.9} parent=42 // loop_exit
                  _
              $region43: #{vit_forward.9} parent=27 // pred_fallthru
                _
            $region28: #{vit_forward.9} parent=23 // pred_fallthru
              _
            // Predicated region
            $region29: #{vit_forward.9} parent=23 // pred_check
              _
            $region30: #{vit_forward.9} parent=23 // pred_check_branch
              %177 = sbr.rel (0) target = $region32
            $region31: #{vit_forward.9} parent=23 // pred_region
              %s179 = ssub.s32 16, 1
              loop: start=0, step=1, limit=1
              $region33: #{vit_forward.9} parent=31 // loop_pre_header
                _
              $region34: #{vit_forward.9} parent=31 // loop_header
                %s181 = sphi 0, %s185
                %p182 = scmp.ge.s32.totalorder %s181, 1
                %s186 = sphi %s171, %s171
                %s187 = sphi %s165, %s165
              $region35: #{vit_forward.9} parent=31 // loop_header_branch
                %184 = sbr.rel (%p182) target = $region39
              $region36: #{vit_forward.9} parent=31 // loop_body
                %v188 = vld [vmem:[%s186] sm:%s179]
                %189 = vst [vmem:[%s187] sm:%s179] %v188
                %v190 = vld [vmem:[%s186 + $0xc] sm:%s179]
                %191 = vst [vmem:[%s187 + $0x4] sm:%s179] %v190
                %v192 = vld [vmem:[%s186 + $0x18] sm:%s179]
                %193 = vst [vmem:[%s187 + $0x8] sm:%s179] %v192
                %v194 = vld [vmem:[%s186 + $0x24] sm:%s179]
                %195 = vst [vmem:[%s187 + $0xc] sm:%s179] %v194
                %v196 = vld [vmem:[%s186 + $0x30] sm:%s179]
                %197 = vst [vmem:[%s187 + $0x10] sm:%s179] %v196
                %v198 = vld [vmem:[%s186 + $0x3c] sm:%s179]
                %199 = vst [vmem:[%s187 + $0x14] sm:%s179] %v198
                %v200 = vld [vmem:[%s186 + $0x48] sm:%s179]
                %201 = vst [vmem:[%s187 + $0x18] sm:%s179] %v200
                %v202 = vld [vmem:[%s186 + $0x54] sm:%s179]
                %203 = vst [vmem:[%s187 + $0x1c] sm:%s179] %v202
              $region37: #{vit_forward.9} parent=31 // loop_footer
                %s185 = sadd.s32 1, %s181
              $region38: #{vit_forward.9} parent=31 // loop_footer_branch
                %180 = sbr.rel target = $region34
              $region39: #{vit_forward.9} parent=31 // loop_exit
                _
            $region32: #{vit_forward.9} parent=23 // pred_fallthru
              _
          $region24: #{vit_forward.9} parent=19 // pred_fallthru
            _
          %240 = vnop
        $region20: #{vit_forward.9} parent=15 // pred_fallthru
          _
        // Predicated region
        $region58: #{vit_forward.9} parent=15 // pred_check
          %p241 = pneg %p78
        $region59: #{vit_forward.9} parent=15 // pred_check_branch
          %243 = sbr.rel (%p241) target = $region61
        $region60: #{vit_forward.9} parent=15 // pred_region
          %s244 = sand.u32 %s68, 1
          %s245 = sand.u32 %s68, 1
          %s246 = smul.addr %s245, 32
          %s247 = scalar_lea.vmem [#allocation6], %s246
          %s248 = smul.u32 8, %s18
          %s249 = smul.addr %s248, 3
          %s250 = sadd.s32 1, %s249
          %s251 = smul.addr %s16, 24
          %s252 = sadd.s32 %s250, %s251
          %s253 = smul.addr %s252, 4
          %s254 = scalar_lea.vmem %s1, %s253
          // Predicated region
          $region62: #{vit_forward.9} parent=60 // pred_check
            _
          $region63: #{vit_forward.9} parent=60 // pred_check_branch
            %256 = sbr.rel (0) target = $region65
          $region64: #{vit_forward.9} parent=60 // pred_region
            // Predicated region
            $region66: #{vit_forward.9} parent=64 // pred_check
              _
            $region67: #{vit_forward.9} parent=64 // pred_check_branch
              %258 = sbr.rel target = $region69
            $region68: #{vit_forward.9} parent=64 // pred_region
              // Predicated region
              $region81: #{vit_forward.9} parent=68 // pred_check
                _
              $region82: #{vit_forward.9} parent=68 // pred_check_branch
                %288 = sbr.rel (0) target = $region84
              $region83: #{vit_forward.9} parent=68 // pred_region
                loop: start=0, step=1, limit=1
                $region85: #{vit_forward.9} parent=83 // loop_pre_header
                  _
                $region86: #{vit_forward.9} parent=83 // loop_header
                  %s290 = sphi 0, %s294
                  %p291 = scmp.ge.s32.totalorder %s290, 1
                  %s295 = sphi %s254, %s254
                  %s296 = sphi %s247, %s247
                $region87: #{vit_forward.9} parent=83 // loop_header_branch
                  %293 = sbr.rel (%p291) target = $region91
                $region88: #{vit_forward.9} parent=83 // loop_body
                  _
                $region89: #{vit_forward.9} parent=83 // loop_footer
                  %s294 = sadd.s32 1, %s290
                $region90: #{vit_forward.9} parent=83 // loop_footer_branch
                  %289 = sbr.rel target = $region86
                $region91: #{vit_forward.9} parent=83 // loop_exit
                  _
                %s298 = ssub.s32 16, 1
                loop: start=0, step=1, limit=1
                $region92: #{vit_forward.9} parent=83 // loop_pre_header
                  _
                $region93: #{vit_forward.9} parent=83 // loop_header
                  %s300 = sphi 0, %s304
                  %p301 = scmp.ge.s32.totalorder %s300, 1
                  %s305 = sphi %s254, %s254
                  %s306 = sphi %s247, %s247
                $region94: #{vit_forward.9} parent=83 // loop_header_branch
                  %303 = sbr.rel (%p301) target = $region98
                $region95: #{vit_forward.9} parent=83 // loop_body
                  %v307 = vld [vmem:[%s305] sm:%s298]
                  %308 = vst [vmem:[%s306] sm:%s298] %v307
                  %v309 = vld [vmem:[%s305 + $0xc] sm:%s298]
                  %310 = vst [vmem:[%s306 + $0x4] sm:%s298] %v309
                  %v311 = vld [vmem:[%s305 + $0x18] sm:%s298]
                  %312 = vst [vmem:[%s306 + $0x8] sm:%s298] %v311
                  %v313 = vld [vmem:[%s305 + $0x24] sm:%s298]
                  %314 = vst [vmem:[%s306 + $0xc] sm:%s298] %v313
                  %v315 = vld [vmem:[%s305 + $0x30] sm:%s298]
                  %316 = vst [vmem:[%s306 + $0x10] sm:%s298] %v315
                  %v317 = vld [vmem:[%s305 + $0x3c] sm:%s298]
                  %318 = vst [vmem:[%s306 + $0x14] sm:%s298] %v317
                  %v319 = vld [vmem:[%s305 + $0x48] sm:%s298]
                  %320 = vst [vmem:[%s306 + $0x18] sm:%s298] %v319
                  %v321 = vld [vmem:[%s305 + $0x54] sm:%s298]
                  %322 = vst [vmem:[%s306 + $0x1c] sm:%s298] %v321
                $region96: #{vit_forward.9} parent=83 // loop_footer
                  %s304 = sadd.s32 1, %s300
                $region97: #{vit_forward.9} parent=83 // loop_footer_branch
                  %299 = sbr.rel target = $region93
                $region98: #{vit_forward.9} parent=83 // loop_exit
                  _
              $region84: #{vit_forward.9} parent=68 // pred_fallthru
                _
            $region69: #{vit_forward.9} parent=64 // pred_fallthru
              _
            // Predicated region
            $region70: #{vit_forward.9} parent=64 // pred_check
              _
            $region71: #{vit_forward.9} parent=64 // pred_check_branch
              %260 = sbr.rel (0) target = $region73
            $region72: #{vit_forward.9} parent=64 // pred_region
              %s262 = ssub.s32 16, 1
              loop: start=0, step=1, limit=1
              $region74: #{vit_forward.9} parent=72 // loop_pre_header
                _
              $region75: #{vit_forward.9} parent=72 // loop_header
                %s264 = sphi 0, %s268
                %p265 = scmp.ge.s32.totalorder %s264, 1
                %s269 = sphi %s254, %s254
                %s270 = sphi %s247, %s247
              $region76: #{vit_forward.9} parent=72 // loop_header_branch
                %267 = sbr.rel (%p265) target = $region80
              $region77: #{vit_forward.9} parent=72 // loop_body
                %v271 = vld [vmem:[%s269] sm:%s262]
                %272 = vst [vmem:[%s270] sm:%s262] %v271
                %v273 = vld [vmem:[%s269 + $0xc] sm:%s262]
                %274 = vst [vmem:[%s270 + $0x4] sm:%s262] %v273
                %v275 = vld [vmem:[%s269 + $0x18] sm:%s262]
                %276 = vst [vmem:[%s270 + $0x8] sm:%s262] %v275
                %v277 = vld [vmem:[%s269 + $0x24] sm:%s262]
                %278 = vst [vmem:[%s270 + $0xc] sm:%s262] %v277
                %v279 = vld [vmem:[%s269 + $0x30] sm:%s262]
                %280 = vst [vmem:[%s270 + $0x10] sm:%s262] %v279
                %v281 = vld [vmem:[%s269 + $0x3c] sm:%s262]
                %282 = vst [vmem:[%s270 + $0x14] sm:%s262] %v281
                %v283 = vld [vmem:[%s269 + $0x48] sm:%s262]
                %284 = vst [vmem:[%s270 + $0x18] sm:%s262] %v283
                %v285 = vld [vmem:[%s269 + $0x54] sm:%s262]
                %286 = vst [vmem:[%s270 + $0x1c] sm:%s262] %v285
              $region78: #{vit_forward.9} parent=72 // loop_footer
                %s268 = sadd.s32 1, %s264
              $region79: #{vit_forward.9} parent=72 // loop_footer_branch
                %263 = sbr.rel target = $region75
              $region80: #{vit_forward.9} parent=72 // loop_exit
                _
            $region73: #{vit_forward.9} parent=64 // pred_fallthru
              _
          $region65: #{vit_forward.9} parent=60 // pred_fallthru
            _
          %323 = vnop
        $region61: #{vit_forward.9} parent=15 // pred_fallthru
          _
        // Predicated region
        $region99: #{vit_forward.9} parent=15 // pred_check
          %p324 = pneg %p106
        $region100: #{vit_forward.9} parent=15 // pred_check_branch
          %326 = sbr.rel (%p324) target = $region102
        $region101: #{vit_forward.9} parent=15 // pred_region
          %s327 = sand.u32 %s96, 1
          %s328 = sand.u32 %s96, 1
          %s329 = smul.addr %s328, 32
          %s330 = scalar_lea.vmem [#allocation7], %s329
          %s331 = smul.u32 8, %s18
          %s332 = smul.addr %s331, 3
          %s333 = sadd.s32 2, %s332
          %s334 = smul.addr %s16, 24
          %s335 = sadd.s32 %s333, %s334
          %s336 = smul.addr %s335, 4
          %s337 = scalar_lea.vmem %s2, %s336
          // Predicated region
          $region103: #{vit_forward.9} parent=101 // pred_check
            _
          $region104: #{vit_forward.9} parent=101 // pred_check_branch
            %339 = sbr.rel (0) target = $region106
          $region105: #{vit_forward.9} parent=101 // pred_region
            // Predicated region
            $region107: #{vit_forward.9} parent=105 // pred_check
              _
            $region108: #{vit_forward.9} parent=105 // pred_check_branch
              %341 = sbr.rel target = $region110
            $region109: #{vit_forward.9} parent=105 // pred_region
              // Predicated region
              $region122: #{vit_forward.9} parent=109 // pred_check
                _
              $region123: #{vit_forward.9} parent=109 // pred_check_branch
                %371 = sbr.rel (0) target = $region125
              $region124: #{vit_forward.9} parent=109 // pred_region
                loop: start=0, step=1, limit=1
                $region126: #{vit_forward.9} parent=124 // loop_pre_header
                  _
                $region127: #{vit_forward.9} parent=124 // loop_header
                  %s373 = sphi 0, %s377
                  %p374 = scmp.ge.s32.totalorder %s373, 1
                  %s378 = sphi %s337, %s337
                  %s379 = sphi %s330, %s330
                $region128: #{vit_forward.9} parent=124 // loop_header_branch
                  %376 = sbr.rel (%p374) target = $region132
                $region129: #{vit_forward.9} parent=124 // loop_body
                  _
                $region130: #{vit_forward.9} parent=124 // loop_footer
                  %s377 = sadd.s32 1, %s373
                $region131: #{vit_forward.9} parent=124 // loop_footer_branch
                  %372 = sbr.rel target = $region127
                $region132: #{vit_forward.9} parent=124 // loop_exit
                  _
                %s381 = ssub.s32 16, 1
                loop: start=0, step=1, limit=1
                $region133: #{vit_forward.9} parent=124 // loop_pre_header
                  _
                $region134: #{vit_forward.9} parent=124 // loop_header
                  %s383 = sphi 0, %s387
                  %p384 = scmp.ge.s32.totalorder %s383, 1
                  %s388 = sphi %s337, %s337
                  %s389 = sphi %s330, %s330
                $region135: #{vit_forward.9} parent=124 // loop_header_branch
                  %386 = sbr.rel (%p384) target = $region139
                $region136: #{vit_forward.9} parent=124 // loop_body
                  %v390 = vld [vmem:[%s388] sm:%s381]
                  %391 = vst [vmem:[%s389] sm:%s381] %v390
                  %v392 = vld [vmem:[%s388 + $0xc] sm:%s381]
                  %393 = vst [vmem:[%s389 + $0x4] sm:%s381] %v392
                  %v394 = vld [vmem:[%s388 + $0x18] sm:%s381]
                  %395 = vst [vmem:[%s389 + $0x8] sm:%s381] %v394
                  %v396 = vld [vmem:[%s388 + $0x24] sm:%s381]
                  %397 = vst [vmem:[%s389 + $0xc] sm:%s381] %v396
                  %v398 = vld [vmem:[%s388 + $0x30] sm:%s381]
                  %399 = vst [vmem:[%s389 + $0x10] sm:%s381] %v398
                  %v400 = vld [vmem:[%s388 + $0x3c] sm:%s381]
                  %401 = vst [vmem:[%s389 + $0x14] sm:%s381] %v400
                  %v402 = vld [vmem:[%s388 + $0x48] sm:%s381]
                  %403 = vst [vmem:[%s389 + $0x18] sm:%s381] %v402
                  %v404 = vld [vmem:[%s388 + $0x54] sm:%s381]
                  %405 = vst [vmem:[%s389 + $0x1c] sm:%s381] %v404
                $region137: #{vit_forward.9} parent=124 // loop_footer
                  %s387 = sadd.s32 1, %s383
                $region138: #{vit_forward.9} parent=124 // loop_footer_branch
                  %382 = sbr.rel target = $region134
                $region139: #{vit_forward.9} parent=124 // loop_exit
                  _
              $region125: #{vit_forward.9} parent=109 // pred_fallthru
                _
            $region110: #{vit_forward.9} parent=105 // pred_fallthru
              _
            // Predicated region
            $region111: #{vit_forward.9} parent=105 // pred_check
              _
            $region112: #{vit_forward.9} parent=105 // pred_check_branch
              %343 = sbr.rel (0) target = $region114
            $region113: #{vit_forward.9} parent=105 // pred_region
              %s345 = ssub.s32 16, 1
              loop: start=0, step=1, limit=1
              $region115: #{vit_forward.9} parent=113 // loop_pre_header
                _
              $region116: #{vit_forward.9} parent=113 // loop_header
                %s347 = sphi 0, %s351
                %p348 = scmp.ge.s32.totalorder %s347, 1
                %s352 = sphi %s337, %s337
                %s353 = sphi %s330, %s330
              $region117: #{vit_forward.9} parent=113 // loop_header_branch
                %350 = sbr.rel (%p348) target = $region121
              $region118: #{vit_forward.9} parent=113 // loop_body
                %v354 = vld [vmem:[%s352] sm:%s345]
                %355 = vst [vmem:[%s353] sm:%s345] %v354
                %v356 = vld [vmem:[%s352 + $0xc] sm:%s345]
                %357 = vst [vmem:[%s353 + $0x4] sm:%s345] %v356
                %v358 = vld [vmem:[%s352 + $0x18] sm:%s345]
                %359 = vst [vmem:[%s353 + $0x8] sm:%s345] %v358
                %v360 = vld [vmem:[%s352 + $0x24] sm:%s345]
                %361 = vst [vmem:[%s353 + $0xc] sm:%s345] %v360
                %v362 = vld [vmem:[%s352 + $0x30] sm:%s345]
                %363 = vst [vmem:[%s353 + $0x10] sm:%s345] %v362
                %v364 = vld [vmem:[%s352 + $0x3c] sm:%s345]
                %365 = vst [vmem:[%s353 + $0x14] sm:%s345] %v364
                %v366 = vld [vmem:[%s352 + $0x48] sm:%s345]
                %367 = vst [vmem:[%s353 + $0x18] sm:%s345] %v366
                %v368 = vld [vmem:[%s352 + $0x54] sm:%s345]
                %369 = vst [vmem:[%s353 + $0x1c] sm:%s345] %v368
              $region119: #{vit_forward.9} parent=113 // loop_footer
                %s351 = sadd.s32 1, %s347
              $region120: #{vit_forward.9} parent=113 // loop_footer_branch
                %346 = sbr.rel target = $region116
              $region121: #{vit_forward.9} parent=113 // loop_exit
                _
            $region114: #{vit_forward.9} parent=105 // pred_fallthru
              _
          $region106: #{vit_forward.9} parent=101 // pred_fallthru
            _
          %406 = vnop
        $region102: #{vit_forward.9} parent=15 // pred_fallthru
          _
      $region16: #{vit_forward.9} parent=5 // pred_fallthru
        _
      %p407 = scmp.le.s32.totalorder 1, %s9
      %p408 = scmp.lt.s32.totalorder %s9, 3
      %p409 = pnand %p407, %p408
      %p410 = pneg %p409
      // Predicated region
      $region140: #{vit_forward.9} parent=5 // pred_check
        _
      $region141: #{vit_forward.9} parent=5 // pred_check_branch
        %412 = sbr.rel (%p409) target = $region143
      $region142: #{vit_forward.9} parent=5 // pred_region
        %s413 = ssub.s32 %s9, 1
        %s414 = sand.u32 %s43, 1
        %s415 = sand.u32 %s43, 1
        %s416 = smul.addr %s415, 32
        %s417 = scalar_lea.vmem [#allocation5], %s416
        // Predicated region
        $region144: #{vit_forward.9} parent=142 // pred_check
          %p418 = pneg %p56
        $region145: #{vit_forward.9} parent=142 // pred_check_branch
          %420 = sbr.rel (%p418) target = $region147
        $region146: #{vit_forward.9} parent=142 // pred_region
          _
        $region147: #{vit_forward.9} parent=142 // pred_fallthru
          _
        %s421 = sand.u32 %s71, 1
        %s422 = sand.u32 %s71, 1
        %s423 = smul.addr %s422, 32
        %s424 = scalar_lea.vmem [#allocation6], %s423
        // Predicated region
        $region148: #{vit_forward.9} parent=142 // pred_check
          %p425 = pneg %p84
        $region149: #{vit_forward.9} parent=142 // pred_check_branch
          %427 = sbr.rel (%p425) target = $region151
        $region150: #{vit_forward.9} parent=142 // pred_region
          _
        $region151: #{vit_forward.9} parent=142 // pred_fallthru
          _
        %s428 = sand.u32 %s99, 1
        %s429 = sand.u32 %s99, 1
        %s430 = smul.addr %s429, 32
        %s431 = scalar_lea.vmem [#allocation7], %s430
        // Predicated region
        $region152: #{vit_forward.9} parent=142 // pred_check
          %p432 = pneg %p112
        $region153: #{vit_forward.9} parent=142 // pred_check_branch
          %434 = sbr.rel (%p432) target = $region155
        $region154: #{vit_forward.9} parent=142 // pred_region
          _
        $region155: #{vit_forward.9} parent=142 // pred_fallthru
          _
        %s435 = sand.u32 %s43, 1
        %s436 = sand.u32 %s43, 1
        %s437 = smul.addr %s436, 32
        %s438 = scalar_lea.vmem [#allocation5], %s437
        %p439 = pneg %p56
        %p440 = pneg %p53
        %s441 = sand.u32 %s71, 1
        %s442 = sand.u32 %s71, 1
        %s443 = smul.addr %s442, 32
        %s444 = scalar_lea.vmem [#allocation6], %s443
        %p445 = pneg %p84
        %p446 = pneg %p81
        %s447 = sand.u32 %s99, 1
        %s448 = sand.u32 %s99, 1
        %s449 = smul.addr %s448, 32
        %s450 = scalar_lea.vmem [#allocation7], %s449
        %p451 = pneg %p112
        %p452 = pneg %p109
        %p453 = pneg %p140
        %p454 = pneg %p137
        %s455 = smul.u32 8, %s20
        %p456 = scmp.lt.s32.totalorder %s19, 1
        %s457 = scalar_select %p456, %s19, 1
        %p458 = scmp.lt.s32.totalorder %s455, 7
        %s459 = scalar_select %p458, %s455, 7
        %s460 = smul.addr %s457, 8
        %s461 = sadd.s32 %s459, %s460
        %s462 = smul.addr %s461, 4
        %s463 = scalar_lea.vmem %s3, %s462
        %s464 = smul.u32 8, %s20
        %s465 = smul.u32 8, %s21
        %s466 = smul.u32 8, %s21
        %s467 = smul.u32 8, %s20
        %p468 = scmp.lt.s32.totalorder %s19, 1
        %s469 = scalar_select %p468, %s19, 1
        %p470 = scmp.lt.s32.totalorder %s467, 7
        %s471 = scalar_select %p470, %s467, 7
        %s472 = smul.addr %s469, 8
        %s473 = sadd.s32 %s471, %s472
        %s474 = smul.addr %s473, 4
        %s475 = scalar_lea.vmem %s3, %s474
        %s476 = smul.u32 8, %s20
        %p478 = scmp.eq.s32.totalorder %s21, 0
        // Predicated region
        $region156: #{vit_forward.9} parent=142 // pred_check
          %p479 = pneg %p478
        $region157: #{vit_forward.9} parent=142 // pred_check_branch
          %481 = sbr.rel (%p479) target = $region159
        $region158: #{vit_forward.9} parent=142 // pred_region
          %vm482 = vcmask 7168
          %483 = vst.msk [vmem:[#allocation2] sm:$0xff] %vm482, -1e+30
          %484 = vst.msk [vmem:[#allocation2 + $0x8] sm:$0xff] %vm482, -1e+30
          %485 = vst.msk [vmem:[#allocation2 + $0x10] sm:$0xff] %vm482, -1e+30
          %486 = vst.msk [vmem:[#allocation2 + $0x18] sm:$0xff] %vm482, -1e+30
          %487 = vst.msk [vmem:[#allocation2 + $0x20] sm:$0xff] %vm482, -1e+30
          %488 = vst.msk [vmem:[#allocation2 + $0x28] sm:$0xff] %vm482, -1e+30
          %489 = vst.msk [vmem:[#allocation2 + $0x30] sm:$0xff] %vm482, -1e+30
          %490 = vst.msk [vmem:[#allocation2 + $0x38] sm:$0xff] %vm482, -1e+30
          %491 = vst.msk [vmem:[#allocation2 + $0x40] sm:$0xff] %vm482, -1e+30
          %492 = vst.msk [vmem:[#allocation2 + $0x48] sm:$0xff] %vm482, -1e+30
          %493 = vst.msk [vmem:[#allocation2 + $0x50] sm:$0xff] %vm482, -1e+30
          %494 = vst.msk [vmem:[#allocation2 + $0x58] sm:$0xff] %vm482, -1e+30
          %495 = vst.msk [vmem:[#allocation2 + $0x60] sm:$0xff] %vm482, -1e+30
          %496 = vst.msk [vmem:[#allocation2 + $0x68] sm:$0xff] %vm482, -1e+30
          %497 = vst.msk [vmem:[#allocation2 + $0x70] sm:$0xff] %vm482, -1e+30
          %498 = vst.msk [vmem:[#allocation2 + $0x78] sm:$0xff] %vm482, -1e+30
          %499 = vst.msk [vmem:[#allocation2 + $0x80] sm:$0xff] %vm482, -1e+30
          %500 = vst.msk [vmem:[#allocation2 + $0x88] sm:$0xff] %vm482, -1e+30
          %501 = vst.msk [vmem:[#allocation2 + $0x90] sm:$0xff] %vm482, -1e+30
          %502 = vst.msk [vmem:[#allocation2 + $0x98] sm:$0xff] %vm482, -1e+30
          %503 = vst.msk [vmem:[#allocation2 + $0xa0] sm:$0xff] %vm482, -1e+30
          %504 = vst.msk [vmem:[#allocation2 + $0xa8] sm:$0xff] %vm482, -1e+30
          %505 = vst.msk [vmem:[#allocation2 + $0xb0] sm:$0xff] %vm482, -1e+30
          %506 = vst.msk [vmem:[#allocation2 + $0xb8] sm:$0xff] %vm482, -1e+30
          %507 = vst.msk [vmem:[#allocation2 + $0xc0] sm:$0xff] %vm482, -1e+30
          %508 = vst.msk [vmem:[#allocation2 + $0xc8] sm:$0xff] %vm482, -1e+30
          %509 = vst.msk [vmem:[#allocation2 + $0xd0] sm:$0xff] %vm482, -1e+30
          %510 = vst.msk [vmem:[#allocation2 + $0xd8] sm:$0xff] %vm482, -1e+30
          %511 = vst.msk [vmem:[#allocation2 + $0xe0] sm:$0xff] %vm482, -1e+30
          %512 = vst.msk [vmem:[#allocation2 + $0xe8] sm:$0xff] %vm482, -1e+30
          %513 = vst.msk [vmem:[#allocation2 + $0xf0] sm:$0xff] %vm482, -1e+30
          %514 = vst.msk [vmem:[#allocation2 + $0xf8] sm:$0xff] %vm482, -1e+30
          %515 = vst.msk [vmem:[#allocation3] sm:$0xff] %vm482, 0.0
          %516 = vst.msk [vmem:[#allocation3 + $0x8] sm:$0xff] %vm482, 0.0
          %517 = vst.msk [vmem:[#allocation3 + $0x10] sm:$0xff] %vm482, 0.0
          %518 = vst.msk [vmem:[#allocation3 + $0x18] sm:$0xff] %vm482, 0.0
          %519 = vst.msk [vmem:[#allocation3 + $0x20] sm:$0xff] %vm482, 0.0
          %520 = vst.msk [vmem:[#allocation3 + $0x28] sm:$0xff] %vm482, 0.0
          %521 = vst.msk [vmem:[#allocation3 + $0x30] sm:$0xff] %vm482, 0.0
          %522 = vst.msk [vmem:[#allocation3 + $0x38] sm:$0xff] %vm482, 0.0
          %523 = vst.msk [vmem:[#allocation3 + $0x40] sm:$0xff] %vm482, 0.0
          %524 = vst.msk [vmem:[#allocation3 + $0x48] sm:$0xff] %vm482, 0.0
          %525 = vst.msk [vmem:[#allocation3 + $0x50] sm:$0xff] %vm482, 0.0
          %526 = vst.msk [vmem:[#allocation3 + $0x58] sm:$0xff] %vm482, 0.0
          %527 = vst.msk [vmem:[#allocation3 + $0x60] sm:$0xff] %vm482, 0.0
          %528 = vst.msk [vmem:[#allocation3 + $0x68] sm:$0xff] %vm482, 0.0
          %529 = vst.msk [vmem:[#allocation3 + $0x70] sm:$0xff] %vm482, 0.0
          %530 = vst.msk [vmem:[#allocation3 + $0x78] sm:$0xff] %vm482, 0.0
          %531 = vst.msk [vmem:[#allocation3 + $0x80] sm:$0xff] %vm482, 0.0
          %532 = vst.msk [vmem:[#allocation3 + $0x88] sm:$0xff] %vm482, 0.0
          %533 = vst.msk [vmem:[#allocation3 + $0x90] sm:$0xff] %vm482, 0.0
          %534 = vst.msk [vmem:[#allocation3 + $0x98] sm:$0xff] %vm482, 0.0
          %535 = vst.msk [vmem:[#allocation3 + $0xa0] sm:$0xff] %vm482, 0.0
          %536 = vst.msk [vmem:[#allocation3 + $0xa8] sm:$0xff] %vm482, 0.0
          %537 = vst.msk [vmem:[#allocation3 + $0xb0] sm:$0xff] %vm482, 0.0
          %538 = vst.msk [vmem:[#allocation3 + $0xb8] sm:$0xff] %vm482, 0.0
          %539 = vst.msk [vmem:[#allocation3 + $0xc0] sm:$0xff] %vm482, 0.0
          %540 = vst.msk [vmem:[#allocation3 + $0xc8] sm:$0xff] %vm482, 0.0
          %541 = vst.msk [vmem:[#allocation3 + $0xd0] sm:$0xff] %vm482, 0.0
          %542 = vst.msk [vmem:[#allocation3 + $0xd8] sm:$0xff] %vm482, 0.0
          %543 = vst.msk [vmem:[#allocation3 + $0xe0] sm:$0xff] %vm482, 0.0
          %544 = vst.msk [vmem:[#allocation3 + $0xe8] sm:$0xff] %vm482, 0.0
          %545 = vst.msk [vmem:[#allocation3 + $0xf0] sm:$0xff] %vm482, 0.0
          %546 = vst.msk [vmem:[#allocation3 + $0xf8] sm:$0xff] %vm482, 0.0
          %vm547 = vcmask 261120
          %548 = vst.msk [vmem:[#allocation4] sm:$0xff] %vm547, 0.0
          %549 = vst.msk [vmem:[#allocation4 + $0x8] sm:$0xff] %vm547, 0.0
          %550 = vst.msk [vmem:[#allocation4 + $0x10] sm:$0xff] %vm547, 0.0
          %551 = vst.msk [vmem:[#allocation4 + $0x18] sm:$0xff] %vm547, 0.0
          %552 = vst.msk [vmem:[#allocation4 + $0x20] sm:$0xff] %vm547, 0.0
          %553 = vst.msk [vmem:[#allocation4 + $0x28] sm:$0xff] %vm547, 0.0
          %554 = vst.msk [vmem:[#allocation4 + $0x30] sm:$0xff] %vm547, 0.0
          %555 = vst.msk [vmem:[#allocation4 + $0x38] sm:$0xff] %vm547, 0.0
          %556 = vst.msk [vmem:[#allocation4 + $0x40] sm:$0xff] %vm547, 0.0
          %557 = vst.msk [vmem:[#allocation4 + $0x48] sm:$0xff] %vm547, 0.0
          %558 = vst.msk [vmem:[#allocation4 + $0x50] sm:$0xff] %vm547, 0.0
          %559 = vst.msk [vmem:[#allocation4 + $0x58] sm:$0xff] %vm547, 0.0
          %560 = vst.msk [vmem:[#allocation4 + $0x60] sm:$0xff] %vm547, 0.0
          %561 = vst.msk [vmem:[#allocation4 + $0x68] sm:$0xff] %vm547, 0.0
          %562 = vst.msk [vmem:[#allocation4 + $0x70] sm:$0xff] %vm547, 0.0
          %563 = vst.msk [vmem:[#allocation4 + $0x78] sm:$0xff] %vm547, 0.0
          %564 = vst.msk [vmem:[#allocation4 + $0x80] sm:$0xff] %vm547, 0.0
          %565 = vst.msk [vmem:[#allocation4 + $0x88] sm:$0xff] %vm547, 0.0
          %566 = vst.msk [vmem:[#allocation4 + $0x90] sm:$0xff] %vm547, 0.0
          %567 = vst.msk [vmem:[#allocation4 + $0x98] sm:$0xff] %vm547, 0.0
          %568 = vst.msk [vmem:[#allocation4 + $0xa0] sm:$0xff] %vm547, 0.0
          %569 = vst.msk [vmem:[#allocation4 + $0xa8] sm:$0xff] %vm547, 0.0
          %570 = vst.msk [vmem:[#allocation4 + $0xb0] sm:$0xff] %vm547, 0.0
          %571 = vst.msk [vmem:[#allocation4 + $0xb8] sm:$0xff] %vm547, 0.0
          %572 = vst.msk [vmem:[#allocation4 + $0xc0] sm:$0xff] %vm547, 0.0
          %573 = vst.msk [vmem:[#allocation4 + $0xc8] sm:$0xff] %vm547, 0.0
          %574 = vst.msk [vmem:[#allocation4 + $0xd0] sm:$0xff] %vm547, 0.0
          %575 = vst.msk [vmem:[#allocation4 + $0xd8] sm:$0xff] %vm547, 0.0
          %576 = vst.msk [vmem:[#allocation4 + $0xe0] sm:$0xff] %vm547, 0.0
          %577 = vst.msk [vmem:[#allocation4 + $0xe8] sm:$0xff] %vm547, 0.0
          %578 = vst.msk [vmem:[#allocation4 + $0xf0] sm:$0xff] %vm547, 0.0
          %579 = vst.msk [vmem:[#allocation4 + $0xf8] sm:$0xff] %vm547, 0.0
        $region159: #{vit_forward.9} parent=142 // pred_fallthru
          _
        %v580 = vld [vmem:[%s417] sm:$0xf]
        %v581 = vld [vmem:[%s417 + $0x4] sm:$0xf]
        %v582 = vld [vmem:[%s417 + $0x8] sm:$0xf]
        %v583 = vld [vmem:[%s417 + $0xc] sm:$0xf]
        %v584 = vld [vmem:[%s417 + $0x10] sm:$0xf]
        %v585 = vld [vmem:[%s417 + $0x14] sm:$0xf]
        %v586 = vld [vmem:[%s417 + $0x18] sm:$0xf]
        %v587 = vld [vmem:[%s417 + $0x1c] sm:$0xf]
        %v588 = vld [vmem:[%s424] sm:$0xf]
        %v589 = vld [vmem:[%s424 + $0x4] sm:$0xf]
        %v590 = vld [vmem:[%s424 + $0x8] sm:$0xf]
        %v591 = vld [vmem:[%s424 + $0xc] sm:$0xf]
        %v592 = vld [vmem:[%s424 + $0x10] sm:$0xf]
        %v593 = vld [vmem:[%s424 + $0x14] sm:$0xf]
        %v594 = vld [vmem:[%s424 + $0x18] sm:$0xf]
        %v595 = vld [vmem:[%s424 + $0x1c] sm:$0xf]
        %v596 = vld [vmem:[%s431] sm:$0xf]
        %v597 = vld [vmem:[%s431 + $0x4] sm:$0xf]
        %v598 = vld [vmem:[%s431 + $0x8] sm:$0xf]
        %v599 = vld [vmem:[%s431 + $0xc] sm:$0xf]
        %v600 = vld [vmem:[%s431 + $0x10] sm:$0xf]
        %v601 = vld [vmem:[%s431 + $0x14] sm:$0xf]
        %v602 = vld [vmem:[%s431 + $0x18] sm:$0xf]
        %v603 = vld [vmem:[%s431 + $0x1c] sm:$0xf]
        %v612 = vunpack.c.l.b16 %v580
        %v613 = vunpack.c.l.b16 %v581
        %v614 = vunpack.c.l.b16 %v582
        %v615 = vunpack.c.l.b16 %v583
        %v616 = vunpack.c.l.b16 %v584
        %v617 = vunpack.c.l.b16 %v585
        %v618 = vunpack.c.l.b16 %v586
        %v619 = vunpack.c.l.b16 %v587
        %v620 = vpack.c.b16 %v613, %v612
        %v621 = vpack.c.b16 %v615, %v614
        %v622 = vpack.c.b16 %v617, %v616
        %v623 = vpack.c.b16 %v619, %v618
        %v632 = vunpack.c.l.b16 %v588
        %v633 = vunpack.c.l.b16 %v589
        %v634 = vunpack.c.l.b16 %v590
        %v635 = vunpack.c.l.b16 %v591
        %v636 = vunpack.c.l.b16 %v592
        %v637 = vunpack.c.l.b16 %v593
        %v638 = vunpack.c.l.b16 %v594
        %v639 = vunpack.c.l.b16 %v595
        %v640 = vpack.c.b16 %v633, %v632
        %v641 = vpack.c.b16 %v635, %v634
        %v642 = vpack.c.b16 %v637, %v636
        %v643 = vpack.c.b16 %v639, %v638
        %vm644 = vcmask 261120
        %v646 = vsel %vm644, %v620, 0
        %v649 = vsel %vm644, %v621, 0
        %v652 = vsel %vm644, %v622, 0
        %v655 = vsel %vm644, %v623, 0
        %v658 = vsel %vm644, %v640, 0
        %v661 = vsel %vm644, %v641, 0
        %v664 = vsel %vm644, %v642, 0
        %v667 = vsel %vm644, %v643, 0
        %669 = vmatprep.subr.bf16.mxu0 0
        %670 = vmatpush1.bf16.xpose.msra.mxu0 0
        %671 = vmatprep.subr.bf16.mxu0 0
        %672 = vmatpush1.bf16.xpose.msra.mxu0 0
        %673 = vmatprep.subr.bf16.mxu0 0
        %674 = vmatpush1.bf16.xpose.msra.mxu0 0
        %675 = vmatprep.subr.bf16.mxu0 0
        %676 = vmatpush1.bf16.xpose.msra.mxu0 0
        %677 = vmatprep.subr.bf16.mxu0 0
        %678 = vmatpush1.bf16.xpose.msra.mxu0 %v667
        %679 = vmatprep.subr.bf16.mxu0 0
        %680 = vmatpush1.bf16.xpose.msra.mxu0 %v664
        %681 = vmatprep.subr.bf16.mxu0 0
        %682 = vmatpush1.bf16.xpose.msra.mxu0 %v661
        %683 = vmatprep.subr.bf16.mxu0 0
        %684 = vmatpush1.bf16.xpose.msra.mxu0 %v658
        %685 = vmatprep.subr.bf16.mxu0 0
        %686 = vmatpush2.bf16.xpose.msra.mxu0 0
        %687 = vmatprep.subr.bf16.mxu0 0
        %688 = vmatpush2.bf16.xpose.msra.mxu0 0
        %689 = vmatprep.subr.bf16.mxu0 0
        %690 = vmatpush2.bf16.xpose.msra.mxu0 0
        %691 = vmatprep.subr.bf16.mxu0 0
        %692 = vmatpush2.bf16.xpose.msra.mxu0 0
        %693 = vmatprep.subr.bf16.mxu0 0
        %694 = vmatpush2.bf16.xpose.msra.mxu0 0
        %695 = vmatprep.subr.bf16.mxu0 0
        %696 = vmatpush2.bf16.xpose.msra.mxu0 0
        %697 = vmatprep.subr.bf16.mxu0 0
        %698 = vmatpush2.bf16.xpose.msra.mxu0 0
        %699 = vmatprep.subr.bf16.mxu0 0
        %700 = vmatpush2.bf16.xpose.msra.mxu0 0
        %701 = vmatprep.mubr.bf16.mxu0 0
        %702 = vmatmul.mubr.bf16.gmra.mxu0 %v646
        %v703 = vpop.f32.mrf.mxu0
        %v704 = vadd.f32 0.0, %v703
        %v705 = vpop.f32.mrf.mxu0
        %v706 = vpop.f32.mrf.mxu0
        %v707 = vadd.f32 0.0, %v706
        %v708 = vpop.f32.mrf.mxu0
        %709 = vmatprep.mubr.bf16.mxu0 0
        %710 = vmatmul.mubr.bf16.gmra.mxu0 %v649
        %v711 = vpop.f32.mrf.mxu0
        %v712 = vadd.f32 0.0, %v711
        %v713 = vpop.f32.mrf.mxu0
        %v714 = vpop.f32.mrf.mxu0
        %v715 = vadd.f32 0.0, %v714
        %v716 = vpop.f32.mrf.mxu0
        %717 = vmatprep.mubr.bf16.mxu0 0
        %718 = vmatmul.mubr.bf16.gmra.mxu0 %v652
        %v719 = vpop.f32.mrf.mxu0
        %v720 = vadd.f32 0.0, %v719
        %v721 = vpop.f32.mrf.mxu0
        %v722 = vpop.f32.mrf.mxu0
        %v723 = vadd.f32 0.0, %v722
        %v724 = vpop.f32.mrf.mxu0
        %725 = vmatprep.mubr.bf16.mxu0 0
        %726 = vmatmul.mubr.bf16.gmra.mxu0 %v655
        %v727 = vpop.f32.mrf.mxu0
        %v728 = vadd.f32 0.0, %v727
        %v729 = vpop.f32.mrf.mxu0
        %v730 = vpop.f32.mrf.mxu0
        %v731 = vadd.f32 0.0, %v730
        %v732 = vpop.f32.mrf.mxu0
        %733 = vdwg.mxu0
        %v734 = vld [vmem:[#allocation2] sm:$0xff]
        %v735 = vld [vmem:[#allocation2 + $0x8] sm:$0xff]
        %v736 = vld [vmem:[#allocation2 + $0x10] sm:$0xff]
        %v737 = vld [vmem:[#allocation2 + $0x18] sm:$0xff]
        %v738 = vld [vmem:[#allocation2 + $0x20] sm:$0xff]
        %v739 = vld [vmem:[#allocation2 + $0x28] sm:$0xff]
        %v740 = vld [vmem:[#allocation2 + $0x30] sm:$0xff]
        %v741 = vld [vmem:[#allocation2 + $0x38] sm:$0xff]
        %vm742 = vcmask 523264
        %v743 = vsel %vm742, %v704, -inf
        %744 = vmax.xlane.f32.xlu0 %v743
        %v745 = vpop.xlane.xlu0 %744
        %v746 = vsel %vm742, %v707, -inf
        %747 = vmax.xlane.f32.xlu0 %v746
        %v748 = vpop.xlane.xlu0 %747
        %v749 = vsel %vm742, %v712, -inf
        %750 = vmax.xlane.f32.xlu0 %v749
        %v751 = vpop.xlane.xlu0 %750
        %v752 = vsel %vm742, %v715, -inf
        %753 = vmax.xlane.f32.xlu0 %v752
        %v754 = vpop.xlane.xlu0 %753
        %v755 = vsel %vm742, %v720, -inf
        %756 = vmax.xlane.f32.xlu0 %v755
        %v757 = vpop.xlane.xlu0 %756
        %v758 = vsel %vm742, %v723, -inf
        %759 = vmax.xlane.f32.xlu0 %v758
        %v760 = vpop.xlane.xlu0 %759
        %v761 = vsel %vm742, %v728, -inf
        %762 = vmax.xlane.f32.xlu0 %v761
        %v763 = vpop.xlane.xlu0 %762
        %v764 = vsel %vm742, %v731, -inf
        %765 = vmax.xlane.f32.xlu0 %v764
        %v766 = vpop.xlane.xlu0 %765
        %v767 = vmax.f32 %v734, %v745
        %v768 = vmax.f32 %v735, %v748
        %v769 = vmax.f32 %v736, %v751
        %v770 = vmax.f32 %v737, %v754
        %v771 = vmax.f32 %v738, %v757
        %v772 = vmax.f32 %v739, %v760
        %v773 = vmax.f32 %v740, %v763
        %v774 = vmax.f32 %v741, %v766
        %v775 = vsub.f32 %v734, %v767
        %v776 = vsub.f32 %v735, %v768
        %v777 = vsub.f32 %v736, %v769
        %v778 = vsub.f32 %v737, %v770
        %v779 = vsub.f32 %v738, %v771
        %v780 = vsub.f32 %v739, %v772
        %v781 = vsub.f32 %v740, %v773
        %v782 = vsub.f32 %v741, %v774
        %v783 = vmul.f32 %v775, 1.442695
        %v784 = vpow.pop %v783
        %v785 = vmul.f32 %v776, 1.442695
        %v786 = vpow.pop %v785
        %v787 = vmul.f32 %v777, 1.442695
        %v788 = vpow.pop %v787
        %v789 = vmul.f32 %v778, 1.442695
        %v790 = vpow.pop %v789
        %v791 = vmul.f32 %v779, 1.442695
        %v792 = vpow.pop %v791
        %v793 = vmul.f32 %v780, 1.442695
        %v794 = vpow.pop %v793
        %v795 = vmul.f32 %v781, 1.442695
        %v796 = vpow.pop %v795
        %v797 = vmul.f32 %v782, 1.442695
        %v798 = vpow.pop %v797
        %800 = vset.pattern.permute.xlu0 0
        %801 = vperm.xlu0 %800, %v767
        %v802 = vpop.permute.xlu0 %801
        %805 = vset.pattern.permute.xlu0 0
        %806 = vperm.xlu0 %805, %v768
        %v807 = vpop.permute.xlu0 %806
        %810 = vset.pattern.permute.xlu0 0
        %811 = vperm.xlu0 %810, %v769
        %v812 = vpop.permute.xlu0 %811
        %815 = vset.pattern.permute.xlu0 0
        %816 = vperm.xlu0 %815, %v770
        %v817 = vpop.permute.xlu0 %816
        %820 = vset.pattern.permute.xlu0 0
        %821 = vperm.xlu0 %820, %v771
        %v822 = vpop.permute.xlu0 %821
        %825 = vset.pattern.permute.xlu0 0
        %826 = vperm.xlu0 %825, %v772
        %v827 = vpop.permute.xlu0 %826
        %830 = vset.pattern.permute.xlu0 0
        %831 = vperm.xlu0 %830, %v773
        %v832 = vpop.permute.xlu0 %831
        %835 = vset.pattern.permute.xlu0 0
        %836 = vperm.xlu0 %835, %v774
        %v837 = vpop.permute.xlu0 %836
        %v839 = vsub.f32 %v704, %v802
        %v840 = vsub.f32 %v707, %v807
        %v841 = vsub.f32 %v712, %v812
        %v842 = vsub.f32 %v715, %v817
        %v843 = vsub.f32 %v720, %v822
        %v844 = vsub.f32 %v723, %v827
        %v845 = vsub.f32 %v728, %v832
        %v846 = vsub.f32 %v731, %v837
        %v847 = vmul.f32 %v839, 1.442695
        %v848 = vpow.pop %v847
        %v849 = vmul.f32 %v840, 1.442695
        %v850 = vpow.pop %v849
        %v851 = vmul.f32 %v841, 1.442695
        %v852 = vpow.pop %v851
        %v853 = vmul.f32 %v842, 1.442695
        %v854 = vpow.pop %v853
        %v855 = vmul.f32 %v843, 1.442695
        %v856 = vpow.pop %v855
        %v857 = vmul.f32 %v844, 1.442695
        %v858 = vpow.pop %v857
        %v859 = vmul.f32 %v845, 1.442695
        %v860 = vpow.pop %v859
        %v861 = vmul.f32 %v846, 1.442695
        %v862 = vpow.pop %v861
        %v863 = vld [vmem:[#allocation3] sm:$0xff]
        %v864 = vld [vmem:[#allocation3 + $0x8] sm:$0xff]
        %v865 = vld [vmem:[#allocation3 + $0x10] sm:$0xff]
        %v866 = vld [vmem:[#allocation3 + $0x18] sm:$0xff]
        %v867 = vld [vmem:[#allocation3 + $0x20] sm:$0xff]
        %v868 = vld [vmem:[#allocation3 + $0x28] sm:$0xff]
        %v869 = vld [vmem:[#allocation3 + $0x30] sm:$0xff]
        %v870 = vld [vmem:[#allocation3 + $0x38] sm:$0xff]
        %v871 = vmul.f32 %v784, %v863
        %v872 = vmul.f32 %v786, %v864
        %v873 = vmul.f32 %v788, %v865
        %v874 = vmul.f32 %v790, %v866
        %v875 = vmul.f32 %v792, %v867
        %v876 = vmul.f32 %v794, %v868
        %v877 = vmul.f32 %v796, %v869
        %v878 = vmul.f32 %v798, %v870
        %v879 = vsel %vm742, %v848, 0.0
        %880 = vadd.xlane.f32.xlu0 %v879
        %v881 = vpop.xlane.xlu0 %880
        %v882 = vsel %vm742, %v850, 0.0
        %883 = vadd.xlane.f32.xlu0 %v882
        %v884 = vpop.xlane.xlu0 %883
        %v885 = vsel %vm742, %v852, 0.0
        %886 = vadd.xlane.f32.xlu0 %v885
        %v887 = vpop.xlane.xlu0 %886
        %v888 = vsel %vm742, %v854, 0.0
        %889 = vadd.xlane.f32.xlu0 %v888
        %v890 = vpop.xlane.xlu0 %889
        %v891 = vsel %vm742, %v856, 0.0
        %892 = vadd.xlane.f32.xlu0 %v891
        %v893 = vpop.xlane.xlu0 %892
        %v894 = vsel %vm742, %v858, 0.0
        %895 = vadd.xlane.f32.xlu0 %v894
        %v896 = vpop.xlane.xlu0 %895
        %v897 = vsel %vm742, %v860, 0.0
        %898 = vadd.xlane.f32.xlu0 %v897
        %v899 = vpop.xlane.xlu0 %898
        %v900 = vsel %vm742, %v862, 0.0
        %901 = vadd.xlane.f32.xlu0 %v900
        %v902 = vpop.xlane.xlu0 %901
        %v903 = vadd.f32 %v871, %v881
        %v904 = vadd.f32 %v872, %v884
        %v905 = vadd.f32 %v873, %v887
        %v906 = vadd.f32 %v874, %v890
        %v907 = vadd.f32 %v875, %v893
        %v908 = vadd.f32 %v876, %v896
        %v909 = vadd.f32 %v877, %v899
        %v910 = vadd.f32 %v878, %v902
        %vm911 = vcmask 7168
        %912 = vst.msk [vmem:[#allocation3] sm:$0xff] %vm911, %v903
        %913 = vst.msk [vmem:[#allocation3 + $0x8] sm:$0xff] %vm911, %v904
        %914 = vst.msk [vmem:[#allocation3 + $0x10] sm:$0xff] %vm911, %v905
        %915 = vst.msk [vmem:[#allocation3 + $0x18] sm:$0xff] %vm911, %v906
        %916 = vst.msk [vmem:[#allocation3 + $0x20] sm:$0xff] %vm911, %v907
        %917 = vst.msk [vmem:[#allocation3 + $0x28] sm:$0xff] %vm911, %v908
        %918 = vst.msk [vmem:[#allocation3 + $0x30] sm:$0xff] %vm911, %v909
        %919 = vst.msk [vmem:[#allocation3 + $0x38] sm:$0xff] %vm911, %v910
        %v920 = vld [vmem:[#allocation4] sm:$0xff]
        %v921 = vld [vmem:[#allocation4 + $0x8] sm:$0xff]
        %v922 = vld [vmem:[#allocation4 + $0x10] sm:$0xff]
        %v923 = vld [vmem:[#allocation4 + $0x18] sm:$0xff]
        %v924 = vld [vmem:[#allocation4 + $0x20] sm:$0xff]
        %v925 = vld [vmem:[#allocation4 + $0x28] sm:$0xff]
        %v926 = vld [vmem:[#allocation4 + $0x30] sm:$0xff]
        %v927 = vld [vmem:[#allocation4 + $0x38] sm:$0xff]
        %929 = vset.pattern.permute.xlu0 0
        %930 = vperm.xlu0 %929, %v784
        %v931 = vpop.permute.xlu0 %930
        %934 = vset.pattern.permute.xlu0 0
        %935 = vperm.xlu0 %934, %v786
        %v936 = vpop.permute.xlu0 %935
        %939 = vset.pattern.permute.xlu0 0
        %940 = vperm.xlu0 %939, %v788
        %v941 = vpop.permute.xlu0 %940
        %944 = vset.pattern.permute.xlu0 0
        %945 = vperm.xlu0 %944, %v790
        %v946 = vpop.permute.xlu0 %945
        %949 = vset.pattern.permute.xlu0 0
        %950 = vperm.xlu0 %949, %v792
        %v951 = vpop.permute.xlu0 %950
        %954 = vset.pattern.permute.xlu0 0
        %955 = vperm.xlu0 %954, %v794
        %v956 = vpop.permute.xlu0 %955
        %959 = vset.pattern.permute.xlu0 0
        %960 = vperm.xlu0 %959, %v796
        %v961 = vpop.permute.xlu0 %960
        %964 = vset.pattern.permute.xlu0 0
        %965 = vperm.xlu0 %964, %v798
        %v966 = vpop.permute.xlu0 %965
        %v968 = vmul.f32 %v931, %v920
        %v969 = vmul.f32 %v936, %v921
        %v970 = vmul.f32 %v941, %v922
        %v971 = vmul.f32 %v946, %v923
        %v972 = vmul.f32 %v951, %v924
        %v973 = vmul.f32 %v956, %v925
        %v974 = vmul.f32 %v961, %v926
        %v975 = vmul.f32 %v966, %v927
        %v976 = vpack.c.bf16 %v850, %v848
        %v977 = vpack.c.bf16 %v854, %v852
        %v978 = vpack.c.bf16 %v858, %v856
        %v979 = vpack.c.bf16 %v862, %v860
        %v988 = vunpack.c.l.b16 %v596
        %v989 = vunpack.c.l.b16 %v597
        %v990 = vunpack.c.l.b16 %v598
        %v991 = vunpack.c.l.b16 %v599
        %v992 = vunpack.c.l.b16 %v600
        %v993 = vunpack.c.l.b16 %v601
        %v994 = vunpack.c.l.b16 %v602
        %v995 = vunpack.c.l.b16 %v603
        %v996 = vpack.c.b16 %v989, %v988
        %v997 = vpack.c.b16 %v991, %v990
        %v998 = vpack.c.b16 %v993, %v992
        %v999 = vpack.c.b16 %v995, %v994
        %v1005 = vsel %vm742, %v976, 0
        %v1008 = vsel %vm742, %v977, 0
        %v1011 = vsel %vm742, %v978, 0
        %v1014 = vsel %vm742, %v979, 0
        %1016 = vmatprep.subr.bf16.mxu0 0
        %1017 = vmatpush1.bf16.msra.mxu0 0
        %1018 = vmatprep.subr.bf16.mxu0 0
        %1019 = vmatpush1.bf16.msra.mxu0 0
        %1020 = vmatprep.subr.bf16.mxu0 0
        %1021 = vmatpush1.bf16.msra.mxu0 0
        %1022 = vmatprep.subr.bf16.mxu0 0
        %1023 = vmatpush1.bf16.msra.mxu0 0
        %1024 = vmatprep.subr.bf16.mxu0 0
        %1025 = vmatpush1.bf16.msra.mxu0 %v999
        %1026 = vmatprep.subr.bf16.mxu0 0
        %1027 = vmatpush1.bf16.msra.mxu0 %v998
        %1028 = vmatprep.subr.bf16.mxu0 0
        %1029 = vmatpush1.bf16.msra.mxu0 %v997
        %1030 = vmatprep.subr.bf16.mxu0 0
        %1031 = vmatpush1.bf16.msra.mxu0 %v996
        %1032 = vmatprep.subr.bf16.mxu0 0
        %1033 = vmatpush2.bf16.msra.mxu0 0
        %1034 = vmatprep.subr.bf16.mxu0 0
        %1035 = vmatpush2.bf16.msra.mxu0 0
        %1036 = vmatprep.subr.bf16.mxu0 0
        %1037 = vmatpush2.bf16.msra.mxu0 0
        %1038 = vmatprep.subr.bf16.mxu0 0
        %1039 = vmatpush2.bf16.msra.mxu0 0
        %1040 = vmatprep.subr.bf16.mxu0 0
        %1041 = vmatpush2.bf16.msra.mxu0 0
        %1042 = vmatprep.subr.bf16.mxu0 0
        %1043 = vmatpush2.bf16.msra.mxu0 0
        %1044 = vmatprep.subr.bf16.mxu0 0
        %1045 = vmatpush2.bf16.msra.mxu0 0
        %1046 = vmatprep.subr.bf16.mxu0 0
        %1047 = vmatpush2.bf16.msra.mxu0 0
        %1048 = vmatprep.mubr.bf16.mxu0 0
        %1049 = vmatmul.mubr.bf16.gmra.mxu0 %v1005
        %v1050 = vpop.f32.mrf.mxu0
        %v1051 = vadd.f32 0.0, %v1050
        %v1052 = vpop.f32.mrf.mxu0
        %v1053 = vpop.f32.mrf.mxu0
        %v1054 = vadd.f32 0.0, %v1053
        %v1055 = vpop.f32.mrf.mxu0
        %1056 = vmatprep.mubr.bf16.mxu0 0
        %1057 = vmatmul.mubr.bf16.gmra.mxu0 %v1008
        %v1058 = vpop.f32.mrf.mxu0
        %v1059 = vadd.f32 0.0, %v1058
        %v1060 = vpop.f32.mrf.mxu0
        %v1061 = vpop.f32.mrf.mxu0
        %v1062 = vadd.f32 0.0, %v1061
        %v1063 = vpop.f32.mrf.mxu0
        %1064 = vmatprep.mubr.bf16.mxu0 0
        %1065 = vmatmul.mubr.bf16.gmra.mxu0 %v1011
        %v1066 = vpop.f32.mrf.mxu0
        %v1067 = vadd.f32 0.0, %v1066
        %v1068 = vpop.f32.mrf.mxu0
        %v1069 = vpop.f32.mrf.mxu0
        %v1070 = vadd.f32 0.0, %v1069
        %v1071 = vpop.f32.mrf.mxu0
        %1072 = vmatprep.mubr.bf16.mxu0 0
        %1073 = vmatmul.mubr.bf16.gmra.mxu0 %v1014
        %v1074 = vpop.f32.mrf.mxu0
        %v1075 = vadd.f32 0.0, %v1074
        %v1076 = vpop.f32.mrf.mxu0
        %v1077 = vpop.f32.mrf.mxu0
        %v1078 = vadd.f32 0.0, %v1077
        %v1079 = vpop.f32.mrf.mxu0
        %1080 = vdwg.mxu0
        %v1081 = vadd.f32 %v968, %v1051
        %v1082 = vadd.f32 %v969, %v1054
        %v1083 = vadd.f32 %v970, %v1059
        %v1084 = vadd.f32 %v971, %v1062
        %v1085 = vadd.f32 %v972, %v1067
        %v1086 = vadd.f32 %v973, %v1070
        %v1087 = vadd.f32 %v974, %v1075
        %v1088 = vadd.f32 %v975, %v1078
        %1089 = vst.msk [vmem:[#allocation4] sm:$0xff] %vm644, %v1081
        %1090 = vst.msk [vmem:[#allocation4 + $0x8] sm:$0xff] %vm644, %v1082
        %1091 = vst.msk [vmem:[#allocation4 + $0x10] sm:$0xff] %vm644, %v1083
        %1092 = vst.msk [vmem:[#allocation4 + $0x18] sm:$0xff] %vm644, %v1084
        %1093 = vst.msk [vmem:[#allocation4 + $0x20] sm:$0xff] %vm644, %v1085
        %1094 = vst.msk [vmem:[#allocation4 + $0x28] sm:$0xff] %vm644, %v1086
        %1095 = vst.msk [vmem:[#allocation4 + $0x30] sm:$0xff] %vm644, %v1087
        %1096 = vst.msk [vmem:[#allocation4 + $0x38] sm:$0xff] %vm644, %v1088
        %1097 = vst.msk [vmem:[#allocation2] sm:$0xff] %vm911, %v767
        %1098 = vst.msk [vmem:[#allocation2 + $0x8] sm:$0xff] %vm911, %v768
        %1099 = vst.msk [vmem:[#allocation2 + $0x10] sm:$0xff] %vm911, %v769
        %1100 = vst.msk [vmem:[#allocation2 + $0x18] sm:$0xff] %vm911, %v770
        %1101 = vst.msk [vmem:[#allocation2 + $0x20] sm:$0xff] %vm911, %v771
        %1102 = vst.msk [vmem:[#allocation2 + $0x28] sm:$0xff] %vm911, %v772
        %1103 = vst.msk [vmem:[#allocation2 + $0x30] sm:$0xff] %vm911, %v773
        %1104 = vst.msk [vmem:[#allocation2 + $0x38] sm:$0xff] %vm911, %v774
        %1105 = vrot.lane.b32.xlu0 %v620, 96
        %v1106 = vpop.permute.xlu0 %1105
        %1107 = vrot.lane.b32.xlu0 %v621, 96
        %v1108 = vpop.permute.xlu0 %1107
        %1109 = vrot.lane.b32.xlu0 %v622, 96
        %v1110 = vpop.permute.xlu0 %1109
        %1111 = vrot.lane.b32.xlu0 %v623, 96
        %v1112 = vpop.permute.xlu0 %1111
        %1113 = vrot.lane.b32.xlu0 %v640, 96
        %v1114 = vpop.permute.xlu0 %1113
        %1115 = vrot.lane.b32.xlu0 %v641, 96
        %v1116 = vpop.permute.xlu0 %1115
        %1117 = vrot.lane.b32.xlu0 %v642, 96
        %v1118 = vpop.permute.xlu0 %1117
        %1119 = vrot.lane.b32.xlu0 %v643, 96
        %v1120 = vpop.permute.xlu0 %1119
        %v1122 = vsel %vm644, %v1106, 0
        %v1125 = vsel %vm644, %v1108, 0
        %v1128 = vsel %vm644, %v1110, 0
        %v1131 = vsel %vm644, %v1112, 0
        %v1134 = vsel %vm644, %v1114, 0
        %v1137 = vsel %vm644, %v1116, 0
        %v1140 = vsel %vm644, %v1118, 0
        %v1143 = vsel %vm644, %v1120, 0
        %1145 = vmatprep.subr.bf16.mxu0 0
        %1146 = vmatpush1.bf16.xpose.msra.mxu0 0
        %1147 = vmatprep.subr.bf16.mxu0 0
        %1148 = vmatpush1.bf16.xpose.msra.mxu0 0
        %1149 = vmatprep.subr.bf16.mxu0 0
        %1150 = vmatpush1.bf16.xpose.msra.mxu0 0
        %1151 = vmatprep.subr.bf16.mxu0 0
        %1152 = vmatpush1.bf16.xpose.msra.mxu0 0
        %1153 = vmatprep.subr.bf16.mxu0 0
        %1154 = vmatpush1.bf16.xpose.msra.mxu0 %v1143
        %1155 = vmatprep.subr.bf16.mxu0 0
        %1156 = vmatpush1.bf16.xpose.msra.mxu0 %v1140
        %1157 = vmatprep.subr.bf16.mxu0 0
        %1158 = vmatpush1.bf16.xpose.msra.mxu0 %v1137
        %1159 = vmatprep.subr.bf16.mxu0 0
        %1160 = vmatpush1.bf16.xpose.msra.mxu0 %v1134
        %1161 = vmatprep.subr.bf16.mxu0 0
        %1162 = vmatpush2.bf16.xpose.msra.mxu0 0
        %1163 = vmatprep.subr.bf16.mxu0 0
        %1164 = vmatpush2.bf16.xpose.msra.mxu0 0
        %1165 = vmatprep.subr.bf16.mxu0 0
        %1166 = vmatpush2.bf16.xpose.msra.mxu0 0
        %1167 = vmatprep.subr.bf16.mxu0 0
        %1168 = vmatpush2.bf16.xpose.msra.mxu0 0
        %1169 = vmatprep.subr.bf16.mxu0 0
        %1170 = vmatpush2.bf16.xpose.msra.mxu0 0
        %1171 = vmatprep.subr.bf16.mxu0 0
        %1172 = vmatpush2.bf16.xpose.msra.mxu0 0
        %1173 = vmatprep.subr.bf16.mxu0 0
        %1174 = vmatpush2.bf16.xpose.msra.mxu0 0
        %1175 = vmatprep.subr.bf16.mxu0 0
        %1176 = vmatpush2.bf16.xpose.msra.mxu0 0
        %1177 = vmatprep.mubr.bf16.mxu0 0
        %1178 = vmatmul.mubr.bf16.gmra.mxu0 %v1122
        %v1179 = vpop.f32.mrf.mxu0
        %v1180 = vadd.f32 0.0, %v1179
        %v1181 = vpop.f32.mrf.mxu0
        %v1182 = vpop.f32.mrf.mxu0
        %v1183 = vadd.f32 0.0, %v1182
        %v1184 = vpop.f32.mrf.mxu0
        %1185 = vmatprep.mubr.bf16.mxu0 0
        %1186 = vmatmul.mubr.bf16.gmra.mxu0 %v1125
        %v1187 = vpop.f32.mrf.mxu0
        %v1188 = vadd.f32 0.0, %v1187
        %v1189 = vpop.f32.mrf.mxu0
        %v1190 = vpop.f32.mrf.mxu0
        %v1191 = vadd.f32 0.0, %v1190
        %v1192 = vpop.f32.mrf.mxu0
        %1193 = vmatprep.mubr.bf16.mxu0 0
        %1194 = vmatmul.mubr.bf16.gmra.mxu0 %v1128
        %v1195 = vpop.f32.mrf.mxu0
        %v1196 = vadd.f32 0.0, %v1195
        %v1197 = vpop.f32.mrf.mxu0
        %v1198 = vpop.f32.mrf.mxu0
        %v1199 = vadd.f32 0.0, %v1198
        %v1200 = vpop.f32.mrf.mxu0
        %1201 = vmatprep.mubr.bf16.mxu0 0
        %1202 = vmatmul.mubr.bf16.gmra.mxu0 %v1131
        %v1203 = vpop.f32.mrf.mxu0
        %v1204 = vadd.f32 0.0, %v1203
        %v1205 = vpop.f32.mrf.mxu0
        %v1206 = vpop.f32.mrf.mxu0
        %v1207 = vadd.f32 0.0, %v1206
        %v1208 = vpop.f32.mrf.mxu0
        %1209 = vdwg.mxu0
        %s1210 = scalar_lea.vmem [#allocation2], 64
        %v1211 = vld [vmem:[%s1210] sm:$0xff]
        %v1212 = vld [vmem:[%s1210 + $0x8] sm:$0xff]
        %v1213 = vld [vmem:[%s1210 + $0x10] sm:$0xff]
        %v1214 = vld [vmem:[%s1210 + $0x18] sm:$0xff]
        %v1215 = vld [vmem:[%s1210 + $0x20] sm:$0xff]
        %v1216 = vld [vmem:[%s1210 + $0x28] sm:$0xff]
        %v1217 = vld [vmem:[%s1210 + $0x30] sm:$0xff]
        %v1218 = vld [vmem:[%s1210 + $0x38] sm:$0xff]
        %v1219 = vsel %vm742, %v1180, -inf
        %1220 = vmax.xlane.f32.xlu0 %v1219
        %v1221 = vpop.xlane.xlu0 %1220
        %v1222 = vsel %vm742, %v1183, -inf
        %1223 = vmax.xlane.f32.xlu0 %v1222
        %v1224 = vpop.xlane.xlu0 %1223
        %v1225 = vsel %vm742, %v1188, -inf
        %1226 = vmax.xlane.f32.xlu0 %v1225
        %v1227 = vpop.xlane.xlu0 %1226
        %v1228 = vsel %vm742, %v1191, -inf
        %1229 = vmax.xlane.f32.xlu0 %v1228
        %v1230 = vpop.xlane.xlu0 %1229
        %v1231 = vsel %vm742, %v1196, -inf
        %1232 = vmax.xlane.f32.xlu0 %v1231
        %v1233 = vpop.xlane.xlu0 %1232
        %v1234 = vsel %vm742, %v1199, -inf
        %1235 = vmax.xlane.f32.xlu0 %v1234
        %v1236 = vpop.xlane.xlu0 %1235
        %v1237 = vsel %vm742, %v1204, -inf
        %1238 = vmax.xlane.f32.xlu0 %v1237
        %v1239 = vpop.xlane.xlu0 %1238
        %v1240 = vsel %vm742, %v1207, -inf
        %1241 = vmax.xlane.f32.xlu0 %v1240
        %v1242 = vpop.xlane.xlu0 %1241
        %v1243 = vmax.f32 %v1211, %v1221
        %v1244 = vmax.f32 %v1212, %v1224
        %v1245 = vmax.f32 %v1213, %v1227
        %v1246 = vmax.f32 %v1214, %v1230
        %v1247 = vmax.f32 %v1215, %v1233
        %v1248 = vmax.f32 %v1216, %v1236
        %v1249 = vmax.f32 %v1217, %v1239
        %v1250 = vmax.f32 %v1218, %v1242
        %v1251 = vsub.f32 %v1211, %v1243
        %v1252 = vsub.f32 %v1212, %v1244
        %v1253 = vsub.f32 %v1213, %v1245
        %v1254 = vsub.f32 %v1214, %v1246
        %v1255 = vsub.f32 %v1215, %v1247
        %v1256 = vsub.f32 %v1216, %v1248
        %v1257 = vsub.f32 %v1217, %v1249
        %v1258 = vsub.f32 %v1218, %v1250
        %v1259 = vmul.f32 %v1251, 1.442695
        %v1260 = vpow.pop %v1259
        %v1261 = vmul.f32 %v1252, 1.442695
        %v1262 = vpow.pop %v1261
        %v1263 = vmul.f32 %v1253, 1.442695
        %v1264 = vpow.pop %v1263
        %v1265 = vmul.f32 %v1254, 1.442695
        %v1266 = vpow.pop %v1265
        %v1267 = vmul.f32 %v1255, 1.442695
        %v1268 = vpow.pop %v1267
        %v1269 = vmul.f32 %v1256, 1.442695
        %v1270 = vpow.pop %v1269
        %v1271 = vmul.f32 %v1257, 1.442695
        %v1272 = vpow.pop %v1271
        %v1273 = vmul.f32 %v1258, 1.442695
        %v1274 = vpow.pop %v1273
        %1276 = vset.pattern.permute.xlu0 0
        %1277 = vperm.xlu0 %1276, %v1243
        %v1278 = vpop.permute.xlu0 %1277
        %1281 = vset.pattern.permute.xlu0 0
        %1282 = vperm.xlu0 %1281, %v1244
        %v1283 = vpop.permute.xlu0 %1282
        %1286 = vset.pattern.permute.xlu0 0
        %1287 = vperm.xlu0 %1286, %v1245
        %v1288 = vpop.permute.xlu0 %1287
        %1291 = vset.pattern.permute.xlu0 0
        %1292 = vperm.xlu0 %1291, %v1246
        %v1293 = vpop.permute.xlu0 %1292
        %1296 = vset.pattern.permute.xlu0 0
        %1297 = vperm.xlu0 %1296, %v1247
        %v1298 = vpop.permute.xlu0 %1297
        %1301 = vset.pattern.permute.xlu0 0
        %1302 = vperm.xlu0 %1301, %v1248
        %v1303 = vpop.permute.xlu0 %1302
        %1306 = vset.pattern.permute.xlu0 0
        %1307 = vperm.xlu0 %1306, %v1249
        %v1308 = vpop.permute.xlu0 %1307
        %1311 = vset.pattern.permute.xlu0 0
        %1312 = vperm.xlu0 %1311, %v1250
        %v1313 = vpop.permute.xlu0 %1312
        %v1315 = vsub.f32 %v1180, %v1278
        %v1316 = vsub.f32 %v1183, %v1283
        %v1317 = vsub.f32 %v1188, %v1288
        %v1318 = vsub.f32 %v1191, %v1293
        %v1319 = vsub.f32 %v1196, %v1298
        %v1320 = vsub.f32 %v1199, %v1303
        %v1321 = vsub.f32 %v1204, %v1308
        %v1322 = vsub.f32 %v1207, %v1313
        %v1323 = vmul.f32 %v1315, 1.442695
        %v1324 = vpow.pop %v1323
        %v1325 = vmul.f32 %v1316, 1.442695
        %v1326 = vpow.pop %v1325
        %v1327 = vmul.f32 %v1317, 1.442695
        %v1328 = vpow.pop %v1327
        %v1329 = vmul.f32 %v1318, 1.442695
        %v1330 = vpow.pop %v1329
        %v1331 = vmul.f32 %v1319, 1.442695
        %v1332 = vpow.pop %v1331
        %v1333 = vmul.f32 %v1320, 1.442695
        %v1334 = vpow.pop %v1333
        %v1335 = vmul.f32 %v1321, 1.442695
        %v1336 = vpow.pop %v1335
        %v1337 = vmul.f32 %v1322, 1.442695
        %v1338 = vpow.pop %v1337
        %s1339 = scalar_lea.vmem [#allocation3], 64
        %v1340 = vld [vmem:[%s1339] sm:$0xff]
        %v1341 = vld [vmem:[%s1339 + $0x8] sm:$0xff]
        %v1342 = vld [vmem:[%s1339 + $0x10] sm:$0xff]
        %v1343 = vld [vmem:[%s1339 + $0x18] sm:$0xff]
        %v1344 = vld [vmem:[%s1339 + $0x20] sm:$0xff]
        %v1345 = vld [vmem:[%s1339 + $0x28] sm:$0xff]
        %v1346 = vld [vmem:[%s1339 + $0x30] sm:$0xff]
        %v1347 = vld [vmem:[%s1339 + $0x38] sm:$0xff]
        %v1348 = vmul.f32 %v1260, %v1340
        %v1349 = vmul.f32 %v1262, %v1341
        %v1350 = vmul.f32 %v1264, %v1342
        %v1351 = vmul.f32 %v1266, %v1343
        %v1352 = vmul.f32 %v1268, %v1344
        %v1353 = vmul.f32 %v1270, %v1345
        %v1354 = vmul.f32 %v1272, %v1346
        %v1355 = vmul.f32 %v1274, %v1347
        %v1356 = vsel %vm742, %v1324, 0.0
        %1357 = vadd.xlane.f32.xlu0 %v1356
        %v1358 = vpop.xlane.xlu0 %1357
        %v1359 = vsel %vm742, %v1326, 0.0
        %1360 = vadd.xlane.f32.xlu0 %v1359
        %v1361 = vpop.xlane.xlu0 %1360
        %v1362 = vsel %vm742, %v1328, 0.0
        %1363 = vadd.xlane.f32.xlu0 %v1362
        %v1364 = vpop.xlane.xlu0 %1363
        %v1365 = vsel %vm742, %v1330, 0.0
        %1366 = vadd.xlane.f32.xlu0 %v1365
        %v1367 = vpop.xlane.xlu0 %1366
        %v1368 = vsel %vm742, %v1332, 0.0
        %1369 = vadd.xlane.f32.xlu0 %v1368
        %v1370 = vpop.xlane.xlu0 %1369
        %v1371 = vsel %vm742, %v1334, 0.0
        %1372 = vadd.xlane.f32.xlu0 %v1371
        %v1373 = vpop.xlane.xlu0 %1372
        %v1374 = vsel %vm742, %v1336, 0.0
        %1375 = vadd.xlane.f32.xlu0 %v1374
        %v1376 = vpop.xlane.xlu0 %1375
        %v1377 = vsel %vm742, %v1338, 0.0
        %1378 = vadd.xlane.f32.xlu0 %v1377
        %v1379 = vpop.xlane.xlu0 %1378
        %v1380 = vadd.f32 %v1348, %v1358
        %v1381 = vadd.f32 %v1349, %v1361
        %v1382 = vadd.f32 %v1350, %v1364
        %v1383 = vadd.f32 %v1351, %v1367
        %v1384 = vadd.f32 %v1352, %v1370
        %v1385 = vadd.f32 %v1353, %v1373
        %v1386 = vadd.f32 %v1354, %v1376
        %v1387 = vadd.f32 %v1355, %v1379
        %1388 = vst.msk [vmem:[%s1339] sm:$0xff] %vm911, %v1380
        %1389 = vst.msk [vmem:[%s1339 + $0x8] sm:$0xff] %vm911, %v1381
        %1390 = vst.msk [vmem:[%s1339 + $0x10] sm:$0xff] %vm911, %v1382
        %1391 = vst.msk [vmem:[%s1339 + $0x18] sm:$0xff] %vm911, %v1383
        %1392 = vst.msk [vmem:[%s1339 + $0x20] sm:$0xff] %vm911, %v1384
        %1393 = vst.msk [vmem:[%s1339 + $0x28] sm:$0xff] %vm911, %v1385
        %1394 = vst.msk [vmem:[%s1339 + $0x30] sm:$0xff] %vm911, %v1386
        %1395 = vst.msk [vmem:[%s1339 + $0x38] sm:$0xff] %vm911, %v1387
        %s1396 = scalar_lea.vmem [#allocation4], 64
        %v1397 = vld [vmem:[%s1396] sm:$0xff]
        %v1398 = vld [vmem:[%s1396 + $0x8] sm:$0xff]
        %v1399 = vld [vmem:[%s1396 + $0x10] sm:$0xff]
        %v1400 = vld [vmem:[%s1396 + $0x18] sm:$0xff]
        %v1401 = vld [vmem:[%s1396 + $0x20] sm:$0xff]
        %v1402 = vld [vmem:[%s1396 + $0x28] sm:$0xff]
        %v1403 = vld [vmem:[%s1396 + $0x30] sm:$0xff]
        %v1404 = vld [vmem:[%s1396 + $0x38] sm:$0xff]
        %1406 = vset.pattern.permute.xlu0 0
        %1407 = vperm.xlu0 %1406, %v1260
        %v1408 = vpop.permute.xlu0 %1407
        %1411 = vset.pattern.permute.xlu0 0
        %1412 = vperm.xlu0 %1411, %v1262
        %v1413 = vpop.permute.xlu0 %1412
        %1416 = vset.pattern.permute.xlu0 0
        %1417 = vperm.xlu0 %1416, %v1264
        %v1418 = vpop.permute.xlu0 %1417
        %1421 = vset.pattern.permute.xlu0 0
        %1422 = vperm.xlu0 %1421, %v1266
        %v1423 = vpop.permute.xlu0 %1422
        %1426 = vset.pattern.permute.xlu0 0
        %1427 = vperm.xlu0 %1426, %v1268
        %v1428 = vpop.permute.xlu0 %1427
        %1431 = vset.pattern.permute.xlu0 0
        %1432 = vperm.xlu0 %1431, %v1270
        %v1433 = vpop.permute.xlu0 %1432
        %1436 = vset.pattern.permute.xlu0 0
        %1437 = vperm.xlu0 %1436, %v1272
        %v1438 = vpop.permute.xlu0 %1437
        %1441 = vset.pattern.permute.xlu0 0
        %1442 = vperm.xlu0 %1441, %v1274
        %v1443 = vpop.permute.xlu0 %1442
        %v1445 = vmul.f32 %v1408, %v1397
        %v1446 = vmul.f32 %v1413, %v1398
        %v1447 = vmul.f32 %v1418, %v1399
        %v1448 = vmul.f32 %v1423, %v1400
        %v1449 = vmul.f32 %v1428, %v1401
        %v1450 = vmul.f32 %v1433, %v1402
        %v1451 = vmul.f32 %v1438, %v1403
        %v1452 = vmul.f32 %v1443, %v1404
        %v1453 = vpack.c.bf16 %v1326, %v1324
        %v1454 = vpack.c.bf16 %v1330, %v1328
        %v1455 = vpack.c.bf16 %v1334, %v1332
        %v1456 = vpack.c.bf16 %v1338, %v1336
        %1457 = vrot.lane.b32.xlu0 %v996, 96
        %v1458 = vpop.permute.xlu0 %1457
        %1459 = vrot.lane.b32.xlu0 %v997, 96
        %v1460 = vpop.permute.xlu0 %1459
        %1461 = vrot.lane.b32.xlu0 %v998, 96
        %v1462 = vpop.permute.xlu0 %1461
        %1463 = vrot.lane.b32.xlu0 %v999, 96
        %v1464 = vpop.permute.xlu0 %1463
        %v1470 = vsel %vm742, %v1453, 0
        %v1473 = vsel %vm742, %v1454, 0
        %v1476 = vsel %vm742, %v1455, 0
        %v1479 = vsel %vm742, %v1456, 0
        %1481 = vmatprep.subr.bf16.mxu0 0
        %1482 = vmatpush1.bf16.msra.mxu0 0
        %1483 = vmatprep.subr.bf16.mxu0 0
        %1484 = vmatpush1.bf16.msra.mxu0 0
        %1485 = vmatprep.subr.bf16.mxu0 0
        %1486 = vmatpush1.bf16.msra.mxu0 0
        %1487 = vmatprep.subr.bf16.mxu0 0
        %1488 = vmatpush1.bf16.msra.mxu0 0
        %1489 = vmatprep.subr.bf16.mxu0 0
        %1490 = vmatpush1.bf16.msra.mxu0 %v1464
        %1491 = vmatprep.subr.bf16.mxu0 0
        %1492 = vmatpush1.bf16.msra.mxu0 %v1462
        %1493 = vmatprep.subr.bf16.mxu0 0
        %1494 = vmatpush1.bf16.msra.mxu0 %v1460
        %1495 = vmatprep.subr.bf16.mxu0 0
        %1496 = vmatpush1.bf16.msra.mxu0 %v1458
        %1497 = vmatprep.subr.bf16.mxu0 0
        %1498 = vmatpush2.bf16.msra.mxu0 0
        %1499 = vmatprep.subr.bf16.mxu0 0
        %1500 = vmatpush2.bf16.msra.mxu0 0
        %1501 = vmatprep.subr.bf16.mxu0 0
        %1502 = vmatpush2.bf16.msra.mxu0 0
        %1503 = vmatprep.subr.bf16.mxu0 0
        %1504 = vmatpush2.bf16.msra.mxu0 0
        %1505 = vmatprep.subr.bf16.mxu0 0
        %1506 = vmatpush2.bf16.msra.mxu0 0
        %1507 = vmatprep.subr.bf16.mxu0 0
        %1508 = vmatpush2.bf16.msra.mxu0 0
        %1509 = vmatprep.subr.bf16.mxu0 0
        %1510 = vmatpush2.bf16.msra.mxu0 0
        %1511 = vmatprep.subr.bf16.mxu0 0
        %1512 = vmatpush2.bf16.msra.mxu0 0
        %1513 = vmatprep.mubr.bf16.mxu0 0
        %1514 = vmatmul.mubr.bf16.gmra.mxu0 %v1470
        %v1515 = vpop.f32.mrf.mxu0
        %v1516 = vadd.f32 0.0, %v1515
        %v1517 = vpop.f32.mrf.mxu0
        %v1518 = vpop.f32.mrf.mxu0
        %v1519 = vadd.f32 0.0, %v1518
        %v1520 = vpop.f32.mrf.mxu0
        %1521 = vmatprep.mubr.bf16.mxu0 0
        %1522 = vmatmul.mubr.bf16.gmra.mxu0 %v1473
        %v1523 = vpop.f32.mrf.mxu0
        %v1524 = vadd.f32 0.0, %v1523
        %v1525 = vpop.f32.mrf.mxu0
        %v1526 = vpop.f32.mrf.mxu0
        %v1527 = vadd.f32 0.0, %v1526
        %v1528 = vpop.f32.mrf.mxu0
        %1529 = vmatprep.mubr.bf16.mxu0 0
        %1530 = vmatmul.mubr.bf16.gmra.mxu0 %v1476
        %v1531 = vpop.f32.mrf.mxu0
        %v1532 = vadd.f32 0.0, %v1531
        %v1533 = vpop.f32.mrf.mxu0
        %v1534 = vpop.f32.mrf.mxu0
        %v1535 = vadd.f32 0.0, %v1534
        %v1536 = vpop.f32.mrf.mxu0
        %1537 = vmatprep.mubr.bf16.mxu0 0
        %1538 = vmatmul.mubr.bf16.gmra.mxu0 %v1479
        %v1539 = vpop.f32.mrf.mxu0
        %v1540 = vadd.f32 0.0, %v1539
        %v1541 = vpop.f32.mrf.mxu0
        %v1542 = vpop.f32.mrf.mxu0
        %v1543 = vadd.f32 0.0, %v1542
        %v1544 = vpop.f32.mrf.mxu0
        %1545 = vdwg.mxu0
        %v1546 = vadd.f32 %v1445, %v1516
        %v1547 = vadd.f32 %v1446, %v1519
        %v1548 = vadd.f32 %v1447, %v1524
        %v1549 = vadd.f32 %v1448, %v1527
        %v1550 = vadd.f32 %v1449, %v1532
        %v1551 = vadd.f32 %v1450, %v1535
        %v1552 = vadd.f32 %v1451, %v1540
        %v1553 = vadd.f32 %v1452, %v1543
        %1554 = vst.msk [vmem:[%s1396] sm:$0xff] %vm644, %v1546
        %1555 = vst.msk [vmem:[%s1396 + $0x8] sm:$0xff] %vm644, %v1547
        %1556 = vst.msk [vmem:[%s1396 + $0x10] sm:$0xff] %vm644, %v1548
        %1557 = vst.msk [vmem:[%s1396 + $0x18] sm:$0xff] %vm644, %v1549
        %1558 = vst.msk [vmem:[%s1396 + $0x20] sm:$0xff] %vm644, %v1550
        %1559 = vst.msk [vmem:[%s1396 + $0x28] sm:$0xff] %vm644, %v1551
        %1560 = vst.msk [vmem:[%s1396 + $0x30] sm:$0xff] %vm644, %v1552
        %1561 = vst.msk [vmem:[%s1396 + $0x38] sm:$0xff] %vm644, %v1553
        %1562 = vst.msk [vmem:[%s1210] sm:$0xff] %vm911, %v1243
        %1563 = vst.msk [vmem:[%s1210 + $0x8] sm:$0xff] %vm911, %v1244
        %1564 = vst.msk [vmem:[%s1210 + $0x10] sm:$0xff] %vm911, %v1245
        %1565 = vst.msk [vmem:[%s1210 + $0x18] sm:$0xff] %vm911, %v1246
        %1566 = vst.msk [vmem:[%s1210 + $0x20] sm:$0xff] %vm911, %v1247
        %1567 = vst.msk [vmem:[%s1210 + $0x28] sm:$0xff] %vm911, %v1248
        %1568 = vst.msk [vmem:[%s1210 + $0x30] sm:$0xff] %vm911, %v1249
        %1569 = vst.msk [vmem:[%s1210 + $0x38] sm:$0xff] %vm911, %v1250
        %1570 = vrot.lane.b32.xlu0 %v620, 64
        %v1571 = vpop.permute.xlu0 %1570
        %1572 = vrot.lane.b32.xlu0 %v621, 64
        %v1573 = vpop.permute.xlu0 %1572
        %1574 = vrot.lane.b32.xlu0 %v622, 64
        %v1575 = vpop.permute.xlu0 %1574
        %1576 = vrot.lane.b32.xlu0 %v623, 64
        %v1577 = vpop.permute.xlu0 %1576
        %1578 = vrot.lane.b32.xlu0 %v640, 64
        %v1579 = vpop.permute.xlu0 %1578
        %1580 = vrot.lane.b32.xlu0 %v641, 64
        %v1581 = vpop.permute.xlu0 %1580
        %1582 = vrot.lane.b32.xlu0 %v642, 64
        %v1583 = vpop.permute.xlu0 %1582
        %1584 = vrot.lane.b32.xlu0 %v643, 64
        %v1585 = vpop.permute.xlu0 %1584
        %v1587 = vsel %vm644, %v1571, 0
        %v1590 = vsel %vm644, %v1573, 0
        %v1593 = vsel %vm644, %v1575, 0
        %v1596 = vsel %vm644, %v1577, 0
        %v1599 = vsel %vm644, %v1579, 0
        %v1602 = vsel %vm644, %v1581, 0
        %v1605 = vsel %vm644, %v1583, 0
        %v1608 = vsel %vm644, %v1585, 0
        %1610 = vmatprep.subr.bf16.mxu0 0
        %1611 = vmatpush1.bf16.xpose.msra.mxu0 0
        %1612 = vmatprep.subr.bf16.mxu0 0
        %1613 = vmatpush1.bf16.xpose.msra.mxu0 0
        %1614 = vmatprep.subr.bf16.mxu0 0
        %1615 = vmatpush1.bf16.xpose.msra.mxu0 0
        %1616 = vmatprep.subr.bf16.mxu0 0
        %1617 = vmatpush1.bf16.xpose.msra.mxu0 0
        %1618 = vmatprep.subr.bf16.mxu0 0
        %1619 = vmatpush1.bf16.xpose.msra.mxu0 %v1608
        %1620 = vmatprep.subr.bf16.mxu0 0
        %1621 = vmatpush1.bf16.xpose.msra.mxu0 %v1605
        %1622 = vmatprep.subr.bf16.mxu0 0
        %1623 = vmatpush1.bf16.xpose.msra.mxu0 %v1602
        %1624 = vmatprep.subr.bf16.mxu0 0
        %1625 = vmatpush1.bf16.xpose.msra.mxu0 %v1599
        %1626 = vmatprep.subr.bf16.mxu0 0
        %1627 = vmatpush2.bf16.xpose.msra.mxu0 0
        %1628 = vmatprep.subr.bf16.mxu0 0
        %1629 = vmatpush2.bf16.xpose.msra.mxu0 0
        %1630 = vmatprep.subr.bf16.mxu0 0
        %1631 = vmatpush2.bf16.xpose.msra.mxu0 0
        %1632 = vmatprep.subr.bf16.mxu0 0
        %1633 = vmatpush2.bf16.xpose.msra.mxu0 0
        %1634 = vmatprep.subr.bf16.mxu0 0
        %1635 = vmatpush2.bf16.xpose.msra.mxu0 0
        %1636 = vmatprep.subr.bf16.mxu0 0
        %1637 = vmatpush2.bf16.xpose.msra.mxu0 0
        %1638 = vmatprep.subr.bf16.mxu0 0
        %1639 = vmatpush2.bf16.xpose.msra.mxu0 0
        %1640 = vmatprep.subr.bf16.mxu0 0
        %1641 = vmatpush2.bf16.xpose.msra.mxu0 0
        %1642 = vmatprep.mubr.bf16.mxu0 0
        %1643 = vmatmul.mubr.bf16.gmra.mxu0 %v1587
        %v1644 = vpop.f32.mrf.mxu0
        %v1645 = vadd.f32 0.0, %v1644
        %v1646 = vpop.f32.mrf.mxu0
        %v1647 = vpop.f32.mrf.mxu0
        %v1648 = vadd.f32 0.0, %v1647
        %v1649 = vpop.f32.mrf.mxu0
        %1650 = vmatprep.mubr.bf16.mxu0 0
        %1651 = vmatmul.mubr.bf16.gmra.mxu0 %v1590
        %v1652 = vpop.f32.mrf.mxu0
        %v1653 = vadd.f32 0.0, %v1652
        %v1654 = vpop.f32.mrf.mxu0
        %v1655 = vpop.f32.mrf.mxu0
        %v1656 = vadd.f32 0.0, %v1655
        %v1657 = vpop.f32.mrf.mxu0
        %1658 = vmatprep.mubr.bf16.mxu0 0
        %1659 = vmatmul.mubr.bf16.gmra.mxu0 %v1593
        %v1660 = vpop.f32.mrf.mxu0
        %v1661 = vadd.f32 0.0, %v1660
        %v1662 = vpop.f32.mrf.mxu0
        %v1663 = vpop.f32.mrf.mxu0
        %v1664 = vadd.f32 0.0, %v1663
        %v1665 = vpop.f32.mrf.mxu0
        %1666 = vmatprep.mubr.bf16.mxu0 0
        %1667 = vmatmul.mubr.bf16.gmra.mxu0 %v1596
        %v1668 = vpop.f32.mrf.mxu0
        %v1669 = vadd.f32 0.0, %v1668
        %v1670 = vpop.f32.mrf.mxu0
        %v1671 = vpop.f32.mrf.mxu0
        %v1672 = vadd.f32 0.0, %v1671
        %v1673 = vpop.f32.mrf.mxu0
        %1674 = vdwg.mxu0
        %s1675 = scalar_lea.vmem [#allocation2], 128
        %v1676 = vld [vmem:[%s1675] sm:$0xff]
        %v1677 = vld [vmem:[%s1675 + $0x8] sm:$0xff]
        %v1678 = vld [vmem:[%s1675 + $0x10] sm:$0xff]
        %v1679 = vld [vmem:[%s1675 + $0x18] sm:$0xff]
        %v1680 = vld [vmem:[%s1675 + $0x20] sm:$0xff]
        %v1681 = vld [vmem:[%s1675 + $0x28] sm:$0xff]
        %v1682 = vld [vmem:[%s1675 + $0x30] sm:$0xff]
        %v1683 = vld [vmem:[%s1675 + $0x38] sm:$0xff]
        %v1684 = vsel %vm742, %v1645, -inf
        %1685 = vmax.xlane.f32.xlu0 %v1684
        %v1686 = vpop.xlane.xlu0 %1685
        %v1687 = vsel %vm742, %v1648, -inf
        %1688 = vmax.xlane.f32.xlu0 %v1687
        %v1689 = vpop.xlane.xlu0 %1688
        %v1690 = vsel %vm742, %v1653, -inf
        %1691 = vmax.xlane.f32.xlu0 %v1690
        %v1692 = vpop.xlane.xlu0 %1691
        %v1693 = vsel %vm742, %v1656, -inf
        %1694 = vmax.xlane.f32.xlu0 %v1693
        %v1695 = vpop.xlane.xlu0 %1694
        %v1696 = vsel %vm742, %v1661, -inf
        %1697 = vmax.xlane.f32.xlu0 %v1696
        %v1698 = vpop.xlane.xlu0 %1697
        %v1699 = vsel %vm742, %v1664, -inf
        %1700 = vmax.xlane.f32.xlu0 %v1699
        %v1701 = vpop.xlane.xlu0 %1700
        %v1702 = vsel %vm742, %v1669, -inf
        %1703 = vmax.xlane.f32.xlu0 %v1702
        %v1704 = vpop.xlane.xlu0 %1703
        %v1705 = vsel %vm742, %v1672, -inf
        %1706 = vmax.xlane.f32.xlu0 %v1705
        %v1707 = vpop.xlane.xlu0 %1706
        %v1708 = vmax.f32 %v1676, %v1686
        %v1709 = vmax.f32 %v1677, %v1689
        %v1710 = vmax.f32 %v1678, %v1692
        %v1711 = vmax.f32 %v1679, %v1695
        %v1712 = vmax.f32 %v1680, %v1698
        %v1713 = vmax.f32 %v1681, %v1701
        %v1714 = vmax.f32 %v1682, %v1704
        %v1715 = vmax.f32 %v1683, %v1707
        %v1716 = vsub.f32 %v1676, %v1708
        %v1717 = vsub.f32 %v1677, %v1709
        %v1718 = vsub.f32 %v1678, %v1710
        %v1719 = vsub.f32 %v1679, %v1711
        %v1720 = vsub.f32 %v1680, %v1712
        %v1721 = vsub.f32 %v1681, %v1713
        %v1722 = vsub.f32 %v1682, %v1714
        %v1723 = vsub.f32 %v1683, %v1715
        %v1724 = vmul.f32 %v1716, 1.442695
        %v1725 = vpow.pop %v1724
        %v1726 = vmul.f32 %v1717, 1.442695
        %v1727 = vpow.pop %v1726
        %v1728 = vmul.f32 %v1718, 1.442695
        %v1729 = vpow.pop %v1728
        %v1730 = vmul.f32 %v1719, 1.442695
        %v1731 = vpow.pop %v1730
        %v1732 = vmul.f32 %v1720, 1.442695
        %v1733 = vpow.pop %v1732
        %v1734 = vmul.f32 %v1721, 1.442695
        %v1735 = vpow.pop %v1734
        %v1736 = vmul.f32 %v1722, 1.442695
        %v1737 = vpow.pop %v1736
        %v1738 = vmul.f32 %v1723, 1.442695
        %v1739 = vpow.pop %v1738
        %1741 = vset.pattern.permute.xlu0 0
        %1742 = vperm.xlu0 %1741, %v1708
        %v1743 = vpop.permute.xlu0 %1742
        %1746 = vset.pattern.permute.xlu0 0
        %1747 = vperm.xlu0 %1746, %v1709
        %v1748 = vpop.permute.xlu0 %1747
        %1751 = vset.pattern.permute.xlu0 0
        %1752 = vperm.xlu0 %1751, %v1710
        %v1753 = vpop.permute.xlu0 %1752
        %1756 = vset.pattern.permute.xlu0 0
        %1757 = vperm.xlu0 %1756, %v1711
        %v1758 = vpop.permute.xlu0 %1757
        %1761 = vset.pattern.permute.xlu0 0
        %1762 = vperm.xlu0 %1761, %v1712
        %v1763 = vpop.permute.xlu0 %1762
        %1766 = vset.pattern.permute.xlu0 0
        %1767 = vperm.xlu0 %1766, %v1713
        %v1768 = vpop.permute.xlu0 %1767
        %1771 = vset.pattern.permute.xlu0 0
        %1772 = vperm.xlu0 %1771, %v1714
        %v1773 = vpop.permute.xlu0 %1772
        %1776 = vset.pattern.permute.xlu0 0
        %1777 = vperm.xlu0 %1776, %v1715
        %v1778 = vpop.permute.xlu0 %1777
        %v1780 = vsub.f32 %v1645, %v1743
        %v1781 = vsub.f32 %v1648, %v1748
        %v1782 = vsub.f32 %v1653, %v1753
        %v1783 = vsub.f32 %v1656, %v1758
        %v1784 = vsub.f32 %v1661, %v1763
        %v1785 = vsub.f32 %v1664, %v1768
        %v1786 = vsub.f32 %v1669, %v1773
        %v1787 = vsub.f32 %v1672, %v1778
        %v1788 = vmul.f32 %v1780, 1.442695
        %v1789 = vpow.pop %v1788
        %v1790 = vmul.f32 %v1781, 1.442695
        %v1791 = vpow.pop %v1790
        %v1792 = vmul.f32 %v1782, 1.442695
        %v1793 = vpow.pop %v1792
        %v1794 = vmul.f32 %v1783, 1.442695
        %v1795 = vpow.pop %v1794
        %v1796 = vmul.f32 %v1784, 1.442695
        %v1797 = vpow.pop %v1796
        %v1798 = vmul.f32 %v1785, 1.442695
        %v1799 = vpow.pop %v1798
        %v1800 = vmul.f32 %v1786, 1.442695
        %v1801 = vpow.pop %v1800
        %v1802 = vmul.f32 %v1787, 1.442695
        %v1803 = vpow.pop %v1802
        %s1804 = scalar_lea.vmem [#allocation3], 128
        %v1805 = vld [vmem:[%s1804] sm:$0xff]
        %v1806 = vld [vmem:[%s1804 + $0x8] sm:$0xff]
        %v1807 = vld [vmem:[%s1804 + $0x10] sm:$0xff]
        %v1808 = vld [vmem:[%s1804 + $0x18] sm:$0xff]
        %v1809 = vld [vmem:[%s1804 + $0x20] sm:$0xff]
        %v1810 = vld [vmem:[%s1804 + $0x28] sm:$0xff]
        %v1811 = vld [vmem:[%s1804 + $0x30] sm:$0xff]
        %v1812 = vld [vmem:[%s1804 + $0x38] sm:$0xff]
        %v1813 = vmul.f32 %v1725, %v1805
        %v1814 = vmul.f32 %v1727, %v1806
        %v1815 = vmul.f32 %v1729, %v1807
        %v1816 = vmul.f32 %v1731, %v1808
        %v1817 = vmul.f32 %v1733, %v1809
        %v1818 = vmul.f32 %v1735, %v1810
        %v1819 = vmul.f32 %v1737, %v1811
        %v1820 = vmul.f32 %v1739, %v1812
        %v1821 = vsel %vm742, %v1789, 0.0
        %1822 = vadd.xlane.f32.xlu0 %v1821
        %v1823 = vpop.xlane.xlu0 %1822
        %v1824 = vsel %vm742, %v1791, 0.0
        %1825 = vadd.xlane.f32.xlu0 %v1824
        %v1826 = vpop.xlane.xlu0 %1825
        %v1827 = vsel %vm742, %v1793, 0.0
        %1828 = vadd.xlane.f32.xlu0 %v1827
        %v1829 = vpop.xlane.xlu0 %1828
        %v1830 = vsel %vm742, %v1795, 0.0
        %1831 = vadd.xlane.f32.xlu0 %v1830
        %v1832 = vpop.xlane.xlu0 %1831
        %v1833 = vsel %vm742, %v1797, 0.0
        %1834 = vadd.xlane.f32.xlu0 %v1833
        %v1835 = vpop.xlane.xlu0 %1834
        %v1836 = vsel %vm742, %v1799, 0.0
        %1837 = vadd.xlane.f32.xlu0 %v1836
        %v1838 = vpop.xlane.xlu0 %1837
        %v1839 = vsel %vm742, %v1801, 0.0
        %1840 = vadd.xlane.f32.xlu0 %v1839
        %v1841 = vpop.xlane.xlu0 %1840
        %v1842 = vsel %vm742, %v1803, 0.0
        %1843 = vadd.xlane.f32.xlu0 %v1842
        %v1844 = vpop.xlane.xlu0 %1843
        %v1845 = vadd.f32 %v1813, %v1823
        %v1846 = vadd.f32 %v1814, %v1826
        %v1847 = vadd.f32 %v1815, %v1829
        %v1848 = vadd.f32 %v1816, %v1832
        %v1849 = vadd.f32 %v1817, %v1835
        %v1850 = vadd.f32 %v1818, %v1838
        %v1851 = vadd.f32 %v1819, %v1841
        %v1852 = vadd.f32 %v1820, %v1844
        %1853 = vst.msk [vmem:[%s1804] sm:$0xff] %vm911, %v1845
        %1854 = vst.msk [vmem:[%s1804 + $0x8] sm:$0xff] %vm911, %v1846
        %1855 = vst.msk [vmem:[%s1804 + $0x10] sm:$0xff] %vm911, %v1847
        %1856 = vst.msk [vmem:[%s1804 + $0x18] sm:$0xff] %vm911, %v1848
        %1857 = vst.msk [vmem:[%s1804 + $0x20] sm:$0xff] %vm911, %v1849
        %1858 = vst.msk [vmem:[%s1804 + $0x28] sm:$0xff] %vm911, %v1850
        %1859 = vst.msk [vmem:[%s1804 + $0x30] sm:$0xff] %vm911, %v1851
        %1860 = vst.msk [vmem:[%s1804 + $0x38] sm:$0xff] %vm911, %v1852
        %s1861 = scalar_lea.vmem [#allocation4], 128
        %v1862 = vld [vmem:[%s1861] sm:$0xff]
        %v1863 = vld [vmem:[%s1861 + $0x8] sm:$0xff]
        %v1864 = vld [vmem:[%s1861 + $0x10] sm:$0xff]
        %v1865 = vld [vmem:[%s1861 + $0x18] sm:$0xff]
        %v1866 = vld [vmem:[%s1861 + $0x20] sm:$0xff]
        %v1867 = vld [vmem:[%s1861 + $0x28] sm:$0xff]
        %v1868 = vld [vmem:[%s1861 + $0x30] sm:$0xff]
        %v1869 = vld [vmem:[%s1861 + $0x38] sm:$0xff]
        %1871 = vset.pattern.permute.xlu0 0
        %1872 = vperm.xlu0 %1871, %v1725
        %v1873 = vpop.permute.xlu0 %1872
        %1876 = vset.pattern.permute.xlu0 0
        %1877 = vperm.xlu0 %1876, %v1727
        %v1878 = vpop.permute.xlu0 %1877
        %1881 = vset.pattern.permute.xlu0 0
        %1882 = vperm.xlu0 %1881, %v1729
        %v1883 = vpop.permute.xlu0 %1882
        %1886 = vset.pattern.permute.xlu0 0
        %1887 = vperm.xlu0 %1886, %v1731
        %v1888 = vpop.permute.xlu0 %1887
        %1891 = vset.pattern.permute.xlu0 0
        %1892 = vperm.xlu0 %1891, %v1733
        %v1893 = vpop.permute.xlu0 %1892
        %1896 = vset.pattern.permute.xlu0 0
        %1897 = vperm.xlu0 %1896, %v1735
        %v1898 = vpop.permute.xlu0 %1897
        %1901 = vset.pattern.permute.xlu0 0
        %1902 = vperm.xlu0 %1901, %v1737
        %v1903 = vpop.permute.xlu0 %1902
        %1906 = vset.pattern.permute.xlu0 0
        %1907 = vperm.xlu0 %1906, %v1739
        %v1908 = vpop.permute.xlu0 %1907
        %v1910 = vmul.f32 %v1873, %v1862
        %v1911 = vmul.f32 %v1878, %v1863
        %v1912 = vmul.f32 %v1883, %v1864
        %v1913 = vmul.f32 %v1888, %v1865
        %v1914 = vmul.f32 %v1893, %v1866
        %v1915 = vmul.f32 %v1898, %v1867
        %v1916 = vmul.f32 %v1903, %v1868
        %v1917 = vmul.f32 %v1908, %v1869
        %v1918 = vpack.c.bf16 %v1791, %v1789
        %v1919 = vpack.c.bf16 %v1795, %v1793
        %v1920 = vpack.c.bf16 %v1799, %v1797
        %v1921 = vpack.c.bf16 %v1803, %v1801
        %1922 = vrot.lane.b32.xlu0 %v996, 64
        %v1923 = vpop.permute.xlu0 %1922
        %1924 = vrot.lane.b32.xlu0 %v997, 64
        %v1925 = vpop.permute.xlu0 %1924
        %1926 = vrot.lane.b32.xlu0 %v998, 64
        %v1927 = vpop.permute.xlu0 %1926
        %1928 = vrot.lane.b32.xlu0 %v999, 64
        %v1929 = vpop.permute.xlu0 %1928
        %v1935 = vsel %vm742, %v1918, 0
        %v1938 = vsel %vm742, %v1919, 0
        %v1941 = vsel %vm742, %v1920, 0
        %v1944 = vsel %vm742, %v1921, 0
        %1946 = vmatprep.subr.bf16.mxu0 0
        %1947 = vmatpush1.bf16.msra.mxu0 0
        %1948 = vmatprep.subr.bf16.mxu0 0
        %1949 = vmatpush1.bf16.msra.mxu0 0
        %1950 = vmatprep.subr.bf16.mxu0 0
        %1951 = vmatpush1.bf16.msra.mxu0 0
        %1952 = vmatprep.subr.bf16.mxu0 0
        %1953 = vmatpush1.bf16.msra.mxu0 0
        %1954 = vmatprep.subr.bf16.mxu0 0
        %1955 = vmatpush1.bf16.msra.mxu0 %v1929
        %1956 = vmatprep.subr.bf16.mxu0 0
        %1957 = vmatpush1.bf16.msra.mxu0 %v1927
        %1958 = vmatprep.subr.bf16.mxu0 0
        %1959 = vmatpush1.bf16.msra.mxu0 %v1925
        %1960 = vmatprep.subr.bf16.mxu0 0
        %1961 = vmatpush1.bf16.msra.mxu0 %v1923
        %1962 = vmatprep.subr.bf16.mxu0 0
        %1963 = vmatpush2.bf16.msra.mxu0 0
        %1964 = vmatprep.subr.bf16.mxu0 0
        %1965 = vmatpush2.bf16.msra.mxu0 0
        %1966 = vmatprep.subr.bf16.mxu0 0
        %1967 = vmatpush2.bf16.msra.mxu0 0
        %1968 = vmatprep.subr.bf16.mxu0 0
        %1969 = vmatpush2.bf16.msra.mxu0 0
        %1970 = vmatprep.subr.bf16.mxu0 0
        %1971 = vmatpush2.bf16.msra.mxu0 0
        %1972 = vmatprep.subr.bf16.mxu0 0
        %1973 = vmatpush2.bf16.msra.mxu0 0
        %1974 = vmatprep.subr.bf16.mxu0 0
        %1975 = vmatpush2.bf16.msra.mxu0 0
        %1976 = vmatprep.subr.bf16.mxu0 0
        %1977 = vmatpush2.bf16.msra.mxu0 0
        %1978 = vmatprep.mubr.bf16.mxu0 0
        %1979 = vmatmul.mubr.bf16.gmra.mxu0 %v1935
        %v1980 = vpop.f32.mrf.mxu0
        %v1981 = vadd.f32 0.0, %v1980
        %v1982 = vpop.f32.mrf.mxu0
        %v1983 = vpop.f32.mrf.mxu0
        %v1984 = vadd.f32 0.0, %v1983
        %v1985 = vpop.f32.mrf.mxu0
        %1986 = vmatprep.mubr.bf16.mxu0 0
        %1987 = vmatmul.mubr.bf16.gmra.mxu0 %v1938
        %v1988 = vpop.f32.mrf.mxu0
        %v1989 = vadd.f32 0.0, %v1988
        %v1990 = vpop.f32.mrf.mxu0
        %v1991 = vpop.f32.mrf.mxu0
        %v1992 = vadd.f32 0.0, %v1991
        %v1993 = vpop.f32.mrf.mxu0
        %1994 = vmatprep.mubr.bf16.mxu0 0
        %1995 = vmatmul.mubr.bf16.gmra.mxu0 %v1941
        %v1996 = vpop.f32.mrf.mxu0
        %v1997 = vadd.f32 0.0, %v1996
        %v1998 = vpop.f32.mrf.mxu0
        %v1999 = vpop.f32.mrf.mxu0
        %v2000 = vadd.f32 0.0, %v1999
        %v2001 = vpop.f32.mrf.mxu0
        %2002 = vmatprep.mubr.bf16.mxu0 0
        %2003 = vmatmul.mubr.bf16.gmra.mxu0 %v1944
        %v2004 = vpop.f32.mrf.mxu0
        %v2005 = vadd.f32 0.0, %v2004
        %v2006 = vpop.f32.mrf.mxu0
        %v2007 = vpop.f32.mrf.mxu0
        %v2008 = vadd.f32 0.0, %v2007
        %v2009 = vpop.f32.mrf.mxu0
        %2010 = vdwg.mxu0
        %v2011 = vadd.f32 %v1910, %v1981
        %v2012 = vadd.f32 %v1911, %v1984
        %v2013 = vadd.f32 %v1912, %v1989
        %v2014 = vadd.f32 %v1913, %v1992
        %v2015 = vadd.f32 %v1914, %v1997
        %v2016 = vadd.f32 %v1915, %v2000
        %v2017 = vadd.f32 %v1916, %v2005
        %v2018 = vadd.f32 %v1917, %v2008
        %2019 = vst.msk [vmem:[%s1861] sm:$0xff] %vm644, %v2011
        %2020 = vst.msk [vmem:[%s1861 + $0x8] sm:$0xff] %vm644, %v2012
        %2021 = vst.msk [vmem:[%s1861 + $0x10] sm:$0xff] %vm644, %v2013
        %2022 = vst.msk [vmem:[%s1861 + $0x18] sm:$0xff] %vm644, %v2014
        %2023 = vst.msk [vmem:[%s1861 + $0x20] sm:$0xff] %vm644, %v2015
        %2024 = vst.msk [vmem:[%s1861 + $0x28] sm:$0xff] %vm644, %v2016
        %2025 = vst.msk [vmem:[%s1861 + $0x30] sm:$0xff] %vm644, %v2017
        %2026 = vst.msk [vmem:[%s1861 + $0x38] sm:$0xff] %vm644, %v2018
        %2027 = vst.msk [vmem:[%s1675] sm:$0xff] %vm911, %v1708
        %2028 = vst.msk [vmem:[%s1675 + $0x8] sm:$0xff] %vm911, %v1709
        %2029 = vst.msk [vmem:[%s1675 + $0x10] sm:$0xff] %vm911, %v1710
        %2030 = vst.msk [vmem:[%s1675 + $0x18] sm:$0xff] %vm911, %v1711
        %2031 = vst.msk [vmem:[%s1675 + $0x20] sm:$0xff] %vm911, %v1712
        %2032 = vst.msk [vmem:[%s1675 + $0x28] sm:$0xff] %vm911, %v1713
        %2033 = vst.msk [vmem:[%s1675 + $0x30] sm:$0xff] %vm911, %v1714
        %2034 = vst.msk [vmem:[%s1675 + $0x38] sm:$0xff] %vm911, %v1715
        %2035 = vrot.lane.b32.xlu0 %v620, 32
        %v2036 = vpop.permute.xlu0 %2035
        %2037 = vrot.lane.b32.xlu0 %v621, 32
        %v2038 = vpop.permute.xlu0 %2037
        %2039 = vrot.lane.b32.xlu0 %v622, 32
        %v2040 = vpop.permute.xlu0 %2039
        %2041 = vrot.lane.b32.xlu0 %v623, 32
        %v2042 = vpop.permute.xlu0 %2041
        %2043 = vrot.lane.b32.xlu0 %v640, 32
        %v2044 = vpop.permute.xlu0 %2043
        %2045 = vrot.lane.b32.xlu0 %v641, 32
        %v2046 = vpop.permute.xlu0 %2045
        %2047 = vrot.lane.b32.xlu0 %v642, 32
        %v2048 = vpop.permute.xlu0 %2047
        %2049 = vrot.lane.b32.xlu0 %v643, 32
        %v2050 = vpop.permute.xlu0 %2049
        %v2052 = vsel %vm644, %v2036, 0
        %v2055 = vsel %vm644, %v2038, 0
        %v2058 = vsel %vm644, %v2040, 0
        %v2061 = vsel %vm644, %v2042, 0
        %v2064 = vsel %vm644, %v2044, 0
        %v2067 = vsel %vm644, %v2046, 0
        %v2070 = vsel %vm644, %v2048, 0
        %v2073 = vsel %vm644, %v2050, 0
        %2075 = vmatprep.subr.bf16.mxu0 0
        %2076 = vmatpush1.bf16.xpose.msra.mxu0 0
        %2077 = vmatprep.subr.bf16.mxu0 0
        %2078 = vmatpush1.bf16.xpose.msra.mxu0 0
        %2079 = vmatprep.subr.bf16.mxu0 0
        %2080 = vmatpush1.bf16.xpose.msra.mxu0 0
        %2081 = vmatprep.subr.bf16.mxu0 0
        %2082 = vmatpush1.bf16.xpose.msra.mxu0 0
        %2083 = vmatprep.subr.bf16.mxu0 0
        %2084 = vmatpush1.bf16.xpose.msra.mxu0 %v2073
        %2085 = vmatprep.subr.bf16.mxu0 0
        %2086 = vmatpush1.bf16.xpose.msra.mxu0 %v2070
        %2087 = vmatprep.subr.bf16.mxu0 0
        %2088 = vmatpush1.bf16.xpose.msra.mxu0 %v2067
        %2089 = vmatprep.subr.bf16.mxu0 0
        %2090 = vmatpush1.bf16.xpose.msra.mxu0 %v2064
        %2091 = vmatprep.subr.bf16.mxu0 0
        %2092 = vmatpush2.bf16.xpose.msra.mxu0 0
        %2093 = vmatprep.subr.bf16.mxu0 0
        %2094 = vmatpush2.bf16.xpose.msra.mxu0 0
        %2095 = vmatprep.subr.bf16.mxu0 0
        %2096 = vmatpush2.bf16.xpose.msra.mxu0 0
        %2097 = vmatprep.subr.bf16.mxu0 0
        %2098 = vmatpush2.bf16.xpose.msra.mxu0 0
        %2099 = vmatprep.subr.bf16.mxu0 0
        %2100 = vmatpush2.bf16.xpose.msra.mxu0 0
        %2101 = vmatprep.subr.bf16.mxu0 0
        %2102 = vmatpush2.bf16.xpose.msra.mxu0 0
        %2103 = vmatprep.subr.bf16.mxu0 0
        %2104 = vmatpush2.bf16.xpose.msra.mxu0 0
        %2105 = vmatprep.subr.bf16.mxu0 0
        %2106 = vmatpush2.bf16.xpose.msra.mxu0 0
        %2107 = vmatprep.mubr.bf16.mxu0 0
        %2108 = vmatmul.mubr.bf16.gmra.mxu0 %v2052
        %v2109 = vpop.f32.mrf.mxu0
        %v2110 = vadd.f32 0.0, %v2109
        %v2111 = vpop.f32.mrf.mxu0
        %v2112 = vpop.f32.mrf.mxu0
        %v2113 = vadd.f32 0.0, %v2112
        %v2114 = vpop.f32.mrf.mxu0
        %2115 = vmatprep.mubr.bf16.mxu0 0
        %2116 = vmatmul.mubr.bf16.gmra.mxu0 %v2055
        %v2117 = vpop.f32.mrf.mxu0
        %v2118 = vadd.f32 0.0, %v2117
        %v2119 = vpop.f32.mrf.mxu0
        %v2120 = vpop.f32.mrf.mxu0
        %v2121 = vadd.f32 0.0, %v2120
        %v2122 = vpop.f32.mrf.mxu0
        %2123 = vmatprep.mubr.bf16.mxu0 0
        %2124 = vmatmul.mubr.bf16.gmra.mxu0 %v2058
        %v2125 = vpop.f32.mrf.mxu0
        %v2126 = vadd.f32 0.0, %v2125
        %v2127 = vpop.f32.mrf.mxu0
        %v2128 = vpop.f32.mrf.mxu0
        %v2129 = vadd.f32 0.0, %v2128
        %v2130 = vpop.f32.mrf.mxu0
        %2131 = vmatprep.mubr.bf16.mxu0 0
        %2132 = vmatmul.mubr.bf16.gmra.mxu0 %v2061
        %v2133 = vpop.f32.mrf.mxu0
        %v2134 = vadd.f32 0.0, %v2133
        %v2135 = vpop.f32.mrf.mxu0
        %v2136 = vpop.f32.mrf.mxu0
        %v2137 = vadd.f32 0.0, %v2136
        %v2138 = vpop.f32.mrf.mxu0
        %2139 = vdwg.mxu0
        %s2140 = scalar_lea.vmem [#allocation2], 192
        %v2141 = vld [vmem:[%s2140] sm:$0xff]
        %v2142 = vld [vmem:[%s2140 + $0x8] sm:$0xff]
        %v2143 = vld [vmem:[%s2140 + $0x10] sm:$0xff]
        %v2144 = vld [vmem:[%s2140 + $0x18] sm:$0xff]
        %v2145 = vld [vmem:[%s2140 + $0x20] sm:$0xff]
        %v2146 = vld [vmem:[%s2140 + $0x28] sm:$0xff]
        %v2147 = vld [vmem:[%s2140 + $0x30] sm:$0xff]
        %v2148 = vld [vmem:[%s2140 + $0x38] sm:$0xff]
        %v2149 = vsel %vm742, %v2110, -inf
        %2150 = vmax.xlane.f32.xlu0 %v2149
        %v2151 = vpop.xlane.xlu0 %2150
        %v2152 = vsel %vm742, %v2113, -inf
        %2153 = vmax.xlane.f32.xlu0 %v2152
        %v2154 = vpop.xlane.xlu0 %2153
        %v2155 = vsel %vm742, %v2118, -inf
        %2156 = vmax.xlane.f32.xlu0 %v2155
        %v2157 = vpop.xlane.xlu0 %2156
        %v2158 = vsel %vm742, %v2121, -inf
        %2159 = vmax.xlane.f32.xlu0 %v2158
        %v2160 = vpop.xlane.xlu0 %2159
        %v2161 = vsel %vm742, %v2126, -inf
        %2162 = vmax.xlane.f32.xlu0 %v2161
        %v2163 = vpop.xlane.xlu0 %2162
        %v2164 = vsel %vm742, %v2129, -inf
        %2165 = vmax.xlane.f32.xlu0 %v2164
        %v2166 = vpop.xlane.xlu0 %2165
        %v2167 = vsel %vm742, %v2134, -inf
        %2168 = vmax.xlane.f32.xlu0 %v2167
        %v2169 = vpop.xlane.xlu0 %2168
        %v2170 = vsel %vm742, %v2137, -inf
        %2171 = vmax.xlane.f32.xlu0 %v2170
        %v2172 = vpop.xlane.xlu0 %2171
        %v2173 = vmax.f32 %v2141, %v2151
        %v2174 = vmax.f32 %v2142, %v2154
        %v2175 = vmax.f32 %v2143, %v2157
        %v2176 = vmax.f32 %v2144, %v2160
        %v2177 = vmax.f32 %v2145, %v2163
        %v2178 = vmax.f32 %v2146, %v2166
        %v2179 = vmax.f32 %v2147, %v2169
        %v2180 = vmax.f32 %v2148, %v2172
        %v2181 = vsub.f32 %v2141, %v2173
        %v2182 = vsub.f32 %v2142, %v2174
        %v2183 = vsub.f32 %v2143, %v2175
        %v2184 = vsub.f32 %v2144, %v2176
        %v2185 = vsub.f32 %v2145, %v2177
        %v2186 = vsub.f32 %v2146, %v2178
        %v2187 = vsub.f32 %v2147, %v2179
        %v2188 = vsub.f32 %v2148, %v2180
        %v2189 = vmul.f32 %v2181, 1.442695
        %v2190 = vpow.pop %v2189
        %v2191 = vmul.f32 %v2182, 1.442695
        %v2192 = vpow.pop %v2191
        %v2193 = vmul.f32 %v2183, 1.442695
        %v2194 = vpow.pop %v2193
        %v2195 = vmul.f32 %v2184, 1.442695
        %v2196 = vpow.pop %v2195
        %v2197 = vmul.f32 %v2185, 1.442695
        %v2198 = vpow.pop %v2197
        %v2199 = vmul.f32 %v2186, 1.442695
        %v2200 = vpow.pop %v2199
        %v2201 = vmul.f32 %v2187, 1.442695
        %v2202 = vpow.pop %v2201
        %v2203 = vmul.f32 %v2188, 1.442695
        %v2204 = vpow.pop %v2203
        %2206 = vset.pattern.permute.xlu0 0
        %2207 = vperm.xlu0 %2206, %v2173
        %v2208 = vpop.permute.xlu0 %2207
        %2211 = vset.pattern.permute.xlu0 0
        %2212 = vperm.xlu0 %2211, %v2174
        %v2213 = vpop.permute.xlu0 %2212
        %2216 = vset.pattern.permute.xlu0 0
        %2217 = vperm.xlu0 %2216, %v2175
        %v2218 = vpop.permute.xlu0 %2217
        %2221 = vset.pattern.permute.xlu0 0
        %2222 = vperm.xlu0 %2221, %v2176
        %v2223 = vpop.permute.xlu0 %2222
        %2226 = vset.pattern.permute.xlu0 0
        %2227 = vperm.xlu0 %2226, %v2177
        %v2228 = vpop.permute.xlu0 %2227
        %2231 = vset.pattern.permute.xlu0 0
        %2232 = vperm.xlu0 %2231, %v2178
        %v2233 = vpop.permute.xlu0 %2232
        %2236 = vset.pattern.permute.xlu0 0
        %2237 = vperm.xlu0 %2236, %v2179
        %v2238 = vpop.permute.xlu0 %2237
        %2241 = vset.pattern.permute.xlu0 0
        %2242 = vperm.xlu0 %2241, %v2180
        %v2243 = vpop.permute.xlu0 %2242
        %v2245 = vsub.f32 %v2110, %v2208
        %v2246 = vsub.f32 %v2113, %v2213
        %v2247 = vsub.f32 %v2118, %v2218
        %v2248 = vsub.f32 %v2121, %v2223
        %v2249 = vsub.f32 %v2126, %v2228
        %v2250 = vsub.f32 %v2129, %v2233
        %v2251 = vsub.f32 %v2134, %v2238
        %v2252 = vsub.f32 %v2137, %v2243
        %v2253 = vmul.f32 %v2245, 1.442695
        %v2254 = vpow.pop %v2253
        %v2255 = vmul.f32 %v2246, 1.442695
        %v2256 = vpow.pop %v2255
        %v2257 = vmul.f32 %v2247, 1.442695
        %v2258 = vpow.pop %v2257
        %v2259 = vmul.f32 %v2248, 1.442695
        %v2260 = vpow.pop %v2259
        %v2261 = vmul.f32 %v2249, 1.442695
        %v2262 = vpow.pop %v2261
        %v2263 = vmul.f32 %v2250, 1.442695
        %v2264 = vpow.pop %v2263
        %v2265 = vmul.f32 %v2251, 1.442695
        %v2266 = vpow.pop %v2265
        %v2267 = vmul.f32 %v2252, 1.442695
        %v2268 = vpow.pop %v2267
        %s2269 = scalar_lea.vmem [#allocation3], 192
        %v2270 = vld [vmem:[%s2269] sm:$0xff]
        %v2271 = vld [vmem:[%s2269 + $0x8] sm:$0xff]
        %v2272 = vld [vmem:[%s2269 + $0x10] sm:$0xff]
        %v2273 = vld [vmem:[%s2269 + $0x18] sm:$0xff]
        %v2274 = vld [vmem:[%s2269 + $0x20] sm:$0xff]
        %v2275 = vld [vmem:[%s2269 + $0x28] sm:$0xff]
        %v2276 = vld [vmem:[%s2269 + $0x30] sm:$0xff]
        %v2277 = vld [vmem:[%s2269 + $0x38] sm:$0xff]
        %v2278 = vmul.f32 %v2190, %v2270
        %v2279 = vmul.f32 %v2192, %v2271
        %v2280 = vmul.f32 %v2194, %v2272
        %v2281 = vmul.f32 %v2196, %v2273
        %v2282 = vmul.f32 %v2198, %v2274
        %v2283 = vmul.f32 %v2200, %v2275
        %v2284 = vmul.f32 %v2202, %v2276
        %v2285 = vmul.f32 %v2204, %v2277
        %v2286 = vsel %vm742, %v2254, 0.0
        %2287 = vadd.xlane.f32.xlu0 %v2286
        %v2288 = vpop.xlane.xlu0 %2287
        %v2289 = vsel %vm742, %v2256, 0.0
        %2290 = vadd.xlane.f32.xlu0 %v2289
        %v2291 = vpop.xlane.xlu0 %2290
        %v2292 = vsel %vm742, %v2258, 0.0
        %2293 = vadd.xlane.f32.xlu0 %v2292
        %v2294 = vpop.xlane.xlu0 %2293
        %v2295 = vsel %vm742, %v2260, 0.0
        %2296 = vadd.xlane.f32.xlu0 %v2295
        %v2297 = vpop.xlane.xlu0 %2296
        %v2298 = vsel %vm742, %v2262, 0.0
        %2299 = vadd.xlane.f32.xlu0 %v2298
        %v2300 = vpop.xlane.xlu0 %2299
        %v2301 = vsel %vm742, %v2264, 0.0
        %2302 = vadd.xlane.f32.xlu0 %v2301
        %v2303 = vpop.xlane.xlu0 %2302
        %v2304 = vsel %vm742, %v2266, 0.0
        %2305 = vadd.xlane.f32.xlu0 %v2304
        %v2306 = vpop.xlane.xlu0 %2305
        %v2307 = vsel %vm742, %v2268, 0.0
        %2308 = vadd.xlane.f32.xlu0 %v2307
        %v2309 = vpop.xlane.xlu0 %2308
        %v2310 = vadd.f32 %v2278, %v2288
        %v2311 = vadd.f32 %v2279, %v2291
        %v2312 = vadd.f32 %v2280, %v2294
        %v2313 = vadd.f32 %v2281, %v2297
        %v2314 = vadd.f32 %v2282, %v2300
        %v2315 = vadd.f32 %v2283, %v2303
        %v2316 = vadd.f32 %v2284, %v2306
        %v2317 = vadd.f32 %v2285, %v2309
        %2318 = vst.msk [vmem:[%s2269] sm:$0xff] %vm911, %v2310
        %2319 = vst.msk [vmem:[%s2269 + $0x8] sm:$0xff] %vm911, %v2311
        %2320 = vst.msk [vmem:[%s2269 + $0x10] sm:$0xff] %vm911, %v2312
        %2321 = vst.msk [vmem:[%s2269 + $0x18] sm:$0xff] %vm911, %v2313
        %2322 = vst.msk [vmem:[%s2269 + $0x20] sm:$0xff] %vm911, %v2314
        %2323 = vst.msk [vmem:[%s2269 + $0x28] sm:$0xff] %vm911, %v2315
        %2324 = vst.msk [vmem:[%s2269 + $0x30] sm:$0xff] %vm911, %v2316
        %2325 = vst.msk [vmem:[%s2269 + $0x38] sm:$0xff] %vm911, %v2317
        %s2326 = scalar_lea.vmem [#allocation4], 192
        %v2327 = vld [vmem:[%s2326] sm:$0xff]
        %v2328 = vld [vmem:[%s2326 + $0x8] sm:$0xff]
        %v2329 = vld [vmem:[%s2326 + $0x10] sm:$0xff]
        %v2330 = vld [vmem:[%s2326 + $0x18] sm:$0xff]
        %v2331 = vld [vmem:[%s2326 + $0x20] sm:$0xff]
        %v2332 = vld [vmem:[%s2326 + $0x28] sm:$0xff]
        %v2333 = vld [vmem:[%s2326 + $0x30] sm:$0xff]
        %v2334 = vld [vmem:[%s2326 + $0x38] sm:$0xff]
        %2336 = vset.pattern.permute.xlu0 0
        %2337 = vperm.xlu0 %2336, %v2190
        %v2338 = vpop.permute.xlu0 %2337
        %2341 = vset.pattern.permute.xlu0 0
        %2342 = vperm.xlu0 %2341, %v2192
        %v2343 = vpop.permute.xlu0 %2342
        %2346 = vset.pattern.permute.xlu0 0
        %2347 = vperm.xlu0 %2346, %v2194
        %v2348 = vpop.permute.xlu0 %2347
        %2351 = vset.pattern.permute.xlu0 0
        %2352 = vperm.xlu0 %2351, %v2196
        %v2353 = vpop.permute.xlu0 %2352
        %2356 = vset.pattern.permute.xlu0 0
        %2357 = vperm.xlu0 %2356, %v2198
        %v2358 = vpop.permute.xlu0 %2357
        %2361 = vset.pattern.permute.xlu0 0
        %2362 = vperm.xlu0 %2361, %v2200
        %v2363 = vpop.permute.xlu0 %2362
        %2366 = vset.pattern.permute.xlu0 0
        %2367 = vperm.xlu0 %2366, %v2202
        %v2368 = vpop.permute.xlu0 %2367
        %2371 = vset.pattern.permute.xlu0 0
        %2372 = vperm.xlu0 %2371, %v2204
        %v2373 = vpop.permute.xlu0 %2372
        %v2375 = vmul.f32 %v2338, %v2327
        %v2376 = vmul.f32 %v2343, %v2328
        %v2377 = vmul.f32 %v2348, %v2329
        %v2378 = vmul.f32 %v2353, %v2330
        %v2379 = vmul.f32 %v2358, %v2331
        %v2380 = vmul.f32 %v2363, %v2332
        %v2381 = vmul.f32 %v2368, %v2333
        %v2382 = vmul.f32 %v2373, %v2334
        %v2383 = vpack.c.bf16 %v2256, %v2254
        %v2384 = vpack.c.bf16 %v2260, %v2258
        %v2385 = vpack.c.bf16 %v2264, %v2262
        %v2386 = vpack.c.bf16 %v2268, %v2266
        %2387 = vrot.lane.b32.xlu0 %v996, 32
        %v2388 = vpop.permute.xlu0 %2387
        %2389 = vrot.lane.b32.xlu0 %v997, 32
        %v2390 = vpop.permute.xlu0 %2389
        %2391 = vrot.lane.b32.xlu0 %v998, 32
        %v2392 = vpop.permute.xlu0 %2391
        %2393 = vrot.lane.b32.xlu0 %v999, 32
        %v2394 = vpop.permute.xlu0 %2393
        %v2400 = vsel %vm742, %v2383, 0
        %v2403 = vsel %vm742, %v2384, 0
        %v2406 = vsel %vm742, %v2385, 0
        %v2409 = vsel %vm742, %v2386, 0
        %2411 = vmatprep.subr.bf16.mxu0 0
        %2412 = vmatpush1.bf16.msra.mxu0 0
        %2413 = vmatprep.subr.bf16.mxu0 0
        %2414 = vmatpush1.bf16.msra.mxu0 0
        %2415 = vmatprep.subr.bf16.mxu0 0
        %2416 = vmatpush1.bf16.msra.mxu0 0
        %2417 = vmatprep.subr.bf16.mxu0 0
        %2418 = vmatpush1.bf16.msra.mxu0 0
        %2419 = vmatprep.subr.bf16.mxu0 0
        %2420 = vmatpush1.bf16.msra.mxu0 %v2394
        %2421 = vmatprep.subr.bf16.mxu0 0
        %2422 = vmatpush1.bf16.msra.mxu0 %v2392
        %2423 = vmatprep.subr.bf16.mxu0 0
        %2424 = vmatpush1.bf16.msra.mxu0 %v2390
        %2425 = vmatprep.subr.bf16.mxu0 0
        %2426 = vmatpush1.bf16.msra.mxu0 %v2388
        %2427 = vmatprep.subr.bf16.mxu0 0
        %2428 = vmatpush2.bf16.msra.mxu0 0
        %2429 = vmatprep.subr.bf16.mxu0 0
        %2430 = vmatpush2.bf16.msra.mxu0 0
        %2431 = vmatprep.subr.bf16.mxu0 0
        %2432 = vmatpush2.bf16.msra.mxu0 0
        %2433 = vmatprep.subr.bf16.mxu0 0
        %2434 = vmatpush2.bf16.msra.mxu0 0
        %2435 = vmatprep.subr.bf16.mxu0 0
        %2436 = vmatpush2.bf16.msra.mxu0 0
        %2437 = vmatprep.subr.bf16.mxu0 0
        %2438 = vmatpush2.bf16.msra.mxu0 0
        %2439 = vmatprep.subr.bf16.mxu0 0
        %2440 = vmatpush2.bf16.msra.mxu0 0
        %2441 = vmatprep.subr.bf16.mxu0 0
        %2442 = vmatpush2.bf16.msra.mxu0 0
        %2443 = vmatprep.mubr.bf16.mxu0 0
        %2444 = vmatmul.mubr.bf16.gmra.mxu0 %v2400
        %v2445 = vpop.f32.mrf.mxu0
        %v2446 = vadd.f32 0.0, %v2445
        %v2447 = vpop.f32.mrf.mxu0
        %v2448 = vpop.f32.mrf.mxu0
        %v2449 = vadd.f32 0.0, %v2448
        %v2450 = vpop.f32.mrf.mxu0
        %2451 = vmatprep.mubr.bf16.mxu0 0
        %2452 = vmatmul.mubr.bf16.gmra.mxu0 %v2403
        %v2453 = vpop.f32.mrf.mxu0
        %v2454 = vadd.f32 0.0, %v2453
        %v2455 = vpop.f32.mrf.mxu0
        %v2456 = vpop.f32.mrf.mxu0
        %v2457 = vadd.f32 0.0, %v2456
        %v2458 = vpop.f32.mrf.mxu0
        %2459 = vmatprep.mubr.bf16.mxu0 0
        %2460 = vmatmul.mubr.bf16.gmra.mxu0 %v2406
        %v2461 = vpop.f32.mrf.mxu0
        %v2462 = vadd.f32 0.0, %v2461
        %v2463 = vpop.f32.mrf.mxu0
        %v2464 = vpop.f32.mrf.mxu0
        %v2465 = vadd.f32 0.0, %v2464
        %v2466 = vpop.f32.mrf.mxu0
        %2467 = vmatprep.mubr.bf16.mxu0 0
        %2468 = vmatmul.mubr.bf16.gmra.mxu0 %v2409
        %v2469 = vpop.f32.mrf.mxu0
        %v2470 = vadd.f32 0.0, %v2469
        %v2471 = vpop.f32.mrf.mxu0
        %v2472 = vpop.f32.mrf.mxu0
        %v2473 = vadd.f32 0.0, %v2472
        %v2474 = vpop.f32.mrf.mxu0
        %2475 = vdwg.mxu0
        %v2476 = vadd.f32 %v2375, %v2446
        %v2477 = vadd.f32 %v2376, %v2449
        %v2478 = vadd.f32 %v2377, %v2454
        %v2479 = vadd.f32 %v2378, %v2457
        %v2480 = vadd.f32 %v2379, %v2462
        %v2481 = vadd.f32 %v2380, %v2465
        %v2482 = vadd.f32 %v2381, %v2470
        %v2483 = vadd.f32 %v2382, %v2473
        %2484 = vst.msk [vmem:[%s2326] sm:$0xff] %vm644, %v2476
        %2485 = vst.msk [vmem:[%s2326 + $0x8] sm:$0xff] %vm644, %v2477
        %2486 = vst.msk [vmem:[%s2326 + $0x10] sm:$0xff] %vm644, %v2478
        %2487 = vst.msk [vmem:[%s2326 + $0x18] sm:$0xff] %vm644, %v2479
        %2488 = vst.msk [vmem:[%s2326 + $0x20] sm:$0xff] %vm644, %v2480
        %2489 = vst.msk [vmem:[%s2326 + $0x28] sm:$0xff] %vm644, %v2481
        %2490 = vst.msk [vmem:[%s2326 + $0x30] sm:$0xff] %vm644, %v2482
        %2491 = vst.msk [vmem:[%s2326 + $0x38] sm:$0xff] %vm644, %v2483
        %2492 = vst.msk [vmem:[%s2140] sm:$0xff] %vm911, %v2173
        %2493 = vst.msk [vmem:[%s2140 + $0x8] sm:$0xff] %vm911, %v2174
        %2494 = vst.msk [vmem:[%s2140 + $0x10] sm:$0xff] %vm911, %v2175
        %2495 = vst.msk [vmem:[%s2140 + $0x18] sm:$0xff] %vm911, %v2176
        %2496 = vst.msk [vmem:[%s2140 + $0x20] sm:$0xff] %vm911, %v2177
        %2497 = vst.msk [vmem:[%s2140 + $0x28] sm:$0xff] %vm911, %v2178
        %2498 = vst.msk [vmem:[%s2140 + $0x30] sm:$0xff] %vm911, %v2179
        %2499 = vst.msk [vmem:[%s2140 + $0x38] sm:$0xff] %vm911, %v2180
        // Predicated region
        $region160: #{vit_forward.9} parent=142 // pred_check
          %p2500 = pneg %p478
        $region161: #{vit_forward.9} parent=142 // pred_check_branch
          %2502 = sbr.rel (%p2500) target = $region163
        $region162: #{vit_forward.9} parent=142 // pred_region
          %v2503 = vld [vmem:[#allocation4] sm:$0xff]
          %v2504 = vld [vmem:[#allocation4 + $0x8] sm:$0xff]
          %v2505 = vld [vmem:[#allocation4 + $0x10] sm:$0xff]
          %v2506 = vld [vmem:[#allocation4 + $0x18] sm:$0xff]
          %v2507 = vld [vmem:[#allocation4 + $0x20] sm:$0xff]
          %v2508 = vld [vmem:[#allocation4 + $0x28] sm:$0xff]
          %v2509 = vld [vmem:[#allocation4 + $0x30] sm:$0xff]
          %v2510 = vld [vmem:[#allocation4 + $0x38] sm:$0xff]
          %v2511 = vld [vmem:[#allocation3] sm:$0xff]
          %v2512 = vld [vmem:[#allocation3 + $0x8] sm:$0xff]
          %v2513 = vld [vmem:[#allocation3 + $0x10] sm:$0xff]
          %v2514 = vld [vmem:[#allocation3 + $0x18] sm:$0xff]
          %v2515 = vld [vmem:[#allocation3 + $0x20] sm:$0xff]
          %v2516 = vld [vmem:[#allocation3 + $0x28] sm:$0xff]
          %v2517 = vld [vmem:[#allocation3 + $0x30] sm:$0xff]
          %v2518 = vld [vmem:[#allocation3 + $0x38] sm:$0xff]
          %2520 = vset.pattern.permute.xlu0 0
          %2521 = vperm.xlu0 %2520, %v2511
          %v2522 = vpop.permute.xlu0 %2521
          %2525 = vset.pattern.permute.xlu0 0
          %2526 = vperm.xlu0 %2525, %v2512
          %v2527 = vpop.permute.xlu0 %2526
          %2530 = vset.pattern.permute.xlu0 0
          %2531 = vperm.xlu0 %2530, %v2513
          %v2532 = vpop.permute.xlu0 %2531
          %2535 = vset.pattern.permute.xlu0 0
          %2536 = vperm.xlu0 %2535, %v2514
          %v2537 = vpop.permute.xlu0 %2536
          %2540 = vset.pattern.permute.xlu0 0
          %2541 = vperm.xlu0 %2540, %v2515
          %v2542 = vpop.permute.xlu0 %2541
          %2545 = vset.pattern.permute.xlu0 0
          %2546 = vperm.xlu0 %2545, %v2516
          %v2547 = vpop.permute.xlu0 %2546
          %2550 = vset.pattern.permute.xlu0 0
          %2551 = vperm.xlu0 %2550, %v2517
          %v2552 = vpop.permute.xlu0 %2551
          %2555 = vset.pattern.permute.xlu0 0
          %2556 = vperm.xlu0 %2555, %v2518
          %v2557 = vpop.permute.xlu0 %2556
          %v2559 = vrcp.pop %v2522
          %v2560 = vmul.f32 %v2503, %v2559
          %v2561 = vrcp.pop %v2527
          %v2562 = vmul.f32 %v2504, %v2561
          %v2563 = vrcp.pop %v2532
          %v2564 = vmul.f32 %v2505, %v2563
          %v2565 = vrcp.pop %v2537
          %v2566 = vmul.f32 %v2506, %v2565
          %v2567 = vrcp.pop %v2542
          %v2568 = vmul.f32 %v2507, %v2567
          %v2569 = vrcp.pop %v2547
          %v2570 = vmul.f32 %v2508, %v2569
          %v2571 = vrcp.pop %v2552
          %v2572 = vmul.f32 %v2509, %v2571
          %v2573 = vrcp.pop %v2557
          %v2574 = vmul.f32 %v2510, %v2573
          %v2575 = vld [vmem:[%s1396] sm:$0xff]
          %v2576 = vld [vmem:[%s1396 + $0x8] sm:$0xff]
          %v2577 = vld [vmem:[%s1396 + $0x10] sm:$0xff]
          %v2578 = vld [vmem:[%s1396 + $0x18] sm:$0xff]
          %v2579 = vld [vmem:[%s1396 + $0x20] sm:$0xff]
          %v2580 = vld [vmem:[%s1396 + $0x28] sm:$0xff]
          %v2581 = vld [vmem:[%s1396 + $0x30] sm:$0xff]
          %v2582 = vld [vmem:[%s1396 + $0x38] sm:$0xff]
          %v2583 = vld [vmem:[%s1339] sm:$0xff]
          %v2584 = vld [vmem:[%s1339 + $0x8] sm:$0xff]
          %v2585 = vld [vmem:[%s1339 + $0x10] sm:$0xff]
          %v2586 = vld [vmem:[%s1339 + $0x18] sm:$0xff]
          %v2587 = vld [vmem:[%s1339 + $0x20] sm:$0xff]
          %v2588 = vld [vmem:[%s1339 + $0x28] sm:$0xff]
          %v2589 = vld [vmem:[%s1339 + $0x30] sm:$0xff]
          %v2590 = vld [vmem:[%s1339 + $0x38] sm:$0xff]
          %2592 = vset.pattern.permute.xlu0 0
          %2593 = vperm.xlu0 %2592, %v2583
          %v2594 = vpop.permute.xlu0 %2593
          %2597 = vset.pattern.permute.xlu0 0
          %2598 = vperm.xlu0 %2597, %v2584
          %v2599 = vpop.permute.xlu0 %2598
          %2602 = vset.pattern.permute.xlu0 0
          %2603 = vperm.xlu0 %2602, %v2585
          %v2604 = vpop.permute.xlu0 %2603
          %2607 = vset.pattern.permute.xlu0 0
          %2608 = vperm.xlu0 %2607, %v2586
          %v2609 = vpop.permute.xlu0 %2608
          %2612 = vset.pattern.permute.xlu0 0
          %2613 = vperm.xlu0 %2612, %v2587
          %v2614 = vpop.permute.xlu0 %2613
          %2617 = vset.pattern.permute.xlu0 0
          %2618 = vperm.xlu0 %2617, %v2588
          %v2619 = vpop.permute.xlu0 %2618
          %2622 = vset.pattern.permute.xlu0 0
          %2623 = vperm.xlu0 %2622, %v2589
          %v2624 = vpop.permute.xlu0 %2623
          %2627 = vset.pattern.permute.xlu0 0
          %2628 = vperm.xlu0 %2627, %v2590
          %v2629 = vpop.permute.xlu0 %2628
          %v2631 = vrcp.pop %v2594
          %v2632 = vmul.f32 %v2575, %v2631
          %v2633 = vrcp.pop %v2599
          %v2634 = vmul.f32 %v2576, %v2633
          %v2635 = vrcp.pop %v2604
          %v2636 = vmul.f32 %v2577, %v2635
          %v2637 = vrcp.pop %v2609
          %v2638 = vmul.f32 %v2578, %v2637
          %v2639 = vrcp.pop %v2614
          %v2640 = vmul.f32 %v2579, %v2639
          %v2641 = vrcp.pop %v2619
          %v2642 = vmul.f32 %v2580, %v2641
          %v2643 = vrcp.pop %v2624
          %v2644 = vmul.f32 %v2581, %v2643
          %v2645 = vrcp.pop %v2629
          %v2646 = vmul.f32 %v2582, %v2645
          %v2647 = vld [vmem:[%s1861] sm:$0xff]
          %v2648 = vld [vmem:[%s1861 + $0x8] sm:$0xff]
          %v2649 = vld [vmem:[%s1861 + $0x10] sm:$0xff]
          %v2650 = vld [vmem:[%s1861 + $0x18] sm:$0xff]
          %v2651 = vld [vmem:[%s1861 + $0x20] sm:$0xff]
          %v2652 = vld [vmem:[%s1861 + $0x28] sm:$0xff]
          %v2653 = vld [vmem:[%s1861 + $0x30] sm:$0xff]
          %v2654 = vld [vmem:[%s1861 + $0x38] sm:$0xff]
          %v2655 = vld [vmem:[%s1804] sm:$0xff]
          %v2656 = vld [vmem:[%s1804 + $0x8] sm:$0xff]
          %v2657 = vld [vmem:[%s1804 + $0x10] sm:$0xff]
          %v2658 = vld [vmem:[%s1804 + $0x18] sm:$0xff]
          %v2659 = vld [vmem:[%s1804 + $0x20] sm:$0xff]
          %v2660 = vld [vmem:[%s1804 + $0x28] sm:$0xff]
          %v2661 = vld [vmem:[%s1804 + $0x30] sm:$0xff]
          %v2662 = vld [vmem:[%s1804 + $0x38] sm:$0xff]
          %2664 = vset.pattern.permute.xlu0 0
          %2665 = vperm.xlu0 %2664, %v2655
          %v2666 = vpop.permute.xlu0 %2665
          %2669 = vset.pattern.permute.xlu0 0
          %2670 = vperm.xlu0 %2669, %v2656
          %v2671 = vpop.permute.xlu0 %2670
          %2674 = vset.pattern.permute.xlu0 0
          %2675 = vperm.xlu0 %2674, %v2657
          %v2676 = vpop.permute.xlu0 %2675
          %2679 = vset.pattern.permute.xlu0 0
          %2680 = vperm.xlu0 %2679, %v2658
          %v2681 = vpop.permute.xlu0 %2680
          %2684 = vset.pattern.permute.xlu0 0
          %2685 = vperm.xlu0 %2684, %v2659
          %v2686 = vpop.permute.xlu0 %2685
          %2689 = vset.pattern.permute.xlu0 0
          %2690 = vperm.xlu0 %2689, %v2660
          %v2691 = vpop.permute.xlu0 %2690
          %2694 = vset.pattern.permute.xlu0 0
          %2695 = vperm.xlu0 %2694, %v2661
          %v2696 = vpop.permute.xlu0 %2695
          %2699 = vset.pattern.permute.xlu0 0
          %2700 = vperm.xlu0 %2699, %v2662
          %v2701 = vpop.permute.xlu0 %2700
          %v2703 = vrcp.pop %v2666
          %v2704 = vmul.f32 %v2647, %v2703
          %v2705 = vrcp.pop %v2671
          %v2706 = vmul.f32 %v2648, %v2705
          %v2707 = vrcp.pop %v2676
          %v2708 = vmul.f32 %v2649, %v2707
          %v2709 = vrcp.pop %v2681
          %v2710 = vmul.f32 %v2650, %v2709
          %v2711 = vrcp.pop %v2686
          %v2712 = vmul.f32 %v2651, %v2711
          %v2713 = vrcp.pop %v2691
          %v2714 = vmul.f32 %v2652, %v2713
          %v2715 = vrcp.pop %v2696
          %v2716 = vmul.f32 %v2653, %v2715
          %v2717 = vrcp.pop %v2701
          %v2718 = vmul.f32 %v2654, %v2717
          %v2719 = vld [vmem:[%s2326] sm:$0xff]
          %v2720 = vld [vmem:[%s2326 + $0x8] sm:$0xff]
          %v2721 = vld [vmem:[%s2326 + $0x10] sm:$0xff]
          %v2722 = vld [vmem:[%s2326 + $0x18] sm:$0xff]
          %v2723 = vld [vmem:[%s2326 + $0x20] sm:$0xff]
          %v2724 = vld [vmem:[%s2326 + $0x28] sm:$0xff]
          %v2725 = vld [vmem:[%s2326 + $0x30] sm:$0xff]
          %v2726 = vld [vmem:[%s2326 + $0x38] sm:$0xff]
          %v2727 = vld [vmem:[%s2269] sm:$0xff]
          %v2728 = vld [vmem:[%s2269 + $0x8] sm:$0xff]
          %v2729 = vld [vmem:[%s2269 + $0x10] sm:$0xff]
          %v2730 = vld [vmem:[%s2269 + $0x18] sm:$0xff]
          %v2731 = vld [vmem:[%s2269 + $0x20] sm:$0xff]
          %v2732 = vld [vmem:[%s2269 + $0x28] sm:$0xff]
          %v2733 = vld [vmem:[%s2269 + $0x30] sm:$0xff]
          %v2734 = vld [vmem:[%s2269 + $0x38] sm:$0xff]
          %2736 = vset.pattern.permute.xlu0 0
          %2737 = vperm.xlu0 %2736, %v2727
          %v2738 = vpop.permute.xlu0 %2737
          %2741 = vset.pattern.permute.xlu0 0
          %2742 = vperm.xlu0 %2741, %v2728
          %v2743 = vpop.permute.xlu0 %2742
          %2746 = vset.pattern.permute.xlu0 0
          %2747 = vperm.xlu0 %2746, %v2729
          %v2748 = vpop.permute.xlu0 %2747
          %2751 = vset.pattern.permute.xlu0 0
          %2752 = vperm.xlu0 %2751, %v2730
          %v2753 = vpop.permute.xlu0 %2752
          %2756 = vset.pattern.permute.xlu0 0
          %2757 = vperm.xlu0 %2756, %v2731
          %v2758 = vpop.permute.xlu0 %2757
          %2761 = vset.pattern.permute.xlu0 0
          %2762 = vperm.xlu0 %2761, %v2732
          %v2763 = vpop.permute.xlu0 %2762
          %2766 = vset.pattern.permute.xlu0 0
          %2767 = vperm.xlu0 %2766, %v2733
          %v2768 = vpop.permute.xlu0 %2767
          %2771 = vset.pattern.permute.xlu0 0
          %2772 = vperm.xlu0 %2771, %v2734
          %v2773 = vpop.permute.xlu0 %2772
          %v2775 = vrcp.pop %v2738
          %v2776 = vmul.f32 %v2719, %v2775
          %v2777 = vrcp.pop %v2743
          %v2778 = vmul.f32 %v2720, %v2777
          %v2779 = vrcp.pop %v2748
          %v2780 = vmul.f32 %v2721, %v2779
          %v2781 = vrcp.pop %v2753
          %v2782 = vmul.f32 %v2722, %v2781
          %v2783 = vrcp.pop %v2758
          %v2784 = vmul.f32 %v2723, %v2783
          %v2785 = vrcp.pop %v2763
          %v2786 = vmul.f32 %v2724, %v2785
          %v2787 = vrcp.pop %v2768
          %v2788 = vmul.f32 %v2725, %v2787
          %v2789 = vrcp.pop %v2773
          %v2790 = vmul.f32 %v2726, %v2789
          %2799 = vrot.lane.b32.xlu0 %v2632, 32
          %v2800 = vpop.permute.xlu0 %2799
          %2801 = vrot.lane.b32.xlu0 %v2634, 32
          %v2802 = vpop.permute.xlu0 %2801
          %2803 = vrot.lane.b32.xlu0 %v2636, 32
          %v2804 = vpop.permute.xlu0 %2803
          %2805 = vrot.lane.b32.xlu0 %v2638, 32
          %v2806 = vpop.permute.xlu0 %2805
          %2807 = vrot.lane.b32.xlu0 %v2640, 32
          %v2808 = vpop.permute.xlu0 %2807
          %2809 = vrot.lane.b32.xlu0 %v2642, 32
          %v2810 = vpop.permute.xlu0 %2809
          %2811 = vrot.lane.b32.xlu0 %v2644, 32
          %v2812 = vpop.permute.xlu0 %2811
          %2813 = vrot.lane.b32.xlu0 %v2646, 32
          %v2814 = vpop.permute.xlu0 %2813
          %2831 = vrot.lane.b32.xlu0 %v2704, 64
          %v2832 = vpop.permute.xlu0 %2831
          %2833 = vrot.lane.b32.xlu0 %v2706, 64
          %v2834 = vpop.permute.xlu0 %2833
          %2835 = vrot.lane.b32.xlu0 %v2708, 64
          %v2836 = vpop.permute.xlu0 %2835
          %2837 = vrot.lane.b32.xlu0 %v2710, 64
          %v2838 = vpop.permute.xlu0 %2837
          %2839 = vrot.lane.b32.xlu0 %v2712, 64
          %v2840 = vpop.permute.xlu0 %2839
          %2841 = vrot.lane.b32.xlu0 %v2714, 64
          %v2842 = vpop.permute.xlu0 %2841
          %2843 = vrot.lane.b32.xlu0 %v2716, 64
          %v2844 = vpop.permute.xlu0 %2843
          %2845 = vrot.lane.b32.xlu0 %v2718, 64
          %v2846 = vpop.permute.xlu0 %2845
          %2863 = vrot.lane.b32.xlu0 %v2776, 96
          %v2864 = vpop.permute.xlu0 %2863
          %2865 = vrot.lane.b32.xlu0 %v2778, 96
          %v2866 = vpop.permute.xlu0 %2865
          %2867 = vrot.lane.b32.xlu0 %v2780, 96
          %v2868 = vpop.permute.xlu0 %2867
          %2869 = vrot.lane.b32.xlu0 %v2782, 96
          %v2870 = vpop.permute.xlu0 %2869
          %2871 = vrot.lane.b32.xlu0 %v2784, 96
          %v2872 = vpop.permute.xlu0 %2871
          %2873 = vrot.lane.b32.xlu0 %v2786, 96
          %v2874 = vpop.permute.xlu0 %2873
          %2875 = vrot.lane.b32.xlu0 %v2788, 96
          %v2876 = vpop.permute.xlu0 %2875
          %2877 = vrot.lane.b32.xlu0 %v2790, 96
          %v2878 = vpop.permute.xlu0 %2877
          %v2887 = vsel %vm644, %v2560, %v2800
          %v2888 = vsel %vm644, %v2562, %v2802
          %v2889 = vsel %vm644, %v2564, %v2804
          %v2890 = vsel %vm644, %v2566, %v2806
          %v2891 = vsel %vm644, %v2568, %v2808
          %v2892 = vsel %vm644, %v2570, %v2810
          %v2893 = vsel %vm644, %v2572, %v2812
          %v2894 = vsel %vm644, %v2574, %v2814
          %v2895 = vsel %vm742, %v2887, %v2832
          %v2896 = vsel %vm742, %v2888, %v2834
          %v2897 = vsel %vm742, %v2889, %v2836
          %v2898 = vsel %vm742, %v2890, %v2838
          %v2899 = vsel %vm742, %v2891, %v2840
          %v2900 = vsel %vm742, %v2892, %v2842
          %v2901 = vsel %vm742, %v2893, %v2844
          %v2902 = vsel %vm742, %v2894, %v2846
          %vm2903 = vcmask 785408
          %v2904 = vsel %vm2903, %v2895, %v2864
          %v2905 = vsel %vm2903, %v2896, %v2866
          %v2906 = vsel %vm2903, %v2897, %v2868
          %v2907 = vsel %vm2903, %v2898, %v2870
          %v2908 = vsel %vm2903, %v2899, %v2872
          %v2909 = vsel %vm2903, %v2900, %v2874
          %v2910 = vsel %vm2903, %v2901, %v2876
          %v2911 = vsel %vm2903, %v2902, %v2878
          %v2912 = vpack.c.bf16 %v2905, %v2904
          %v2913 = vpack.c.bf16 %v2907, %v2906
          %v2914 = vpack.c.bf16 %v2909, %v2908
          %v2915 = vpack.c.bf16 %v2911, %v2910
          %v2920 = vunpack.c.l.b16 %v2912
          %v2921 = vunpack.c.h.b16 %v2912
          %v2922 = vunpack.c.l.b16 %v2913
          %v2923 = vunpack.c.h.b16 %v2913
          %v2924 = vunpack.c.l.b16 %v2914
          %v2925 = vunpack.c.h.b16 %v2914
          %v2926 = vunpack.c.l.b16 %v2915
          %v2927 = vunpack.c.h.b16 %v2915
          %v2928 = vpack.c.b16 %v2920, %v2920
          %v2929 = vpack.c.b16 %v2921, %v2921
          %v2930 = vpack.c.b16 %v2922, %v2922
          %v2931 = vpack.c.b16 %v2923, %v2923
          %v2932 = vpack.c.b16 %v2924, %v2924
          %v2933 = vpack.c.b16 %v2925, %v2925
          %v2934 = vpack.c.b16 %v2926, %v2926
          %v2935 = vpack.c.b16 %v2927, %v2927
          %2944 = vst [vmem:[%s475] sm:$0xf] %v2928
          %2945 = vst [vmem:[%s475 + $0x4] sm:$0xf] %v2929
          %2946 = vst [vmem:[%s475 + $0x8] sm:$0xf] %v2930
          %2947 = vst [vmem:[%s475 + $0xc] sm:$0xf] %v2931
          %2948 = vst [vmem:[%s475 + $0x10] sm:$0xf] %v2932
          %2949 = vst [vmem:[%s475 + $0x14] sm:$0xf] %v2933
          %2950 = vst [vmem:[%s475 + $0x18] sm:$0xf] %v2934
          %2951 = vst [vmem:[%s475 + $0x1c] sm:$0xf] %v2935
        $region163: #{vit_forward.9} parent=142 // pred_fallthru
          _
        %s2952 = smul.u32 8, %s20
        %p2953 = scmp.lt.s32.totalorder %s19, 1
        %s2954 = scalar_select %p2953, %s19, 1
        %p2955 = scmp.lt.s32.totalorder %s2952, 7
        %s2956 = scalar_select %p2955, %s2952, 7
        %s2957 = smul.addr %s2954, 8
        %s2958 = sadd.s32 %s2956, %s2957
        %s2959 = smul.addr %s2958, 4
        %s2960 = scalar_lea.vmem %s3, %s2959
        // Predicated region
        $region164: #{vit_forward.9} parent=142 // pred_check
          %p2961 = pneg %p137
        $region165: #{vit_forward.9} parent=142 // pred_check_branch
          %2963 = sbr.rel (%p2961) target = $region167
        $region166: #{vit_forward.9} parent=142 // pred_region
          %s2964 = smul.u32 8, %s20
        $region167: #{vit_forward.9} parent=142 // pred_fallthru
          _
      $region143: #{vit_forward.9} parent=5 // pred_fallthru
        _
      %p2965 = scmp.le.s32.totalorder 2, %s9
      // Predicated region
      $region168: #{vit_forward.9} parent=5 // pred_check
        %p2966 = pneg %p2965
      $region169: #{vit_forward.9} parent=5 // pred_check_branch
        %2968 = sbr.rel (%p2966) target = $region171
      $region170: #{vit_forward.9} parent=5 // pred_region
        %s2969 = ssub.s32 %s9, 2
        // Predicated region
        $region172: #{vit_forward.9} parent=170 // pred_check
          %p2970 = pneg %p143
        $region173: #{vit_forward.9} parent=170 // pred_check_branch
          %2972 = sbr.rel (%p2970) target = $region175
        $region174: #{vit_forward.9} parent=170 // pred_region
          %s2973 = smul.u32 8, %s23
          %p2974 = scmp.lt.s32.totalorder %s22, 1
          %s2975 = scalar_select %p2974, %s22, 1
          %p2976 = scmp.lt.s32.totalorder %s2973, 7
          %s2977 = scalar_select %p2976, %s2973, 7
          %s2978 = smul.addr %s2975, 8
          %s2979 = sadd.s32 %s2977, %s2978
          %s2980 = smul.addr %s2979, 4
          %s2981 = scalar_lea.vmem %s3, %s2980
        $region175: #{vit_forward.9} parent=170 // pred_fallthru
          _
      $region171: #{vit_forward.9} parent=5 // pred_fallthru
        _
    $region6: #{vit_forward.9} parent=1 // loop_footer
      %s13 = sadd.s32 1, %s9
    $region7: #{vit_forward.9} parent=1 // loop_footer_branch
      %8 = sbr.rel target = $region3
    $region8: #{vit_forward.9} parent=1 // loop_exit
      _

</llo_original>
